<compile_context>
chip_gen: v7x
topology: tpu7x:2x2x1
jax: 0.10.0
libtpu: 0.0.40
codegen_flags: <defaults>
</compile_context>

<pallas_src>
import numpy as np
import jax
import jax.numpy as jnp
from jax.experimental import pallas as pl
from jax.experimental.pallas import tpu as pltpu


# ----------------------------------------------------------------------------
# In-kernel helpers (channel-major: activations are (C, D*H), spatial on lanes)
# ----------------------------------------------------------------------------
def _shift_flat(x, s):
    """v[c, p] = x[c, p + s] for 0 <= p + s < DH, else 0.  Static lane shift."""
    C, DH = x.shape
    if s == 0:
        return x
    if s > 0:
        return jnp.concatenate([x[:, s:], jnp.zeros((C, s), x.dtype)], axis=1)
    return jnp.concatenate([jnp.zeros((C, -s), x.dtype), x[:, :s]], axis=1)


def _conv3x3_cm(x, get_w, bcol, H, row_masks, cdt):
    """3x3x1 conv, channel-major & transposed.

    y(Cout, DH) = sum_t  W_t(Cout, Cin) @ tap_t(x)(Cin, DH)  + b.
    The D-border zero padding falls out of the flat shift's zero fill; only the
    h-direction wrap across rows needs a (precomputed) lane mask.
    """
    valid_hm1, valid_hp1 = row_masks           # (1, DH) bool, hoisted per resolution
    acc = None
    t = 0
    for a in (-1, 0, 1):
        for b in (-1, 0, 1):
            xt = _shift_flat(x, a * H + b)
            if b == 1:
                xt = jnp.where(valid_hp1, xt, 0.0)
            elif b == -1:
                xt = jnp.where(valid_hm1, xt, 0.0)
            y = jnp.dot(get_w(t), xt.astype(cdt),
                        preferred_element_type=jnp.float32)
            acc = y if acc is None else acc + y
            t += 1
    return acc + bcol


def _resblock_cm(x, get_w1, b1, get_w2, b2, H, row_masks, cdt, proj=None):
    """ResidualBlock3d (channel-major): proj(x) + conv2(relu(conv1(x)+b1)) + b2."""
    h = jnp.maximum(_conv3x3_cm(x, get_w1, b1, H, row_masks, cdt), 0.0)
    y = _conv3x3_cm(h, get_w2, b2, H, row_masks, cdt)
    if proj is None:                            # cin == cout -> identity residual
        return y + x
    r = jnp.dot(proj, x.astype(proj.dtype), preferred_element_type=jnp.float32)
    return y + r


def _maxpool_cm(x, H, pool_sel):
    """max_pool kernel [3,3] stride [2,2] VALID, channel-major.

    Elementwise max over the 9 flat shifts, then an exact one-hot selection
    matmul (f32 on the MXU) picks the (even, even) output positions.  Every tap
    a *selected* position reads is in-bounds and in-row, so no masking is needed;
    garbage at non-selected positions is multiplied by 0 in the selection.
    """
    m = x
    for i in range(3):
        for j in range(3):
            s = i * H + j
            if s:
                m = jnp.maximum(m, _shift_flat(x, s))
    return jnp.dot(m, pool_sel, preferred_element_type=jnp.float32)


# ----------------------------------------------------------------------------
# The fused kernel: whole SoftMaskBranch forward for one sample per grid step
# ----------------------------------------------------------------------------
def _make_kernel(dims, cdt):
    (_D0, H0), (D1, H1), (D2, H2) = dims

    def kernel(x_ref, wd1_ref, wcv_ref, prj_ref, woc_ref, b_ref,
               p1_ref, p2_ref, u1_ref, u2_ref, o_ref):
        # h-boundary masks, computed once per grid step per conv resolution.
        def row_masks(D, H):
            h = jax.lax.broadcasted_iota(jnp.int32, (1, D * H), 1) % H
            return (h >= 1, h < H - 1)          # (valid for h-1 tap, valid for h+1 tap)

        rm1 = row_masks(D1, H1)
        rm2 = row_masks(D2, H2)

        b = b_ref[...]                          # (Cout, 10) f32, biases as columns
        bcol = lambda j: b[:, j:j + 1]
        prj = prj_ref[...]                      # (Cout, Cin) bf16

        def conv_w(ci):                         # tap getter for packed conv slab
            return lambda t: wcv_ref[ci, t]     # -> (Cout, Cout) bf16

        x = x_ref[0].astype(jnp.float32)        # (Cin, D0*H0)

        # down1: maxpool + ResidualBlock3d(in_ch, out_ch)               @ (D1, H1)
        p1 = _maxpool_cm(x, H0, p1_ref[...])
        m1 = _resblock_cm(p1, lambda t: wd1_ref[t], bcol(0), conv_w(0), bcol(1),
                          H1, rm1, cdt, proj=prj)
        # down2: maxpool + the SAME ResidualBlock3d instance applied twice @ (D2, H2)
        p2 = _maxpool_cm(m1, H1, p2_ref[...])
        m2 = _resblock_cm(p2, conv_w(1), bcol(2), conv_w(2), bcol(3), H2, rm2, cdt)
        m2 = _resblock_cm(m2, conv_w(1), bcol(2), conv_w(2), bcol(3), H2, rm2, cdt)
        # skip branch                                                    @ (D1, H1)
        sk = _resblock_cm(m1, conv_w(3), bcol(4), conv_w(4), bcol(5), H1, rm1, cdt)
        # nearest resize (one-hot selection matmul on the MXU) + up1
        m2u = jnp.dot(m2, u1_ref[...], preferred_element_type=jnp.float32)
        m3 = _resblock_cm(m2u + sk, conv_w(5), bcol(6), conv_w(6), bcol(7),
                          H1, rm1, cdt)
        m3u = jnp.dot(m3, u2_ref[...], preferred_element_type=jnp.float32)  # (Cout, D0*H0)

        # out_conv: two InvertedConv3d 1x1  (y = W @ relu(h) + b), then sigmoid.
        h = jnp.dot(woc_ref[0], jnp.maximum(m3u, 0.0).astype(cdt),
                    preferred_element_type=jnp.float32) + bcol(8)
        h = jnp.dot(woc_ref[1], jnp.maximum(h, 0.0).astype(cdt),
                    preferred_element_type=jnp.float32) + bcol(9)
        o_ref[0] = jax.nn.sigmoid(h)            # lane-dense (Cout, D0*H0) store

    return kernel


# ----------------------------------------------------------------------------
# Wrapper: weight packing, one-hot selection matrices, one pallas_call
# ----------------------------------------------------------------------------
def _pool_sizes(D, H):
    return (D - 3) // 2 + 1, (H - 3) // 2 + 1


def _pool_select_matrix(D, H):
    Do, Ho = _pool_sizes(D, H)
    P = np.zeros((D * H, Do * Ho), np.float32)
    for do in range(Do):
        for ho in range(Ho):
            P[(2 * do) * H + 2 * ho, do * Ho + ho] = 1.0
    return jnp.asarray(P)


def _resize_select_matrix(Din, Hin, Dout, Hout):
    # PyTorch F.interpolate(mode='nearest') floor semantics: src = (dst*size_in)//size_out
    U = np.zeros((Din * Hin, Dout * Hout), np.float32)
    for do in range(Dout):
        di = (do * Din) // Dout
        for ho in range(Hout):
            hi = (ho * Hin) // Hout
            U[di * Hin + hi, do * Hout + ho] = 1.0
    return jnp.asarray(U)


def soft_mask_branch_forward(x_ncdhw, params, *, compute_dtype=jnp.bfloat16):
    N, Cin, D, H, W = x_ncdhw.shape
    B, DH = N * W, D * H
    Cout = params["down1"]["w1"].shape[-1]
    D1, H1 = _pool_sizes(D, H)
    D2, H2 = _pool_sizes(D1, H1)

    # Channel-major, lane-dense input (B, Cin, D*H); bf16 halves the input DMA.
    x = (jnp.transpose(x_ncdhw, (0, 4, 1, 2, 3))
         .reshape(B, Cin, DH).astype(compute_dtype))

    def taps(w):   # (3,3,cin,cout) -> (9, cout, cin), tap t = 3*(a+1)+(b+1)
        return (jnp.transpose(w, (0, 1, 3, 2))
                .reshape(9, w.shape[3], w.shape[2]).astype(compute_dtype))

    d1, d2, sk, u1, oc = (params["down1"], params["down2"], params["skip"],
                          params["up1"], params["out_conv"])
    wd1 = taps(d1["w1"])                                             # (9, Cout, Cin)
    wcv = jnp.stack([taps(d1["w2"]), taps(d2["w1"]), taps(d2["w2"]),
                     taps(sk["w1"]), taps(sk["w2"]),
                     taps(u1["w1"]), taps(u1["w2"])])                # (7, 9, Cout, Cout)
    prj = d1["proj"]
    prj = (jnp.eye(Cout, Cin) if prj is None else prj.T).astype(compute_dtype)  # (Cout, Cin)
    woc = jnp.stack([oc["w1"].T, oc["w2"].T]).astype(compute_dtype)  # (2, Cout, Cout)
    biases = jnp.concatenate(                                        # (Cout, 10) f32
        [d1["b1"].T, d1["b2"].T, d2["b1"].T, d2["b2"].T, sk["b1"].T, sk["b2"].T,
         u1["b1"].T, u1["b2"].T, oc["b1"].T, oc["b2"].T], axis=1).astype(jnp.float32)

    P1 = _pool_select_matrix(D, H)               # (D*H,   D1*H1)
    P2 = _pool_select_matrix(D1, H1)             # (D1*H1, D2*H2)
    U1 = _resize_select_matrix(D2, H2, D1, H1)   # (D2*H2, D1*H1)
    U2 = _resize_select_matrix(D1, H1, D, H)     # (D1*H1, D*H)

    weights = [wd1, wcv, prj, woc, biases, P1, P2, U1, U2]
    kernel = _make_kernel(((D, H), (D1, H1), (D2, H2)), compute_dtype)

    in_specs = [pl.BlockSpec((1, Cin, DH), lambda b: (b, 0, 0))]
    for w in weights:
        in_specs.append(pl.BlockSpec(w.shape, lambda b, n=w.ndim: (0,) * n))

    # TODO(synk): for realistic sizes (D,H >= 128, C >= 64) add a D-tiling grid axis
    # with a 1-row halo and set pltpu.CompilerParams(vmem_limit_bytes=...) so the
    # per-step footprint fits v7x's 64 MiB VMEM; at the test size everything fits.
    out = pl.pallas_call(
        kernel,
        out_shape=jax.ShapeDtypeStruct((B, Cout, DH), jnp.float32),
        grid=(B,),                               # Bt = 1: bounded live ranges, >= 4 steps
        in_specs=in_specs,
        out_specs=pl.BlockSpec((1, Cout, DH), lambda b: (b, 0, 0)),
        compiler_params=pltpu.CompilerParams(dimension_semantics=("parallel",)),
    )(x, *weights)

    return jnp.transpose(out.reshape(N, W, Cout, D, H), (0, 2, 3, 4, 1))


# ----------------------------------------------------------------------------
# Pure-JAX (XLA) reference with the same precision policy, for a correctness check
# ----------------------------------------------------------------------------
def _reference_forward(x_ncdhw, params):
    N, Cin, D, H, W = x_ncdhw.shape
    x = jnp.transpose(x_ncdhw, (0, 4, 2, 3, 1)).reshape(N * W, D, H, Cin)
    bf = jnp.bfloat16

    def conv(a, w):
        return jax.lax.conv_general_dilated(
            a.astype(bf), w.astype(bf), window_strides=(1, 1),
            padding=((1, 1), (1, 1)), dimension_numbers=("NHWC", "HWIO", "NHWC"),
            preferred_element_type=jnp.float32)

    def resblock(a, p):
        h = jnp.maximum(conv(a, p["w1"]) + p["b1"], 0.0)
        y = conv(h, p["w2"]) + p["b2"]
        if p.get("proj") is None:
            return y + a
        r = jnp.einsum("bdhc,co->bdho", a.astype(bf), p["proj"].astype(bf),
                       preferred_element_type=jnp.float32)
        return y + r

    def pool(a):
        return jax.lax.reduce_window(a, -jnp.inf, jax.lax.max,
                                     (1, 3, 3, 1), (1, 2, 2, 1), "VALID")

    def resize(a, Do, Ho):
        _, D_, H_, _ = a.shape
        di = (jnp.arange(Do) * D_) // Do
        hi = (jnp.arange(Ho) * H_) // Ho
        return jnp.take(jnp.take(a, di, axis=1), hi, axis=2)

    m1 = resblock(pool(x), params["down1"])
    m2 = resblock(pool(m1), params["down2"])
    m2 = resblock(m2, params["down2"])
    sk = resblock(m1, params["skip"])
    m3 = resblock(resize(m2, sk.shape[1], sk.shape[2]) + sk, params["up1"])
    m3 = resize(m3, D, H)

    oc = params["out_conv"]

    def ic(a, w, b):
        return jnp.einsum("bdhc,co->bdho", jnp.maximum(a, 0.0).astype(bf),
                          w.astype(bf), preferred_element_type=jnp.float32) + b

    out = jax.nn.sigmoid(ic(ic(m3, oc["w1"], oc["b1"]), oc["w2"], oc["b2"]))
    Cout = out.shape[-1]
    return jnp.transpose(out.reshape(N, W, D, H, Cout), (0, 4, 2, 3, 1))


# ----------------------------------------------------------------------------
# Deterministic parameter initialization (synthetic weights, no checkpoint)
# ----------------------------------------------------------------------------
def _res_params(key, cin, cout, *, with_proj):
    k1, k2, k3, k4, k5 = jax.random.split(key, 5)
    p = dict(
        w1=0.1 * jax.random.normal(k1, (3, 3, cin, cout), jnp.float32),
        b1=0.01 * jax.random.normal(k2, (1, cout), jnp.float32),
        w2=0.1 * jax.random.normal(k3, (3, 3, cout, cout), jnp.float32),
        b2=0.01 * jax.random.normal(k4, (1, cout), jnp.float32),
        proj=None,
    )
    if with_proj:
        p["proj"] = (jnp.eye(cout, dtype=jnp.float32) if cin == cout
                     else 0.1 * jax.random.normal(k5, (cin, cout), jnp.float32))
    return p


def init_params(key, in_ch, out_ch):
    kd1, kd2, ks, ku, ko = jax.random.split(key, 5)
    ka, kb, kc, kd = jax.random.split(ko, 4)
    return dict(
        down1=_res_params(kd1, in_ch, out_ch, with_proj=True),
        down2=_res_params(kd2, out_ch, out_ch, with_proj=False),
        skip=_res_params(ks, out_ch, out_ch, with_proj=False),
        up1=_res_params(ku, out_ch, out_ch, with_proj=False),
        out_conv=dict(
            w1=0.1 * jax.random.normal(ka, (out_ch, out_ch), jnp.float32),
            b1=0.01 * jax.random.normal(kb, (1, out_ch), jnp.float32),
            w2=0.1 * jax.random.normal(kc, (out_ch, out_ch), jnp.float32),
            b2=0.01 * jax.random.normal(kd, (1, out_ch), jnp.float32),
        ),
    )


if __name__ == "__main__":
    key = jax.random.PRNGKey(0)
    kx, kp = jax.random.split(key)
    N, C, D, H, W = 2, 4, 16, 16, 3            # NCDHW, W = 2.5D slice axis
    in_ch, out_ch = C, 8
    x = jax.random.normal(kx, (N, C, D, H, W), jnp.float32)
    params = init_params(kp, in_ch, out_ch)

    fwd = jax.jit(soft_mask_branch_forward)
    out = jax.block_until_ready(fwd(x, params))

    assert out.shape == (N, out_ch, D, H, W), out.shape
    assert bool(jnp.all(jnp.isfinite(out)))
    assert bool(jnp.all((out >= 0.0) & (out <= 1.0)))

    ref = _reference_forward(x, params)
    err = float(jnp.max(jnp.abs(out - ref)))
    assert err < 5e-3, f"max abs err vs reference = {err}"
    print("KERNEL_OK")
</pallas_src>

<mosaic_0001>
module attributes {stable_mosaic.version = 11 : i64} {
  func.func @kernel(%arg0: i32, %arg1: memref<1x4x256xbf16, #tpu.memory_space<vmem>>, %arg2: memref<9x8x4xbf16, #tpu.memory_space<vmem>>, %arg3: memref<7x9x8x8xbf16, #tpu.memory_space<vmem>>, %arg4: memref<8x4xbf16, #tpu.memory_space<vmem>>, %arg5: memref<2x8x8xbf16, #tpu.memory_space<vmem>>, %arg6: memref<8x10xf32, #tpu.memory_space<vmem>>, %arg7: memref<256x49xf32, #tpu.memory_space<vmem>>, %arg8: memref<49x9xf32, #tpu.memory_space<vmem>>, %arg9: memref<9x49xf32, #tpu.memory_space<vmem>>, %arg10: memref<49x256xf32, #tpu.memory_space<vmem>>, %arg11: memref<1x8x256xf32, #tpu.memory_space<vmem>>) attributes {dimension_semantics = [#tpu.dimension_semantics<parallel>], iteration_bounds = array<i64: 6>, scalar_prefetch = 0 : i64, scratch_operands = 0 : i64, tpu.core_type = #tpu.core_type<tc>, window_params = [{transform_indices = @transform_0, window_bounds = array<i64: 1, 4, 256>}, {pipeline_mode = #tpu.pipeline_mode<synchronous>, transform_indices = @transform_1, window_bounds = array<i64: 9, 8, 4>}, {pipeline_mode = #tpu.pipeline_mode<synchronous>, transform_indices = @transform_2, window_bounds = array<i64: 7, 9, 8, 8>}, {pipeline_mode = #tpu.pipeline_mode<synchronous>, transform_indices = @transform_3, window_bounds = array<i64: 8, 4>}, {pipeline_mode = #tpu.pipeline_mode<synchronous>, transform_indices = @transform_4, window_bounds = array<i64: 2, 8, 8>}, {pipeline_mode = #tpu.pipeline_mode<synchronous>, transform_indices = @transform_5, window_bounds = array<i64: 8, 10>}, {pipeline_mode = #tpu.pipeline_mode<synchronous>, transform_indices = @transform_6, window_bounds = array<i64: 256, 49>}, {pipeline_mode = #tpu.pipeline_mode<synchronous>, transform_indices = @transform_7, window_bounds = array<i64: 49, 9>}, {pipeline_mode = #tpu.pipeline_mode<synchronous>, transform_indices = @transform_8, window_bounds = array<i64: 9, 49>}, {pipeline_mode = #tpu.pipeline_mode<synchronous>, transform_indices = @transform_9, window_bounds = array<i64: 49, 256>}, {transform_indices = @transform_10, window_bounds = array<i64: 1, 8, 256>}]} {
    %0 = tpu.iota {dimensions = array<i32: 1>} : vector<1x49xi32>
    %c7_i32 = arith.constant 7 : i32
    %c0_i32 = arith.constant 0 : i32
    %1 = arith.cmpi eq, %c7_i32, %c0_i32 : i32
    %c1_i32 = arith.constant 1 : i32
    %2 = arith.select %1, %c1_i32, %c7_i32 : i32
    %3 = vector.broadcast %2 : i32 to vector<1x49xi32>
    %4 = arith.remsi %0, %3 : vector<1x49xi32>
    %c0_i32_0 = arith.constant 0 : i32
    %5 = vector.broadcast %c0_i32_0 : i32 to vector<1x49xi32>
    %6 = arith.cmpi ne, %4, %5 : vector<1x49xi32>
    %c0_i32_1 = arith.constant 0 : i32
    %7 = vector.broadcast %c0_i32_1 : i32 to vector<1x49xi32>
    %8 = arith.cmpi slt, %4, %7 : vector<1x49xi32>
    %c0_i32_2 = arith.constant 0 : i32
    %9 = arith.cmpi slt, %2, %c0_i32_2 : i32
    %10 = vector.broadcast %9 : i1 to vector<1x49xi1>
    %11 = vector.broadcast %10 : vector<1x49xi1> to vector<1x49xi1>
    %12 = arith.xori %8, %11 : vector<1x49xi1>
    %13 = arith.andi %12, %6 : vector<1x49xi1>
    %14 = vector.broadcast %2 : i32 to vector<1x49xi32>
    %15 = arith.addi %4, %14 : vector<1x49xi32>
    %16 = arith.select %13, %15, %4 : vector<1x49xi1>, vector<1x49xi32>
    %c1_i32_3 = arith.constant 1 : i32
    %17 = vector.broadcast %c1_i32_3 : i32 to vector<1x49xi32>
    %18 = arith.cmpi sge, %16, %17 : vector<1x49xi32>
    %c6_i32 = arith.constant 6 : i32
    %19 = vector.broadcast %c6_i32 : i32 to vector<1x49xi32>
    %20 = arith.cmpi slt, %16, %19 : vector<1x49xi32>
    %21 = tpu.iota {dimensions = array<i32: 1>} : vector<1x9xi32>
    %c3_i32 = arith.constant 3 : i32
    %c0_i32_4 = arith.constant 0 : i32
    %22 = arith.cmpi eq, %c3_i32, %c0_i32_4 : i32
    %c1_i32_5 = arith.constant 1 : i32
    %23 = arith.select %22, %c1_i32_5, %c3_i32 : i32
    %24 = vector.broadcast %23 : i32 to vector<1x9xi32>
    %25 = arith.remsi %21, %24 : vector<1x9xi32>
    %c0_i32_6 = arith.constant 0 : i32
    %26 = vector.broadcast %c0_i32_6 : i32 to vector<1x9xi32>
    %27 = arith.cmpi ne, %25, %26 : vector<1x9xi32>
    %c0_i32_7 = arith.constant 0 : i32
    %28 = vector.broadcast %c0_i32_7 : i32 to vector<1x9xi32>
    %29 = arith.cmpi slt, %25, %28 : vector<1x9xi32>
    %c0_i32_8 = arith.constant 0 : i32
    %30 = arith.cmpi slt, %23, %c0_i32_8 : i32
    %31 = vector.broadcast %30 : i1 to vector<1x9xi1>
    %32 = vector.broadcast %31 : vector<1x9xi1> to vector<1x9xi1>
    %33 = arith.xori %29, %32 : vector<1x9xi1>
    %34 = arith.andi %33, %27 : vector<1x9xi1>
    %35 = vector.broadcast %23 : i32 to vector<1x9xi32>
    %36 = arith.addi %25, %35 : vector<1x9xi32>
    %37 = arith.select %34, %36, %25 : vector<1x9xi1>, vector<1x9xi32>
    %c1_i32_9 = arith.constant 1 : i32
    %38 = vector.broadcast %c1_i32_9 : i32 to vector<1x9xi32>
    %39 = arith.cmpi sge, %37, %38 : vector<1x9xi32>
    %c2_i32 = arith.constant 2 : i32
    %40 = vector.broadcast %c2_i32 : i32 to vector<1x9xi32>
    %41 = arith.cmpi slt, %37, %40 : vector<1x9xi32>
    %c0 = arith.constant 0 : index
    %c0_10 = arith.constant 0 : index
    %42 = vector.load %arg6[%c0, %c0_10] : memref<8x10xf32, #tpu.memory_space<vmem>>, vector<8x10xf32>
    %c0_11 = arith.constant 0 : index
    %c0_12 = arith.constant 0 : index
    %43 = vector.load %arg4[%c0_11, %c0_12] : memref<8x4xbf16, #tpu.memory_space<vmem>>, vector<8x4xbf16>
    %c0_13 = arith.constant 0 : index
    %c0_14 = arith.constant 0 : index
    %c0_15 = arith.constant 0 : index
    %44 = vector.load %arg1[%c0_13, %c0_14, %c0_15] : memref<1x4x256xbf16, #tpu.memory_space<vmem>>, vector<1x4x256xbf16>
    %45 = vector.shape_cast %44 : vector<1x4x256xbf16> to vector<4x256xbf16>
    %46 = arith.extf %45 : vector<4x256xbf16> to vector<4x256xf32>
    %c0_16 = arith.constant 0 : index
    %c0_17 = arith.constant 0 : index
    %47 = vector.load %arg7[%c0_16, %c0_17] : memref<256x49xf32, #tpu.memory_space<vmem>>, vector<256x49xf32>
    %48 = vector.extract_strided_slice %46 {offsets = [0, 1], sizes = [4, 255], strides = [1, 1]} : vector<4x256xf32> to vector<4x255xf32>
    %cst = arith.constant 0.000000e+00 : f32
    %49 = vector.broadcast %cst : f32 to vector<4x1xf32>
    %50 = tpu.concatenate %48, %49 in 1 : vector<4x255xf32>, vector<4x1xf32> -> vector<4x256xf32>
    %51 = arith.maximumf %46, %50 : vector<4x256xf32>
    %52 = vector.extract_strided_slice %46 {offsets = [0, 2], sizes = [4, 254], strides = [1, 1]} : vector<4x256xf32> to vector<4x254xf32>
    %cst_18 = arith.constant 0.000000e+00 : f32
    %53 = vector.broadcast %cst_18 : f32 to vector<4x2xf32>
    %54 = tpu.concatenate %52, %53 in 1 : vector<4x254xf32>, vector<4x2xf32> -> vector<4x256xf32>
    %55 = arith.maximumf %51, %54 : vector<4x256xf32>
    %56 = vector.extract_strided_slice %46 {offsets = [0, 16], sizes = [4, 240], strides = [1, 1]} : vector<4x256xf32> to vector<4x240xf32>
    %cst_19 = arith.constant 0.000000e+00 : f32
    %57 = vector.broadcast %cst_19 : f32 to vector<4x16xf32>
    %58 = tpu.concatenate %56, %57 in 1 : vector<4x240xf32>, vector<4x16xf32> -> vector<4x256xf32>
    %59 = arith.maximumf %55, %58 : vector<4x256xf32>
    %60 = vector.extract_strided_slice %46 {offsets = [0, 17], sizes = [4, 239], strides = [1, 1]} : vector<4x256xf32> to vector<4x239xf32>
    %cst_20 = arith.constant 0.000000e+00 : f32
    %61 = vector.broadcast %cst_20 : f32 to vector<4x17xf32>
    %62 = tpu.concatenate %60, %61 in 1 : vector<4x239xf32>, vector<4x17xf32> -> vector<4x256xf32>
    %63 = arith.maximumf %59, %62 : vector<4x256xf32>
    %64 = vector.extract_strided_slice %46 {offsets = [0, 18], sizes = [4, 238], strides = [1, 1]} : vector<4x256xf32> to vector<4x238xf32>
    %cst_21 = arith.constant 0.000000e+00 : f32
    %65 = vector.broadcast %cst_21 : f32 to vector<4x18xf32>
    %66 = tpu.concatenate %64, %65 in 1 : vector<4x238xf32>, vector<4x18xf32> -> vector<4x256xf32>
    %67 = arith.maximumf %63, %66 : vector<4x256xf32>
    %68 = vector.extract_strided_slice %46 {offsets = [0, 32], sizes = [4, 224], strides = [1, 1]} : vector<4x256xf32> to vector<4x224xf32>
    %cst_22 = arith.constant 0.000000e+00 : f32
    %69 = vector.broadcast %cst_22 : f32 to vector<4x32xf32>
    %70 = tpu.concatenate %68, %69 in 1 : vector<4x224xf32>, vector<4x32xf32> -> vector<4x256xf32>
    %71 = arith.maximumf %67, %70 : vector<4x256xf32>
    %72 = vector.extract_strided_slice %46 {offsets = [0, 33], sizes = [4, 223], strides = [1, 1]} : vector<4x256xf32> to vector<4x223xf32>
    %cst_23 = arith.constant 0.000000e+00 : f32
    %73 = vector.broadcast %cst_23 : f32 to vector<4x33xf32>
    %74 = tpu.concatenate %72, %73 in 1 : vector<4x223xf32>, vector<4x33xf32> -> vector<4x256xf32>
    %75 = arith.maximumf %71, %74 : vector<4x256xf32>
    %76 = vector.extract_strided_slice %46 {offsets = [0, 34], sizes = [4, 222], strides = [1, 1]} : vector<4x256xf32> to vector<4x222xf32>
    %cst_24 = arith.constant 0.000000e+00 : f32
    %77 = vector.broadcast %cst_24 : f32 to vector<4x34xf32>
    %78 = tpu.concatenate %76, %77 in 1 : vector<4x222xf32>, vector<4x34xf32> -> vector<4x256xf32>
    %79 = arith.maximumf %75, %78 : vector<4x256xf32>
    %cst_25 = arith.constant dense<0.000000e+00> : vector<4x49xf32>
    %80 = tpu.matmul %79, %47, %cst_25 {dimension_numbers = #tpu.dot_dimension_numbers<[1], [0], [0], [1], [0, 0, 1, 1], [], []>} : vector<4x256xf32>, vector<256x49xf32>, vector<4x49xf32> -> vector<4x49xf32>
    %81 = vector.extract_strided_slice %42 {offsets = [0, 0], sizes = [8, 1], strides = [1, 1]} : vector<8x10xf32> to vector<8x1xf32>
    %82 = vector.extract_strided_slice %42 {offsets = [0, 1], sizes = [8, 1], strides = [1, 1]} : vector<8x10xf32> to vector<8x1xf32>
    %cst_26 = arith.constant 0.000000e+00 : f32
    %83 = vector.broadcast %cst_26 : f32 to vector<4x8xf32>
    %84 = vector.extract_strided_slice %80 {offsets = [0, 0], sizes = [4, 41], strides = [1, 1]} : vector<4x49xf32> to vector<4x41xf32>
    %85 = tpu.concatenate %83, %84 in 1 : vector<4x8xf32>, vector<4x41xf32> -> vector<4x49xf32>
    %cst_27 = arith.constant 0.000000e+00 : f32
    %86 = vector.shape_cast %18 : vector<1x49xi1> to vector<1x49xi1>
    %87 = vector.broadcast %86 : vector<1x49xi1> to vector<4x49xi1>
    %88 = vector.broadcast %cst_27 : f32 to vector<4x49xf32>
    %89 = arith.select %87, %85, %88 : vector<4x49xi1>, vector<4x49xf32>
    %c0_28 = arith.constant 0 : index
    %c0_29 = arith.constant 0 : index
    %c0_30 = arith.constant 0 : index
    %90 = vector.load %arg2[%c0_28, %c0_29, %c0_30] : memref<9x8x4xbf16, #tpu.memory_space<vmem>>, vector<1x8x4xbf16>
    %91 = vector.shape_cast %90 : vector<1x8x4xbf16> to vector<8x4xbf16>
    %92 = arith.truncf %89 : vector<4x49xf32> to vector<4x49xbf16>
    %cst_31 = arith.constant dense<0.000000e+00> : vector<8x49xf32>
    %93 = tpu.matmul %91, %92, %cst_31 {dimension_numbers = #tpu.dot_dimension_numbers<[1], [0], [0], [1], [0, 0, 1, 1], [], []>} : vector<8x4xbf16>, vector<4x49xbf16>, vector<8x49xf32> -> vector<8x49xf32>
    %cst_32 = arith.constant 0.000000e+00 : f32
    %94 = vector.broadcast %cst_32 : f32 to vector<4x7xf32>
    %95 = vector.extract_strided_slice %80 {offsets = [0, 0], sizes = [4, 42], strides = [1, 1]} : vector<4x49xf32> to vector<4x42xf32>
    %96 = tpu.concatenate %94, %95 in 1 : vector<4x7xf32>, vector<4x42xf32> -> vector<4x49xf32>
    %c1 = arith.constant 1 : index
    %c0_33 = arith.constant 0 : index
    %c0_34 = arith.constant 0 : index
    %97 = vector.load %arg2[%c1, %c0_33, %c0_34] : memref<9x8x4xbf16, #tpu.memory_space<vmem>>, vector<1x8x4xbf16>
    %98 = vector.shape_cast %97 : vector<1x8x4xbf16> to vector<8x4xbf16>
    %99 = arith.truncf %96 : vector<4x49xf32> to vector<4x49xbf16>
    %cst_35 = arith.constant dense<0.000000e+00> : vector<8x49xf32>
    %100 = tpu.matmul %98, %99, %cst_35 {dimension_numbers = #tpu.dot_dimension_numbers<[1], [0], [0], [1], [0, 0, 1, 1], [], []>} : vector<8x4xbf16>, vector<4x49xbf16>, vector<8x49xf32> -> vector<8x49xf32>
    %101 = arith.addf %93, %100 : vector<8x49xf32>
    %cst_36 = arith.constant 0.000000e+00 : f32
    %102 = vector.broadcast %cst_36 : f32 to vector<4x6xf32>
    %103 = vector.extract_strided_slice %80 {offsets = [0, 0], sizes = [4, 43], strides = [1, 1]} : vector<4x49xf32> to vector<4x43xf32>
    %104 = tpu.concatenate %102, %103 in 1 : vector<4x6xf32>, vector<4x43xf32> -> vector<4x49xf32>
    %cst_37 = arith.constant 0.000000e+00 : f32
    %105 = vector.shape_cast %20 : vector<1x49xi1> to vector<1x49xi1>
    %106 = vector.broadcast %105 : vector<1x49xi1> to vector<4x49xi1>
    %107 = vector.broadcast %cst_37 : f32 to vector<4x49xf32>
    %108 = arith.select %106, %104, %107 : vector<4x49xi1>, vector<4x49xf32>
    %c2 = arith.constant 2 : index
    %c0_38 = arith.constant 0 : index
    %c0_39 = arith.constant 0 : index
    %109 = vector.load %arg2[%c2, %c0_38, %c0_39] : memref<9x8x4xbf16, #tpu.memory_space<vmem>>, vector<1x8x4xbf16>
    %110 = vector.shape_cast %109 : vector<1x8x4xbf16> to vector<8x4xbf16>
    %111 = arith.truncf %108 : vector<4x49xf32> to vector<4x49xbf16>
    %cst_40 = arith.constant dense<0.000000e+00> : vector<8x49xf32>
    %112 = tpu.matmul %110, %111, %cst_40 {dimension_numbers = #tpu.dot_dimension_numbers<[1], [0], [0], [1], [0, 0, 1, 1], [], []>} : vector<8x4xbf16>, vector<4x49xbf16>, vector<8x49xf32> -> vector<8x49xf32>
    %113 = arith.addf %101, %112 : vector<8x49xf32>
    %cst_41 = arith.constant 0.000000e+00 : f32
    %114 = vector.broadcast %cst_41 : f32 to vector<4x1xf32>
    %115 = vector.extract_strided_slice %80 {offsets = [0, 0], sizes = [4, 48], strides = [1, 1]} : vector<4x49xf32> to vector<4x48xf32>
    %116 = tpu.concatenate %114, %115 in 1 : vector<4x1xf32>, vector<4x48xf32> -> vector<4x49xf32>
    %cst_42 = arith.constant 0.000000e+00 : f32
    %117 = vector.shape_cast %18 : vector<1x49xi1> to vector<1x49xi1>
    %118 = vector.broadcast %117 : vector<1x49xi1> to vector<4x49xi1>
    %119 = vector.broadcast %cst_42 : f32 to vector<4x49xf32>
    %120 = arith.select %118, %116, %119 : vector<4x49xi1>, vector<4x49xf32>
    %c3 = arith.constant 3 : index
    %c0_43 = arith.constant 0 : index
    %c0_44 = arith.constant 0 : index
    %121 = vector.load %arg2[%c3, %c0_43, %c0_44] : memref<9x8x4xbf16, #tpu.memory_space<vmem>>, vector<1x8x4xbf16>
    %122 = vector.shape_cast %121 : vector<1x8x4xbf16> to vector<8x4xbf16>
    %123 = arith.truncf %120 : vector<4x49xf32> to vector<4x49xbf16>
    %cst_45 = arith.constant dense<0.000000e+00> : vector<8x49xf32>
    %124 = tpu.matmul %122, %123, %cst_45 {dimension_numbers = #tpu.dot_dimension_numbers<[1], [0], [0], [1], [0, 0, 1, 1], [], []>} : vector<8x4xbf16>, vector<4x49xbf16>, vector<8x49xf32> -> vector<8x49xf32>
    %125 = arith.addf %113, %124 : vector<8x49xf32>
    %c4 = arith.constant 4 : index
    %c0_46 = arith.constant 0 : index
    %c0_47 = arith.constant 0 : index
    %126 = vector.load %arg2[%c4, %c0_46, %c0_47] : memref<9x8x4xbf16, #tpu.memory_space<vmem>>, vector<1x8x4xbf16>
    %127 = vector.shape_cast %126 : vector<1x8x4xbf16> to vector<8x4xbf16>
    %128 = arith.truncf %80 : vector<4x49xf32> to vector<4x49xbf16>
    %cst_48 = arith.constant dense<0.000000e+00> : vector<8x49xf32>
    %129 = tpu.matmul %127, %128, %cst_48 {dimension_numbers = #tpu.dot_dimension_numbers<[1], [0], [0], [1], [0, 0, 1, 1], [], []>} : vector<8x4xbf16>, vector<4x49xbf16>, vector<8x49xf32> -> vector<8x49xf32>
    %130 = arith.addf %125, %129 : vector<8x49xf32>
    %131 = vector.extract_strided_slice %80 {offsets = [0, 1], sizes = [4, 48], strides = [1, 1]} : vector<4x49xf32> to vector<4x48xf32>
    %cst_49 = arith.constant 0.000000e+00 : f32
    %132 = vector.broadcast %cst_49 : f32 to vector<4x1xf32>
    %133 = tpu.concatenate %131, %132 in 1 : vector<4x48xf32>, vector<4x1xf32> -> vector<4x49xf32>
    %cst_50 = arith.constant 0.000000e+00 : f32
    %134 = vector.shape_cast %20 : vector<1x49xi1> to vector<1x49xi1>
    %135 = vector.broadcast %134 : vector<1x49xi1> to vector<4x49xi1>
    %136 = vector.broadcast %cst_50 : f32 to vector<4x49xf32>
    %137 = arith.select %135, %133, %136 : vector<4x49xi1>, vector<4x49xf32>
    %c5 = arith.constant 5 : index
    %c0_51 = arith.constant 0 : index
    %c0_52 = arith.constant 0 : index
    %138 = vector.load %arg2[%c5, %c0_51, %c0_52] : memref<9x8x4xbf16, #tpu.memory_space<vmem>>, vector<1x8x4xbf16>
    %139 = vector.shape_cast %138 : vector<1x8x4xbf16> to vector<8x4xbf16>
    %140 = arith.truncf %137 : vector<4x49xf32> to vector<4x49xbf16>
    %cst_53 = arith.constant dense<0.000000e+00> : vector<8x49xf32>
    %141 = tpu.matmul %139, %140, %cst_53 {dimension_numbers = #tpu.dot_dimension_numbers<[1], [0], [0], [1], [0, 0, 1, 1], [], []>} : vector<8x4xbf16>, vector<4x49xbf16>, vector<8x49xf32> -> vector<8x49xf32>
    %142 = arith.addf %130, %141 : vector<8x49xf32>
    %143 = vector.extract_strided_slice %80 {offsets = [0, 6], sizes = [4, 43], strides = [1, 1]} : vector<4x49xf32> to vector<4x43xf32>
    %cst_54 = arith.constant 0.000000e+00 : f32
    %144 = vector.broadcast %cst_54 : f32 to vector<4x6xf32>
    %145 = tpu.concatenate %143, %144 in 1 : vector<4x43xf32>, vector<4x6xf32> -> vector<4x49xf32>
    %cst_55 = arith.constant 0.000000e+00 : f32
    %146 = vector.shape_cast %18 : vector<1x49xi1> to vector<1x49xi1>
    %147 = vector.broadcast %146 : vector<1x49xi1> to vector<4x49xi1>
    %148 = vector.broadcast %cst_55 : f32 to vector<4x49xf32>
    %149 = arith.select %147, %145, %148 : vector<4x49xi1>, vector<4x49xf32>
    %c6 = arith.constant 6 : index
    %c0_56 = arith.constant 0 : index
    %c0_57 = arith.constant 0 : index
    %150 = vector.load %arg2[%c6, %c0_56, %c0_57] : memref<9x8x4xbf16, #tpu.memory_space<vmem>>, vector<1x8x4xbf16>
    %151 = vector.shape_cast %150 : vector<1x8x4xbf16> to vector<8x4xbf16>
    %152 = arith.truncf %149 : vector<4x49xf32> to vector<4x49xbf16>
    %cst_58 = arith.constant dense<0.000000e+00> : vector<8x49xf32>
    %153 = tpu.matmul %151, %152, %cst_58 {dimension_numbers = #tpu.dot_dimension_numbers<[1], [0], [0], [1], [0, 0, 1, 1], [], []>} : vector<8x4xbf16>, vector<4x49xbf16>, vector<8x49xf32> -> vector<8x49xf32>
    %154 = arith.addf %142, %153 : vector<8x49xf32>
    %155 = vector.extract_strided_slice %80 {offsets = [0, 7], sizes = [4, 42], strides = [1, 1]} : vector<4x49xf32> to vector<4x42xf32>
    %cst_59 = arith.constant 0.000000e+00 : f32
    %156 = vector.broadcast %cst_59 : f32 to vector<4x7xf32>
    %157 = tpu.concatenate %155, %156 in 1 : vector<4x42xf32>, vector<4x7xf32> -> vector<4x49xf32>
    %c7 = arith.constant 7 : index
    %c0_60 = arith.constant 0 : index
    %c0_61 = arith.constant 0 : index
    %158 = vector.load %arg2[%c7, %c0_60, %c0_61] : memref<9x8x4xbf16, #tpu.memory_space<vmem>>, vector<1x8x4xbf16>
    %159 = vector.shape_cast %158 : vector<1x8x4xbf16> to vector<8x4xbf16>
    %160 = arith.truncf %157 : vector<4x49xf32> to vector<4x49xbf16>
    %cst_62 = arith.constant dense<0.000000e+00> : vector<8x49xf32>
    %161 = tpu.matmul %159, %160, %cst_62 {dimension_numbers = #tpu.dot_dimension_numbers<[1], [0], [0], [1], [0, 0, 1, 1], [], []>} : vector<8x4xbf16>, vector<4x49xbf16>, vector<8x49xf32> -> vector<8x49xf32>
    %162 = arith.addf %154, %161 : vector<8x49xf32>
    %163 = vector.extract_strided_slice %80 {offsets = [0, 8], sizes = [4, 41], strides = [1, 1]} : vector<4x49xf32> to vector<4x41xf32>
    %cst_63 = arith.constant 0.000000e+00 : f32
    %164 = vector.broadcast %cst_63 : f32 to vector<4x8xf32>
    %165 = tpu.concatenate %163, %164 in 1 : vector<4x41xf32>, vector<4x8xf32> -> vector<4x49xf32>
    %cst_64 = arith.constant 0.000000e+00 : f32
    %166 = vector.shape_cast %20 : vector<1x49xi1> to vector<1x49xi1>
    %167 = vector.broadcast %166 : vector<1x49xi1> to vector<4x49xi1>
    %168 = vector.broadcast %cst_64 : f32 to vector<4x49xf32>
    %169 = arith.select %167, %165, %168 : vector<4x49xi1>, vector<4x49xf32>
    %c8 = arith.constant 8 : index
    %c0_65 = arith.constant 0 : index
    %c0_66 = arith.constant 0 : index
    %170 = vector.load %arg2[%c8, %c0_65, %c0_66] : memref<9x8x4xbf16, #tpu.memory_space<vmem>>, vector<1x8x4xbf16>
    %171 = vector.shape_cast %170 : vector<1x8x4xbf16> to vector<8x4xbf16>
    %172 = arith.truncf %169 : vector<4x49xf32> to vector<4x49xbf16>
    %cst_67 = arith.constant dense<0.000000e+00> : vector<8x49xf32>
    %173 = tpu.matmul %171, %172, %cst_67 {dimension_numbers = #tpu.dot_dimension_numbers<[1], [0], [0], [1], [0, 0, 1, 1], [], []>} : vector<8x4xbf16>, vector<4x49xbf16>, vector<8x49xf32> -> vector<8x49xf32>
    %174 = arith.addf %162, %173 : vector<8x49xf32>
    %175 = vector.broadcast %81 : vector<8x1xf32> to vector<8x49xf32>
    %176 = arith.addf %174, %175 : vector<8x49xf32>
    %cst_68 = arith.constant 0.000000e+00 : f32
    %177 = vector.broadcast %cst_68 : f32 to vector<8x49xf32>
    %178 = arith.maximumf %176, %177 : vector<8x49xf32>
    %cst_69 = arith.constant 0.000000e+00 : f32
    %179 = vector.broadcast %cst_69 : f32 to vector<8x8xf32>
    %180 = vector.extract_strided_slice %178 {offsets = [0, 0], sizes = [8, 41], strides = [1, 1]} : vector<8x49xf32> to vector<8x41xf32>
    %181 = tpu.concatenate %179, %180 in 1 : vector<8x8xf32>, vector<8x41xf32> -> vector<8x49xf32>
    %cst_70 = arith.constant 0.000000e+00 : f32
    %182 = vector.shape_cast %18 : vector<1x49xi1> to vector<1x49xi1>
    %183 = vector.broadcast %182 : vector<1x49xi1> to vector<8x49xi1>
    %184 = vector.broadcast %cst_70 : f32 to vector<8x49xf32>
    %185 = arith.select %183, %181, %184 : vector<8x49xi1>, vector<8x49xf32>
    %c0_71 = arith.constant 0 : index
    %c0_72 = arith.constant 0 : index
    %c0_73 = arith.constant 0 : index
    %c0_74 = arith.constant 0 : index
    %186 = vector.load %arg3[%c0_71, %c0_72, %c0_73, %c0_74] : memref<7x9x8x8xbf16, #tpu.memory_space<vmem>>, vector<1x1x8x8xbf16>
    %187 = vector.shape_cast %186 : vector<1x1x8x8xbf16> to vector<8x8xbf16>
    %188 = arith.truncf %185 : vector<8x49xf32> to vector<8x49xbf16>
    %cst_75 = arith.constant dense<0.000000e+00> : vector<8x49xf32>
    %189 = tpu.matmul %187, %188, %cst_75 {dimension_numbers = #tpu.dot_dimension_numbers<[1], [0], [0], [1], [0, 0, 1, 1], [], []>} : vector<8x8xbf16>, vector<8x49xbf16>, vector<8x49xf32> -> vector<8x49xf32>
    %cst_76 = arith.constant 0.000000e+00 : f32
    %190 = vector.broadcast %cst_76 : f32 to vector<8x7xf32>
    %191 = vector.extract_strided_slice %178 {offsets = [0, 0], sizes = [8, 42], strides = [1, 1]} : vector<8x49xf32> to vector<8x42xf32>
    %192 = tpu.concatenate %190, %191 in 1 : vector<8x7xf32>, vector<8x42xf32> -> vector<8x49xf32>
    %c0_77 = arith.constant 0 : index
    %c1_78 = arith.constant 1 : index
    %c0_79 = arith.constant 0 : index
    %c0_80 = arith.constant 0 : index
    %193 = vector.load %arg3[%c0_77, %c1_78, %c0_79, %c0_80] : memref<7x9x8x8xbf16, #tpu.memory_space<vmem>>, vector<1x1x8x8xbf16>
    %194 = vector.shape_cast %193 : vector<1x1x8x8xbf16> to vector<8x8xbf16>
    %195 = arith.truncf %192 : vector<8x49xf32> to vector<8x49xbf16>
    %cst_81 = arith.constant dense<0.000000e+00> : vector<8x49xf32>
    %196 = tpu.matmul %194, %195, %cst_81 {dimension_numbers = #tpu.dot_dimension_numbers<[1], [0], [0], [1], [0, 0, 1, 1], [], []>} : vector<8x8xbf16>, vector<8x49xbf16>, vector<8x49xf32> -> vector<8x49xf32>
    %197 = arith.addf %189, %196 : vector<8x49xf32>
    %cst_82 = arith.constant 0.000000e+00 : f32
    %198 = vector.broadcast %cst_82 : f32 to vector<8x6xf32>
    %199 = vector.extract_strided_slice %178 {offsets = [0, 0], sizes = [8, 43], strides = [1, 1]} : vector<8x49xf32> to vector<8x43xf32>
    %200 = tpu.concatenate %198, %199 in 1 : vector<8x6xf32>, vector<8x43xf32> -> vector<8x49xf32>
    %cst_83 = arith.constant 0.000000e+00 : f32
    %201 = vector.shape_cast %20 : vector<1x49xi1> to vector<1x49xi1>
    %202 = vector.broadcast %201 : vector<1x49xi1> to vector<8x49xi1>
    %203 = vector.broadcast %cst_83 : f32 to vector<8x49xf32>
    %204 = arith.select %202, %200, %203 : vector<8x49xi1>, vector<8x49xf32>
    %c0_84 = arith.constant 0 : index
    %c2_85 = arith.constant 2 : index
    %c0_86 = arith.constant 0 : index
    %c0_87 = arith.constant 0 : index
    %205 = vector.load %arg3[%c0_84, %c2_85, %c0_86, %c0_87] : memref<7x9x8x8xbf16, #tpu.memory_space<vmem>>, vector<1x1x8x8xbf16>
    %206 = vector.shape_cast %205 : vector<1x1x8x8xbf16> to vector<8x8xbf16>
    %207 = arith.truncf %204 : vector<8x49xf32> to vector<8x49xbf16>
    %cst_88 = arith.constant dense<0.000000e+00> : vector<8x49xf32>
    %208 = tpu.matmul %206, %207, %cst_88 {dimension_numbers = #tpu.dot_dimension_numbers<[1], [0], [0], [1], [0, 0, 1, 1], [], []>} : vector<8x8xbf16>, vector<8x49xbf16>, vector<8x49xf32> -> vector<8x49xf32>
    %209 = arith.addf %197, %208 : vector<8x49xf32>
    %cst_89 = arith.constant 0.000000e+00 : f32
    %210 = vector.broadcast %cst_89 : f32 to vector<8x1xf32>
    %211 = vector.extract_strided_slice %178 {offsets = [0, 0], sizes = [8, 48], strides = [1, 1]} : vector<8x49xf32> to vector<8x48xf32>
    %212 = tpu.concatenate %210, %211 in 1 : vector<8x1xf32>, vector<8x48xf32> -> vector<8x49xf32>
    %cst_90 = arith.constant 0.000000e+00 : f32
    %213 = vector.shape_cast %18 : vector<1x49xi1> to vector<1x49xi1>
    %214 = vector.broadcast %213 : vector<1x49xi1> to vector<8x49xi1>
    %215 = vector.broadcast %cst_90 : f32 to vector<8x49xf32>
    %216 = arith.select %214, %212, %215 : vector<8x49xi1>, vector<8x49xf32>
    %c0_91 = arith.constant 0 : index
    %c3_92 = arith.constant 3 : index
    %c0_93 = arith.constant 0 : index
    %c0_94 = arith.constant 0 : index
    %217 = vector.load %arg3[%c0_91, %c3_92, %c0_93, %c0_94] : memref<7x9x8x8xbf16, #tpu.memory_space<vmem>>, vector<1x1x8x8xbf16>
    %218 = vector.shape_cast %217 : vector<1x1x8x8xbf16> to vector<8x8xbf16>
    %219 = arith.truncf %216 : vector<8x49xf32> to vector<8x49xbf16>
    %cst_95 = arith.constant dense<0.000000e+00> : vector<8x49xf32>
    %220 = tpu.matmul %218, %219, %cst_95 {dimension_numbers = #tpu.dot_dimension_numbers<[1], [0], [0], [1], [0, 0, 1, 1], [], []>} : vector<8x8xbf16>, vector<8x49xbf16>, vector<8x49xf32> -> vector<8x49xf32>
    %221 = arith.addf %209, %220 : vector<8x49xf32>
    %c0_96 = arith.constant 0 : index
    %c4_97 = arith.constant 4 : index
    %c0_98 = arith.constant 0 : index
    %c0_99 = arith.constant 0 : index
    %222 = vector.load %arg3[%c0_96, %c4_97, %c0_98, %c0_99] : memref<7x9x8x8xbf16, #tpu.memory_space<vmem>>, vector<1x1x8x8xbf16>
    %223 = vector.shape_cast %222 : vector<1x1x8x8xbf16> to vector<8x8xbf16>
    %224 = arith.truncf %178 : vector<8x49xf32> to vector<8x49xbf16>
    %cst_100 = arith.constant dense<0.000000e+00> : vector<8x49xf32>
    %225 = tpu.matmul %223, %224, %cst_100 {dimension_numbers = #tpu.dot_dimension_numbers<[1], [0], [0], [1], [0, 0, 1, 1], [], []>} : vector<8x8xbf16>, vector<8x49xbf16>, vector<8x49xf32> -> vector<8x49xf32>
    %226 = arith.addf %221, %225 : vector<8x49xf32>
    %227 = vector.extract_strided_slice %178 {offsets = [0, 1], sizes = [8, 48], strides = [1, 1]} : vector<8x49xf32> to vector<8x48xf32>
    %cst_101 = arith.constant 0.000000e+00 : f32
    %228 = vector.broadcast %cst_101 : f32 to vector<8x1xf32>
    %229 = tpu.concatenate %227, %228 in 1 : vector<8x48xf32>, vector<8x1xf32> -> vector<8x49xf32>
    %cst_102 = arith.constant 0.000000e+00 : f32
    %230 = vector.shape_cast %20 : vector<1x49xi1> to vector<1x49xi1>
    %231 = vector.broadcast %230 : vector<1x49xi1> to vector<8x49xi1>
    %232 = vector.broadcast %cst_102 : f32 to vector<8x49xf32>
    %233 = arith.select %231, %229, %232 : vector<8x49xi1>, vector<8x49xf32>
    %c0_103 = arith.constant 0 : index
    %c5_104 = arith.constant 5 : index
    %c0_105 = arith.constant 0 : index
    %c0_106 = arith.constant 0 : index
    %234 = vector.load %arg3[%c0_103, %c5_104, %c0_105, %c0_106] : memref<7x9x8x8xbf16, #tpu.memory_space<vmem>>, vector<1x1x8x8xbf16>
    %235 = vector.shape_cast %234 : vector<1x1x8x8xbf16> to vector<8x8xbf16>
    %236 = arith.truncf %233 : vector<8x49xf32> to vector<8x49xbf16>
    %cst_107 = arith.constant dense<0.000000e+00> : vector<8x49xf32>
    %237 = tpu.matmul %235, %236, %cst_107 {dimension_numbers = #tpu.dot_dimension_numbers<[1], [0], [0], [1], [0, 0, 1, 1], [], []>} : vector<8x8xbf16>, vector<8x49xbf16>, vector<8x49xf32> -> vector<8x49xf32>
    %238 = arith.addf %226, %237 : vector<8x49xf32>
    %239 = vector.extract_strided_slice %178 {offsets = [0, 6], sizes = [8, 43], strides = [1, 1]} : vector<8x49xf32> to vector<8x43xf32>
    %cst_108 = arith.constant 0.000000e+00 : f32
    %240 = vector.broadcast %cst_108 : f32 to vector<8x6xf32>
    %241 = tpu.concatenate %239, %240 in 1 : vector<8x43xf32>, vector<8x6xf32> -> vector<8x49xf32>
    %cst_109 = arith.constant 0.000000e+00 : f32
    %242 = vector.shape_cast %18 : vector<1x49xi1> to vector<1x49xi1>
    %243 = vector.broadcast %242 : vector<1x49xi1> to vector<8x49xi1>
    %244 = vector.broadcast %cst_109 : f32 to vector<8x49xf32>
    %245 = arith.select %243, %241, %244 : vector<8x49xi1>, vector<8x49xf32>
    %c0_110 = arith.constant 0 : index
    %c6_111 = arith.constant 6 : index
    %c0_112 = arith.constant 0 : index
    %c0_113 = arith.constant 0 : index
    %246 = vector.load %arg3[%c0_110, %c6_111, %c0_112, %c0_113] : memref<7x9x8x8xbf16, #tpu.memory_space<vmem>>, vector<1x1x8x8xbf16>
    %247 = vector.shape_cast %246 : vector<1x1x8x8xbf16> to vector<8x8xbf16>
    %248 = arith.truncf %245 : vector<8x49xf32> to vector<8x49xbf16>
    %cst_114 = arith.constant dense<0.000000e+00> : vector<8x49xf32>
    %249 = tpu.matmul %247, %248, %cst_114 {dimension_numbers = #tpu.dot_dimension_numbers<[1], [0], [0], [1], [0, 0, 1, 1], [], []>} : vector<8x8xbf16>, vector<8x49xbf16>, vector<8x49xf32> -> vector<8x49xf32>
    %250 = arith.addf %238, %249 : vector<8x49xf32>
    %251 = vector.extract_strided_slice %178 {offsets = [0, 7], sizes = [8, 42], strides = [1, 1]} : vector<8x49xf32> to vector<8x42xf32>
    %cst_115 = arith.constant 0.000000e+00 : f32
    %252 = vector.broadcast %cst_115 : f32 to vector<8x7xf32>
    %253 = tpu.concatenate %251, %252 in 1 : vector<8x42xf32>, vector<8x7xf32> -> vector<8x49xf32>
    %c0_116 = arith.constant 0 : index
    %c7_117 = arith.constant 7 : index
    %c0_118 = arith.constant 0 : index
    %c0_119 = arith.constant 0 : index
    %254 = vector.load %arg3[%c0_116, %c7_117, %c0_118, %c0_119] : memref<7x9x8x8xbf16, #tpu.memory_space<vmem>>, vector<1x1x8x8xbf16>
    %255 = vector.shape_cast %254 : vector<1x1x8x8xbf16> to vector<8x8xbf16>
    %256 = arith.truncf %253 : vector<8x49xf32> to vector<8x49xbf16>
    %cst_120 = arith.constant dense<0.000000e+00> : vector<8x49xf32>
    %257 = tpu.matmul %255, %256, %cst_120 {dimension_numbers = #tpu.dot_dimension_numbers<[1], [0], [0], [1], [0, 0, 1, 1], [], []>} : vector<8x8xbf16>, vector<8x49xbf16>, vector<8x49xf32> -> vector<8x49xf32>
    %258 = arith.addf %250, %257 : vector<8x49xf32>
    %259 = vector.extract_strided_slice %178 {offsets = [0, 8], sizes = [8, 41], strides = [1, 1]} : vector<8x49xf32> to vector<8x41xf32>
    %cst_121 = arith.constant 0.000000e+00 : f32
    %260 = vector.broadcast %cst_121 : f32 to vector<8x8xf32>
    %261 = tpu.concatenate %259, %260 in 1 : vector<8x41xf32>, vector<8x8xf32> -> vector<8x49xf32>
    %cst_122 = arith.constant 0.000000e+00 : f32
    %262 = vector.shape_cast %20 : vector<1x49xi1> to vector<1x49xi1>
    %263 = vector.broadcast %262 : vector<1x49xi1> to vector<8x49xi1>
    %264 = vector.broadcast %cst_122 : f32 to vector<8x49xf32>
    %265 = arith.select %263, %261, %264 : vector<8x49xi1>, vector<8x49xf32>
    %c0_123 = arith.constant 0 : index
    %c8_124 = arith.constant 8 : index
    %c0_125 = arith.constant 0 : index
    %c0_126 = arith.constant 0 : index
    %266 = vector.load %arg3[%c0_123, %c8_124, %c0_125, %c0_126] : memref<7x9x8x8xbf16, #tpu.memory_space<vmem>>, vector<1x1x8x8xbf16>
    %267 = vector.shape_cast %266 : vector<1x1x8x8xbf16> to vector<8x8xbf16>
    %268 = arith.truncf %265 : vector<8x49xf32> to vector<8x49xbf16>
    %cst_127 = arith.constant dense<0.000000e+00> : vector<8x49xf32>
    %269 = tpu.matmul %267, %268, %cst_127 {dimension_numbers = #tpu.dot_dimension_numbers<[1], [0], [0], [1], [0, 0, 1, 1], [], []>} : vector<8x8xbf16>, vector<8x49xbf16>, vector<8x49xf32> -> vector<8x49xf32>
    %270 = arith.addf %258, %269 : vector<8x49xf32>
    %271 = vector.broadcast %82 : vector<8x1xf32> to vector<8x49xf32>
    %272 = arith.addf %270, %271 : vector<8x49xf32>
    %273 = arith.truncf %80 : vector<4x49xf32> to vector<4x49xbf16>
    %cst_128 = arith.constant dense<0.000000e+00> : vector<8x49xf32>
    %274 = tpu.matmul %43, %273, %cst_128 {dimension_numbers = #tpu.dot_dimension_numbers<[1], [0], [0], [1], [0, 0, 1, 1], [], []>} : vector<8x4xbf16>, vector<4x49xbf16>, vector<8x49xf32> -> vector<8x49xf32>
    %275 = arith.addf %272, %274 : vector<8x49xf32>
    %c0_129 = arith.constant 0 : index
    %c0_130 = arith.constant 0 : index
    %276 = vector.load %arg8[%c0_129, %c0_130] : memref<49x9xf32, #tpu.memory_space<vmem>>, vector<49x9xf32>
    %277 = vector.extract_strided_slice %275 {offsets = [0, 1], sizes = [8, 48], strides = [1, 1]} : vector<8x49xf32> to vector<8x48xf32>
    %cst_131 = arith.constant 0.000000e+00 : f32
    %278 = vector.broadcast %cst_131 : f32 to vector<8x1xf32>
    %279 = tpu.concatenate %277, %278 in 1 : vector<8x48xf32>, vector<8x1xf32> -> vector<8x49xf32>
    %280 = arith.maximumf %275, %279 : vector<8x49xf32>
    %281 = vector.extract_strided_slice %275 {offsets = [0, 2], sizes = [8, 47], strides = [1, 1]} : vector<8x49xf32> to vector<8x47xf32>
    %cst_132 = arith.constant 0.000000e+00 : f32
    %282 = vector.broadcast %cst_132 : f32 to vector<8x2xf32>
    %283 = tpu.concatenate %281, %282 in 1 : vector<8x47xf32>, vector<8x2xf32> -> vector<8x49xf32>
    %284 = arith.maximumf %280, %283 : vector<8x49xf32>
    %285 = vector.extract_strided_slice %275 {offsets = [0, 7], sizes = [8, 42], strides = [1, 1]} : vector<8x49xf32> to vector<8x42xf32>
    %cst_133 = arith.constant 0.000000e+00 : f32
    %286 = vector.broadcast %cst_133 : f32 to vector<8x7xf32>
    %287 = tpu.concatenate %285, %286 in 1 : vector<8x42xf32>, vector<8x7xf32> -> vector<8x49xf32>
    %288 = arith.maximumf %284, %287 : vector<8x49xf32>
    %289 = vector.extract_strided_slice %275 {offsets = [0, 8], sizes = [8, 41], strides = [1, 1]} : vector<8x49xf32> to vector<8x41xf32>
    %cst_134 = arith.constant 0.000000e+00 : f32
    %290 = vector.broadcast %cst_134 : f32 to vector<8x8xf32>
    %291 = tpu.concatenate %289, %290 in 1 : vector<8x41xf32>, vector<8x8xf32> -> vector<8x49xf32>
    %292 = arith.maximumf %288, %291 : vector<8x49xf32>
    %293 = vector.extract_strided_slice %275 {offsets = [0, 9], sizes = [8, 40], strides = [1, 1]} : vector<8x49xf32> to vector<8x40xf32>
    %cst_135 = arith.constant 0.000000e+00 : f32
    %294 = vector.broadcast %cst_135 : f32 to vector<8x9xf32>
    %295 = tpu.concatenate %293, %294 in 1 : vector<8x40xf32>, vector<8x9xf32> -> vector<8x49xf32>
    %296 = arith.maximumf %292, %295 : vector<8x49xf32>
    %297 = vector.extract_strided_slice %275 {offsets = [0, 14], sizes = [8, 35], strides = [1, 1]} : vector<8x49xf32> to vector<8x35xf32>
    %cst_136 = arith.constant 0.000000e+00 : f32
    %298 = vector.broadcast %cst_136 : f32 to vector<8x14xf32>
    %299 = tpu.concatenate %297, %298 in 1 : vector<8x35xf32>, vector<8x14xf32> -> vector<8x49xf32>
    %300 = arith.maximumf %296, %299 : vector<8x49xf32>
    %301 = vector.extract_strided_slice %275 {offsets = [0, 15], sizes = [8, 34], strides = [1, 1]} : vector<8x49xf32> to vector<8x34xf32>
    %cst_137 = arith.constant 0.000000e+00 : f32
    %302 = vector.broadcast %cst_137 : f32 to vector<8x15xf32>
    %303 = tpu.concatenate %301, %302 in 1 : vector<8x34xf32>, vector<8x15xf32> -> vector<8x49xf32>
    %304 = arith.maximumf %300, %303 : vector<8x49xf32>
    %305 = vector.extract_strided_slice %275 {offsets = [0, 16], sizes = [8, 33], strides = [1, 1]} : vector<8x49xf32> to vector<8x33xf32>
    %cst_138 = arith.constant 0.000000e+00 : f32
    %306 = vector.broadcast %cst_138 : f32 to vector<8x16xf32>
    %307 = tpu.concatenate %305, %306 in 1 : vector<8x33xf32>, vector<8x16xf32> -> vector<8x49xf32>
    %308 = arith.maximumf %304, %307 : vector<8x49xf32>
    %cst_139 = arith.constant dense<0.000000e+00> : vector<8x9xf32>
    %309 = tpu.matmul %308, %276, %cst_139 {dimension_numbers = #tpu.dot_dimension_numbers<[1], [0], [0], [1], [0, 0, 1, 1], [], []>} : vector<8x49xf32>, vector<49x9xf32>, vector<8x9xf32> -> vector<8x9xf32>
    %310 = vector.extract_strided_slice %42 {offsets = [0, 2], sizes = [8, 1], strides = [1, 1]} : vector<8x10xf32> to vector<8x1xf32>
    %311 = vector.extract_strided_slice %42 {offsets = [0, 3], sizes = [8, 1], strides = [1, 1]} : vector<8x10xf32> to vector<8x1xf32>
    %cst_140 = arith.constant 0.000000e+00 : f32
    %312 = vector.broadcast %cst_140 : f32 to vector<8x4xf32>
    %313 = vector.extract_strided_slice %309 {offsets = [0, 0], sizes = [8, 5], strides = [1, 1]} : vector<8x9xf32> to vector<8x5xf32>
    %314 = tpu.concatenate %312, %313 in 1 : vector<8x4xf32>, vector<8x5xf32> -> vector<8x9xf32>
    %cst_141 = arith.constant 0.000000e+00 : f32
    %315 = vector.shape_cast %39 : vector<1x9xi1> to vector<1x9xi1>
    %316 = vector.broadcast %315 : vector<1x9xi1> to vector<8x9xi1>
    %317 = vector.broadcast %cst_141 : f32 to vector<8x9xf32>
    %318 = arith.select %316, %314, %317 : vector<8x9xi1>, vector<8x9xf32>
    %c1_142 = arith.constant 1 : index
    %c0_143 = arith.constant 0 : index
    %c0_144 = arith.constant 0 : index
    %c0_145 = arith.constant 0 : index
    %319 = vector.load %arg3[%c1_142, %c0_143, %c0_144, %c0_145] : memref<7x9x8x8xbf16, #tpu.memory_space<vmem>>, vector<1x1x8x8xbf16>
    %320 = vector.shape_cast %319 : vector<1x1x8x8xbf16> to vector<8x8xbf16>
    %321 = arith.truncf %318 : vector<8x9xf32> to vector<8x9xbf16>
    %cst_146 = arith.constant dense<0.000000e+00> : vector<8x9xf32>
    %322 = tpu.matmul %320, %321, %cst_146 {dimension_numbers = #tpu.dot_dimension_numbers<[1], [0], [0], [1], [0, 0, 1, 1], [], []>} : vector<8x8xbf16>, vector<8x9xbf16>, vector<8x9xf32> -> vector<8x9xf32>
    %cst_147 = arith.constant 0.000000e+00 : f32
    %323 = vector.broadcast %cst_147 : f32 to vector<8x3xf32>
    %324 = vector.extract_strided_slice %309 {offsets = [0, 0], sizes = [8, 6], strides = [1, 1]} : vector<8x9xf32> to vector<8x6xf32>
    %325 = tpu.concatenate %323, %324 in 1 : vector<8x3xf32>, vector<8x6xf32> -> vector<8x9xf32>
    %c1_148 = arith.constant 1 : index
    %c1_149 = arith.constant 1 : index
    %c0_150 = arith.constant 0 : index
    %c0_151 = arith.constant 0 : index
    %326 = vector.load %arg3[%c1_148, %c1_149, %c0_150, %c0_151] : memref<7x9x8x8xbf16, #tpu.memory_space<vmem>>, vector<1x1x8x8xbf16>
    %327 = vector.shape_cast %326 : vector<1x1x8x8xbf16> to vector<8x8xbf16>
    %328 = arith.truncf %325 : vector<8x9xf32> to vector<8x9xbf16>
    %cst_152 = arith.constant dense<0.000000e+00> : vector<8x9xf32>
    %329 = tpu.matmul %327, %328, %cst_152 {dimension_numbers = #tpu.dot_dimension_numbers<[1], [0], [0], [1], [0, 0, 1, 1], [], []>} : vector<8x8xbf16>, vector<8x9xbf16>, vector<8x9xf32> -> vector<8x9xf32>
    %330 = arith.addf %322, %329 : vector<8x9xf32>
    %cst_153 = arith.constant 0.000000e+00 : f32
    %331 = vector.broadcast %cst_153 : f32 to vector<8x2xf32>
    %332 = vector.extract_strided_slice %309 {offsets = [0, 0], sizes = [8, 7], strides = [1, 1]} : vector<8x9xf32> to vector<8x7xf32>
    %333 = tpu.concatenate %331, %332 in 1 : vector<8x2xf32>, vector<8x7xf32> -> vector<8x9xf32>
    %cst_154 = arith.constant 0.000000e+00 : f32
    %334 = vector.shape_cast %41 : vector<1x9xi1> to vector<1x9xi1>
    %335 = vector.broadcast %334 : vector<1x9xi1> to vector<8x9xi1>
    %336 = vector.broadcast %cst_154 : f32 to vector<8x9xf32>
    %337 = arith.select %335, %333, %336 : vector<8x9xi1>, vector<8x9xf32>
    %c1_155 = arith.constant 1 : index
    %c2_156 = arith.constant 2 : index
    %c0_157 = arith.constant 0 : index
    %c0_158 = arith.constant 0 : index
    %338 = vector.load %arg3[%c1_155, %c2_156, %c0_157, %c0_158] : memref<7x9x8x8xbf16, #tpu.memory_space<vmem>>, vector<1x1x8x8xbf16>
    %339 = vector.shape_cast %338 : vector<1x1x8x8xbf16> to vector<8x8xbf16>
    %340 = arith.truncf %337 : vector<8x9xf32> to vector<8x9xbf16>
    %cst_159 = arith.constant dense<0.000000e+00> : vector<8x9xf32>
    %341 = tpu.matmul %339, %340, %cst_159 {dimension_numbers = #tpu.dot_dimension_numbers<[1], [0], [0], [1], [0, 0, 1, 1], [], []>} : vector<8x8xbf16>, vector<8x9xbf16>, vector<8x9xf32> -> vector<8x9xf32>
    %342 = arith.addf %330, %341 : vector<8x9xf32>
    %cst_160 = arith.constant 0.000000e+00 : f32
    %343 = vector.broadcast %cst_160 : f32 to vector<8x1xf32>
    %344 = vector.extract_strided_slice %309 {offsets = [0, 0], sizes = [8, 8], strides = [1, 1]} : vector<8x9xf32> to vector<8x8xf32>
    %345 = tpu.concatenate %343, %344 in 1 : vector<8x1xf32>, vector<8x8xf32> -> vector<8x9xf32>
    %cst_161 = arith.constant 0.000000e+00 : f32
    %346 = vector.shape_cast %39 : vector<1x9xi1> to vector<1x9xi1>
    %347 = vector.broadcast %346 : vector<1x9xi1> to vector<8x9xi1>
    %348 = vector.broadcast %cst_161 : f32 to vector<8x9xf32>
    %349 = arith.select %347, %345, %348 : vector<8x9xi1>, vector<8x9xf32>
    %c1_162 = arith.constant 1 : index
    %c3_163 = arith.constant 3 : index
    %c0_164 = arith.constant 0 : index
    %c0_165 = arith.constant 0 : index
    %350 = vector.load %arg3[%c1_162, %c3_163, %c0_164, %c0_165] : memref<7x9x8x8xbf16, #tpu.memory_space<vmem>>, vector<1x1x8x8xbf16>
    %351 = vector.shape_cast %350 : vector<1x1x8x8xbf16> to vector<8x8xbf16>
    %352 = arith.truncf %349 : vector<8x9xf32> to vector<8x9xbf16>
    %cst_166 = arith.constant dense<0.000000e+00> : vector<8x9xf32>
    %353 = tpu.matmul %351, %352, %cst_166 {dimension_numbers = #tpu.dot_dimension_numbers<[1], [0], [0], [1], [0, 0, 1, 1], [], []>} : vector<8x8xbf16>, vector<8x9xbf16>, vector<8x9xf32> -> vector<8x9xf32>
    %354 = arith.addf %342, %353 : vector<8x9xf32>
    %c1_167 = arith.constant 1 : index
    %c4_168 = arith.constant 4 : index
    %c0_169 = arith.constant 0 : index
    %c0_170 = arith.constant 0 : index
    %355 = vector.load %arg3[%c1_167, %c4_168, %c0_169, %c0_170] : memref<7x9x8x8xbf16, #tpu.memory_space<vmem>>, vector<1x1x8x8xbf16>
    %356 = vector.shape_cast %355 : vector<1x1x8x8xbf16> to vector<8x8xbf16>
    %357 = arith.truncf %309 : vector<8x9xf32> to vector<8x9xbf16>
    %cst_171 = arith.constant dense<0.000000e+00> : vector<8x9xf32>
    %358 = tpu.matmul %356, %357, %cst_171 {dimension_numbers = #tpu.dot_dimension_numbers<[1], [0], [0], [1], [0, 0, 1, 1], [], []>} : vector<8x8xbf16>, vector<8x9xbf16>, vector<8x9xf32> -> vector<8x9xf32>
    %359 = arith.addf %354, %358 : vector<8x9xf32>
    %360 = vector.extract_strided_slice %309 {offsets = [0, 1], sizes = [8, 8], strides = [1, 1]} : vector<8x9xf32> to vector<8x8xf32>
    %cst_172 = arith.constant 0.000000e+00 : f32
    %361 = vector.broadcast %cst_172 : f32 to vector<8x1xf32>
    %362 = tpu.concatenate %360, %361 in 1 : vector<8x8xf32>, vector<8x1xf32> -> vector<8x9xf32>
    %cst_173 = arith.constant 0.000000e+00 : f32
    %363 = vector.shape_cast %41 : vector<1x9xi1> to vector<1x9xi1>
    %364 = vector.broadcast %363 : vector<1x9xi1> to vector<8x9xi1>
    %365 = vector.broadcast %cst_173 : f32 to vector<8x9xf32>
    %366 = arith.select %364, %362, %365 : vector<8x9xi1>, vector<8x9xf32>
    %c1_174 = arith.constant 1 : index
    %c5_175 = arith.constant 5 : index
    %c0_176 = arith.constant 0 : index
    %c0_177 = arith.constant 0 : index
    %367 = vector.load %arg3[%c1_174, %c5_175, %c0_176, %c0_177] : memref<7x9x8x8xbf16, #tpu.memory_space<vmem>>, vector<1x1x8x8xbf16>
    %368 = vector.shape_cast %367 : vector<1x1x8x8xbf16> to vector<8x8xbf16>
    %369 = arith.truncf %366 : vector<8x9xf32> to vector<8x9xbf16>
    %cst_178 = arith.constant dense<0.000000e+00> : vector<8x9xf32>
    %370 = tpu.matmul %368, %369, %cst_178 {dimension_numbers = #tpu.dot_dimension_numbers<[1], [0], [0], [1], [0, 0, 1, 1], [], []>} : vector<8x8xbf16>, vector<8x9xbf16>, vector<8x9xf32> -> vector<8x9xf32>
    %371 = arith.addf %359, %370 : vector<8x9xf32>
    %372 = vector.extract_strided_slice %309 {offsets = [0, 2], sizes = [8, 7], strides = [1, 1]} : vector<8x9xf32> to vector<8x7xf32>
    %cst_179 = arith.constant 0.000000e+00 : f32
    %373 = vector.broadcast %cst_179 : f32 to vector<8x2xf32>
    %374 = tpu.concatenate %372, %373 in 1 : vector<8x7xf32>, vector<8x2xf32> -> vector<8x9xf32>
    %cst_180 = arith.constant 0.000000e+00 : f32
    %375 = vector.shape_cast %39 : vector<1x9xi1> to vector<1x9xi1>
    %376 = vector.broadcast %375 : vector<1x9xi1> to vector<8x9xi1>
    %377 = vector.broadcast %cst_180 : f32 to vector<8x9xf32>
    %378 = arith.select %376, %374, %377 : vector<8x9xi1>, vector<8x9xf32>
    %c1_181 = arith.constant 1 : index
    %c6_182 = arith.constant 6 : index
    %c0_183 = arith.constant 0 : index
    %c0_184 = arith.constant 0 : index
    %379 = vector.load %arg3[%c1_181, %c6_182, %c0_183, %c0_184] : memref<7x9x8x8xbf16, #tpu.memory_space<vmem>>, vector<1x1x8x8xbf16>
    %380 = vector.shape_cast %379 : vector<1x1x8x8xbf16> to vector<8x8xbf16>
    %381 = arith.truncf %378 : vector<8x9xf32> to vector<8x9xbf16>
    %cst_185 = arith.constant dense<0.000000e+00> : vector<8x9xf32>
    %382 = tpu.matmul %380, %381, %cst_185 {dimension_numbers = #tpu.dot_dimension_numbers<[1], [0], [0], [1], [0, 0, 1, 1], [], []>} : vector<8x8xbf16>, vector<8x9xbf16>, vector<8x9xf32> -> vector<8x9xf32>
    %383 = arith.addf %371, %382 : vector<8x9xf32>
    %384 = vector.extract_strided_slice %309 {offsets = [0, 3], sizes = [8, 6], strides = [1, 1]} : vector<8x9xf32> to vector<8x6xf32>
    %cst_186 = arith.constant 0.000000e+00 : f32
    %385 = vector.broadcast %cst_186 : f32 to vector<8x3xf32>
    %386 = tpu.concatenate %384, %385 in 1 : vector<8x6xf32>, vector<8x3xf32> -> vector<8x9xf32>
    %c1_187 = arith.constant 1 : index
    %c7_188 = arith.constant 7 : index
    %c0_189 = arith.constant 0 : index
    %c0_190 = arith.constant 0 : index
    %387 = vector.load %arg3[%c1_187, %c7_188, %c0_189, %c0_190] : memref<7x9x8x8xbf16, #tpu.memory_space<vmem>>, vector<1x1x8x8xbf16>
    %388 = vector.shape_cast %387 : vector<1x1x8x8xbf16> to vector<8x8xbf16>
    %389 = arith.truncf %386 : vector<8x9xf32> to vector<8x9xbf16>
    %cst_191 = arith.constant dense<0.000000e+00> : vector<8x9xf32>
    %390 = tpu.matmul %388, %389, %cst_191 {dimension_numbers = #tpu.dot_dimension_numbers<[1], [0], [0], [1], [0, 0, 1, 1], [], []>} : vector<8x8xbf16>, vector<8x9xbf16>, vector<8x9xf32> -> vector<8x9xf32>
    %391 = arith.addf %383, %390 : vector<8x9xf32>
    %392 = vector.extract_strided_slice %309 {offsets = [0, 4], sizes = [8, 5], strides = [1, 1]} : vector<8x9xf32> to vector<8x5xf32>
    %cst_192 = arith.constant 0.000000e+00 : f32
    %393 = vector.broadcast %cst_192 : f32 to vector<8x4xf32>
    %394 = tpu.concatenate %392, %393 in 1 : vector<8x5xf32>, vector<8x4xf32> -> vector<8x9xf32>
    %cst_193 = arith.constant 0.000000e+00 : f32
    %395 = vector.shape_cast %41 : vector<1x9xi1> to vector<1x9xi1>
    %396 = vector.broadcast %395 : vector<1x9xi1> to vector<8x9xi1>
    %397 = vector.broadcast %cst_193 : f32 to vector<8x9xf32>
    %398 = arith.select %396, %394, %397 : vector<8x9xi1>, vector<8x9xf32>
    %c1_194 = arith.constant 1 : index
    %c8_195 = arith.constant 8 : index
    %c0_196 = arith.constant 0 : index
    %c0_197 = arith.constant 0 : index
    %399 = vector.load %arg3[%c1_194, %c8_195, %c0_196, %c0_197] : memref<7x9x8x8xbf16, #tpu.memory_space<vmem>>, vector<1x1x8x8xbf16>
    %400 = vector.shape_cast %399 : vector<1x1x8x8xbf16> to vector<8x8xbf16>
    %401 = arith.truncf %398 : vector<8x9xf32> to vector<8x9xbf16>
    %cst_198 = arith.constant dense<0.000000e+00> : vector<8x9xf32>
    %402 = tpu.matmul %400, %401, %cst_198 {dimension_numbers = #tpu.dot_dimension_numbers<[1], [0], [0], [1], [0, 0, 1, 1], [], []>} : vector<8x8xbf16>, vector<8x9xbf16>, vector<8x9xf32> -> vector<8x9xf32>
    %403 = arith.addf %391, %402 : vector<8x9xf32>
    %404 = vector.broadcast %310 : vector<8x1xf32> to vector<8x9xf32>
    %405 = arith.addf %403, %404 : vector<8x9xf32>
    %cst_199 = arith.constant 0.000000e+00 : f32
    %406 = vector.broadcast %cst_199 : f32 to vector<8x9xf32>
    %407 = arith.maximumf %405, %406 : vector<8x9xf32>
    %cst_200 = arith.constant 0.000000e+00 : f32
    %408 = vector.broadcast %cst_200 : f32 to vector<8x4xf32>
    %409 = vector.extract_strided_slice %407 {offsets = [0, 0], sizes = [8, 5], strides = [1, 1]} : vector<8x9xf32> to vector<8x5xf32>
    %410 = tpu.concatenate %408, %409 in 1 : vector<8x4xf32>, vector<8x5xf32> -> vector<8x9xf32>
    %cst_201 = arith.constant 0.000000e+00 : f32
    %411 = vector.shape_cast %39 : vector<1x9xi1> to vector<1x9xi1>
    %412 = vector.broadcast %411 : vector<1x9xi1> to vector<8x9xi1>
    %413 = vector.broadcast %cst_201 : f32 to vector<8x9xf32>
    %414 = arith.select %412, %410, %413 : vector<8x9xi1>, vector<8x9xf32>
    %c2_202 = arith.constant 2 : index
    %c0_203 = arith.constant 0 : index
    %c0_204 = arith.constant 0 : index
    %c0_205 = arith.constant 0 : index
    %415 = vector.load %arg3[%c2_202, %c0_203, %c0_204, %c0_205] : memref<7x9x8x8xbf16, #tpu.memory_space<vmem>>, vector<1x1x8x8xbf16>
    %416 = vector.shape_cast %415 : vector<1x1x8x8xbf16> to vector<8x8xbf16>
    %417 = arith.truncf %414 : vector<8x9xf32> to vector<8x9xbf16>
    %cst_206 = arith.constant dense<0.000000e+00> : vector<8x9xf32>
    %418 = tpu.matmul %416, %417, %cst_206 {dimension_numbers = #tpu.dot_dimension_numbers<[1], [0], [0], [1], [0, 0, 1, 1], [], []>} : vector<8x8xbf16>, vector<8x9xbf16>, vector<8x9xf32> -> vector<8x9xf32>
    %cst_207 = arith.constant 0.000000e+00 : f32
    %419 = vector.broadcast %cst_207 : f32 to vector<8x3xf32>
    %420 = vector.extract_strided_slice %407 {offsets = [0, 0], sizes = [8, 6], strides = [1, 1]} : vector<8x9xf32> to vector<8x6xf32>
    %421 = tpu.concatenate %419, %420 in 1 : vector<8x3xf32>, vector<8x6xf32> -> vector<8x9xf32>
    %c2_208 = arith.constant 2 : index
    %c1_209 = arith.constant 1 : index
    %c0_210 = arith.constant 0 : index
    %c0_211 = arith.constant 0 : index
    %422 = vector.load %arg3[%c2_208, %c1_209, %c0_210, %c0_211] : memref<7x9x8x8xbf16, #tpu.memory_space<vmem>>, vector<1x1x8x8xbf16>
    %423 = vector.shape_cast %422 : vector<1x1x8x8xbf16> to vector<8x8xbf16>
    %424 = arith.truncf %421 : vector<8x9xf32> to vector<8x9xbf16>
    %cst_212 = arith.constant dense<0.000000e+00> : vector<8x9xf32>
    %425 = tpu.matmul %423, %424, %cst_212 {dimension_numbers = #tpu.dot_dimension_numbers<[1], [0], [0], [1], [0, 0, 1, 1], [], []>} : vector<8x8xbf16>, vector<8x9xbf16>, vector<8x9xf32> -> vector<8x9xf32>
    %426 = arith.addf %418, %425 : vector<8x9xf32>
    %cst_213 = arith.constant 0.000000e+00 : f32
    %427 = vector.broadcast %cst_213 : f32 to vector<8x2xf32>
    %428 = vector.extract_strided_slice %407 {offsets = [0, 0], sizes = [8, 7], strides = [1, 1]} : vector<8x9xf32> to vector<8x7xf32>
    %429 = tpu.concatenate %427, %428 in 1 : vector<8x2xf32>, vector<8x7xf32> -> vector<8x9xf32>
    %cst_214 = arith.constant 0.000000e+00 : f32
    %430 = vector.shape_cast %41 : vector<1x9xi1> to vector<1x9xi1>
    %431 = vector.broadcast %430 : vector<1x9xi1> to vector<8x9xi1>
    %432 = vector.broadcast %cst_214 : f32 to vector<8x9xf32>
    %433 = arith.select %431, %429, %432 : vector<8x9xi1>, vector<8x9xf32>
    %c2_215 = arith.constant 2 : index
    %c2_216 = arith.constant 2 : index
    %c0_217 = arith.constant 0 : index
    %c0_218 = arith.constant 0 : index
    %434 = vector.load %arg3[%c2_215, %c2_216, %c0_217, %c0_218] : memref<7x9x8x8xbf16, #tpu.memory_space<vmem>>, vector<1x1x8x8xbf16>
    %435 = vector.shape_cast %434 : vector<1x1x8x8xbf16> to vector<8x8xbf16>
    %436 = arith.truncf %433 : vector<8x9xf32> to vector<8x9xbf16>
    %cst_219 = arith.constant dense<0.000000e+00> : vector<8x9xf32>
    %437 = tpu.matmul %435, %436, %cst_219 {dimension_numbers = #tpu.dot_dimension_numbers<[1], [0], [0], [1], [0, 0, 1, 1], [], []>} : vector<8x8xbf16>, vector<8x9xbf16>, vector<8x9xf32> -> vector<8x9xf32>
    %438 = arith.addf %426, %437 : vector<8x9xf32>
    %cst_220 = arith.constant 0.000000e+00 : f32
    %439 = vector.broadcast %cst_220 : f32 to vector<8x1xf32>
    %440 = vector.extract_strided_slice %407 {offsets = [0, 0], sizes = [8, 8], strides = [1, 1]} : vector<8x9xf32> to vector<8x8xf32>
    %441 = tpu.concatenate %439, %440 in 1 : vector<8x1xf32>, vector<8x8xf32> -> vector<8x9xf32>
    %cst_221 = arith.constant 0.000000e+00 : f32
    %442 = vector.shape_cast %39 : vector<1x9xi1> to vector<1x9xi1>
    %443 = vector.broadcast %442 : vector<1x9xi1> to vector<8x9xi1>
    %444 = vector.broadcast %cst_221 : f32 to vector<8x9xf32>
    %445 = arith.select %443, %441, %444 : vector<8x9xi1>, vector<8x9xf32>
    %c2_222 = arith.constant 2 : index
    %c3_223 = arith.constant 3 : index
    %c0_224 = arith.constant 0 : index
    %c0_225 = arith.constant 0 : index
    %446 = vector.load %arg3[%c2_222, %c3_223, %c0_224, %c0_225] : memref<7x9x8x8xbf16, #tpu.memory_space<vmem>>, vector<1x1x8x8xbf16>
    %447 = vector.shape_cast %446 : vector<1x1x8x8xbf16> to vector<8x8xbf16>
    %448 = arith.truncf %445 : vector<8x9xf32> to vector<8x9xbf16>
    %cst_226 = arith.constant dense<0.000000e+00> : vector<8x9xf32>
    %449 = tpu.matmul %447, %448, %cst_226 {dimension_numbers = #tpu.dot_dimension_numbers<[1], [0], [0], [1], [0, 0, 1, 1], [], []>} : vector<8x8xbf16>, vector<8x9xbf16>, vector<8x9xf32> -> vector<8x9xf32>
    %450 = arith.addf %438, %449 : vector<8x9xf32>
    %c2_227 = arith.constant 2 : index
    %c4_228 = arith.constant 4 : index
    %c0_229 = arith.constant 0 : index
    %c0_230 = arith.constant 0 : index
    %451 = vector.load %arg3[%c2_227, %c4_228, %c0_229, %c0_230] : memref<7x9x8x8xbf16, #tpu.memory_space<vmem>>, vector<1x1x8x8xbf16>
    %452 = vector.shape_cast %451 : vector<1x1x8x8xbf16> to vector<8x8xbf16>
    %453 = arith.truncf %407 : vector<8x9xf32> to vector<8x9xbf16>
    %cst_231 = arith.constant dense<0.000000e+00> : vector<8x9xf32>
    %454 = tpu.matmul %452, %453, %cst_231 {dimension_numbers = #tpu.dot_dimension_numbers<[1], [0], [0], [1], [0, 0, 1, 1], [], []>} : vector<8x8xbf16>, vector<8x9xbf16>, vector<8x9xf32> -> vector<8x9xf32>
    %455 = arith.addf %450, %454 : vector<8x9xf32>
    %456 = vector.extract_strided_slice %407 {offsets = [0, 1], sizes = [8, 8], strides = [1, 1]} : vector<8x9xf32> to vector<8x8xf32>
    %cst_232 = arith.constant 0.000000e+00 : f32
    %457 = vector.broadcast %cst_232 : f32 to vector<8x1xf32>
    %458 = tpu.concatenate %456, %457 in 1 : vector<8x8xf32>, vector<8x1xf32> -> vector<8x9xf32>
    %cst_233 = arith.constant 0.000000e+00 : f32
    %459 = vector.shape_cast %41 : vector<1x9xi1> to vector<1x9xi1>
    %460 = vector.broadcast %459 : vector<1x9xi1> to vector<8x9xi1>
    %461 = vector.broadcast %cst_233 : f32 to vector<8x9xf32>
    %462 = arith.select %460, %458, %461 : vector<8x9xi1>, vector<8x9xf32>
    %c2_234 = arith.constant 2 : index
    %c5_235 = arith.constant 5 : index
    %c0_236 = arith.constant 0 : index
    %c0_237 = arith.constant 0 : index
    %463 = vector.load %arg3[%c2_234, %c5_235, %c0_236, %c0_237] : memref<7x9x8x8xbf16, #tpu.memory_space<vmem>>, vector<1x1x8x8xbf16>
    %464 = vector.shape_cast %463 : vector<1x1x8x8xbf16> to vector<8x8xbf16>
    %465 = arith.truncf %462 : vector<8x9xf32> to vector<8x9xbf16>
    %cst_238 = arith.constant dense<0.000000e+00> : vector<8x9xf32>
    %466 = tpu.matmul %464, %465, %cst_238 {dimension_numbers = #tpu.dot_dimension_numbers<[1], [0], [0], [1], [0, 0, 1, 1], [], []>} : vector<8x8xbf16>, vector<8x9xbf16>, vector<8x9xf32> -> vector<8x9xf32>
    %467 = arith.addf %455, %466 : vector<8x9xf32>
    %468 = vector.extract_strided_slice %407 {offsets = [0, 2], sizes = [8, 7], strides = [1, 1]} : vector<8x9xf32> to vector<8x7xf32>
    %cst_239 = arith.constant 0.000000e+00 : f32
    %469 = vector.broadcast %cst_239 : f32 to vector<8x2xf32>
    %470 = tpu.concatenate %468, %469 in 1 : vector<8x7xf32>, vector<8x2xf32> -> vector<8x9xf32>
    %cst_240 = arith.constant 0.000000e+00 : f32
    %471 = vector.shape_cast %39 : vector<1x9xi1> to vector<1x9xi1>
    %472 = vector.broadcast %471 : vector<1x9xi1> to vector<8x9xi1>
    %473 = vector.broadcast %cst_240 : f32 to vector<8x9xf32>
    %474 = arith.select %472, %470, %473 : vector<8x9xi1>, vector<8x9xf32>
    %c2_241 = arith.constant 2 : index
    %c6_242 = arith.constant 6 : index
    %c0_243 = arith.constant 0 : index
    %c0_244 = arith.constant 0 : index
    %475 = vector.load %arg3[%c2_241, %c6_242, %c0_243, %c0_244] : memref<7x9x8x8xbf16, #tpu.memory_space<vmem>>, vector<1x1x8x8xbf16>
    %476 = vector.shape_cast %475 : vector<1x1x8x8xbf16> to vector<8x8xbf16>
    %477 = arith.truncf %474 : vector<8x9xf32> to vector<8x9xbf16>
    %cst_245 = arith.constant dense<0.000000e+00> : vector<8x9xf32>
    %478 = tpu.matmul %476, %477, %cst_245 {dimension_numbers = #tpu.dot_dimension_numbers<[1], [0], [0], [1], [0, 0, 1, 1], [], []>} : vector<8x8xbf16>, vector<8x9xbf16>, vector<8x9xf32> -> vector<8x9xf32>
    %479 = arith.addf %467, %478 : vector<8x9xf32>
    %480 = vector.extract_strided_slice %407 {offsets = [0, 3], sizes = [8, 6], strides = [1, 1]} : vector<8x9xf32> to vector<8x6xf32>
    %cst_246 = arith.constant 0.000000e+00 : f32
    %481 = vector.broadcast %cst_246 : f32 to vector<8x3xf32>
    %482 = tpu.concatenate %480, %481 in 1 : vector<8x6xf32>, vector<8x3xf32> -> vector<8x9xf32>
    %c2_247 = arith.constant 2 : index
    %c7_248 = arith.constant 7 : index
    %c0_249 = arith.constant 0 : index
    %c0_250 = arith.constant 0 : index
    %483 = vector.load %arg3[%c2_247, %c7_248, %c0_249, %c0_250] : memref<7x9x8x8xbf16, #tpu.memory_space<vmem>>, vector<1x1x8x8xbf16>
    %484 = vector.shape_cast %483 : vector<1x1x8x8xbf16> to vector<8x8xbf16>
    %485 = arith.truncf %482 : vector<8x9xf32> to vector<8x9xbf16>
    %cst_251 = arith.constant dense<0.000000e+00> : vector<8x9xf32>
    %486 = tpu.matmul %484, %485, %cst_251 {dimension_numbers = #tpu.dot_dimension_numbers<[1], [0], [0], [1], [0, 0, 1, 1], [], []>} : vector<8x8xbf16>, vector<8x9xbf16>, vector<8x9xf32> -> vector<8x9xf32>
    %487 = arith.addf %479, %486 : vector<8x9xf32>
    %488 = vector.extract_strided_slice %407 {offsets = [0, 4], sizes = [8, 5], strides = [1, 1]} : vector<8x9xf32> to vector<8x5xf32>
    %cst_252 = arith.constant 0.000000e+00 : f32
    %489 = vector.broadcast %cst_252 : f32 to vector<8x4xf32>
    %490 = tpu.concatenate %488, %489 in 1 : vector<8x5xf32>, vector<8x4xf32> -> vector<8x9xf32>
    %cst_253 = arith.constant 0.000000e+00 : f32
    %491 = vector.shape_cast %41 : vector<1x9xi1> to vector<1x9xi1>
    %492 = vector.broadcast %491 : vector<1x9xi1> to vector<8x9xi1>
    %493 = vector.broadcast %cst_253 : f32 to vector<8x9xf32>
    %494 = arith.select %492, %490, %493 : vector<8x9xi1>, vector<8x9xf32>
    %c2_254 = arith.constant 2 : index
    %c8_255 = arith.constant 8 : index
    %c0_256 = arith.constant 0 : index
    %c0_257 = arith.constant 0 : index
    %495 = vector.load %arg3[%c2_254, %c8_255, %c0_256, %c0_257] : memref<7x9x8x8xbf16, #tpu.memory_space<vmem>>, vector<1x1x8x8xbf16>
    %496 = vector.shape_cast %495 : vector<1x1x8x8xbf16> to vector<8x8xbf16>
    %497 = arith.truncf %494 : vector<8x9xf32> to vector<8x9xbf16>
    %cst_258 = arith.constant dense<0.000000e+00> : vector<8x9xf32>
    %498 = tpu.matmul %496, %497, %cst_258 {dimension_numbers = #tpu.dot_dimension_numbers<[1], [0], [0], [1], [0, 0, 1, 1], [], []>} : vector<8x8xbf16>, vector<8x9xbf16>, vector<8x9xf32> -> vector<8x9xf32>
    %499 = arith.addf %487, %498 : vector<8x9xf32>
    %500 = vector.broadcast %311 : vector<8x1xf32> to vector<8x9xf32>
    %501 = arith.addf %499, %500 : vector<8x9xf32>
    %502 = arith.addf %501, %309 : vector<8x9xf32>
    %503 = vector.extract_strided_slice %42 {offsets = [0, 2], sizes = [8, 1], strides = [1, 1]} : vector<8x10xf32> to vector<8x1xf32>
    %504 = vector.extract_strided_slice %42 {offsets = [0, 3], sizes = [8, 1], strides = [1, 1]} : vector<8x10xf32> to vector<8x1xf32>
    %cst_259 = arith.constant 0.000000e+00 : f32
    %505 = vector.broadcast %cst_259 : f32 to vector<8x4xf32>
    %506 = vector.extract_strided_slice %502 {offsets = [0, 0], sizes = [8, 5], strides = [1, 1]} : vector<8x9xf32> to vector<8x5xf32>
    %507 = tpu.concatenate %505, %506 in 1 : vector<8x4xf32>, vector<8x5xf32> -> vector<8x9xf32>
    %cst_260 = arith.constant 0.000000e+00 : f32
    %508 = vector.shape_cast %39 : vector<1x9xi1> to vector<1x9xi1>
    %509 = vector.broadcast %508 : vector<1x9xi1> to vector<8x9xi1>
    %510 = vector.broadcast %cst_260 : f32 to vector<8x9xf32>
    %511 = arith.select %509, %507, %510 : vector<8x9xi1>, vector<8x9xf32>
    %c1_261 = arith.constant 1 : index
    %c0_262 = arith.constant 0 : index
    %c0_263 = arith.constant 0 : index
    %c0_264 = arith.constant 0 : index
    %512 = vector.load %arg3[%c1_261, %c0_262, %c0_263, %c0_264] : memref<7x9x8x8xbf16, #tpu.memory_space<vmem>>, vector<1x1x8x8xbf16>
    %513 = vector.shape_cast %512 : vector<1x1x8x8xbf16> to vector<8x8xbf16>
    %514 = arith.truncf %511 : vector<8x9xf32> to vector<8x9xbf16>
    %cst_265 = arith.constant dense<0.000000e+00> : vector<8x9xf32>
    %515 = tpu.matmul %513, %514, %cst_265 {dimension_numbers = #tpu.dot_dimension_numbers<[1], [0], [0], [1], [0, 0, 1, 1], [], []>} : vector<8x8xbf16>, vector<8x9xbf16>, vector<8x9xf32> -> vector<8x9xf32>
    %cst_266 = arith.constant 0.000000e+00 : f32
    %516 = vector.broadcast %cst_266 : f32 to vector<8x3xf32>
    %517 = vector.extract_strided_slice %502 {offsets = [0, 0], sizes = [8, 6], strides = [1, 1]} : vector<8x9xf32> to vector<8x6xf32>
    %518 = tpu.concatenate %516, %517 in 1 : vector<8x3xf32>, vector<8x6xf32> -> vector<8x9xf32>
    %c1_267 = arith.constant 1 : index
    %c1_268 = arith.constant 1 : index
    %c0_269 = arith.constant 0 : index
    %c0_270 = arith.constant 0 : index
    %519 = vector.load %arg3[%c1_267, %c1_268, %c0_269, %c0_270] : memref<7x9x8x8xbf16, #tpu.memory_space<vmem>>, vector<1x1x8x8xbf16>
    %520 = vector.shape_cast %519 : vector<1x1x8x8xbf16> to vector<8x8xbf16>
    %521 = arith.truncf %518 : vector<8x9xf32> to vector<8x9xbf16>
    %cst_271 = arith.constant dense<0.000000e+00> : vector<8x9xf32>
    %522 = tpu.matmul %520, %521, %cst_271 {dimension_numbers = #tpu.dot_dimension_numbers<[1], [0], [0], [1], [0, 0, 1, 1], [], []>} : vector<8x8xbf16>, vector<8x9xbf16>, vector<8x9xf32> -> vector<8x9xf32>
    %523 = arith.addf %515, %522 : vector<8x9xf32>
    %cst_272 = arith.constant 0.000000e+00 : f32
    %524 = vector.broadcast %cst_272 : f32 to vector<8x2xf32>
    %525 = vector.extract_strided_slice %502 {offsets = [0, 0], sizes = [8, 7], strides = [1, 1]} : vector<8x9xf32> to vector<8x7xf32>
    %526 = tpu.concatenate %524, %525 in 1 : vector<8x2xf32>, vector<8x7xf32> -> vector<8x9xf32>
    %cst_273 = arith.constant 0.000000e+00 : f32
    %527 = vector.shape_cast %41 : vector<1x9xi1> to vector<1x9xi1>
    %528 = vector.broadcast %527 : vector<1x9xi1> to vector<8x9xi1>
    %529 = vector.broadcast %cst_273 : f32 to vector<8x9xf32>
    %530 = arith.select %528, %526, %529 : vector<8x9xi1>, vector<8x9xf32>
    %c1_274 = arith.constant 1 : index
    %c2_275 = arith.constant 2 : index
    %c0_276 = arith.constant 0 : index
    %c0_277 = arith.constant 0 : index
    %531 = vector.load %arg3[%c1_274, %c2_275, %c0_276, %c0_277] : memref<7x9x8x8xbf16, #tpu.memory_space<vmem>>, vector<1x1x8x8xbf16>
    %532 = vector.shape_cast %531 : vector<1x1x8x8xbf16> to vector<8x8xbf16>
    %533 = arith.truncf %530 : vector<8x9xf32> to vector<8x9xbf16>
    %cst_278 = arith.constant dense<0.000000e+00> : vector<8x9xf32>
    %534 = tpu.matmul %532, %533, %cst_278 {dimension_numbers = #tpu.dot_dimension_numbers<[1], [0], [0], [1], [0, 0, 1, 1], [], []>} : vector<8x8xbf16>, vector<8x9xbf16>, vector<8x9xf32> -> vector<8x9xf32>
    %535 = arith.addf %523, %534 : vector<8x9xf32>
    %cst_279 = arith.constant 0.000000e+00 : f32
    %536 = vector.broadcast %cst_279 : f32 to vector<8x1xf32>
    %537 = vector.extract_strided_slice %502 {offsets = [0, 0], sizes = [8, 8], strides = [1, 1]} : vector<8x9xf32> to vector<8x8xf32>
    %538 = tpu.concatenate %536, %537 in 1 : vector<8x1xf32>, vector<8x8xf32> -> vector<8x9xf32>
    %cst_280 = arith.constant 0.000000e+00 : f32
    %539 = vector.shape_cast %39 : vector<1x9xi1> to vector<1x9xi1>
    %540 = vector.broadcast %539 : vector<1x9xi1> to vector<8x9xi1>
    %541 = vector.broadcast %cst_280 : f32 to vector<8x9xf32>
    %542 = arith.select %540, %538, %541 : vector<8x9xi1>, vector<8x9xf32>
    %c1_281 = arith.constant 1 : index
    %c3_282 = arith.constant 3 : index
    %c0_283 = arith.constant 0 : index
    %c0_284 = arith.constant 0 : index
    %543 = vector.load %arg3[%c1_281, %c3_282, %c0_283, %c0_284] : memref<7x9x8x8xbf16, #tpu.memory_space<vmem>>, vector<1x1x8x8xbf16>
    %544 = vector.shape_cast %543 : vector<1x1x8x8xbf16> to vector<8x8xbf16>
    %545 = arith.truncf %542 : vector<8x9xf32> to vector<8x9xbf16>
    %cst_285 = arith.constant dense<0.000000e+00> : vector<8x9xf32>
    %546 = tpu.matmul %544, %545, %cst_285 {dimension_numbers = #tpu.dot_dimension_numbers<[1], [0], [0], [1], [0, 0, 1, 1], [], []>} : vector<8x8xbf16>, vector<8x9xbf16>, vector<8x9xf32> -> vector<8x9xf32>
    %547 = arith.addf %535, %546 : vector<8x9xf32>
    %c1_286 = arith.constant 1 : index
    %c4_287 = arith.constant 4 : index
    %c0_288 = arith.constant 0 : index
    %c0_289 = arith.constant 0 : index
    %548 = vector.load %arg3[%c1_286, %c4_287, %c0_288, %c0_289] : memref<7x9x8x8xbf16, #tpu.memory_space<vmem>>, vector<1x1x8x8xbf16>
    %549 = vector.shape_cast %548 : vector<1x1x8x8xbf16> to vector<8x8xbf16>
    %550 = arith.truncf %502 : vector<8x9xf32> to vector<8x9xbf16>
    %cst_290 = arith.constant dense<0.000000e+00> : vector<8x9xf32>
    %551 = tpu.matmul %549, %550, %cst_290 {dimension_numbers = #tpu.dot_dimension_numbers<[1], [0], [0], [1], [0, 0, 1, 1], [], []>} : vector<8x8xbf16>, vector<8x9xbf16>, vector<8x9xf32> -> vector<8x9xf32>
    %552 = arith.addf %547, %551 : vector<8x9xf32>
    %553 = vector.extract_strided_slice %502 {offsets = [0, 1], sizes = [8, 8], strides = [1, 1]} : vector<8x9xf32> to vector<8x8xf32>
    %cst_291 = arith.constant 0.000000e+00 : f32
    %554 = vector.broadcast %cst_291 : f32 to vector<8x1xf32>
    %555 = tpu.concatenate %553, %554 in 1 : vector<8x8xf32>, vector<8x1xf32> -> vector<8x9xf32>
    %cst_292 = arith.constant 0.000000e+00 : f32
    %556 = vector.shape_cast %41 : vector<1x9xi1> to vector<1x9xi1>
    %557 = vector.broadcast %556 : vector<1x9xi1> to vector<8x9xi1>
    %558 = vector.broadcast %cst_292 : f32 to vector<8x9xf32>
    %559 = arith.select %557, %555, %558 : vector<8x9xi1>, vector<8x9xf32>
    %c1_293 = arith.constant 1 : index
    %c5_294 = arith.constant 5 : index
    %c0_295 = arith.constant 0 : index
    %c0_296 = arith.constant 0 : index
    %560 = vector.load %arg3[%c1_293, %c5_294, %c0_295, %c0_296] : memref<7x9x8x8xbf16, #tpu.memory_space<vmem>>, vector<1x1x8x8xbf16>
    %561 = vector.shape_cast %560 : vector<1x1x8x8xbf16> to vector<8x8xbf16>
    %562 = arith.truncf %559 : vector<8x9xf32> to vector<8x9xbf16>
    %cst_297 = arith.constant dense<0.000000e+00> : vector<8x9xf32>
    %563 = tpu.matmul %561, %562, %cst_297 {dimension_numbers = #tpu.dot_dimension_numbers<[1], [0], [0], [1], [0, 0, 1, 1], [], []>} : vector<8x8xbf16>, vector<8x9xbf16>, vector<8x9xf32> -> vector<8x9xf32>
    %564 = arith.addf %552, %563 : vector<8x9xf32>
    %565 = vector.extract_strided_slice %502 {offsets = [0, 2], sizes = [8, 7], strides = [1, 1]} : vector<8x9xf32> to vector<8x7xf32>
    %cst_298 = arith.constant 0.000000e+00 : f32
    %566 = vector.broadcast %cst_298 : f32 to vector<8x2xf32>
    %567 = tpu.concatenate %565, %566 in 1 : vector<8x7xf32>, vector<8x2xf32> -> vector<8x9xf32>
    %cst_299 = arith.constant 0.000000e+00 : f32
    %568 = vector.shape_cast %39 : vector<1x9xi1> to vector<1x9xi1>
    %569 = vector.broadcast %568 : vector<1x9xi1> to vector<8x9xi1>
    %570 = vector.broadcast %cst_299 : f32 to vector<8x9xf32>
    %571 = arith.select %569, %567, %570 : vector<8x9xi1>, vector<8x9xf32>
    %c1_300 = arith.constant 1 : index
    %c6_301 = arith.constant 6 : index
    %c0_302 = arith.constant 0 : index
    %c0_303 = arith.constant 0 : index
    %572 = vector.load %arg3[%c1_300, %c6_301, %c0_302, %c0_303] : memref<7x9x8x8xbf16, #tpu.memory_space<vmem>>, vector<1x1x8x8xbf16>
    %573 = vector.shape_cast %572 : vector<1x1x8x8xbf16> to vector<8x8xbf16>
    %574 = arith.truncf %571 : vector<8x9xf32> to vector<8x9xbf16>
    %cst_304 = arith.constant dense<0.000000e+00> : vector<8x9xf32>
    %575 = tpu.matmul %573, %574, %cst_304 {dimension_numbers = #tpu.dot_dimension_numbers<[1], [0], [0], [1], [0, 0, 1, 1], [], []>} : vector<8x8xbf16>, vector<8x9xbf16>, vector<8x9xf32> -> vector<8x9xf32>
    %576 = arith.addf %564, %575 : vector<8x9xf32>
    %577 = vector.extract_strided_slice %502 {offsets = [0, 3], sizes = [8, 6], strides = [1, 1]} : vector<8x9xf32> to vector<8x6xf32>
    %cst_305 = arith.constant 0.000000e+00 : f32
    %578 = vector.broadcast %cst_305 : f32 to vector<8x3xf32>
    %579 = tpu.concatenate %577, %578 in 1 : vector<8x6xf32>, vector<8x3xf32> -> vector<8x9xf32>
    %c1_306 = arith.constant 1 : index
    %c7_307 = arith.constant 7 : index
    %c0_308 = arith.constant 0 : index
    %c0_309 = arith.constant 0 : index
    %580 = vector.load %arg3[%c1_306, %c7_307, %c0_308, %c0_309] : memref<7x9x8x8xbf16, #tpu.memory_space<vmem>>, vector<1x1x8x8xbf16>
    %581 = vector.shape_cast %580 : vector<1x1x8x8xbf16> to vector<8x8xbf16>
    %582 = arith.truncf %579 : vector<8x9xf32> to vector<8x9xbf16>
    %cst_310 = arith.constant dense<0.000000e+00> : vector<8x9xf32>
    %583 = tpu.matmul %581, %582, %cst_310 {dimension_numbers = #tpu.dot_dimension_numbers<[1], [0], [0], [1], [0, 0, 1, 1], [], []>} : vector<8x8xbf16>, vector<8x9xbf16>, vector<8x9xf32> -> vector<8x9xf32>
    %584 = arith.addf %576, %583 : vector<8x9xf32>
    %585 = vector.extract_strided_slice %502 {offsets = [0, 4], sizes = [8, 5], strides = [1, 1]} : vector<8x9xf32> to vector<8x5xf32>
    %cst_311 = arith.constant 0.000000e+00 : f32
    %586 = vector.broadcast %cst_311 : f32 to vector<8x4xf32>
    %587 = tpu.concatenate %585, %586 in 1 : vector<8x5xf32>, vector<8x4xf32> -> vector<8x9xf32>
    %cst_312 = arith.constant 0.000000e+00 : f32
    %588 = vector.shape_cast %41 : vector<1x9xi1> to vector<1x9xi1>
    %589 = vector.broadcast %588 : vector<1x9xi1> to vector<8x9xi1>
    %590 = vector.broadcast %cst_312 : f32 to vector<8x9xf32>
    %591 = arith.select %589, %587, %590 : vector<8x9xi1>, vector<8x9xf32>
    %c1_313 = arith.constant 1 : index
    %c8_314 = arith.constant 8 : index
    %c0_315 = arith.constant 0 : index
    %c0_316 = arith.constant 0 : index
    %592 = vector.load %arg3[%c1_313, %c8_314, %c0_315, %c0_316] : memref<7x9x8x8xbf16, #tpu.memory_space<vmem>>, vector<1x1x8x8xbf16>
    %593 = vector.shape_cast %592 : vector<1x1x8x8xbf16> to vector<8x8xbf16>
    %594 = arith.truncf %591 : vector<8x9xf32> to vector<8x9xbf16>
    %cst_317 = arith.constant dense<0.000000e+00> : vector<8x9xf32>
    %595 = tpu.matmul %593, %594, %cst_317 {dimension_numbers = #tpu.dot_dimension_numbers<[1], [0], [0], [1], [0, 0, 1, 1], [], []>} : vector<8x8xbf16>, vector<8x9xbf16>, vector<8x9xf32> -> vector<8x9xf32>
    %596 = arith.addf %584, %595 : vector<8x9xf32>
    %597 = vector.broadcast %503 : vector<8x1xf32> to vector<8x9xf32>
    %598 = arith.addf %596, %597 : vector<8x9xf32>
    %cst_318 = arith.constant 0.000000e+00 : f32
    %599 = vector.broadcast %cst_318 : f32 to vector<8x9xf32>
    %600 = arith.maximumf %598, %599 : vector<8x9xf32>
    %cst_319 = arith.constant 0.000000e+00 : f32
    %601 = vector.broadcast %cst_319 : f32 to vector<8x4xf32>
    %602 = vector.extract_strided_slice %600 {offsets = [0, 0], sizes = [8, 5], strides = [1, 1]} : vector<8x9xf32> to vector<8x5xf32>
    %603 = tpu.concatenate %601, %602 in 1 : vector<8x4xf32>, vector<8x5xf32> -> vector<8x9xf32>
    %cst_320 = arith.constant 0.000000e+00 : f32
    %604 = vector.shape_cast %39 : vector<1x9xi1> to vector<1x9xi1>
    %605 = vector.broadcast %604 : vector<1x9xi1> to vector<8x9xi1>
    %606 = vector.broadcast %cst_320 : f32 to vector<8x9xf32>
    %607 = arith.select %605, %603, %606 : vector<8x9xi1>, vector<8x9xf32>
    %c2_321 = arith.constant 2 : index
    %c0_322 = arith.constant 0 : index
    %c0_323 = arith.constant 0 : index
    %c0_324 = arith.constant 0 : index
    %608 = vector.load %arg3[%c2_321, %c0_322, %c0_323, %c0_324] : memref<7x9x8x8xbf16, #tpu.memory_space<vmem>>, vector<1x1x8x8xbf16>
    %609 = vector.shape_cast %608 : vector<1x1x8x8xbf16> to vector<8x8xbf16>
    %610 = arith.truncf %607 : vector<8x9xf32> to vector<8x9xbf16>
    %cst_325 = arith.constant dense<0.000000e+00> : vector<8x9xf32>
    %611 = tpu.matmul %609, %610, %cst_325 {dimension_numbers = #tpu.dot_dimension_numbers<[1], [0], [0], [1], [0, 0, 1, 1], [], []>} : vector<8x8xbf16>, vector<8x9xbf16>, vector<8x9xf32> -> vector<8x9xf32>
    %cst_326 = arith.constant 0.000000e+00 : f32
    %612 = vector.broadcast %cst_326 : f32 to vector<8x3xf32>
    %613 = vector.extract_strided_slice %600 {offsets = [0, 0], sizes = [8, 6], strides = [1, 1]} : vector<8x9xf32> to vector<8x6xf32>
    %614 = tpu.concatenate %612, %613 in 1 : vector<8x3xf32>, vector<8x6xf32> -> vector<8x9xf32>
    %c2_327 = arith.constant 2 : index
    %c1_328 = arith.constant 1 : index
    %c0_329 = arith.constant 0 : index
    %c0_330 = arith.constant 0 : index
    %615 = vector.load %arg3[%c2_327, %c1_328, %c0_329, %c0_330] : memref<7x9x8x8xbf16, #tpu.memory_space<vmem>>, vector<1x1x8x8xbf16>
    %616 = vector.shape_cast %615 : vector<1x1x8x8xbf16> to vector<8x8xbf16>
    %617 = arith.truncf %614 : vector<8x9xf32> to vector<8x9xbf16>
    %cst_331 = arith.constant dense<0.000000e+00> : vector<8x9xf32>
    %618 = tpu.matmul %616, %617, %cst_331 {dimension_numbers = #tpu.dot_dimension_numbers<[1], [0], [0], [1], [0, 0, 1, 1], [], []>} : vector<8x8xbf16>, vector<8x9xbf16>, vector<8x9xf32> -> vector<8x9xf32>
    %619 = arith.addf %611, %618 : vector<8x9xf32>
    %cst_332 = arith.constant 0.000000e+00 : f32
    %620 = vector.broadcast %cst_332 : f32 to vector<8x2xf32>
    %621 = vector.extract_strided_slice %600 {offsets = [0, 0], sizes = [8, 7], strides = [1, 1]} : vector<8x9xf32> to vector<8x7xf32>
    %622 = tpu.concatenate %620, %621 in 1 : vector<8x2xf32>, vector<8x7xf32> -> vector<8x9xf32>
    %cst_333 = arith.constant 0.000000e+00 : f32
    %623 = vector.shape_cast %41 : vector<1x9xi1> to vector<1x9xi1>
    %624 = vector.broadcast %623 : vector<1x9xi1> to vector<8x9xi1>
    %625 = vector.broadcast %cst_333 : f32 to vector<8x9xf32>
    %626 = arith.select %624, %622, %625 : vector<8x9xi1>, vector<8x9xf32>
    %c2_334 = arith.constant 2 : index
    %c2_335 = arith.constant 2 : index
    %c0_336 = arith.constant 0 : index
    %c0_337 = arith.constant 0 : index
    %627 = vector.load %arg3[%c2_334, %c2_335, %c0_336, %c0_337] : memref<7x9x8x8xbf16, #tpu.memory_space<vmem>>, vector<1x1x8x8xbf16>
    %628 = vector.shape_cast %627 : vector<1x1x8x8xbf16> to vector<8x8xbf16>
    %629 = arith.truncf %626 : vector<8x9xf32> to vector<8x9xbf16>
    %cst_338 = arith.constant dense<0.000000e+00> : vector<8x9xf32>
    %630 = tpu.matmul %628, %629, %cst_338 {dimension_numbers = #tpu.dot_dimension_numbers<[1], [0], [0], [1], [0, 0, 1, 1], [], []>} : vector<8x8xbf16>, vector<8x9xbf16>, vector<8x9xf32> -> vector<8x9xf32>
    %631 = arith.addf %619, %630 : vector<8x9xf32>
    %cst_339 = arith.constant 0.000000e+00 : f32
    %632 = vector.broadcast %cst_339 : f32 to vector<8x1xf32>
    %633 = vector.extract_strided_slice %600 {offsets = [0, 0], sizes = [8, 8], strides = [1, 1]} : vector<8x9xf32> to vector<8x8xf32>
    %634 = tpu.concatenate %632, %633 in 1 : vector<8x1xf32>, vector<8x8xf32> -> vector<8x9xf32>
    %cst_340 = arith.constant 0.000000e+00 : f32
    %635 = vector.shape_cast %39 : vector<1x9xi1> to vector<1x9xi1>
    %636 = vector.broadcast %635 : vector<1x9xi1> to vector<8x9xi1>
    %637 = vector.broadcast %cst_340 : f32 to vector<8x9xf32>
    %638 = arith.select %636, %634, %637 : vector<8x9xi1>, vector<8x9xf32>
    %c2_341 = arith.constant 2 : index
    %c3_342 = arith.constant 3 : index
    %c0_343 = arith.constant 0 : index
    %c0_344 = arith.constant 0 : index
    %639 = vector.load %arg3[%c2_341, %c3_342, %c0_343, %c0_344] : memref<7x9x8x8xbf16, #tpu.memory_space<vmem>>, vector<1x1x8x8xbf16>
    %640 = vector.shape_cast %639 : vector<1x1x8x8xbf16> to vector<8x8xbf16>
    %641 = arith.truncf %638 : vector<8x9xf32> to vector<8x9xbf16>
    %cst_345 = arith.constant dense<0.000000e+00> : vector<8x9xf32>
    %642 = tpu.matmul %640, %641, %cst_345 {dimension_numbers = #tpu.dot_dimension_numbers<[1], [0], [0], [1], [0, 0, 1, 1], [], []>} : vector<8x8xbf16>, vector<8x9xbf16>, vector<8x9xf32> -> vector<8x9xf32>
    %643 = arith.addf %631, %642 : vector<8x9xf32>
    %c2_346 = arith.constant 2 : index
    %c4_347 = arith.constant 4 : index
    %c0_348 = arith.constant 0 : index
    %c0_349 = arith.constant 0 : index
    %644 = vector.load %arg3[%c2_346, %c4_347, %c0_348, %c0_349] : memref<7x9x8x8xbf16, #tpu.memory_space<vmem>>, vector<1x1x8x8xbf16>
    %645 = vector.shape_cast %644 : vector<1x1x8x8xbf16> to vector<8x8xbf16>
    %646 = arith.truncf %600 : vector<8x9xf32> to vector<8x9xbf16>
    %cst_350 = arith.constant dense<0.000000e+00> : vector<8x9xf32>
    %647 = tpu.matmul %645, %646, %cst_350 {dimension_numbers = #tpu.dot_dimension_numbers<[1], [0], [0], [1], [0, 0, 1, 1], [], []>} : vector<8x8xbf16>, vector<8x9xbf16>, vector<8x9xf32> -> vector<8x9xf32>
    %648 = arith.addf %643, %647 : vector<8x9xf32>
    %649 = vector.extract_strided_slice %600 {offsets = [0, 1], sizes = [8, 8], strides = [1, 1]} : vector<8x9xf32> to vector<8x8xf32>
    %cst_351 = arith.constant 0.000000e+00 : f32
    %650 = vector.broadcast %cst_351 : f32 to vector<8x1xf32>
    %651 = tpu.concatenate %649, %650 in 1 : vector<8x8xf32>, vector<8x1xf32> -> vector<8x9xf32>
    %cst_352 = arith.constant 0.000000e+00 : f32
    %652 = vector.shape_cast %41 : vector<1x9xi1> to vector<1x9xi1>
    %653 = vector.broadcast %652 : vector<1x9xi1> to vector<8x9xi1>
    %654 = vector.broadcast %cst_352 : f32 to vector<8x9xf32>
    %655 = arith.select %653, %651, %654 : vector<8x9xi1>, vector<8x9xf32>
    %c2_353 = arith.constant 2 : index
    %c5_354 = arith.constant 5 : index
    %c0_355 = arith.constant 0 : index
    %c0_356 = arith.constant 0 : index
    %656 = vector.load %arg3[%c2_353, %c5_354, %c0_355, %c0_356] : memref<7x9x8x8xbf16, #tpu.memory_space<vmem>>, vector<1x1x8x8xbf16>
    %657 = vector.shape_cast %656 : vector<1x1x8x8xbf16> to vector<8x8xbf16>
    %658 = arith.truncf %655 : vector<8x9xf32> to vector<8x9xbf16>
    %cst_357 = arith.constant dense<0.000000e+00> : vector<8x9xf32>
    %659 = tpu.matmul %657, %658, %cst_357 {dimension_numbers = #tpu.dot_dimension_numbers<[1], [0], [0], [1], [0, 0, 1, 1], [], []>} : vector<8x8xbf16>, vector<8x9xbf16>, vector<8x9xf32> -> vector<8x9xf32>
    %660 = arith.addf %648, %659 : vector<8x9xf32>
    %661 = vector.extract_strided_slice %600 {offsets = [0, 2], sizes = [8, 7], strides = [1, 1]} : vector<8x9xf32> to vector<8x7xf32>
    %cst_358 = arith.constant 0.000000e+00 : f32
    %662 = vector.broadcast %cst_358 : f32 to vector<8x2xf32>
    %663 = tpu.concatenate %661, %662 in 1 : vector<8x7xf32>, vector<8x2xf32> -> vector<8x9xf32>
    %cst_359 = arith.constant 0.000000e+00 : f32
    %664 = vector.shape_cast %39 : vector<1x9xi1> to vector<1x9xi1>
    %665 = vector.broadcast %664 : vector<1x9xi1> to vector<8x9xi1>
    %666 = vector.broadcast %cst_359 : f32 to vector<8x9xf32>
    %667 = arith.select %665, %663, %666 : vector<8x9xi1>, vector<8x9xf32>
    %c2_360 = arith.constant 2 : index
    %c6_361 = arith.constant 6 : index
    %c0_362 = arith.constant 0 : index
    %c0_363 = arith.constant 0 : index
    %668 = vector.load %arg3[%c2_360, %c6_361, %c0_362, %c0_363] : memref<7x9x8x8xbf16, #tpu.memory_space<vmem>>, vector<1x1x8x8xbf16>
    %669 = vector.shape_cast %668 : vector<1x1x8x8xbf16> to vector<8x8xbf16>
    %670 = arith.truncf %667 : vector<8x9xf32> to vector<8x9xbf16>
    %cst_364 = arith.constant dense<0.000000e+00> : vector<8x9xf32>
    %671 = tpu.matmul %669, %670, %cst_364 {dimension_numbers = #tpu.dot_dimension_numbers<[1], [0], [0], [1], [0, 0, 1, 1], [], []>} : vector<8x8xbf16>, vector<8x9xbf16>, vector<8x9xf32> -> vector<8x9xf32>
    %672 = arith.addf %660, %671 : vector<8x9xf32>
    %673 = vector.extract_strided_slice %600 {offsets = [0, 3], sizes = [8, 6], strides = [1, 1]} : vector<8x9xf32> to vector<8x6xf32>
    %cst_365 = arith.constant 0.000000e+00 : f32
    %674 = vector.broadcast %cst_365 : f32 to vector<8x3xf32>
    %675 = tpu.concatenate %673, %674 in 1 : vector<8x6xf32>, vector<8x3xf32> -> vector<8x9xf32>
    %c2_366 = arith.constant 2 : index
    %c7_367 = arith.constant 7 : index
    %c0_368 = arith.constant 0 : index
    %c0_369 = arith.constant 0 : index
    %676 = vector.load %arg3[%c2_366, %c7_367, %c0_368, %c0_369] : memref<7x9x8x8xbf16, #tpu.memory_space<vmem>>, vector<1x1x8x8xbf16>
    %677 = vector.shape_cast %676 : vector<1x1x8x8xbf16> to vector<8x8xbf16>
    %678 = arith.truncf %675 : vector<8x9xf32> to vector<8x9xbf16>
    %cst_370 = arith.constant dense<0.000000e+00> : vector<8x9xf32>
    %679 = tpu.matmul %677, %678, %cst_370 {dimension_numbers = #tpu.dot_dimension_numbers<[1], [0], [0], [1], [0, 0, 1, 1], [], []>} : vector<8x8xbf16>, vector<8x9xbf16>, vector<8x9xf32> -> vector<8x9xf32>
    %680 = arith.addf %672, %679 : vector<8x9xf32>
    %681 = vector.extract_strided_slice %600 {offsets = [0, 4], sizes = [8, 5], strides = [1, 1]} : vector<8x9xf32> to vector<8x5xf32>
    %cst_371 = arith.constant 0.000000e+00 : f32
    %682 = vector.broadcast %cst_371 : f32 to vector<8x4xf32>
    %683 = tpu.concatenate %681, %682 in 1 : vector<8x5xf32>, vector<8x4xf32> -> vector<8x9xf32>
    %cst_372 = arith.constant 0.000000e+00 : f32
    %684 = vector.shape_cast %41 : vector<1x9xi1> to vector<1x9xi1>
    %685 = vector.broadcast %684 : vector<1x9xi1> to vector<8x9xi1>
    %686 = vector.broadcast %cst_372 : f32 to vector<8x9xf32>
    %687 = arith.select %685, %683, %686 : vector<8x9xi1>, vector<8x9xf32>
    %c2_373 = arith.constant 2 : index
    %c8_374 = arith.constant 8 : index
    %c0_375 = arith.constant 0 : index
    %c0_376 = arith.constant 0 : index
    %688 = vector.load %arg3[%c2_373, %c8_374, %c0_375, %c0_376] : memref<7x9x8x8xbf16, #tpu.memory_space<vmem>>, vector<1x1x8x8xbf16>
    %689 = vector.shape_cast %688 : vector<1x1x8x8xbf16> to vector<8x8xbf16>
    %690 = arith.truncf %687 : vector<8x9xf32> to vector<8x9xbf16>
    %cst_377 = arith.constant dense<0.000000e+00> : vector<8x9xf32>
    %691 = tpu.matmul %689, %690, %cst_377 {dimension_numbers = #tpu.dot_dimension_numbers<[1], [0], [0], [1], [0, 0, 1, 1], [], []>} : vector<8x8xbf16>, vector<8x9xbf16>, vector<8x9xf32> -> vector<8x9xf32>
    %692 = arith.addf %680, %691 : vector<8x9xf32>
    %693 = vector.broadcast %504 : vector<8x1xf32> to vector<8x9xf32>
    %694 = arith.addf %692, %693 : vector<8x9xf32>
    %695 = arith.addf %694, %502 : vector<8x9xf32>
    %696 = vector.extract_strided_slice %42 {offsets = [0, 4], sizes = [8, 1], strides = [1, 1]} : vector<8x10xf32> to vector<8x1xf32>
    %697 = vector.extract_strided_slice %42 {offsets = [0, 5], sizes = [8, 1], strides = [1, 1]} : vector<8x10xf32> to vector<8x1xf32>
    %cst_378 = arith.constant 0.000000e+00 : f32
    %698 = vector.broadcast %cst_378 : f32 to vector<8x8xf32>
    %699 = vector.extract_strided_slice %275 {offsets = [0, 0], sizes = [8, 41], strides = [1, 1]} : vector<8x49xf32> to vector<8x41xf32>
    %700 = tpu.concatenate %698, %699 in 1 : vector<8x8xf32>, vector<8x41xf32> -> vector<8x49xf32>
    %cst_379 = arith.constant 0.000000e+00 : f32
    %701 = vector.shape_cast %18 : vector<1x49xi1> to vector<1x49xi1>
    %702 = vector.broadcast %701 : vector<1x49xi1> to vector<8x49xi1>
    %703 = vector.broadcast %cst_379 : f32 to vector<8x49xf32>
    %704 = arith.select %702, %700, %703 : vector<8x49xi1>, vector<8x49xf32>
    %c3_380 = arith.constant 3 : index
    %c0_381 = arith.constant 0 : index
    %c0_382 = arith.constant 0 : index
    %c0_383 = arith.constant 0 : index
    %705 = vector.load %arg3[%c3_380, %c0_381, %c0_382, %c0_383] : memref<7x9x8x8xbf16, #tpu.memory_space<vmem>>, vector<1x1x8x8xbf16>
    %706 = vector.shape_cast %705 : vector<1x1x8x8xbf16> to vector<8x8xbf16>
    %707 = arith.truncf %704 : vector<8x49xf32> to vector<8x49xbf16>
    %cst_384 = arith.constant dense<0.000000e+00> : vector<8x49xf32>
    %708 = tpu.matmul %706, %707, %cst_384 {dimension_numbers = #tpu.dot_dimension_numbers<[1], [0], [0], [1], [0, 0, 1, 1], [], []>} : vector<8x8xbf16>, vector<8x49xbf16>, vector<8x49xf32> -> vector<8x49xf32>
    %cst_385 = arith.constant 0.000000e+00 : f32
    %709 = vector.broadcast %cst_385 : f32 to vector<8x7xf32>
    %710 = vector.extract_strided_slice %275 {offsets = [0, 0], sizes = [8, 42], strides = [1, 1]} : vector<8x49xf32> to vector<8x42xf32>
    %711 = tpu.concatenate %709, %710 in 1 : vector<8x7xf32>, vector<8x42xf32> -> vector<8x49xf32>
    %c3_386 = arith.constant 3 : index
    %c1_387 = arith.constant 1 : index
    %c0_388 = arith.constant 0 : index
    %c0_389 = arith.constant 0 : index
    %712 = vector.load %arg3[%c3_386, %c1_387, %c0_388, %c0_389] : memref<7x9x8x8xbf16, #tpu.memory_space<vmem>>, vector<1x1x8x8xbf16>
    %713 = vector.shape_cast %712 : vector<1x1x8x8xbf16> to vector<8x8xbf16>
    %714 = arith.truncf %711 : vector<8x49xf32> to vector<8x49xbf16>
    %cst_390 = arith.constant dense<0.000000e+00> : vector<8x49xf32>
    %715 = tpu.matmul %713, %714, %cst_390 {dimension_numbers = #tpu.dot_dimension_numbers<[1], [0], [0], [1], [0, 0, 1, 1], [], []>} : vector<8x8xbf16>, vector<8x49xbf16>, vector<8x49xf32> -> vector<8x49xf32>
    %716 = arith.addf %708, %715 : vector<8x49xf32>
    %cst_391 = arith.constant 0.000000e+00 : f32
    %717 = vector.broadcast %cst_391 : f32 to vector<8x6xf32>
    %718 = vector.extract_strided_slice %275 {offsets = [0, 0], sizes = [8, 43], strides = [1, 1]} : vector<8x49xf32> to vector<8x43xf32>
    %719 = tpu.concatenate %717, %718 in 1 : vector<8x6xf32>, vector<8x43xf32> -> vector<8x49xf32>
    %cst_392 = arith.constant 0.000000e+00 : f32
    %720 = vector.shape_cast %20 : vector<1x49xi1> to vector<1x49xi1>
    %721 = vector.broadcast %720 : vector<1x49xi1> to vector<8x49xi1>
    %722 = vector.broadcast %cst_392 : f32 to vector<8x49xf32>
    %723 = arith.select %721, %719, %722 : vector<8x49xi1>, vector<8x49xf32>
    %c3_393 = arith.constant 3 : index
    %c2_394 = arith.constant 2 : index
    %c0_395 = arith.constant 0 : index
    %c0_396 = arith.constant 0 : index
    %724 = vector.load %arg3[%c3_393, %c2_394, %c0_395, %c0_396] : memref<7x9x8x8xbf16, #tpu.memory_space<vmem>>, vector<1x1x8x8xbf16>
    %725 = vector.shape_cast %724 : vector<1x1x8x8xbf16> to vector<8x8xbf16>
    %726 = arith.truncf %723 : vector<8x49xf32> to vector<8x49xbf16>
    %cst_397 = arith.constant dense<0.000000e+00> : vector<8x49xf32>
    %727 = tpu.matmul %725, %726, %cst_397 {dimension_numbers = #tpu.dot_dimension_numbers<[1], [0], [0], [1], [0, 0, 1, 1], [], []>} : vector<8x8xbf16>, vector<8x49xbf16>, vector<8x49xf32> -> vector<8x49xf32>
    %728 = arith.addf %716, %727 : vector<8x49xf32>
    %cst_398 = arith.constant 0.000000e+00 : f32
    %729 = vector.broadcast %cst_398 : f32 to vector<8x1xf32>
    %730 = vector.extract_strided_slice %275 {offsets = [0, 0], sizes = [8, 48], strides = [1, 1]} : vector<8x49xf32> to vector<8x48xf32>
    %731 = tpu.concatenate %729, %730 in 1 : vector<8x1xf32>, vector<8x48xf32> -> vector<8x49xf32>
    %cst_399 = arith.constant 0.000000e+00 : f32
    %732 = vector.shape_cast %18 : vector<1x49xi1> to vector<1x49xi1>
    %733 = vector.broadcast %732 : vector<1x49xi1> to vector<8x49xi1>
    %734 = vector.broadcast %cst_399 : f32 to vector<8x49xf32>
    %735 = arith.select %733, %731, %734 : vector<8x49xi1>, vector<8x49xf32>
    %c3_400 = arith.constant 3 : index
    %c3_401 = arith.constant 3 : index
    %c0_402 = arith.constant 0 : index
    %c0_403 = arith.constant 0 : index
    %736 = vector.load %arg3[%c3_400, %c3_401, %c0_402, %c0_403] : memref<7x9x8x8xbf16, #tpu.memory_space<vmem>>, vector<1x1x8x8xbf16>
    %737 = vector.shape_cast %736 : vector<1x1x8x8xbf16> to vector<8x8xbf16>
    %738 = arith.truncf %735 : vector<8x49xf32> to vector<8x49xbf16>
    %cst_404 = arith.constant dense<0.000000e+00> : vector<8x49xf32>
    %739 = tpu.matmul %737, %738, %cst_404 {dimension_numbers = #tpu.dot_dimension_numbers<[1], [0], [0], [1], [0, 0, 1, 1], [], []>} : vector<8x8xbf16>, vector<8x49xbf16>, vector<8x49xf32> -> vector<8x49xf32>
    %740 = arith.addf %728, %739 : vector<8x49xf32>
    %c3_405 = arith.constant 3 : index
    %c4_406 = arith.constant 4 : index
    %c0_407 = arith.constant 0 : index
    %c0_408 = arith.constant 0 : index
    %741 = vector.load %arg3[%c3_405, %c4_406, %c0_407, %c0_408] : memref<7x9x8x8xbf16, #tpu.memory_space<vmem>>, vector<1x1x8x8xbf16>
    %742 = vector.shape_cast %741 : vector<1x1x8x8xbf16> to vector<8x8xbf16>
    %743 = arith.truncf %275 : vector<8x49xf32> to vector<8x49xbf16>
    %cst_409 = arith.constant dense<0.000000e+00> : vector<8x49xf32>
    %744 = tpu.matmul %742, %743, %cst_409 {dimension_numbers = #tpu.dot_dimension_numbers<[1], [0], [0], [1], [0, 0, 1, 1], [], []>} : vector<8x8xbf16>, vector<8x49xbf16>, vector<8x49xf32> -> vector<8x49xf32>
    %745 = arith.addf %740, %744 : vector<8x49xf32>
    %746 = vector.extract_strided_slice %275 {offsets = [0, 1], sizes = [8, 48], strides = [1, 1]} : vector<8x49xf32> to vector<8x48xf32>
    %cst_410 = arith.constant 0.000000e+00 : f32
    %747 = vector.broadcast %cst_410 : f32 to vector<8x1xf32>
    %748 = tpu.concatenate %746, %747 in 1 : vector<8x48xf32>, vector<8x1xf32> -> vector<8x49xf32>
    %cst_411 = arith.constant 0.000000e+00 : f32
    %749 = vector.shape_cast %20 : vector<1x49xi1> to vector<1x49xi1>
    %750 = vector.broadcast %749 : vector<1x49xi1> to vector<8x49xi1>
    %751 = vector.broadcast %cst_411 : f32 to vector<8x49xf32>
    %752 = arith.select %750, %748, %751 : vector<8x49xi1>, vector<8x49xf32>
    %c3_412 = arith.constant 3 : index
    %c5_413 = arith.constant 5 : index
    %c0_414 = arith.constant 0 : index
    %c0_415 = arith.constant 0 : index
    %753 = vector.load %arg3[%c3_412, %c5_413, %c0_414, %c0_415] : memref<7x9x8x8xbf16, #tpu.memory_space<vmem>>, vector<1x1x8x8xbf16>
    %754 = vector.shape_cast %753 : vector<1x1x8x8xbf16> to vector<8x8xbf16>
    %755 = arith.truncf %752 : vector<8x49xf32> to vector<8x49xbf16>
    %cst_416 = arith.constant dense<0.000000e+00> : vector<8x49xf32>
    %756 = tpu.matmul %754, %755, %cst_416 {dimension_numbers = #tpu.dot_dimension_numbers<[1], [0], [0], [1], [0, 0, 1, 1], [], []>} : vector<8x8xbf16>, vector<8x49xbf16>, vector<8x49xf32> -> vector<8x49xf32>
    %757 = arith.addf %745, %756 : vector<8x49xf32>
    %758 = vector.extract_strided_slice %275 {offsets = [0, 6], sizes = [8, 43], strides = [1, 1]} : vector<8x49xf32> to vector<8x43xf32>
    %cst_417 = arith.constant 0.000000e+00 : f32
    %759 = vector.broadcast %cst_417 : f32 to vector<8x6xf32>
    %760 = tpu.concatenate %758, %759 in 1 : vector<8x43xf32>, vector<8x6xf32> -> vector<8x49xf32>
    %cst_418 = arith.constant 0.000000e+00 : f32
    %761 = vector.shape_cast %18 : vector<1x49xi1> to vector<1x49xi1>
    %762 = vector.broadcast %761 : vector<1x49xi1> to vector<8x49xi1>
    %763 = vector.broadcast %cst_418 : f32 to vector<8x49xf32>
    %764 = arith.select %762, %760, %763 : vector<8x49xi1>, vector<8x49xf32>
    %c3_419 = arith.constant 3 : index
    %c6_420 = arith.constant 6 : index
    %c0_421 = arith.constant 0 : index
    %c0_422 = arith.constant 0 : index
    %765 = vector.load %arg3[%c3_419, %c6_420, %c0_421, %c0_422] : memref<7x9x8x8xbf16, #tpu.memory_space<vmem>>, vector<1x1x8x8xbf16>
    %766 = vector.shape_cast %765 : vector<1x1x8x8xbf16> to vector<8x8xbf16>
    %767 = arith.truncf %764 : vector<8x49xf32> to vector<8x49xbf16>
    %cst_423 = arith.constant dense<0.000000e+00> : vector<8x49xf32>
    %768 = tpu.matmul %766, %767, %cst_423 {dimension_numbers = #tpu.dot_dimension_numbers<[1], [0], [0], [1], [0, 0, 1, 1], [], []>} : vector<8x8xbf16>, vector<8x49xbf16>, vector<8x49xf32> -> vector<8x49xf32>
    %769 = arith.addf %757, %768 : vector<8x49xf32>
    %770 = vector.extract_strided_slice %275 {offsets = [0, 7], sizes = [8, 42], strides = [1, 1]} : vector<8x49xf32> to vector<8x42xf32>
    %cst_424 = arith.constant 0.000000e+00 : f32
    %771 = vector.broadcast %cst_424 : f32 to vector<8x7xf32>
    %772 = tpu.concatenate %770, %771 in 1 : vector<8x42xf32>, vector<8x7xf32> -> vector<8x49xf32>
    %c3_425 = arith.constant 3 : index
    %c7_426 = arith.constant 7 : index
    %c0_427 = arith.constant 0 : index
    %c0_428 = arith.constant 0 : index
    %773 = vector.load %arg3[%c3_425, %c7_426, %c0_427, %c0_428] : memref<7x9x8x8xbf16, #tpu.memory_space<vmem>>, vector<1x1x8x8xbf16>
    %774 = vector.shape_cast %773 : vector<1x1x8x8xbf16> to vector<8x8xbf16>
    %775 = arith.truncf %772 : vector<8x49xf32> to vector<8x49xbf16>
    %cst_429 = arith.constant dense<0.000000e+00> : vector<8x49xf32>
    %776 = tpu.matmul %774, %775, %cst_429 {dimension_numbers = #tpu.dot_dimension_numbers<[1], [0], [0], [1], [0, 0, 1, 1], [], []>} : vector<8x8xbf16>, vector<8x49xbf16>, vector<8x49xf32> -> vector<8x49xf32>
    %777 = arith.addf %769, %776 : vector<8x49xf32>
    %778 = vector.extract_strided_slice %275 {offsets = [0, 8], sizes = [8, 41], strides = [1, 1]} : vector<8x49xf32> to vector<8x41xf32>
    %cst_430 = arith.constant 0.000000e+00 : f32
    %779 = vector.broadcast %cst_430 : f32 to vector<8x8xf32>
    %780 = tpu.concatenate %778, %779 in 1 : vector<8x41xf32>, vector<8x8xf32> -> vector<8x49xf32>
    %cst_431 = arith.constant 0.000000e+00 : f32
    %781 = vector.shape_cast %20 : vector<1x49xi1> to vector<1x49xi1>
    %782 = vector.broadcast %781 : vector<1x49xi1> to vector<8x49xi1>
    %783 = vector.broadcast %cst_431 : f32 to vector<8x49xf32>
    %784 = arith.select %782, %780, %783 : vector<8x49xi1>, vector<8x49xf32>
    %c3_432 = arith.constant 3 : index
    %c8_433 = arith.constant 8 : index
    %c0_434 = arith.constant 0 : index
    %c0_435 = arith.constant 0 : index
    %785 = vector.load %arg3[%c3_432, %c8_433, %c0_434, %c0_435] : memref<7x9x8x8xbf16, #tpu.memory_space<vmem>>, vector<1x1x8x8xbf16>
    %786 = vector.shape_cast %785 : vector<1x1x8x8xbf16> to vector<8x8xbf16>
    %787 = arith.truncf %784 : vector<8x49xf32> to vector<8x49xbf16>
    %cst_436 = arith.constant dense<0.000000e+00> : vector<8x49xf32>
    %788 = tpu.matmul %786, %787, %cst_436 {dimension_numbers = #tpu.dot_dimension_numbers<[1], [0], [0], [1], [0, 0, 1, 1], [], []>} : vector<8x8xbf16>, vector<8x49xbf16>, vector<8x49xf32> -> vector<8x49xf32>
    %789 = arith.addf %777, %788 : vector<8x49xf32>
    %790 = vector.broadcast %696 : vector<8x1xf32> to vector<8x49xf32>
    %791 = arith.addf %789, %790 : vector<8x49xf32>
    %cst_437 = arith.constant 0.000000e+00 : f32
    %792 = vector.broadcast %cst_437 : f32 to vector<8x49xf32>
    %793 = arith.maximumf %791, %792 : vector<8x49xf32>
    %cst_438 = arith.constant 0.000000e+00 : f32
    %794 = vector.broadcast %cst_438 : f32 to vector<8x8xf32>
    %795 = vector.extract_strided_slice %793 {offsets = [0, 0], sizes = [8, 41], strides = [1, 1]} : vector<8x49xf32> to vector<8x41xf32>
    %796 = tpu.concatenate %794, %795 in 1 : vector<8x8xf32>, vector<8x41xf32> -> vector<8x49xf32>
    %cst_439 = arith.constant 0.000000e+00 : f32
    %797 = vector.shape_cast %18 : vector<1x49xi1> to vector<1x49xi1>
    %798 = vector.broadcast %797 : vector<1x49xi1> to vector<8x49xi1>
    %799 = vector.broadcast %cst_439 : f32 to vector<8x49xf32>
    %800 = arith.select %798, %796, %799 : vector<8x49xi1>, vector<8x49xf32>
    %c4_440 = arith.constant 4 : index
    %c0_441 = arith.constant 0 : index
    %c0_442 = arith.constant 0 : index
    %c0_443 = arith.constant 0 : index
    %801 = vector.load %arg3[%c4_440, %c0_441, %c0_442, %c0_443] : memref<7x9x8x8xbf16, #tpu.memory_space<vmem>>, vector<1x1x8x8xbf16>
    %802 = vector.shape_cast %801 : vector<1x1x8x8xbf16> to vector<8x8xbf16>
    %803 = arith.truncf %800 : vector<8x49xf32> to vector<8x49xbf16>
    %cst_444 = arith.constant dense<0.000000e+00> : vector<8x49xf32>
    %804 = tpu.matmul %802, %803, %cst_444 {dimension_numbers = #tpu.dot_dimension_numbers<[1], [0], [0], [1], [0, 0, 1, 1], [], []>} : vector<8x8xbf16>, vector<8x49xbf16>, vector<8x49xf32> -> vector<8x49xf32>
    %cst_445 = arith.constant 0.000000e+00 : f32
    %805 = vector.broadcast %cst_445 : f32 to vector<8x7xf32>
    %806 = vector.extract_strided_slice %793 {offsets = [0, 0], sizes = [8, 42], strides = [1, 1]} : vector<8x49xf32> to vector<8x42xf32>
    %807 = tpu.concatenate %805, %806 in 1 : vector<8x7xf32>, vector<8x42xf32> -> vector<8x49xf32>
    %c4_446 = arith.constant 4 : index
    %c1_447 = arith.constant 1 : index
    %c0_448 = arith.constant 0 : index
    %c0_449 = arith.constant 0 : index
    %808 = vector.load %arg3[%c4_446, %c1_447, %c0_448, %c0_449] : memref<7x9x8x8xbf16, #tpu.memory_space<vmem>>, vector<1x1x8x8xbf16>
    %809 = vector.shape_cast %808 : vector<1x1x8x8xbf16> to vector<8x8xbf16>
    %810 = arith.truncf %807 : vector<8x49xf32> to vector<8x49xbf16>
    %cst_450 = arith.constant dense<0.000000e+00> : vector<8x49xf32>
    %811 = tpu.matmul %809, %810, %cst_450 {dimension_numbers = #tpu.dot_dimension_numbers<[1], [0], [0], [1], [0, 0, 1, 1], [], []>} : vector<8x8xbf16>, vector<8x49xbf16>, vector<8x49xf32> -> vector<8x49xf32>
    %812 = arith.addf %804, %811 : vector<8x49xf32>
    %cst_451 = arith.constant 0.000000e+00 : f32
    %813 = vector.broadcast %cst_451 : f32 to vector<8x6xf32>
    %814 = vector.extract_strided_slice %793 {offsets = [0, 0], sizes = [8, 43], strides = [1, 1]} : vector<8x49xf32> to vector<8x43xf32>
    %815 = tpu.concatenate %813, %814 in 1 : vector<8x6xf32>, vector<8x43xf32> -> vector<8x49xf32>
    %cst_452 = arith.constant 0.000000e+00 : f32
    %816 = vector.shape_cast %20 : vector<1x49xi1> to vector<1x49xi1>
    %817 = vector.broadcast %816 : vector<1x49xi1> to vector<8x49xi1>
    %818 = vector.broadcast %cst_452 : f32 to vector<8x49xf32>
    %819 = arith.select %817, %815, %818 : vector<8x49xi1>, vector<8x49xf32>
    %c4_453 = arith.constant 4 : index
    %c2_454 = arith.constant 2 : index
    %c0_455 = arith.constant 0 : index
    %c0_456 = arith.constant 0 : index
    %820 = vector.load %arg3[%c4_453, %c2_454, %c0_455, %c0_456] : memref<7x9x8x8xbf16, #tpu.memory_space<vmem>>, vector<1x1x8x8xbf16>
    %821 = vector.shape_cast %820 : vector<1x1x8x8xbf16> to vector<8x8xbf16>
    %822 = arith.truncf %819 : vector<8x49xf32> to vector<8x49xbf16>
    %cst_457 = arith.constant dense<0.000000e+00> : vector<8x49xf32>
    %823 = tpu.matmul %821, %822, %cst_457 {dimension_numbers = #tpu.dot_dimension_numbers<[1], [0], [0], [1], [0, 0, 1, 1], [], []>} : vector<8x8xbf16>, vector<8x49xbf16>, vector<8x49xf32> -> vector<8x49xf32>
    %824 = arith.addf %812, %823 : vector<8x49xf32>
    %cst_458 = arith.constant 0.000000e+00 : f32
    %825 = vector.broadcast %cst_458 : f32 to vector<8x1xf32>
    %826 = vector.extract_strided_slice %793 {offsets = [0, 0], sizes = [8, 48], strides = [1, 1]} : vector<8x49xf32> to vector<8x48xf32>
    %827 = tpu.concatenate %825, %826 in 1 : vector<8x1xf32>, vector<8x48xf32> -> vector<8x49xf32>
    %cst_459 = arith.constant 0.000000e+00 : f32
    %828 = vector.shape_cast %18 : vector<1x49xi1> to vector<1x49xi1>
    %829 = vector.broadcast %828 : vector<1x49xi1> to vector<8x49xi1>
    %830 = vector.broadcast %cst_459 : f32 to vector<8x49xf32>
    %831 = arith.select %829, %827, %830 : vector<8x49xi1>, vector<8x49xf32>
    %c4_460 = arith.constant 4 : index
    %c3_461 = arith.constant 3 : index
    %c0_462 = arith.constant 0 : index
    %c0_463 = arith.constant 0 : index
    %832 = vector.load %arg3[%c4_460, %c3_461, %c0_462, %c0_463] : memref<7x9x8x8xbf16, #tpu.memory_space<vmem>>, vector<1x1x8x8xbf16>
    %833 = vector.shape_cast %832 : vector<1x1x8x8xbf16> to vector<8x8xbf16>
    %834 = arith.truncf %831 : vector<8x49xf32> to vector<8x49xbf16>
    %cst_464 = arith.constant dense<0.000000e+00> : vector<8x49xf32>
    %835 = tpu.matmul %833, %834, %cst_464 {dimension_numbers = #tpu.dot_dimension_numbers<[1], [0], [0], [1], [0, 0, 1, 1], [], []>} : vector<8x8xbf16>, vector<8x49xbf16>, vector<8x49xf32> -> vector<8x49xf32>
    %836 = arith.addf %824, %835 : vector<8x49xf32>
    %c4_465 = arith.constant 4 : index
    %c4_466 = arith.constant 4 : index
    %c0_467 = arith.constant 0 : index
    %c0_468 = arith.constant 0 : index
    %837 = vector.load %arg3[%c4_465, %c4_466, %c0_467, %c0_468] : memref<7x9x8x8xbf16, #tpu.memory_space<vmem>>, vector<1x1x8x8xbf16>
    %838 = vector.shape_cast %837 : vector<1x1x8x8xbf16> to vector<8x8xbf16>
    %839 = arith.truncf %793 : vector<8x49xf32> to vector<8x49xbf16>
    %cst_469 = arith.constant dense<0.000000e+00> : vector<8x49xf32>
    %840 = tpu.matmul %838, %839, %cst_469 {dimension_numbers = #tpu.dot_dimension_numbers<[1], [0], [0], [1], [0, 0, 1, 1], [], []>} : vector<8x8xbf16>, vector<8x49xbf16>, vector<8x49xf32> -> vector<8x49xf32>
    %841 = arith.addf %836, %840 : vector<8x49xf32>
    %842 = vector.extract_strided_slice %793 {offsets = [0, 1], sizes = [8, 48], strides = [1, 1]} : vector<8x49xf32> to vector<8x48xf32>
    %cst_470 = arith.constant 0.000000e+00 : f32
    %843 = vector.broadcast %cst_470 : f32 to vector<8x1xf32>
    %844 = tpu.concatenate %842, %843 in 1 : vector<8x48xf32>, vector<8x1xf32> -> vector<8x49xf32>
    %cst_471 = arith.constant 0.000000e+00 : f32
    %845 = vector.shape_cast %20 : vector<1x49xi1> to vector<1x49xi1>
    %846 = vector.broadcast %845 : vector<1x49xi1> to vector<8x49xi1>
    %847 = vector.broadcast %cst_471 : f32 to vector<8x49xf32>
    %848 = arith.select %846, %844, %847 : vector<8x49xi1>, vector<8x49xf32>
    %c4_472 = arith.constant 4 : index
    %c5_473 = arith.constant 5 : index
    %c0_474 = arith.constant 0 : index
    %c0_475 = arith.constant 0 : index
    %849 = vector.load %arg3[%c4_472, %c5_473, %c0_474, %c0_475] : memref<7x9x8x8xbf16, #tpu.memory_space<vmem>>, vector<1x1x8x8xbf16>
    %850 = vector.shape_cast %849 : vector<1x1x8x8xbf16> to vector<8x8xbf16>
    %851 = arith.truncf %848 : vector<8x49xf32> to vector<8x49xbf16>
    %cst_476 = arith.constant dense<0.000000e+00> : vector<8x49xf32>
    %852 = tpu.matmul %850, %851, %cst_476 {dimension_numbers = #tpu.dot_dimension_numbers<[1], [0], [0], [1], [0, 0, 1, 1], [], []>} : vector<8x8xbf16>, vector<8x49xbf16>, vector<8x49xf32> -> vector<8x49xf32>
    %853 = arith.addf %841, %852 : vector<8x49xf32>
    %854 = vector.extract_strided_slice %793 {offsets = [0, 6], sizes = [8, 43], strides = [1, 1]} : vector<8x49xf32> to vector<8x43xf32>
    %cst_477 = arith.constant 0.000000e+00 : f32
    %855 = vector.broadcast %cst_477 : f32 to vector<8x6xf32>
    %856 = tpu.concatenate %854, %855 in 1 : vector<8x43xf32>, vector<8x6xf32> -> vector<8x49xf32>
    %cst_478 = arith.constant 0.000000e+00 : f32
    %857 = vector.shape_cast %18 : vector<1x49xi1> to vector<1x49xi1>
    %858 = vector.broadcast %857 : vector<1x49xi1> to vector<8x49xi1>
    %859 = vector.broadcast %cst_478 : f32 to vector<8x49xf32>
    %860 = arith.select %858, %856, %859 : vector<8x49xi1>, vector<8x49xf32>
    %c4_479 = arith.constant 4 : index
    %c6_480 = arith.constant 6 : index
    %c0_481 = arith.constant 0 : index
    %c0_482 = arith.constant 0 : index
    %861 = vector.load %arg3[%c4_479, %c6_480, %c0_481, %c0_482] : memref<7x9x8x8xbf16, #tpu.memory_space<vmem>>, vector<1x1x8x8xbf16>
    %862 = vector.shape_cast %861 : vector<1x1x8x8xbf16> to vector<8x8xbf16>
    %863 = arith.truncf %860 : vector<8x49xf32> to vector<8x49xbf16>
    %cst_483 = arith.constant dense<0.000000e+00> : vector<8x49xf32>
    %864 = tpu.matmul %862, %863, %cst_483 {dimension_numbers = #tpu.dot_dimension_numbers<[1], [0], [0], [1], [0, 0, 1, 1], [], []>} : vector<8x8xbf16>, vector<8x49xbf16>, vector<8x49xf32> -> vector<8x49xf32>
    %865 = arith.addf %853, %864 : vector<8x49xf32>
    %866 = vector.extract_strided_slice %793 {offsets = [0, 7], sizes = [8, 42], strides = [1, 1]} : vector<8x49xf32> to vector<8x42xf32>
    %cst_484 = arith.constant 0.000000e+00 : f32
    %867 = vector.broadcast %cst_484 : f32 to vector<8x7xf32>
    %868 = tpu.concatenate %866, %867 in 1 : vector<8x42xf32>, vector<8x7xf32> -> vector<8x49xf32>
    %c4_485 = arith.constant 4 : index
    %c7_486 = arith.constant 7 : index
    %c0_487 = arith.constant 0 : index
    %c0_488 = arith.constant 0 : index
    %869 = vector.load %arg3[%c4_485, %c7_486, %c0_487, %c0_488] : memref<7x9x8x8xbf16, #tpu.memory_space<vmem>>, vector<1x1x8x8xbf16>
    %870 = vector.shape_cast %869 : vector<1x1x8x8xbf16> to vector<8x8xbf16>
    %871 = arith.truncf %868 : vector<8x49xf32> to vector<8x49xbf16>
    %cst_489 = arith.constant dense<0.000000e+00> : vector<8x49xf32>
    %872 = tpu.matmul %870, %871, %cst_489 {dimension_numbers = #tpu.dot_dimension_numbers<[1], [0], [0], [1], [0, 0, 1, 1], [], []>} : vector<8x8xbf16>, vector<8x49xbf16>, vector<8x49xf32> -> vector<8x49xf32>
    %873 = arith.addf %865, %872 : vector<8x49xf32>
    %874 = vector.extract_strided_slice %793 {offsets = [0, 8], sizes = [8, 41], strides = [1, 1]} : vector<8x49xf32> to vector<8x41xf32>
    %cst_490 = arith.constant 0.000000e+00 : f32
    %875 = vector.broadcast %cst_490 : f32 to vector<8x8xf32>
    %876 = tpu.concatenate %874, %875 in 1 : vector<8x41xf32>, vector<8x8xf32> -> vector<8x49xf32>
    %cst_491 = arith.constant 0.000000e+00 : f32
    %877 = vector.shape_cast %20 : vector<1x49xi1> to vector<1x49xi1>
    %878 = vector.broadcast %877 : vector<1x49xi1> to vector<8x49xi1>
    %879 = vector.broadcast %cst_491 : f32 to vector<8x49xf32>
    %880 = arith.select %878, %876, %879 : vector<8x49xi1>, vector<8x49xf32>
    %c4_492 = arith.constant 4 : index
    %c8_493 = arith.constant 8 : index
    %c0_494 = arith.constant 0 : index
    %c0_495 = arith.constant 0 : index
    %881 = vector.load %arg3[%c4_492, %c8_493, %c0_494, %c0_495] : memref<7x9x8x8xbf16, #tpu.memory_space<vmem>>, vector<1x1x8x8xbf16>
    %882 = vector.shape_cast %881 : vector<1x1x8x8xbf16> to vector<8x8xbf16>
    %883 = arith.truncf %880 : vector<8x49xf32> to vector<8x49xbf16>
    %cst_496 = arith.constant dense<0.000000e+00> : vector<8x49xf32>
    %884 = tpu.matmul %882, %883, %cst_496 {dimension_numbers = #tpu.dot_dimension_numbers<[1], [0], [0], [1], [0, 0, 1, 1], [], []>} : vector<8x8xbf16>, vector<8x49xbf16>, vector<8x49xf32> -> vector<8x49xf32>
    %885 = arith.addf %873, %884 : vector<8x49xf32>
    %886 = vector.broadcast %697 : vector<8x1xf32> to vector<8x49xf32>
    %887 = arith.addf %885, %886 : vector<8x49xf32>
    %888 = arith.addf %887, %275 : vector<8x49xf32>
    %c0_497 = arith.constant 0 : index
    %c0_498 = arith.constant 0 : index
    %889 = vector.load %arg9[%c0_497, %c0_498] : memref<9x49xf32, #tpu.memory_space<vmem>>, vector<9x49xf32>
    %cst_499 = arith.constant dense<0.000000e+00> : vector<8x49xf32>
    %890 = tpu.matmul %695, %889, %cst_499 {dimension_numbers = #tpu.dot_dimension_numbers<[1], [0], [0], [1], [0, 0, 1, 1], [], []>} : vector<8x9xf32>, vector<9x49xf32>, vector<8x49xf32> -> vector<8x49xf32>
    %891 = arith.addf %890, %888 : vector<8x49xf32>
    %892 = vector.extract_strided_slice %42 {offsets = [0, 6], sizes = [8, 1], strides = [1, 1]} : vector<8x10xf32> to vector<8x1xf32>
    %893 = vector.extract_strided_slice %42 {offsets = [0, 7], sizes = [8, 1], strides = [1, 1]} : vector<8x10xf32> to vector<8x1xf32>
    %cst_500 = arith.constant 0.000000e+00 : f32
    %894 = vector.broadcast %cst_500 : f32 to vector<8x8xf32>
    %895 = vector.extract_strided_slice %891 {offsets = [0, 0], sizes = [8, 41], strides = [1, 1]} : vector<8x49xf32> to vector<8x41xf32>
    %896 = tpu.concatenate %894, %895 in 1 : vector<8x8xf32>, vector<8x41xf32> -> vector<8x49xf32>
    %cst_501 = arith.constant 0.000000e+00 : f32
    %897 = vector.shape_cast %18 : vector<1x49xi1> to vector<1x49xi1>
    %898 = vector.broadcast %897 : vector<1x49xi1> to vector<8x49xi1>
    %899 = vector.broadcast %cst_501 : f32 to vector<8x49xf32>
    %900 = arith.select %898, %896, %899 : vector<8x49xi1>, vector<8x49xf32>
    %c5_502 = arith.constant 5 : index
    %c0_503 = arith.constant 0 : index
    %c0_504 = arith.constant 0 : index
    %c0_505 = arith.constant 0 : index
    %901 = vector.load %arg3[%c5_502, %c0_503, %c0_504, %c0_505] : memref<7x9x8x8xbf16, #tpu.memory_space<vmem>>, vector<1x1x8x8xbf16>
    %902 = vector.shape_cast %901 : vector<1x1x8x8xbf16> to vector<8x8xbf16>
    %903 = arith.truncf %900 : vector<8x49xf32> to vector<8x49xbf16>
    %cst_506 = arith.constant dense<0.000000e+00> : vector<8x49xf32>
    %904 = tpu.matmul %902, %903, %cst_506 {dimension_numbers = #tpu.dot_dimension_numbers<[1], [0], [0], [1], [0, 0, 1, 1], [], []>} : vector<8x8xbf16>, vector<8x49xbf16>, vector<8x49xf32> -> vector<8x49xf32>
    %cst_507 = arith.constant 0.000000e+00 : f32
    %905 = vector.broadcast %cst_507 : f32 to vector<8x7xf32>
    %906 = vector.extract_strided_slice %891 {offsets = [0, 0], sizes = [8, 42], strides = [1, 1]} : vector<8x49xf32> to vector<8x42xf32>
    %907 = tpu.concatenate %905, %906 in 1 : vector<8x7xf32>, vector<8x42xf32> -> vector<8x49xf32>
    %c5_508 = arith.constant 5 : index
    %c1_509 = arith.constant 1 : index
    %c0_510 = arith.constant 0 : index
    %c0_511 = arith.constant 0 : index
    %908 = vector.load %arg3[%c5_508, %c1_509, %c0_510, %c0_511] : memref<7x9x8x8xbf16, #tpu.memory_space<vmem>>, vector<1x1x8x8xbf16>
    %909 = vector.shape_cast %908 : vector<1x1x8x8xbf16> to vector<8x8xbf16>
    %910 = arith.truncf %907 : vector<8x49xf32> to vector<8x49xbf16>
    %cst_512 = arith.constant dense<0.000000e+00> : vector<8x49xf32>
    %911 = tpu.matmul %909, %910, %cst_512 {dimension_numbers = #tpu.dot_dimension_numbers<[1], [0], [0], [1], [0, 0, 1, 1], [], []>} : vector<8x8xbf16>, vector<8x49xbf16>, vector<8x49xf32> -> vector<8x49xf32>
    %912 = arith.addf %904, %911 : vector<8x49xf32>
    %cst_513 = arith.constant 0.000000e+00 : f32
    %913 = vector.broadcast %cst_513 : f32 to vector<8x6xf32>
    %914 = vector.extract_strided_slice %891 {offsets = [0, 0], sizes = [8, 43], strides = [1, 1]} : vector<8x49xf32> to vector<8x43xf32>
    %915 = tpu.concatenate %913, %914 in 1 : vector<8x6xf32>, vector<8x43xf32> -> vector<8x49xf32>
    %cst_514 = arith.constant 0.000000e+00 : f32
    %916 = vector.shape_cast %20 : vector<1x49xi1> to vector<1x49xi1>
    %917 = vector.broadcast %916 : vector<1x49xi1> to vector<8x49xi1>
    %918 = vector.broadcast %cst_514 : f32 to vector<8x49xf32>
    %919 = arith.select %917, %915, %918 : vector<8x49xi1>, vector<8x49xf32>
    %c5_515 = arith.constant 5 : index
    %c2_516 = arith.constant 2 : index
    %c0_517 = arith.constant 0 : index
    %c0_518 = arith.constant 0 : index
    %920 = vector.load %arg3[%c5_515, %c2_516, %c0_517, %c0_518] : memref<7x9x8x8xbf16, #tpu.memory_space<vmem>>, vector<1x1x8x8xbf16>
    %921 = vector.shape_cast %920 : vector<1x1x8x8xbf16> to vector<8x8xbf16>
    %922 = arith.truncf %919 : vector<8x49xf32> to vector<8x49xbf16>
    %cst_519 = arith.constant dense<0.000000e+00> : vector<8x49xf32>
    %923 = tpu.matmul %921, %922, %cst_519 {dimension_numbers = #tpu.dot_dimension_numbers<[1], [0], [0], [1], [0, 0, 1, 1], [], []>} : vector<8x8xbf16>, vector<8x49xbf16>, vector<8x49xf32> -> vector<8x49xf32>
    %924 = arith.addf %912, %923 : vector<8x49xf32>
    %cst_520 = arith.constant 0.000000e+00 : f32
    %925 = vector.broadcast %cst_520 : f32 to vector<8x1xf32>
    %926 = vector.extract_strided_slice %891 {offsets = [0, 0], sizes = [8, 48], strides = [1, 1]} : vector<8x49xf32> to vector<8x48xf32>
    %927 = tpu.concatenate %925, %926 in 1 : vector<8x1xf32>, vector<8x48xf32> -> vector<8x49xf32>
    %cst_521 = arith.constant 0.000000e+00 : f32
    %928 = vector.shape_cast %18 : vector<1x49xi1> to vector<1x49xi1>
    %929 = vector.broadcast %928 : vector<1x49xi1> to vector<8x49xi1>
    %930 = vector.broadcast %cst_521 : f32 to vector<8x49xf32>
    %931 = arith.select %929, %927, %930 : vector<8x49xi1>, vector<8x49xf32>
    %c5_522 = arith.constant 5 : index
    %c3_523 = arith.constant 3 : index
    %c0_524 = arith.constant 0 : index
    %c0_525 = arith.constant 0 : index
    %932 = vector.load %arg3[%c5_522, %c3_523, %c0_524, %c0_525] : memref<7x9x8x8xbf16, #tpu.memory_space<vmem>>, vector<1x1x8x8xbf16>
    %933 = vector.shape_cast %932 : vector<1x1x8x8xbf16> to vector<8x8xbf16>
    %934 = arith.truncf %931 : vector<8x49xf32> to vector<8x49xbf16>
    %cst_526 = arith.constant dense<0.000000e+00> : vector<8x49xf32>
    %935 = tpu.matmul %933, %934, %cst_526 {dimension_numbers = #tpu.dot_dimension_numbers<[1], [0], [0], [1], [0, 0, 1, 1], [], []>} : vector<8x8xbf16>, vector<8x49xbf16>, vector<8x49xf32> -> vector<8x49xf32>
    %936 = arith.addf %924, %935 : vector<8x49xf32>
    %c5_527 = arith.constant 5 : index
    %c4_528 = arith.constant 4 : index
    %c0_529 = arith.constant 0 : index
    %c0_530 = arith.constant 0 : index
    %937 = vector.load %arg3[%c5_527, %c4_528, %c0_529, %c0_530] : memref<7x9x8x8xbf16, #tpu.memory_space<vmem>>, vector<1x1x8x8xbf16>
    %938 = vector.shape_cast %937 : vector<1x1x8x8xbf16> to vector<8x8xbf16>
    %939 = arith.truncf %891 : vector<8x49xf32> to vector<8x49xbf16>
    %cst_531 = arith.constant dense<0.000000e+00> : vector<8x49xf32>
    %940 = tpu.matmul %938, %939, %cst_531 {dimension_numbers = #tpu.dot_dimension_numbers<[1], [0], [0], [1], [0, 0, 1, 1], [], []>} : vector<8x8xbf16>, vector<8x49xbf16>, vector<8x49xf32> -> vector<8x49xf32>
    %941 = arith.addf %936, %940 : vector<8x49xf32>
    %942 = vector.extract_strided_slice %891 {offsets = [0, 1], sizes = [8, 48], strides = [1, 1]} : vector<8x49xf32> to vector<8x48xf32>
    %cst_532 = arith.constant 0.000000e+00 : f32
    %943 = vector.broadcast %cst_532 : f32 to vector<8x1xf32>
    %944 = tpu.concatenate %942, %943 in 1 : vector<8x48xf32>, vector<8x1xf32> -> vector<8x49xf32>
    %cst_533 = arith.constant 0.000000e+00 : f32
    %945 = vector.shape_cast %20 : vector<1x49xi1> to vector<1x49xi1>
    %946 = vector.broadcast %945 : vector<1x49xi1> to vector<8x49xi1>
    %947 = vector.broadcast %cst_533 : f32 to vector<8x49xf32>
    %948 = arith.select %946, %944, %947 : vector<8x49xi1>, vector<8x49xf32>
    %c5_534 = arith.constant 5 : index
    %c5_535 = arith.constant 5 : index
    %c0_536 = arith.constant 0 : index
    %c0_537 = arith.constant 0 : index
    %949 = vector.load %arg3[%c5_534, %c5_535, %c0_536, %c0_537] : memref<7x9x8x8xbf16, #tpu.memory_space<vmem>>, vector<1x1x8x8xbf16>
    %950 = vector.shape_cast %949 : vector<1x1x8x8xbf16> to vector<8x8xbf16>
    %951 = arith.truncf %948 : vector<8x49xf32> to vector<8x49xbf16>
    %cst_538 = arith.constant dense<0.000000e+00> : vector<8x49xf32>
    %952 = tpu.matmul %950, %951, %cst_538 {dimension_numbers = #tpu.dot_dimension_numbers<[1], [0], [0], [1], [0, 0, 1, 1], [], []>} : vector<8x8xbf16>, vector<8x49xbf16>, vector<8x49xf32> -> vector<8x49xf32>
    %953 = arith.addf %941, %952 : vector<8x49xf32>
    %954 = vector.extract_strided_slice %891 {offsets = [0, 6], sizes = [8, 43], strides = [1, 1]} : vector<8x49xf32> to vector<8x43xf32>
    %cst_539 = arith.constant 0.000000e+00 : f32
    %955 = vector.broadcast %cst_539 : f32 to vector<8x6xf32>
    %956 = tpu.concatenate %954, %955 in 1 : vector<8x43xf32>, vector<8x6xf32> -> vector<8x49xf32>
    %cst_540 = arith.constant 0.000000e+00 : f32
    %957 = vector.shape_cast %18 : vector<1x49xi1> to vector<1x49xi1>
    %958 = vector.broadcast %957 : vector<1x49xi1> to vector<8x49xi1>
    %959 = vector.broadcast %cst_540 : f32 to vector<8x49xf32>
    %960 = arith.select %958, %956, %959 : vector<8x49xi1>, vector<8x49xf32>
    %c5_541 = arith.constant 5 : index
    %c6_542 = arith.constant 6 : index
    %c0_543 = arith.constant 0 : index
    %c0_544 = arith.constant 0 : index
    %961 = vector.load %arg3[%c5_541, %c6_542, %c0_543, %c0_544] : memref<7x9x8x8xbf16, #tpu.memory_space<vmem>>, vector<1x1x8x8xbf16>
    %962 = vector.shape_cast %961 : vector<1x1x8x8xbf16> to vector<8x8xbf16>
    %963 = arith.truncf %960 : vector<8x49xf32> to vector<8x49xbf16>
    %cst_545 = arith.constant dense<0.000000e+00> : vector<8x49xf32>
    %964 = tpu.matmul %962, %963, %cst_545 {dimension_numbers = #tpu.dot_dimension_numbers<[1], [0], [0], [1], [0, 0, 1, 1], [], []>} : vector<8x8xbf16>, vector<8x49xbf16>, vector<8x49xf32> -> vector<8x49xf32>
    %965 = arith.addf %953, %964 : vector<8x49xf32>
    %966 = vector.extract_strided_slice %891 {offsets = [0, 7], sizes = [8, 42], strides = [1, 1]} : vector<8x49xf32> to vector<8x42xf32>
    %cst_546 = arith.constant 0.000000e+00 : f32
    %967 = vector.broadcast %cst_546 : f32 to vector<8x7xf32>
    %968 = tpu.concatenate %966, %967 in 1 : vector<8x42xf32>, vector<8x7xf32> -> vector<8x49xf32>
    %c5_547 = arith.constant 5 : index
    %c7_548 = arith.constant 7 : index
    %c0_549 = arith.constant 0 : index
    %c0_550 = arith.constant 0 : index
    %969 = vector.load %arg3[%c5_547, %c7_548, %c0_549, %c0_550] : memref<7x9x8x8xbf16, #tpu.memory_space<vmem>>, vector<1x1x8x8xbf16>
    %970 = vector.shape_cast %969 : vector<1x1x8x8xbf16> to vector<8x8xbf16>
    %971 = arith.truncf %968 : vector<8x49xf32> to vector<8x49xbf16>
    %cst_551 = arith.constant dense<0.000000e+00> : vector<8x49xf32>
    %972 = tpu.matmul %970, %971, %cst_551 {dimension_numbers = #tpu.dot_dimension_numbers<[1], [0], [0], [1], [0, 0, 1, 1], [], []>} : vector<8x8xbf16>, vector<8x49xbf16>, vector<8x49xf32> -> vector<8x49xf32>
    %973 = arith.addf %965, %972 : vector<8x49xf32>
    %974 = vector.extract_strided_slice %891 {offsets = [0, 8], sizes = [8, 41], strides = [1, 1]} : vector<8x49xf32> to vector<8x41xf32>
    %cst_552 = arith.constant 0.000000e+00 : f32
    %975 = vector.broadcast %cst_552 : f32 to vector<8x8xf32>
    %976 = tpu.concatenate %974, %975 in 1 : vector<8x41xf32>, vector<8x8xf32> -> vector<8x49xf32>
    %cst_553 = arith.constant 0.000000e+00 : f32
    %977 = vector.shape_cast %20 : vector<1x49xi1> to vector<1x49xi1>
    %978 = vector.broadcast %977 : vector<1x49xi1> to vector<8x49xi1>
    %979 = vector.broadcast %cst_553 : f32 to vector<8x49xf32>
    %980 = arith.select %978, %976, %979 : vector<8x49xi1>, vector<8x49xf32>
    %c5_554 = arith.constant 5 : index
    %c8_555 = arith.constant 8 : index
    %c0_556 = arith.constant 0 : index
    %c0_557 = arith.constant 0 : index
    %981 = vector.load %arg3[%c5_554, %c8_555, %c0_556, %c0_557] : memref<7x9x8x8xbf16, #tpu.memory_space<vmem>>, vector<1x1x8x8xbf16>
    %982 = vector.shape_cast %981 : vector<1x1x8x8xbf16> to vector<8x8xbf16>
    %983 = arith.truncf %980 : vector<8x49xf32> to vector<8x49xbf16>
    %cst_558 = arith.constant dense<0.000000e+00> : vector<8x49xf32>
    %984 = tpu.matmul %982, %983, %cst_558 {dimension_numbers = #tpu.dot_dimension_numbers<[1], [0], [0], [1], [0, 0, 1, 1], [], []>} : vector<8x8xbf16>, vector<8x49xbf16>, vector<8x49xf32> -> vector<8x49xf32>
    %985 = arith.addf %973, %984 : vector<8x49xf32>
    %986 = vector.broadcast %892 : vector<8x1xf32> to vector<8x49xf32>
    %987 = arith.addf %985, %986 : vector<8x49xf32>
    %cst_559 = arith.constant 0.000000e+00 : f32
    %988 = vector.broadcast %cst_559 : f32 to vector<8x49xf32>
    %989 = arith.maximumf %987, %988 : vector<8x49xf32>
    %cst_560 = arith.constant 0.000000e+00 : f32
    %990 = vector.broadcast %cst_560 : f32 to vector<8x8xf32>
    %991 = vector.extract_strided_slice %989 {offsets = [0, 0], sizes = [8, 41], strides = [1, 1]} : vector<8x49xf32> to vector<8x41xf32>
    %992 = tpu.concatenate %990, %991 in 1 : vector<8x8xf32>, vector<8x41xf32> -> vector<8x49xf32>
    %cst_561 = arith.constant 0.000000e+00 : f32
    %993 = vector.shape_cast %18 : vector<1x49xi1> to vector<1x49xi1>
    %994 = vector.broadcast %993 : vector<1x49xi1> to vector<8x49xi1>
    %995 = vector.broadcast %cst_561 : f32 to vector<8x49xf32>
    %996 = arith.select %994, %992, %995 : vector<8x49xi1>, vector<8x49xf32>
    %c6_562 = arith.constant 6 : index
    %c0_563 = arith.constant 0 : index
    %c0_564 = arith.constant 0 : index
    %c0_565 = arith.constant 0 : index
    %997 = vector.load %arg3[%c6_562, %c0_563, %c0_564, %c0_565] : memref<7x9x8x8xbf16, #tpu.memory_space<vmem>>, vector<1x1x8x8xbf16>
    %998 = vector.shape_cast %997 : vector<1x1x8x8xbf16> to vector<8x8xbf16>
    %999 = arith.truncf %996 : vector<8x49xf32> to vector<8x49xbf16>
    %cst_566 = arith.constant dense<0.000000e+00> : vector<8x49xf32>
    %1000 = tpu.matmul %998, %999, %cst_566 {dimension_numbers = #tpu.dot_dimension_numbers<[1], [0], [0], [1], [0, 0, 1, 1], [], []>} : vector<8x8xbf16>, vector<8x49xbf16>, vector<8x49xf32> -> vector<8x49xf32>
    %cst_567 = arith.constant 0.000000e+00 : f32
    %1001 = vector.broadcast %cst_567 : f32 to vector<8x7xf32>
    %1002 = vector.extract_strided_slice %989 {offsets = [0, 0], sizes = [8, 42], strides = [1, 1]} : vector<8x49xf32> to vector<8x42xf32>
    %1003 = tpu.concatenate %1001, %1002 in 1 : vector<8x7xf32>, vector<8x42xf32> -> vector<8x49xf32>
    %c6_568 = arith.constant 6 : index
    %c1_569 = arith.constant 1 : index
    %c0_570 = arith.constant 0 : index
    %c0_571 = arith.constant 0 : index
    %1004 = vector.load %arg3[%c6_568, %c1_569, %c0_570, %c0_571] : memref<7x9x8x8xbf16, #tpu.memory_space<vmem>>, vector<1x1x8x8xbf16>
    %1005 = vector.shape_cast %1004 : vector<1x1x8x8xbf16> to vector<8x8xbf16>
    %1006 = arith.truncf %1003 : vector<8x49xf32> to vector<8x49xbf16>
    %cst_572 = arith.constant dense<0.000000e+00> : vector<8x49xf32>
    %1007 = tpu.matmul %1005, %1006, %cst_572 {dimension_numbers = #tpu.dot_dimension_numbers<[1], [0], [0], [1], [0, 0, 1, 1], [], []>} : vector<8x8xbf16>, vector<8x49xbf16>, vector<8x49xf32> -> vector<8x49xf32>
    %1008 = arith.addf %1000, %1007 : vector<8x49xf32>
    %cst_573 = arith.constant 0.000000e+00 : f32
    %1009 = vector.broadcast %cst_573 : f32 to vector<8x6xf32>
    %1010 = vector.extract_strided_slice %989 {offsets = [0, 0], sizes = [8, 43], strides = [1, 1]} : vector<8x49xf32> to vector<8x43xf32>
    %1011 = tpu.concatenate %1009, %1010 in 1 : vector<8x6xf32>, vector<8x43xf32> -> vector<8x49xf32>
    %cst_574 = arith.constant 0.000000e+00 : f32
    %1012 = vector.shape_cast %20 : vector<1x49xi1> to vector<1x49xi1>
    %1013 = vector.broadcast %1012 : vector<1x49xi1> to vector<8x49xi1>
    %1014 = vector.broadcast %cst_574 : f32 to vector<8x49xf32>
    %1015 = arith.select %1013, %1011, %1014 : vector<8x49xi1>, vector<8x49xf32>
    %c6_575 = arith.constant 6 : index
    %c2_576 = arith.constant 2 : index
    %c0_577 = arith.constant 0 : index
    %c0_578 = arith.constant 0 : index
    %1016 = vector.load %arg3[%c6_575, %c2_576, %c0_577, %c0_578] : memref<7x9x8x8xbf16, #tpu.memory_space<vmem>>, vector<1x1x8x8xbf16>
    %1017 = vector.shape_cast %1016 : vector<1x1x8x8xbf16> to vector<8x8xbf16>
    %1018 = arith.truncf %1015 : vector<8x49xf32> to vector<8x49xbf16>
    %cst_579 = arith.constant dense<0.000000e+00> : vector<8x49xf32>
    %1019 = tpu.matmul %1017, %1018, %cst_579 {dimension_numbers = #tpu.dot_dimension_numbers<[1], [0], [0], [1], [0, 0, 1, 1], [], []>} : vector<8x8xbf16>, vector<8x49xbf16>, vector<8x49xf32> -> vector<8x49xf32>
    %1020 = arith.addf %1008, %1019 : vector<8x49xf32>
    %cst_580 = arith.constant 0.000000e+00 : f32
    %1021 = vector.broadcast %cst_580 : f32 to vector<8x1xf32>
    %1022 = vector.extract_strided_slice %989 {offsets = [0, 0], sizes = [8, 48], strides = [1, 1]} : vector<8x49xf32> to vector<8x48xf32>
    %1023 = tpu.concatenate %1021, %1022 in 1 : vector<8x1xf32>, vector<8x48xf32> -> vector<8x49xf32>
    %cst_581 = arith.constant 0.000000e+00 : f32
    %1024 = vector.shape_cast %18 : vector<1x49xi1> to vector<1x49xi1>
    %1025 = vector.broadcast %1024 : vector<1x49xi1> to vector<8x49xi1>
    %1026 = vector.broadcast %cst_581 : f32 to vector<8x49xf32>
    %1027 = arith.select %1025, %1023, %1026 : vector<8x49xi1>, vector<8x49xf32>
    %c6_582 = arith.constant 6 : index
    %c3_583 = arith.constant 3 : index
    %c0_584 = arith.constant 0 : index
    %c0_585 = arith.constant 0 : index
    %1028 = vector.load %arg3[%c6_582, %c3_583, %c0_584, %c0_585] : memref<7x9x8x8xbf16, #tpu.memory_space<vmem>>, vector<1x1x8x8xbf16>
    %1029 = vector.shape_cast %1028 : vector<1x1x8x8xbf16> to vector<8x8xbf16>
    %1030 = arith.truncf %1027 : vector<8x49xf32> to vector<8x49xbf16>
    %cst_586 = arith.constant dense<0.000000e+00> : vector<8x49xf32>
    %1031 = tpu.matmul %1029, %1030, %cst_586 {dimension_numbers = #tpu.dot_dimension_numbers<[1], [0], [0], [1], [0, 0, 1, 1], [], []>} : vector<8x8xbf16>, vector<8x49xbf16>, vector<8x49xf32> -> vector<8x49xf32>
    %1032 = arith.addf %1020, %1031 : vector<8x49xf32>
    %c6_587 = arith.constant 6 : index
    %c4_588 = arith.constant 4 : index
    %c0_589 = arith.constant 0 : index
    %c0_590 = arith.constant 0 : index
    %1033 = vector.load %arg3[%c6_587, %c4_588, %c0_589, %c0_590] : memref<7x9x8x8xbf16, #tpu.memory_space<vmem>>, vector<1x1x8x8xbf16>
    %1034 = vector.shape_cast %1033 : vector<1x1x8x8xbf16> to vector<8x8xbf16>
    %1035 = arith.truncf %989 : vector<8x49xf32> to vector<8x49xbf16>
    %cst_591 = arith.constant dense<0.000000e+00> : vector<8x49xf32>
    %1036 = tpu.matmul %1034, %1035, %cst_591 {dimension_numbers = #tpu.dot_dimension_numbers<[1], [0], [0], [1], [0, 0, 1, 1], [], []>} : vector<8x8xbf16>, vector<8x49xbf16>, vector<8x49xf32> -> vector<8x49xf32>
    %1037 = arith.addf %1032, %1036 : vector<8x49xf32>
    %1038 = vector.extract_strided_slice %989 {offsets = [0, 1], sizes = [8, 48], strides = [1, 1]} : vector<8x49xf32> to vector<8x48xf32>
    %cst_592 = arith.constant 0.000000e+00 : f32
    %1039 = vector.broadcast %cst_592 : f32 to vector<8x1xf32>
    %1040 = tpu.concatenate %1038, %1039 in 1 : vector<8x48xf32>, vector<8x1xf32> -> vector<8x49xf32>
    %cst_593 = arith.constant 0.000000e+00 : f32
    %1041 = vector.shape_cast %20 : vector<1x49xi1> to vector<1x49xi1>
    %1042 = vector.broadcast %1041 : vector<1x49xi1> to vector<8x49xi1>
    %1043 = vector.broadcast %cst_593 : f32 to vector<8x49xf32>
    %1044 = arith.select %1042, %1040, %1043 : vector<8x49xi1>, vector<8x49xf32>
    %c6_594 = arith.constant 6 : index
    %c5_595 = arith.constant 5 : index
    %c0_596 = arith.constant 0 : index
    %c0_597 = arith.constant 0 : index
    %1045 = vector.load %arg3[%c6_594, %c5_595, %c0_596, %c0_597] : memref<7x9x8x8xbf16, #tpu.memory_space<vmem>>, vector<1x1x8x8xbf16>
    %1046 = vector.shape_cast %1045 : vector<1x1x8x8xbf16> to vector<8x8xbf16>
    %1047 = arith.truncf %1044 : vector<8x49xf32> to vector<8x49xbf16>
    %cst_598 = arith.constant dense<0.000000e+00> : vector<8x49xf32>
    %1048 = tpu.matmul %1046, %1047, %cst_598 {dimension_numbers = #tpu.dot_dimension_numbers<[1], [0], [0], [1], [0, 0, 1, 1], [], []>} : vector<8x8xbf16>, vector<8x49xbf16>, vector<8x49xf32> -> vector<8x49xf32>
    %1049 = arith.addf %1037, %1048 : vector<8x49xf32>
    %1050 = vector.extract_strided_slice %989 {offsets = [0, 6], sizes = [8, 43], strides = [1, 1]} : vector<8x49xf32> to vector<8x43xf32>
    %cst_599 = arith.constant 0.000000e+00 : f32
    %1051 = vector.broadcast %cst_599 : f32 to vector<8x6xf32>
    %1052 = tpu.concatenate %1050, %1051 in 1 : vector<8x43xf32>, vector<8x6xf32> -> vector<8x49xf32>
    %cst_600 = arith.constant 0.000000e+00 : f32
    %1053 = vector.shape_cast %18 : vector<1x49xi1> to vector<1x49xi1>
    %1054 = vector.broadcast %1053 : vector<1x49xi1> to vector<8x49xi1>
    %1055 = vector.broadcast %cst_600 : f32 to vector<8x49xf32>
    %1056 = arith.select %1054, %1052, %1055 : vector<8x49xi1>, vector<8x49xf32>
    %c6_601 = arith.constant 6 : index
    %c6_602 = arith.constant 6 : index
    %c0_603 = arith.constant 0 : index
    %c0_604 = arith.constant 0 : index
    %1057 = vector.load %arg3[%c6_601, %c6_602, %c0_603, %c0_604] : memref<7x9x8x8xbf16, #tpu.memory_space<vmem>>, vector<1x1x8x8xbf16>
    %1058 = vector.shape_cast %1057 : vector<1x1x8x8xbf16> to vector<8x8xbf16>
    %1059 = arith.truncf %1056 : vector<8x49xf32> to vector<8x49xbf16>
    %cst_605 = arith.constant dense<0.000000e+00> : vector<8x49xf32>
    %1060 = tpu.matmul %1058, %1059, %cst_605 {dimension_numbers = #tpu.dot_dimension_numbers<[1], [0], [0], [1], [0, 0, 1, 1], [], []>} : vector<8x8xbf16>, vector<8x49xbf16>, vector<8x49xf32> -> vector<8x49xf32>
    %1061 = arith.addf %1049, %1060 : vector<8x49xf32>
    %1062 = vector.extract_strided_slice %989 {offsets = [0, 7], sizes = [8, 42], strides = [1, 1]} : vector<8x49xf32> to vector<8x42xf32>
    %cst_606 = arith.constant 0.000000e+00 : f32
    %1063 = vector.broadcast %cst_606 : f32 to vector<8x7xf32>
    %1064 = tpu.concatenate %1062, %1063 in 1 : vector<8x42xf32>, vector<8x7xf32> -> vector<8x49xf32>
    %c6_607 = arith.constant 6 : index
    %c7_608 = arith.constant 7 : index
    %c0_609 = arith.constant 0 : index
    %c0_610 = arith.constant 0 : index
    %1065 = vector.load %arg3[%c6_607, %c7_608, %c0_609, %c0_610] : memref<7x9x8x8xbf16, #tpu.memory_space<vmem>>, vector<1x1x8x8xbf16>
    %1066 = vector.shape_cast %1065 : vector<1x1x8x8xbf16> to vector<8x8xbf16>
    %1067 = arith.truncf %1064 : vector<8x49xf32> to vector<8x49xbf16>
    %cst_611 = arith.constant dense<0.000000e+00> : vector<8x49xf32>
    %1068 = tpu.matmul %1066, %1067, %cst_611 {dimension_numbers = #tpu.dot_dimension_numbers<[1], [0], [0], [1], [0, 0, 1, 1], [], []>} : vector<8x8xbf16>, vector<8x49xbf16>, vector<8x49xf32> -> vector<8x49xf32>
    %1069 = arith.addf %1061, %1068 : vector<8x49xf32>
    %1070 = vector.extract_strided_slice %989 {offsets = [0, 8], sizes = [8, 41], strides = [1, 1]} : vector<8x49xf32> to vector<8x41xf32>
    %cst_612 = arith.constant 0.000000e+00 : f32
    %1071 = vector.broadcast %cst_612 : f32 to vector<8x8xf32>
    %1072 = tpu.concatenate %1070, %1071 in 1 : vector<8x41xf32>, vector<8x8xf32> -> vector<8x49xf32>
    %cst_613 = arith.constant 0.000000e+00 : f32
    %1073 = vector.shape_cast %20 : vector<1x49xi1> to vector<1x49xi1>
    %1074 = vector.broadcast %1073 : vector<1x49xi1> to vector<8x49xi1>
    %1075 = vector.broadcast %cst_613 : f32 to vector<8x49xf32>
    %1076 = arith.select %1074, %1072, %1075 : vector<8x49xi1>, vector<8x49xf32>
    %c6_614 = arith.constant 6 : index
    %c8_615 = arith.constant 8 : index
    %c0_616 = arith.constant 0 : index
    %c0_617 = arith.constant 0 : index
    %1077 = vector.load %arg3[%c6_614, %c8_615, %c0_616, %c0_617] : memref<7x9x8x8xbf16, #tpu.memory_space<vmem>>, vector<1x1x8x8xbf16>
    %1078 = vector.shape_cast %1077 : vector<1x1x8x8xbf16> to vector<8x8xbf16>
    %1079 = arith.truncf %1076 : vector<8x49xf32> to vector<8x49xbf16>
    %cst_618 = arith.constant dense<0.000000e+00> : vector<8x49xf32>
    %1080 = tpu.matmul %1078, %1079, %cst_618 {dimension_numbers = #tpu.dot_dimension_numbers<[1], [0], [0], [1], [0, 0, 1, 1], [], []>} : vector<8x8xbf16>, vector<8x49xbf16>, vector<8x49xf32> -> vector<8x49xf32>
    %1081 = arith.addf %1069, %1080 : vector<8x49xf32>
    %1082 = vector.broadcast %893 : vector<8x1xf32> to vector<8x49xf32>
    %1083 = arith.addf %1081, %1082 : vector<8x49xf32>
    %1084 = arith.addf %1083, %891 : vector<8x49xf32>
    %c0_619 = arith.constant 0 : index
    %c0_620 = arith.constant 0 : index
    %1085 = vector.load %arg10[%c0_619, %c0_620] : memref<49x256xf32, #tpu.memory_space<vmem>>, vector<49x256xf32>
    %cst_621 = arith.constant dense<0.000000e+00> : vector<8x256xf32>
    %1086 = tpu.matmul %1084, %1085, %cst_621 {dimension_numbers = #tpu.dot_dimension_numbers<[1], [0], [0], [1], [0, 0, 1, 1], [], []>} : vector<8x49xf32>, vector<49x256xf32>, vector<8x256xf32> -> vector<8x256xf32>
    %c0_622 = arith.constant 0 : index
    %c0_623 = arith.constant 0 : index
    %c0_624 = arith.constant 0 : index
    %1087 = vector.load %arg5[%c0_622, %c0_623, %c0_624] : memref<2x8x8xbf16, #tpu.memory_space<vmem>>, vector<1x8x8xbf16>
    %1088 = vector.shape_cast %1087 : vector<1x8x8xbf16> to vector<8x8xbf16>
    %cst_625 = arith.constant 0.000000e+00 : f32
    %1089 = vector.broadcast %cst_625 : f32 to vector<8x256xf32>
    %1090 = arith.maximumf %1086, %1089 : vector<8x256xf32>
    %1091 = arith.truncf %1090 : vector<8x256xf32> to vector<8x256xbf16>
    %cst_626 = arith.constant dense<0.000000e+00> : vector<8x256xf32>
    %1092 = tpu.matmul %1088, %1091, %cst_626 {dimension_numbers = #tpu.dot_dimension_numbers<[1], [0], [0], [1], [0, 0, 1, 1], [], []>} : vector<8x8xbf16>, vector<8x256xbf16>, vector<8x256xf32> -> vector<8x256xf32>
    %1093 = vector.extract_strided_slice %42 {offsets = [0, 8], sizes = [8, 1], strides = [1, 1]} : vector<8x10xf32> to vector<8x1xf32>
    %1094 = vector.broadcast %1093 : vector<8x1xf32> to vector<8x256xf32>
    %1095 = arith.addf %1092, %1094 : vector<8x256xf32>
    %c1_627 = arith.constant 1 : index
    %c0_628 = arith.constant 0 : index
    %c0_629 = arith.constant 0 : index
    %1096 = vector.load %arg5[%c1_627, %c0_628, %c0_629] : memref<2x8x8xbf16, #tpu.memory_space<vmem>>, vector<1x8x8xbf16>
    %1097 = vector.shape_cast %1096 : vector<1x8x8xbf16> to vector<8x8xbf16>
    %cst_630 = arith.constant 0.000000e+00 : f32
    %1098 = vector.broadcast %cst_630 : f32 to vector<8x256xf32>
    %1099 = arith.maximumf %1095, %1098 : vector<8x256xf32>
    %1100 = arith.truncf %1099 : vector<8x256xf32> to vector<8x256xbf16>
    %cst_631 = arith.constant dense<0.000000e+00> : vector<8x256xf32>
    %1101 = tpu.matmul %1097, %1100, %cst_631 {dimension_numbers = #tpu.dot_dimension_numbers<[1], [0], [0], [1], [0, 0, 1, 1], [], []>} : vector<8x8xbf16>, vector<8x256xbf16>, vector<8x256xf32> -> vector<8x256xf32>
    %1102 = vector.extract_strided_slice %42 {offsets = [0, 9], sizes = [8, 1], strides = [1, 1]} : vector<8x10xf32> to vector<8x1xf32>
    %1103 = vector.broadcast %1102 : vector<8x1xf32> to vector<8x256xf32>
    %1104 = arith.addf %1101, %1103 : vector<8x256xf32>
    %1105 = arith.negf %1104 : vector<8x256xf32>
    %1106 = math.exp %1105 : vector<8x256xf32>
    %cst_632 = arith.constant 1.000000e+00 : f32
    %1107 = vector.broadcast %cst_632 : f32 to vector<8x256xf32>
    %1108 = arith.addf %1107, %1106 : vector<8x256xf32>
    %1109 = arith.divf %1107, %1108 : vector<8x256xf32>
    %c0_633 = arith.constant 0 : index
    %c0_634 = arith.constant 0 : index
    %c0_635 = arith.constant 0 : index
    %1110 = vector.load %arg11[%c0_633, %c0_634, %c0_635] : memref<1x8x256xf32, #tpu.memory_space<vmem>>, vector<1x8x256xf32>
    %1111 = vector.shape_cast %1110 : vector<1x8x256xf32> to vector<8x256xf32>
    %1112 = vector.shape_cast %1109 : vector<8x256xf32> to vector<1x8x256xf32>
    tpu.vector_store %arg11[%c0_633, %c0_634, %c0_635], %1112 {strides = array<i32>} : memref<1x8x256xf32, #tpu.memory_space<vmem>>, vector<1x8x256xf32>,
    return
  }
  func.func @transform_0(%arg0: i32) -> (i32, i32, i32) {
    %c0_i32 = arith.constant 0 : i32
    %c0_i32_0 = arith.constant 0 : i32
    %c0_i32_1 = arith.constant 0 : i32
    return %arg0, %c0_i32, %c0_i32_0 : i32, i32, i32
  }
  func.func @transform_1(%arg0: i32) -> (i32, i32, i32) {
    %c0_i32 = arith.constant 0 : i32
    %c0_i32_0 = arith.constant 0 : i32
    %c0_i32_1 = arith.constant 0 : i32
    %c0_i32_2 = arith.constant 0 : i32
    return %c0_i32, %c0_i32_0, %c0_i32_1 : i32, i32, i32
  }
  func.func @transform_2(%arg0: i32) -> (i32, i32, i32, i32) {
    %c0_i32 = arith.constant 0 : i32
    %c0_i32_0 = arith.constant 0 : i32
    %c0_i32_1 = arith.constant 0 : i32
    %c0_i32_2 = arith.constant 0 : i32
    %c0_i32_3 = arith.constant 0 : i32
    return %c0_i32, %c0_i32_0, %c0_i32_1, %c0_i32_2 : i32, i32, i32, i32
  }
  func.func @transform_3(%arg0: i32) -> (i32, i32) {
    %c0_i32 = arith.constant 0 : i32
    %c0_i32_0 = arith.constant 0 : i32
    %c0_i32_1 = arith.constant 0 : i32
    return %c0_i32, %c0_i32_0 : i32, i32
  }
  func.func @transform_4(%arg0: i32) -> (i32, i32, i32) {
    %c0_i32 = arith.constant 0 : i32
    %c0_i32_0 = arith.constant 0 : i32
    %c0_i32_1 = arith.constant 0 : i32
    %c0_i32_2 = arith.constant 0 : i32
    return %c0_i32, %c0_i32_0, %c0_i32_1 : i32, i32, i32
  }
  func.func @transform_5(%arg0: i32) -> (i32, i32) {
    %c0_i32 = arith.constant 0 : i32
    %c0_i32_0 = arith.constant 0 : i32
    %c0_i32_1 = arith.constant 0 : i32
    return %c0_i32, %c0_i32_0 : i32, i32
  }
  func.func @transform_6(%arg0: i32) -> (i32, i32) {
    %c0_i32 = arith.constant 0 : i32
    %c0_i32_0 = arith.constant 0 : i32
    %c0_i32_1 = arith.constant 0 : i32
    return %c0_i32, %c0_i32_0 : i32, i32
  }
  func.func @transform_7(%arg0: i32) -> (i32, i32) {
    %c0_i32 = arith.constant 0 : i32
    %c0_i32_0 = arith.constant 0 : i32
    %c0_i32_1 = arith.constant 0 : i32
    return %c0_i32, %c0_i32_0 : i32, i32
  }
  func.func @transform_8(%arg0: i32) -> (i32, i32) {
    %c0_i32 = arith.constant 0 : i32
    %c0_i32_0 = arith.constant 0 : i32
    %c0_i32_1 = arith.constant 0 : i32
    return %c0_i32, %c0_i32_0 : i32, i32
  }
  func.func @transform_9(%arg0: i32) -> (i32, i32) {
    %c0_i32 = arith.constant 0 : i32
    %c0_i32_0 = arith.constant 0 : i32
    %c0_i32_1 = arith.constant 0 : i32
    return %c0_i32, %c0_i32_0 : i32, i32
  }
  func.func @transform_10(%arg0: i32) -> (i32, i32, i32) {
    %c0_i32 = arith.constant 0 : i32
    %c0_i32_0 = arith.constant 0 : i32
    %c0_i32_1 = arith.constant 0 : i32
    return %arg0, %c0_i32, %c0_i32_0 : i32, i32, i32
  }
}

</mosaic_0001>

<llo_original>
// kernel: soft_mask_branch_forward.1
$region0: #{soft_mask_branch_forward.1}
  #allocation0 [shape = 'u32[]', space=smem, size = 0x4, offset = 0x4, fixed_abs, tag = 'smem constant byte address 0x4 - core index']
  #allocation1 [shape = 'u32[144,128]{1,0:T(1,128)}', space=vmem, size = 0x12000, scoped, tag = 'internal scratch']
  %s0 = inlined_call_operand.vmem [shape: bf16[6,4,256], index: 0, kind: input, shape index: {}]
  %s1 = inlined_call_operand.vmem [shape: bf16[9,8,4], index: 1, kind: input, shape index: {}]
  %s2 = inlined_call_operand.vmem [shape: bf16[7,9,8,8], index: 2, kind: input, shape index: {}]
  %s3 = inlined_call_operand.vmem [shape: bf16[8,4], index: 3, kind: input, shape index: {}]
  %s4 = inlined_call_operand.vmem [shape: bf16[2,8,8], index: 4, kind: input, shape index: {}]
  %s5 = inlined_call_operand.vmem [shape: f32[8,10], index: 5, kind: input, shape index: {}]
  %s6 = inlined_call_operand.vmem [shape: f32[256,49], index: 6, kind: input, shape index: {}]
  %s7 = inlined_call_operand.vmem [shape: f32[49,9], index: 7, kind: input, shape index: {}]
  %s8 = inlined_call_operand.vmem [shape: f32[9,49], index: 8, kind: input, shape index: {}]
  %s9 = inlined_call_operand.vmem [shape: f32[49,256], index: 9, kind: input, shape index: {}]
  %s10 = inlined_call_operand.vmem [shape: f32[6,8,256], index: 10, kind: output, shape index: {}]
  %s11 = sld [smem:[#allocation0]]
  $region73: #{soft_mask_branch_forward.1} parent=0
    _
  %s13 = ssub.s32 1, %s11
  %s14 = scalar_select 0, %s13, %s11
  loop: start=0, step=1, limit=8
  $region2: #{soft_mask_branch_forward.1} parent=0 // loop_pre_header
    _
  $region3: #{soft_mask_branch_forward.1} parent=0 // loop_header
    %s16 = sphi 0, %s20
    %p17 = scmp.ge.s32.totalorder %s16, 8
    %s26 = sphi 0, %s28
    %s29 = sphi 0, %s26
    %s30 = sphi 0, %s29
    %s46 = sphi 0, %s30
    %s50 = sphi 0, %s50
    %s52 = sphi 0, %s50
    %s53 = sphi 0, %s52
    %s67 = sphi 0, %s53
    %s71 = sphi 0, %s71
    %s73 = sphi 0, %s71
    %s74 = sphi 0, %s73
    %s88 = sphi 0, %s74
    %s92 = sphi 0, %s92
    %s94 = sphi 0, %s92
    %s95 = sphi 0, %s94
    %s109 = sphi 0, %s95
    %s113 = sphi 0, %s113
    %s115 = sphi 0, %s113
    %s116 = sphi 0, %s115
    %s130 = sphi 0, %s116
    %s134 = sphi 0, %s134
    %s136 = sphi 0, %s134
    %s137 = sphi 0, %s136
    %s151 = sphi 0, %s137
    %s155 = sphi 0, %s155
    %s157 = sphi 0, %s155
    %s158 = sphi 0, %s157
    %s172 = sphi 0, %s158
    %s176 = sphi 0, %s176
    %s178 = sphi 0, %s176
    %s179 = sphi 0, %s178
    %s193 = sphi 0, %s179
    %s197 = sphi 0, %s197
    %s199 = sphi 0, %s197
    %s200 = sphi 0, %s199
    %s214 = sphi 0, %s200
    %s218 = sphi 0, %s218
    %s220 = sphi 0, %s218
    %s221 = sphi 0, %s220
    %s235 = sphi 0, %s221
    %s241 = sphi 0, %s243
    %s244 = sphi 0, %s241
    %s245 = sphi 0, %s244
    %s261 = sphi 0, %s245
  $region4: #{soft_mask_branch_forward.1} parent=0 // loop_header_branch
    %19 = sbr.rel (%p17) target = $region8
  $region5: #{soft_mask_branch_forward.1} parent=0 // loop_body
    %s21 = ssub.s32 %s16, 1
    %s22 = ssub.s32 %s16, 2
    %s23 = sadd.s32 %s16, 1
    %s24 = ssub.s32 %s16, %s23
    %p25 = scmp.eq.s32.totalorder %s24, 0
    %s27 = sadd.s32 %s26, 1
    %s28 = scalar_select %p25, %s26, %s27
    %p31 = pneg %p25
    %p32 = scmp.eq.s32.totalorder %s16, 5
    %p33 = por %p31, %p32
    %p34 = scmp.ne.s32.totalorder %s26, %s29
    %p35 = scmp.eq.s32.totalorder %s16, 0
    %p36 = por %p34, %p35
    %p37 = scmp.ne.s32.totalorder %s26, %s29
    %p38 = scmp.eq.s32.totalorder %s21, 5
    %p39 = por %p37, %p38
    %p40 = scmp.ne.s32.totalorder %s29, %s30
    %p41 = scmp.eq.s32.totalorder %s21, 0
    %p42 = por %p40, %p41
    %p43 = scmp.ne.s32.totalorder %s29, %s30
    %p44 = scmp.eq.s32.totalorder %s22, 5
    %p45 = por %p43, %p44
    %p47 = scmp.ne.s32.totalorder %s30, %s46
    %p48 = scmp.eq.s32.totalorder %s22, 0
    %p49 = por %p47, %p48
    %s51 = sadd.s32 %s50, 1
    %p54 = scmp.eq.s32.totalorder %s16, 5
    %p55 = scmp.ne.s32.totalorder %s50, %s52
    %p56 = scmp.eq.s32.totalorder %s16, 0
    %p57 = por %p55, %p56
    %p58 = scmp.ne.s32.totalorder %s50, %s52
    %p59 = scmp.eq.s32.totalorder %s21, 5
    %p60 = por %p58, %p59
    %p61 = scmp.ne.s32.totalorder %s52, %s53
    %p62 = scmp.eq.s32.totalorder %s21, 0
    %p63 = por %p61, %p62
    %p64 = scmp.ne.s32.totalorder %s52, %s53
    %p65 = scmp.eq.s32.totalorder %s22, 5
    %p66 = por %p64, %p65
    %p68 = scmp.ne.s32.totalorder %s53, %s67
    %p69 = scmp.eq.s32.totalorder %s22, 0
    %p70 = por %p68, %p69
    %s72 = sadd.s32 %s71, 1
    %p75 = scmp.eq.s32.totalorder %s16, 5
    %p76 = scmp.ne.s32.totalorder %s71, %s73
    %p77 = scmp.eq.s32.totalorder %s16, 0
    %p78 = por %p76, %p77
    %p79 = scmp.ne.s32.totalorder %s71, %s73
    %p80 = scmp.eq.s32.totalorder %s21, 5
    %p81 = por %p79, %p80
    %p82 = scmp.ne.s32.totalorder %s73, %s74
    %p83 = scmp.eq.s32.totalorder %s21, 0
    %p84 = por %p82, %p83
    %p85 = scmp.ne.s32.totalorder %s73, %s74
    %p86 = scmp.eq.s32.totalorder %s22, 5
    %p87 = por %p85, %p86
    %p89 = scmp.ne.s32.totalorder %s74, %s88
    %p90 = scmp.eq.s32.totalorder %s22, 0
    %p91 = por %p89, %p90
    %s93 = sadd.s32 %s92, 1
    %p96 = scmp.eq.s32.totalorder %s16, 5
    %p97 = scmp.ne.s32.totalorder %s92, %s94
    %p98 = scmp.eq.s32.totalorder %s16, 0
    %p99 = por %p97, %p98
    %p100 = scmp.ne.s32.totalorder %s92, %s94
    %p101 = scmp.eq.s32.totalorder %s21, 5
    %p102 = por %p100, %p101
    %p103 = scmp.ne.s32.totalorder %s94, %s95
    %p104 = scmp.eq.s32.totalorder %s21, 0
    %p105 = por %p103, %p104
    %p106 = scmp.ne.s32.totalorder %s94, %s95
    %p107 = scmp.eq.s32.totalorder %s22, 5
    %p108 = por %p106, %p107
    %p110 = scmp.ne.s32.totalorder %s95, %s109
    %p111 = scmp.eq.s32.totalorder %s22, 0
    %p112 = por %p110, %p111
    %s114 = sadd.s32 %s113, 1
    %p117 = scmp.eq.s32.totalorder %s16, 5
    %p118 = scmp.ne.s32.totalorder %s113, %s115
    %p119 = scmp.eq.s32.totalorder %s16, 0
    %p120 = por %p118, %p119
    %p121 = scmp.ne.s32.totalorder %s113, %s115
    %p122 = scmp.eq.s32.totalorder %s21, 5
    %p123 = por %p121, %p122
    %p124 = scmp.ne.s32.totalorder %s115, %s116
    %p125 = scmp.eq.s32.totalorder %s21, 0
    %p126 = por %p124, %p125
    %p127 = scmp.ne.s32.totalorder %s115, %s116
    %p128 = scmp.eq.s32.totalorder %s22, 5
    %p129 = por %p127, %p128
    %p131 = scmp.ne.s32.totalorder %s116, %s130
    %p132 = scmp.eq.s32.totalorder %s22, 0
    %p133 = por %p131, %p132
    %s135 = sadd.s32 %s134, 1
    %p138 = scmp.eq.s32.totalorder %s16, 5
    %p139 = scmp.ne.s32.totalorder %s134, %s136
    %p140 = scmp.eq.s32.totalorder %s16, 0
    %p141 = por %p139, %p140
    %p142 = scmp.ne.s32.totalorder %s134, %s136
    %p143 = scmp.eq.s32.totalorder %s21, 5
    %p144 = por %p142, %p143
    %p145 = scmp.ne.s32.totalorder %s136, %s137
    %p146 = scmp.eq.s32.totalorder %s21, 0
    %p147 = por %p145, %p146
    %p148 = scmp.ne.s32.totalorder %s136, %s137
    %p149 = scmp.eq.s32.totalorder %s22, 5
    %p150 = por %p148, %p149
    %p152 = scmp.ne.s32.totalorder %s137, %s151
    %p153 = scmp.eq.s32.totalorder %s22, 0
    %p154 = por %p152, %p153
    %s156 = sadd.s32 %s155, 1
    %p159 = scmp.eq.s32.totalorder %s16, 5
    %p160 = scmp.ne.s32.totalorder %s155, %s157
    %p161 = scmp.eq.s32.totalorder %s16, 0
    %p162 = por %p160, %p161
    %p163 = scmp.ne.s32.totalorder %s155, %s157
    %p164 = scmp.eq.s32.totalorder %s21, 5
    %p165 = por %p163, %p164
    %p166 = scmp.ne.s32.totalorder %s157, %s158
    %p167 = scmp.eq.s32.totalorder %s21, 0
    %p168 = por %p166, %p167
    %p169 = scmp.ne.s32.totalorder %s157, %s158
    %p170 = scmp.eq.s32.totalorder %s22, 5
    %p171 = por %p169, %p170
    %p173 = scmp.ne.s32.totalorder %s158, %s172
    %p174 = scmp.eq.s32.totalorder %s22, 0
    %p175 = por %p173, %p174
    %s177 = sadd.s32 %s176, 1
    %p180 = scmp.eq.s32.totalorder %s16, 5
    %p181 = scmp.ne.s32.totalorder %s176, %s178
    %p182 = scmp.eq.s32.totalorder %s16, 0
    %p183 = por %p181, %p182
    %p184 = scmp.ne.s32.totalorder %s176, %s178
    %p185 = scmp.eq.s32.totalorder %s21, 5
    %p186 = por %p184, %p185
    %p187 = scmp.ne.s32.totalorder %s178, %s179
    %p188 = scmp.eq.s32.totalorder %s21, 0
    %p189 = por %p187, %p188
    %p190 = scmp.ne.s32.totalorder %s178, %s179
    %p191 = scmp.eq.s32.totalorder %s22, 5
    %p192 = por %p190, %p191
    %p194 = scmp.ne.s32.totalorder %s179, %s193
    %p195 = scmp.eq.s32.totalorder %s22, 0
    %p196 = por %p194, %p195
    %s198 = sadd.s32 %s197, 1
    %p201 = scmp.eq.s32.totalorder %s16, 5
    %p202 = scmp.ne.s32.totalorder %s197, %s199
    %p203 = scmp.eq.s32.totalorder %s16, 0
    %p204 = por %p202, %p203
    %p205 = scmp.ne.s32.totalorder %s197, %s199
    %p206 = scmp.eq.s32.totalorder %s21, 5
    %p207 = por %p205, %p206
    %p208 = scmp.ne.s32.totalorder %s199, %s200
    %p209 = scmp.eq.s32.totalorder %s21, 0
    %p210 = por %p208, %p209
    %p211 = scmp.ne.s32.totalorder %s199, %s200
    %p212 = scmp.eq.s32.totalorder %s22, 5
    %p213 = por %p211, %p212
    %p215 = scmp.ne.s32.totalorder %s200, %s214
    %p216 = scmp.eq.s32.totalorder %s22, 0
    %p217 = por %p215, %p216
    %s219 = sadd.s32 %s218, 1
    %p222 = scmp.eq.s32.totalorder %s16, 5
    %p223 = scmp.ne.s32.totalorder %s218, %s220
    %p224 = scmp.eq.s32.totalorder %s16, 0
    %p225 = por %p223, %p224
    %p226 = scmp.ne.s32.totalorder %s218, %s220
    %p227 = scmp.eq.s32.totalorder %s21, 5
    %p228 = por %p226, %p227
    %p229 = scmp.ne.s32.totalorder %s220, %s221
    %p230 = scmp.eq.s32.totalorder %s21, 0
    %p231 = por %p229, %p230
    %p232 = scmp.ne.s32.totalorder %s220, %s221
    %p233 = scmp.eq.s32.totalorder %s22, 5
    %p234 = por %p232, %p233
    %p236 = scmp.ne.s32.totalorder %s221, %s235
    %p237 = scmp.eq.s32.totalorder %s22, 0
    %p238 = por %p236, %p237
    %s239 = ssub.s32 %s16, %s23
    %p240 = scmp.eq.s32.totalorder %s239, 0
    %s242 = sadd.s32 %s241, 1
    %s243 = scalar_select %p240, %s241, %s242
    %p246 = pneg %p240
    %p247 = scmp.eq.s32.totalorder %s16, 5
    %p248 = por %p246, %p247
    %p249 = scmp.ne.s32.totalorder %s241, %s244
    %p250 = scmp.eq.s32.totalorder %s16, 0
    %p251 = por %p249, %p250
    %p252 = scmp.ne.s32.totalorder %s241, %s244
    %p253 = scmp.eq.s32.totalorder %s21, 5
    %p254 = por %p252, %p253
    %p255 = scmp.ne.s32.totalorder %s244, %s245
    %p256 = scmp.eq.s32.totalorder %s21, 0
    %p257 = por %p255, %p256
    %p258 = scmp.ne.s32.totalorder %s244, %s245
    %p259 = scmp.eq.s32.totalorder %s22, 5
    %p260 = por %p258, %p259
    %p262 = scmp.ne.s32.totalorder %s245, %s261
    %p263 = scmp.eq.s32.totalorder %s22, 0
    %p264 = por %p262, %p263
    %p265 = scmp.le.s32.totalorder 1, %s16
    %p266 = scmp.lt.s32.totalorder %s16, 7
    %p267 = pnand %p265, %p266
    %p268 = pneg %p267
    // Predicated region
    $region9: #{soft_mask_branch_forward.1} parent=5 // pred_check
      _
    $region10: #{soft_mask_branch_forward.1} parent=5 // pred_check_branch
      %270 = sbr.rel (%p267) target = $region12
    $region11: #{soft_mask_branch_forward.1} parent=5 // pred_region
      %s271 = ssub.s32 %s16, 1
      // Predicated region
      $region13: #{soft_mask_branch_forward.1} parent=11 // pred_check
        %p272 = pneg %p63
      $region14: #{soft_mask_branch_forward.1} parent=11 // pred_check_branch
        %274 = sbr.rel (%p272) target = $region16
      $region15: #{soft_mask_branch_forward.1} parent=11 // pred_region
        _
      $region16: #{soft_mask_branch_forward.1} parent=11 // pred_fallthru
        _
      // Predicated region
      $region17: #{soft_mask_branch_forward.1} parent=11 // pred_check
        %p275 = pneg %p84
      $region18: #{soft_mask_branch_forward.1} parent=11 // pred_check_branch
        %277 = sbr.rel (%p275) target = $region20
      $region19: #{soft_mask_branch_forward.1} parent=11 // pred_region
        _
      $region20: #{soft_mask_branch_forward.1} parent=11 // pred_fallthru
        _
      // Predicated region
      $region21: #{soft_mask_branch_forward.1} parent=11 // pred_check
        %p278 = pneg %p105
      $region22: #{soft_mask_branch_forward.1} parent=11 // pred_check_branch
        %280 = sbr.rel (%p278) target = $region24
      $region23: #{soft_mask_branch_forward.1} parent=11 // pred_region
        _
      $region24: #{soft_mask_branch_forward.1} parent=11 // pred_fallthru
        _
      // Predicated region
      $region25: #{soft_mask_branch_forward.1} parent=11 // pred_check
        %p281 = pneg %p126
      $region26: #{soft_mask_branch_forward.1} parent=11 // pred_check_branch
        %283 = sbr.rel (%p281) target = $region28
      $region27: #{soft_mask_branch_forward.1} parent=11 // pred_region
        _
      $region28: #{soft_mask_branch_forward.1} parent=11 // pred_fallthru
        _
      // Predicated region
      $region29: #{soft_mask_branch_forward.1} parent=11 // pred_check
        %p284 = pneg %p147
      $region30: #{soft_mask_branch_forward.1} parent=11 // pred_check_branch
        %286 = sbr.rel (%p284) target = $region32
      $region31: #{soft_mask_branch_forward.1} parent=11 // pred_region
        _
      $region32: #{soft_mask_branch_forward.1} parent=11 // pred_fallthru
        _
      // Predicated region
      $region33: #{soft_mask_branch_forward.1} parent=11 // pred_check
        %p287 = pneg %p168
      $region34: #{soft_mask_branch_forward.1} parent=11 // pred_check_branch
        %289 = sbr.rel (%p287) target = $region36
      $region35: #{soft_mask_branch_forward.1} parent=11 // pred_region
        _
      $region36: #{soft_mask_branch_forward.1} parent=11 // pred_fallthru
        _
      // Predicated region
      $region37: #{soft_mask_branch_forward.1} parent=11 // pred_check
        %p290 = pneg %p189
      $region38: #{soft_mask_branch_forward.1} parent=11 // pred_check_branch
        %292 = sbr.rel (%p290) target = $region40
      $region39: #{soft_mask_branch_forward.1} parent=11 // pred_region
        _
      $region40: #{soft_mask_branch_forward.1} parent=11 // pred_fallthru
        _
      // Predicated region
      $region41: #{soft_mask_branch_forward.1} parent=11 // pred_check
        %p293 = pneg %p210
      $region42: #{soft_mask_branch_forward.1} parent=11 // pred_check_branch
        %295 = sbr.rel (%p293) target = $region44
      $region43: #{soft_mask_branch_forward.1} parent=11 // pred_region
        _
      $region44: #{soft_mask_branch_forward.1} parent=11 // pred_fallthru
        _
      // Predicated region
      $region45: #{soft_mask_branch_forward.1} parent=11 // pred_check
        %p296 = pneg %p231
      $region46: #{soft_mask_branch_forward.1} parent=11 // pred_check_branch
        %298 = sbr.rel (%p296) target = $region48
      $region47: #{soft_mask_branch_forward.1} parent=11 // pred_region
        _
      $region48: #{soft_mask_branch_forward.1} parent=11 // pred_fallthru
        _
    $region12: #{soft_mask_branch_forward.1} parent=5 // pred_fallthru
      _
    %p299 = scmp.lt.s32.totalorder %s16, 6
    // Predicated region
    $region49: #{soft_mask_branch_forward.1} parent=5 // pred_check
      %p300 = pneg %p299
    $region50: #{soft_mask_branch_forward.1} parent=5 // pred_check_branch
      %302 = sbr.rel (%p300) target = $region52
    $region51: #{soft_mask_branch_forward.1} parent=5 // pred_region
      // Predicated region
      $region53: #{soft_mask_branch_forward.1} parent=51 // pred_check
        %p303 = pneg %p36
      $region54: #{soft_mask_branch_forward.1} parent=51 // pred_check_branch
        %305 = sbr.rel (%p303) target = $region56
      $region55: #{soft_mask_branch_forward.1} parent=51 // pred_region
        %p306 = scmp.lt.s32.totalorder %s16, 5
        %s307 = scalar_select %p306, %s16, 5
        %s308 = smul.addr %s307, 2
        %s309 = smul.addr %s308, 2
        %s310 = scalar_lea.vmem %s0, %s309
      $region56: #{soft_mask_branch_forward.1} parent=51 // pred_fallthru
        _
    $region52: #{soft_mask_branch_forward.1} parent=5 // pred_fallthru
      _
    %p311 = scmp.le.s32.totalorder 1, %s16
    %p312 = scmp.lt.s32.totalorder %s16, 7
    %p313 = pnand %p311, %p312
    %p314 = pneg %p313
    // Predicated region
    $region57: #{soft_mask_branch_forward.1} parent=5 // pred_check
      _
    $region58: #{soft_mask_branch_forward.1} parent=5 // pred_check_branch
      %316 = sbr.rel (%p313) target = $region60
    $region59: #{soft_mask_branch_forward.1} parent=5 // pred_region
      %s317 = ssub.s32 %s16, 1
      %p318 = scmp.lt.s32.totalorder %s21, 5
      %s319 = scalar_select %p318, %s21, 5
      %s320 = smul.addr %s319, 2
      %s321 = smul.addr %s320, 2
      %s322 = scalar_lea.vmem %s0, %s321
      %p323 = pneg %p42
      %p324 = pneg %p39
      %p325 = pneg %p63
      %p326 = pneg %p60
      %p327 = pneg %p84
      %p328 = pneg %p81
      %p329 = pneg %p105
      %p330 = pneg %p102
      %p331 = pneg %p126
      %p332 = pneg %p123
      %p333 = pneg %p147
      %p334 = pneg %p144
      %p335 = pneg %p168
      %p336 = pneg %p165
      %p337 = pneg %p189
      %p338 = pneg %p186
      %p339 = pneg %p210
      %p340 = pneg %p207
      %p341 = pneg %p231
      %p342 = pneg %p228
      %p343 = pneg %p257
      %p344 = pneg %p254
      %p345 = scmp.lt.s32.totalorder %s21, 5
      %s346 = scalar_select %p345, %s21, 5
      %s347 = smul.addr %s346, 2
      %s348 = smul.addr %s347, 8
      %s349 = scalar_lea.vmem %s10, %s348
      %p350 = scmp.lt.s32.totalorder %s21, 5
      %s351 = scalar_select %p350, %s21, 5
      %s352 = smul.addr %s351, 2
      %s353 = smul.addr %s352, 2
      %s354 = scalar_lea.vmem %s0, %s353
      %p355 = scmp.lt.s32.totalorder %s21, 5
      %s356 = scalar_select %p355, %s21, 5
      %s357 = smul.addr %s356, 2
      %s358 = smul.addr %s357, 8
      %s359 = scalar_lea.vmem %s10, %s358
      %v361 = vlaneseq
      %v362 = vand.u32 %v361, 127
      %vm363 = vcmp.lt.s32.totalorder %v362, 0
      %v364 = vsub.s32 0, %v362
      %v365 = vsel %vm363, %v364, %v362
      %v366 = vmul.u32.u64.compose %v365, 2454267026
      %v367 = vextract.low.u32 %v366
      %v368 = vextract.high.u32 %v366
      %vm369 = vc.u32 %v367, 2454267026
      %v370 = vsel %vm369, 1, 0
      %v371 = vadd.s32 %v368, %v370
      %v372 = vshrl.u32 %v371, 2
      %v373 = vmul.u32 %v372, 7
      %v374 = vsub.s32 %v365, %v373
      %v375 = vsub.s32 0, %v374
      %v376 = vsel %vm363, %v375, %v374
      %vm377 = vcmp.ne.s32.totalorder %v376, 0
      %vm378 = vcmp.lt.s32.totalorder %v376, 0
      %vm379 = vmand %vm378, %vm377
      %v380 = vadd.s32 %v376, 7
      %v381 = vsel %vm379, %v380, %v376
      %vm382 = vcmp.ge.s32.totalorder %v381, 1
      %vm383 = vcmp.lt.s32.totalorder %v381, 6
      %vm384 = vcmp.lt.s32.totalorder %v362, 0
      %v385 = vsub.s32 0, %v362
      %v386 = vsel %vm384, %v385, %v362
      %v387 = vmul.u32.u64.compose %v386, 2863311531
      %v388 = vextract.low.u32 %v387
      %v389 = vextract.high.u32 %v387
      %v390 = vshrl.u32 %v389, 1
      %v391 = vmul.u32 %v390, 3
      %v392 = vsub.s32 %v386, %v391
      %v393 = vsub.s32 0, %v392
      %v394 = vsel %vm384, %v393, %v392
      %vm395 = vcmp.ne.s32.totalorder %v394, 0
      %vm396 = vcmp.lt.s32.totalorder %v394, 0
      %vm397 = vmand %vm396, %vm395
      %v398 = vadd.s32 %v394, 3
      %v399 = vsel %vm397, %v398, %v394
      %vm400 = vcmp.ge.s32.totalorder %v399, 1
      %vm401 = vcmp.lt.s32.totalorder %v399, 2
      %v402 = vld [vmem:[%s5] sm:$0xff]
      %v403 = vld [vmem:[%s3] sm:$0xf]
      %v404 = vld [vmem:[%s354] sm:$0xf]
      %v405 = vunpack.c.l.bf16 %v404
      %v406 = vld [vmem:[%s6] sm:$0xff]
      %v407 = vld [vmem:[%s6 + $0x8] sm:$0xff]
      %v408 = vld [vmem:[%s6 + $0x10] sm:$0xff]
      %v409 = vld [vmem:[%s6 + $0x18] sm:$0xff]
      %v410 = vld [vmem:[%s6 + $0x20] sm:$0xff]
      %v411 = vld [vmem:[%s6 + $0x28] sm:$0xff]
      %v412 = vld [vmem:[%s6 + $0x30] sm:$0xff]
      %v413 = vld [vmem:[%s6 + $0x38] sm:$0xff]
      %v414 = vld [vmem:[%s6 + $0x40] sm:$0xff]
      %v415 = vld [vmem:[%s6 + $0x48] sm:$0xff]
      %v416 = vld [vmem:[%s6 + $0x50] sm:$0xff]
      %v417 = vld [vmem:[%s6 + $0x58] sm:$0xff]
      %v418 = vld [vmem:[%s6 + $0x60] sm:$0xff]
      %v419 = vld [vmem:[%s6 + $0x68] sm:$0xff]
      %v420 = vld [vmem:[%s6 + $0x70] sm:$0xff]
      %v421 = vld [vmem:[%s6 + $0x78] sm:$0xff]
      %v422 = vld [vmem:[%s6 + $0x80] sm:$0xff]
      %v423 = vld [vmem:[%s6 + $0x88] sm:$0xff]
      %v424 = vld [vmem:[%s6 + $0x90] sm:$0xff]
      %v425 = vld [vmem:[%s6 + $0x98] sm:$0xff]
      %v426 = vld [vmem:[%s6 + $0xa0] sm:$0xff]
      %v427 = vld [vmem:[%s6 + $0xa8] sm:$0xff]
      %v428 = vld [vmem:[%s6 + $0xb0] sm:$0xff]
      %v429 = vld [vmem:[%s6 + $0xb8] sm:$0xff]
      %v430 = vld [vmem:[%s6 + $0xc0] sm:$0xff]
      %v431 = vld [vmem:[%s6 + $0xc8] sm:$0xff]
      %v432 = vld [vmem:[%s6 + $0xd0] sm:$0xff]
      %v433 = vld [vmem:[%s6 + $0xd8] sm:$0xff]
      %v434 = vld [vmem:[%s6 + $0xe0] sm:$0xff]
      %v435 = vld [vmem:[%s6 + $0xe8] sm:$0xff]
      %v436 = vld [vmem:[%s6 + $0xf0] sm:$0xff]
      %v437 = vld [vmem:[%s6 + $0xf8] sm:$0xff]
      %v439 = vcombine.high %v405, %v405
      %440 = vrot.lane.b32.xlu0 %v405, 127
      %v441 = vpop.permute.xlu0 %440
      %442 = vrot.lane.b32.xlu0 %v439, 127
      %v443 = vpop.permute.xlu0 %442
      %vm444 = vcmask 1039360
      %v445 = vsel %vm444, %v441, %v443
      %v447 = vsel %vm444, %v443, 0.0
      %v449 = vcombine.low %v445, %v447
      %v451 = vmax.f32 %v405, %v449
      %452 = vrot.lane.b32.xlu0 %v405, 126
      %v453 = vpop.permute.xlu0 %452
      %454 = vrot.lane.b32.xlu0 %v439, 126
      %v455 = vpop.permute.xlu0 %454
      %vm456 = vcmask 1031168
      %v457 = vsel %vm456, %v453, %v455
      %v459 = vsel %vm456, %v455, 0.0
      %v461 = vcombine.low %v457, %v459
      %v463 = vmax.f32 %v451, %v461
      %464 = vrot.lane.b32.xlu0 %v405, 112
      %v465 = vpop.permute.xlu0 %464
      %466 = vrot.lane.b32.xlu0 %v439, 112
      %v467 = vpop.permute.xlu0 %466
      %vm468 = vcmask 916480
      %v469 = vsel %vm468, %v465, %v467
      %v471 = vsel %vm468, %v467, 0.0
      %v473 = vcombine.low %v469, %v471
      %v475 = vmax.f32 %v463, %v473
      %476 = vrot.lane.b32.xlu0 %v405, 111
      %v477 = vpop.permute.xlu0 %476
      %478 = vrot.lane.b32.xlu0 %v439, 111
      %v479 = vpop.permute.xlu0 %478
      %vm480 = vcmask 908288
      %v481 = vsel %vm480, %v477, %v479
      %v483 = vsel %vm480, %v479, 0.0
      %v485 = vcombine.low %v481, %v483
      %v487 = vmax.f32 %v475, %v485
      %488 = vrot.lane.b32.xlu0 %v405, 110
      %v489 = vpop.permute.xlu0 %488
      %490 = vrot.lane.b32.xlu0 %v439, 110
      %v491 = vpop.permute.xlu0 %490
      %vm492 = vcmask 900096
      %v493 = vsel %vm492, %v489, %v491
      %v495 = vsel %vm492, %v491, 0.0
      %v497 = vcombine.low %v493, %v495
      %v499 = vmax.f32 %v487, %v497
      %500 = vrot.lane.b32.xlu0 %v405, 96
      %v501 = vpop.permute.xlu0 %500
      %502 = vrot.lane.b32.xlu0 %v439, 96
      %v503 = vpop.permute.xlu0 %502
      %vm504 = vcmask 785408
      %v505 = vsel %vm504, %v501, %v503
      %v507 = vsel %vm504, %v503, 0.0
      %v509 = vcombine.low %v505, %v507
      %v511 = vmax.f32 %v499, %v509
      %512 = vrot.lane.b32.xlu0 %v405, 95
      %v513 = vpop.permute.xlu0 %512
      %514 = vrot.lane.b32.xlu0 %v439, 95
      %v515 = vpop.permute.xlu0 %514
      %vm516 = vcmask 777216
      %v517 = vsel %vm516, %v513, %v515
      %v519 = vsel %vm516, %v515, 0.0
      %v521 = vcombine.low %v517, %v519
      %v523 = vmax.f32 %v511, %v521
      %524 = vrot.lane.b32.xlu0 %v405, 94
      %v525 = vpop.permute.xlu0 %524
      %526 = vrot.lane.b32.xlu0 %v439, 94
      %v527 = vpop.permute.xlu0 %526
      %vm528 = vcmask 769024
      %v529 = vsel %vm528, %v525, %v527
      %v531 = vsel %vm528, %v527, 0.0
      %v533 = vcombine.low %v529, %v531
      %v535 = vmax.f32 %v523, %v533
      %v537 = vcombine.high %v535, %v535
      %539 = vmatprep.subr.mxu0 0.0
      %540 = vmatpush1.msra.mxu0 %v406
      %541 = vmatprep.subr.mxu0 0.0
      %542 = vmatpush1.msra.mxu0 %v407
      %543 = vmatprep.subr.mxu0 0.0
      %544 = vmatpush1.msra.mxu0 %v408
      %545 = vmatprep.subr.mxu0 0.0
      %546 = vmatpush1.msra.mxu0 %v409
      %547 = vmatprep.subr.mxu0 0.0
      %548 = vmatpush1.msra.mxu0 %v410
      %549 = vmatprep.subr.mxu0 0.0
      %550 = vmatpush1.msra.mxu0 %v411
      %551 = vmatprep.subr.mxu0 0.0
      %552 = vmatpush1.msra.mxu0 %v412
      %553 = vmatprep.subr.mxu0 0.0
      %554 = vmatpush1.msra.mxu0 %v413
      %555 = vmatprep.subr.mxu0 0.0
      %556 = vmatpush1.msra.mxu0 %v414
      %557 = vmatprep.subr.mxu0 0.0
      %558 = vmatpush1.msra.mxu0 %v415
      %559 = vmatprep.subr.mxu0 0.0
      %560 = vmatpush1.msra.mxu0 %v416
      %561 = vmatprep.subr.mxu0 0.0
      %562 = vmatpush1.msra.mxu0 %v417
      %563 = vmatprep.subr.mxu0 0.0
      %564 = vmatpush1.msra.mxu0 %v418
      %565 = vmatprep.subr.mxu0 0.0
      %566 = vmatpush1.msra.mxu0 %v419
      %567 = vmatprep.subr.mxu0 0.0
      %568 = vmatpush1.msra.mxu0 %v420
      %569 = vmatprep.subr.mxu0 0.0
      %570 = vmatpush1.msra.mxu0 %v421
      %571 = vmatprep.subr.mxu0 0.0
      %572 = vmatpush1.msra.mxu0 %v422
      %573 = vmatprep.subr.mxu0 0.0
      %574 = vmatpush1.msra.mxu0 %v423
      %575 = vmatprep.subr.mxu0 0.0
      %576 = vmatpush1.msra.mxu0 %v424
      %577 = vmatprep.subr.mxu0 0.0
      %578 = vmatpush1.msra.mxu0 %v425
      %579 = vmatprep.subr.mxu0 0.0
      %580 = vmatpush1.msra.mxu0 %v426
      %581 = vmatprep.subr.mxu0 0.0
      %582 = vmatpush1.msra.mxu0 %v427
      %583 = vmatprep.subr.mxu0 0.0
      %584 = vmatpush1.msra.mxu0 %v428
      %585 = vmatprep.subr.mxu0 0.0
      %586 = vmatpush1.msra.mxu0 %v429
      %587 = vmatprep.subr.mxu0 0.0
      %588 = vmatpush1.msra.mxu0 %v430
      %589 = vmatprep.subr.mxu0 0.0
      %590 = vmatpush1.msra.mxu0 %v431
      %591 = vmatprep.subr.mxu0 0.0
      %592 = vmatpush1.msra.mxu0 %v432
      %593 = vmatprep.subr.mxu0 0.0
      %594 = vmatpush1.msra.mxu0 %v433
      %595 = vmatprep.subr.mxu0 0.0
      %596 = vmatpush1.msra.mxu0 %v434
      %597 = vmatprep.subr.mxu0 0.0
      %598 = vmatpush1.msra.mxu0 %v435
      %599 = vmatprep.subr.mxu0 0.0
      %600 = vmatpush1.msra.mxu0 %v436
      %601 = vmatprep.subr.mxu0 0.0
      %602 = vmatpush1.msra.mxu0 %v437
      %603 = vmatprep.mubr.f32.mxu0 %v537
      %604 = vmatmul.mubr.f32.gmra.mrb[0].mxu0 %v535
      %v605 = vpop.f32.mrb[0].mxu0
      %v606 = vadd.f32 0.0, %v605
      %v607 = vpop.f32.mrb[0].mxu0
      %608 = vdwg.mxu0
      %610 = vrot.lane.b32.xlu0 %v606, 8
      %v611 = vpop.permute.xlu0 %610
      %vm613 = vcmask 64512
      %v614 = vsel %vm613, 0.0, %v611
      %v615 = vsel %vm382, 1, 0
      %vm616 = vcmp.eq.s32.totalorder %v615, 1
      %v617 = vsel %vm616, %v614, 0.0
      %v618 = vld [vmem:[%s1] sm:$0xf]
      %v619 = vpack.c.bf16 %v617, %v617
      %620 = vrot.lane.b32.xlu0 %v606, 7
      %v621 = vpop.permute.xlu0 %620
      %vm623 = vcmask 56320
      %v624 = vsel %vm623, 0.0, %v621
      %s625 = scalar_lea.vmem %s1, 4
      %v626 = vld [vmem:[%s625] sm:$0xf]
      %v627 = vpack.c.bf16 %v624, %v624
      %vm628 = vcmask 31744
      %v630 = vsel %vm628, %v626, 0
      %vm632 = vcmask 1041408
      %v634 = vsel %vm632, %v627, 0
      %636 = vmatprep.subr.bf16.mxu0 0
      %637 = vmatpush1.bf16.msra.mxu0 %v634
      %638 = vmatprep.subr.bf16.mxu0 0
      %639 = vmatpush1.bf16.msra.mxu0 0
      %640 = vmatprep.subr.bf16.mxu0 0
      %641 = vmatpush1.bf16.msra.mxu0 0
      %642 = vmatprep.subr.bf16.mxu0 0
      %643 = vmatpush1.bf16.msra.mxu0 0
      %644 = vmatprep.subr.bf16.mxu0 0
      %645 = vmatpush1.bf16.msra.mxu0 0
      %646 = vmatprep.subr.bf16.mxu0 0
      %647 = vmatpush1.bf16.msra.mxu0 0
      %648 = vmatprep.subr.bf16.mxu0 0
      %649 = vmatpush1.bf16.msra.mxu0 0
      %650 = vmatprep.subr.bf16.mxu0 0
      %651 = vmatpush1.bf16.msra.mxu0 0
      %652 = vmatprep.subr.bf16.mxu0 0
      %653 = vmatpush1.bf16.msra.mxu0 0
      %654 = vmatprep.subr.bf16.mxu0 0
      %655 = vmatpush1.bf16.msra.mxu0 0
      %656 = vmatprep.subr.bf16.mxu0 0
      %657 = vmatpush1.bf16.msra.mxu0 0
      %658 = vmatprep.subr.bf16.mxu0 0
      %659 = vmatpush1.bf16.msra.mxu0 0
      %660 = vmatprep.subr.bf16.mxu0 0
      %661 = vmatpush1.bf16.msra.mxu0 0
      %662 = vmatprep.subr.bf16.mxu0 0
      %663 = vmatpush1.bf16.msra.mxu0 0
      %664 = vmatprep.subr.bf16.mxu0 0
      %665 = vmatpush1.bf16.msra.mxu0 0
      %666 = vmatprep.subr.bf16.mxu0 0
      %667 = vmatpush1.bf16.msra.mxu0 0
      %668 = vmatprep.mubr.bf16.mxu0 0
      %669 = vmatmul.mubr.bf16.gmra.mrb[0].mxu0 %v630
      %v670 = vpop.f32.mrb[0].mxu0
      %v671 = vadd.f32 0.0, %v670
      %v672 = vpop.f32.mrb[0].mxu0
      %v673 = vpop.f32.mrb[0].mxu0
      %v674 = vpop.f32.mrb[0].mxu0
      %675 = vdwg.mxu0
      %v677 = vsel %vm628, %v618, 0
      %v680 = vsel %vm632, %v619, 0
      %682 = vmatprep.subr.bf16.mxu0 0
      %683 = vmatpush1.bf16.msra.mxu0 %v680
      %684 = vmatprep.subr.bf16.mxu0 0
      %685 = vmatpush1.bf16.msra.mxu0 0
      %686 = vmatprep.subr.bf16.mxu0 0
      %687 = vmatpush1.bf16.msra.mxu0 0
      %688 = vmatprep.subr.bf16.mxu0 0
      %689 = vmatpush1.bf16.msra.mxu0 0
      %690 = vmatprep.subr.bf16.mxu0 0
      %691 = vmatpush1.bf16.msra.mxu0 0
      %692 = vmatprep.subr.bf16.mxu0 0
      %693 = vmatpush1.bf16.msra.mxu0 0
      %694 = vmatprep.subr.bf16.mxu0 0
      %695 = vmatpush1.bf16.msra.mxu0 0
      %696 = vmatprep.subr.bf16.mxu0 0
      %697 = vmatpush1.bf16.msra.mxu0 0
      %698 = vmatprep.subr.bf16.mxu0 0
      %699 = vmatpush1.bf16.msra.mxu0 0
      %700 = vmatprep.subr.bf16.mxu0 0
      %701 = vmatpush1.bf16.msra.mxu0 0
      %702 = vmatprep.subr.bf16.mxu0 0
      %703 = vmatpush1.bf16.msra.mxu0 0
      %704 = vmatprep.subr.bf16.mxu0 0
      %705 = vmatpush1.bf16.msra.mxu0 0
      %706 = vmatprep.subr.bf16.mxu0 0
      %707 = vmatpush1.bf16.msra.mxu0 0
      %708 = vmatprep.subr.bf16.mxu0 0
      %709 = vmatpush1.bf16.msra.mxu0 0
      %710 = vmatprep.subr.bf16.mxu0 0
      %711 = vmatpush1.bf16.msra.mxu0 0
      %712 = vmatprep.subr.bf16.mxu0 0
      %713 = vmatpush1.bf16.msra.mxu0 0
      %714 = vmatprep.mubr.bf16.mxu0 0
      %715 = vmatmul.mubr.bf16.gmra.mrb[0].mxu0 %v677
      %v716 = vpop.f32.mrb[0].mxu0
      %v717 = vadd.f32 %v671, %v716
      %v718 = vpop.f32.mrb[0].mxu0
      %v719 = vpop.f32.mrb[0].mxu0
      %v720 = vpop.f32.mrb[0].mxu0
      %721 = vdwg.mxu0
      %722 = vrot.lane.b32.xlu0 %v606, 6
      %v723 = vpop.permute.xlu0 %722
      %vm725 = vcmask 48128
      %v726 = vsel %vm725, 0.0, %v723
      %v727 = vsel %vm383, 1, 0
      %vm728 = vcmp.eq.s32.totalorder %v727, 1
      %v729 = vsel %vm728, %v726, 0.0
      %s730 = scalar_lea.vmem %s1, 8
      %v731 = vld [vmem:[%s730] sm:$0xf]
      %v732 = vpack.c.bf16 %v729, %v729
      %v734 = vsel %vm628, %v731, 0
      %v737 = vsel %vm632, %v732, 0
      %739 = vmatprep.subr.bf16.mxu0 0
      %740 = vmatpush1.bf16.msra.mxu0 %v737
      %741 = vmatprep.subr.bf16.mxu0 0
      %742 = vmatpush1.bf16.msra.mxu0 0
      %743 = vmatprep.subr.bf16.mxu0 0
      %744 = vmatpush1.bf16.msra.mxu0 0
      %745 = vmatprep.subr.bf16.mxu0 0
      %746 = vmatpush1.bf16.msra.mxu0 0
      %747 = vmatprep.subr.bf16.mxu0 0
      %748 = vmatpush1.bf16.msra.mxu0 0
      %749 = vmatprep.subr.bf16.mxu0 0
      %750 = vmatpush1.bf16.msra.mxu0 0
      %751 = vmatprep.subr.bf16.mxu0 0
      %752 = vmatpush1.bf16.msra.mxu0 0
      %753 = vmatprep.subr.bf16.mxu0 0
      %754 = vmatpush1.bf16.msra.mxu0 0
      %755 = vmatprep.subr.bf16.mxu0 0
      %756 = vmatpush1.bf16.msra.mxu0 0
      %757 = vmatprep.subr.bf16.mxu0 0
      %758 = vmatpush1.bf16.msra.mxu0 0
      %759 = vmatprep.subr.bf16.mxu0 0
      %760 = vmatpush1.bf16.msra.mxu0 0
      %761 = vmatprep.subr.bf16.mxu0 0
      %762 = vmatpush1.bf16.msra.mxu0 0
      %763 = vmatprep.subr.bf16.mxu0 0
      %764 = vmatpush1.bf16.msra.mxu0 0
      %765 = vmatprep.subr.bf16.mxu0 0
      %766 = vmatpush1.bf16.msra.mxu0 0
      %767 = vmatprep.subr.bf16.mxu0 0
      %768 = vmatpush1.bf16.msra.mxu0 0
      %769 = vmatprep.subr.bf16.mxu0 0
      %770 = vmatpush1.bf16.msra.mxu0 0
      %771 = vmatprep.mubr.bf16.mxu0 0
      %772 = vmatmul.mubr.bf16.gmra.mrb[0].mxu0 %v734
      %v773 = vpop.f32.mrb[0].mxu0
      %v774 = vadd.f32 0.0, %v773
      %v775 = vpop.f32.mrb[0].mxu0
      %v776 = vpop.f32.mrb[0].mxu0
      %v777 = vpop.f32.mrb[0].mxu0
      %778 = vdwg.mxu0
      %v779 = vadd.f32 %v717, %v774
      %780 = vrot.lane.b32.xlu0 %v606, 1
      %v781 = vpop.permute.xlu0 %780
      %vm783 = vcmask 7168
      %v784 = vsel %vm783, 0.0, %v781
      %v785 = vsel %vm616, %v784, 0.0
      %s786 = scalar_lea.vmem %s1, 12
      %v787 = vld [vmem:[%s786] sm:$0xf]
      %v788 = vpack.c.bf16 %v785, %v785
      %v790 = vsel %vm628, %v787, 0
      %v793 = vsel %vm632, %v788, 0
      %795 = vmatprep.subr.bf16.mxu0 0
      %796 = vmatpush1.bf16.msra.mxu0 %v793
      %797 = vmatprep.subr.bf16.mxu0 0
      %798 = vmatpush1.bf16.msra.mxu0 0
      %799 = vmatprep.subr.bf16.mxu0 0
      %800 = vmatpush1.bf16.msra.mxu0 0
      %801 = vmatprep.subr.bf16.mxu0 0
      %802 = vmatpush1.bf16.msra.mxu0 0
      %803 = vmatprep.subr.bf16.mxu0 0
      %804 = vmatpush1.bf16.msra.mxu0 0
      %805 = vmatprep.subr.bf16.mxu0 0
      %806 = vmatpush1.bf16.msra.mxu0 0
      %807 = vmatprep.subr.bf16.mxu0 0
      %808 = vmatpush1.bf16.msra.mxu0 0
      %809 = vmatprep.subr.bf16.mxu0 0
      %810 = vmatpush1.bf16.msra.mxu0 0
      %811 = vmatprep.subr.bf16.mxu0 0
      %812 = vmatpush1.bf16.msra.mxu0 0
      %813 = vmatprep.subr.bf16.mxu0 0
      %814 = vmatpush1.bf16.msra.mxu0 0
      %815 = vmatprep.subr.bf16.mxu0 0
      %816 = vmatpush1.bf16.msra.mxu0 0
      %817 = vmatprep.subr.bf16.mxu0 0
      %818 = vmatpush1.bf16.msra.mxu0 0
      %819 = vmatprep.subr.bf16.mxu0 0
      %820 = vmatpush1.bf16.msra.mxu0 0
      %821 = vmatprep.subr.bf16.mxu0 0
      %822 = vmatpush1.bf16.msra.mxu0 0
      %823 = vmatprep.subr.bf16.mxu0 0
      %824 = vmatpush1.bf16.msra.mxu0 0
      %825 = vmatprep.subr.bf16.mxu0 0
      %826 = vmatpush1.bf16.msra.mxu0 0
      %827 = vmatprep.mubr.bf16.mxu0 0
      %828 = vmatmul.mubr.bf16.gmra.mrb[0].mxu0 %v790
      %v829 = vpop.f32.mrb[0].mxu0
      %v830 = vadd.f32 0.0, %v829
      %v831 = vpop.f32.mrb[0].mxu0
      %v832 = vpop.f32.mrb[0].mxu0
      %v833 = vpop.f32.mrb[0].mxu0
      %834 = vdwg.mxu0
      %v835 = vadd.f32 %v779, %v830
      %s836 = scalar_lea.vmem %s1, 16
      %v837 = vld [vmem:[%s836] sm:$0xf]
      %v838 = vpack.c.bf16 %v606, %v606
      %v840 = vsel %vm628, %v837, 0
      %v843 = vsel %vm632, %v838, 0
      %845 = vmatprep.subr.bf16.mxu0 0
      %846 = vmatpush1.bf16.msra.mxu0 %v843
      %847 = vmatprep.subr.bf16.mxu0 0
      %848 = vmatpush1.bf16.msra.mxu0 0
      %849 = vmatprep.subr.bf16.mxu0 0
      %850 = vmatpush1.bf16.msra.mxu0 0
      %851 = vmatprep.subr.bf16.mxu0 0
      %852 = vmatpush1.bf16.msra.mxu0 0
      %853 = vmatprep.subr.bf16.mxu0 0
      %854 = vmatpush1.bf16.msra.mxu0 0
      %855 = vmatprep.subr.bf16.mxu0 0
      %856 = vmatpush1.bf16.msra.mxu0 0
      %857 = vmatprep.subr.bf16.mxu0 0
      %858 = vmatpush1.bf16.msra.mxu0 0
      %859 = vmatprep.subr.bf16.mxu0 0
      %860 = vmatpush1.bf16.msra.mxu0 0
      %861 = vmatprep.subr.bf16.mxu0 0
      %862 = vmatpush1.bf16.msra.mxu0 0
      %863 = vmatprep.subr.bf16.mxu0 0
      %864 = vmatpush1.bf16.msra.mxu0 0
      %865 = vmatprep.subr.bf16.mxu0 0
      %866 = vmatpush1.bf16.msra.mxu0 0
      %867 = vmatprep.subr.bf16.mxu0 0
      %868 = vmatpush1.bf16.msra.mxu0 0
      %869 = vmatprep.subr.bf16.mxu0 0
      %870 = vmatpush1.bf16.msra.mxu0 0
      %871 = vmatprep.subr.bf16.mxu0 0
      %872 = vmatpush1.bf16.msra.mxu0 0
      %873 = vmatprep.subr.bf16.mxu0 0
      %874 = vmatpush1.bf16.msra.mxu0 0
      %875 = vmatprep.subr.bf16.mxu0 0
      %876 = vmatpush1.bf16.msra.mxu0 0
      %877 = vmatprep.mubr.bf16.mxu0 0
      %878 = vmatmul.mubr.bf16.gmra.mrb[0].mxu0 %v840
      %v879 = vpop.f32.mrb[0].mxu0
      %v880 = vadd.f32 0.0, %v879
      %v881 = vpop.f32.mrb[0].mxu0
      %v882 = vpop.f32.mrb[0].mxu0
      %v883 = vpop.f32.mrb[0].mxu0
      %884 = vdwg.mxu0
      %v885 = vadd.f32 %v835, %v880
      %886 = vrot.lane.b32.xlu0 %v606, 127
      %v887 = vpop.permute.xlu0 %886
      %vm889 = vcmask 392192
      %v890 = vsel %vm889, %v887, 0.0
      %v891 = vsel %vm728, %v890, 0.0
      %s892 = scalar_lea.vmem %s1, 20
      %v893 = vld [vmem:[%s892] sm:$0xf]
      %v894 = vpack.c.bf16 %v891, %v891
      %v896 = vsel %vm628, %v893, 0
      %v899 = vsel %vm632, %v894, 0
      %901 = vmatprep.subr.bf16.mxu0 0
      %902 = vmatpush1.bf16.msra.mxu0 %v899
      %903 = vmatprep.subr.bf16.mxu0 0
      %904 = vmatpush1.bf16.msra.mxu0 0
      %905 = vmatprep.subr.bf16.mxu0 0
      %906 = vmatpush1.bf16.msra.mxu0 0
      %907 = vmatprep.subr.bf16.mxu0 0
      %908 = vmatpush1.bf16.msra.mxu0 0
      %909 = vmatprep.subr.bf16.mxu0 0
      %910 = vmatpush1.bf16.msra.mxu0 0
      %911 = vmatprep.subr.bf16.mxu0 0
      %912 = vmatpush1.bf16.msra.mxu0 0
      %913 = vmatprep.subr.bf16.mxu0 0
      %914 = vmatpush1.bf16.msra.mxu0 0
      %915 = vmatprep.subr.bf16.mxu0 0
      %916 = vmatpush1.bf16.msra.mxu0 0
      %917 = vmatprep.subr.bf16.mxu0 0
      %918 = vmatpush1.bf16.msra.mxu0 0
      %919 = vmatprep.subr.bf16.mxu0 0
      %920 = vmatpush1.bf16.msra.mxu0 0
      %921 = vmatprep.subr.bf16.mxu0 0
      %922 = vmatpush1.bf16.msra.mxu0 0
      %923 = vmatprep.subr.bf16.mxu0 0
      %924 = vmatpush1.bf16.msra.mxu0 0
      %925 = vmatprep.subr.bf16.mxu0 0
      %926 = vmatpush1.bf16.msra.mxu0 0
      %927 = vmatprep.subr.bf16.mxu0 0
      %928 = vmatpush1.bf16.msra.mxu0 0
      %929 = vmatprep.subr.bf16.mxu0 0
      %930 = vmatpush1.bf16.msra.mxu0 0
      %931 = vmatprep.subr.bf16.mxu0 0
      %932 = vmatpush1.bf16.msra.mxu0 0
      %933 = vmatprep.mubr.bf16.mxu0 0
      %934 = vmatmul.mubr.bf16.gmra.mrb[0].mxu0 %v896
      %v935 = vpop.f32.mrb[0].mxu0
      %v936 = vadd.f32 0.0, %v935
      %v937 = vpop.f32.mrb[0].mxu0
      %v938 = vpop.f32.mrb[0].mxu0
      %v939 = vpop.f32.mrb[0].mxu0
      %940 = vdwg.mxu0
      %v941 = vadd.f32 %v885, %v936
      %942 = vrot.lane.b32.xlu0 %v606, 122
      %v943 = vpop.permute.xlu0 %942
      %vm945 = vcmask 351232
      %v946 = vsel %vm945, %v943, 0.0
      %v947 = vsel %vm616, %v946, 0.0
      %s948 = scalar_lea.vmem %s1, 24
      %v949 = vld [vmem:[%s948] sm:$0xf]
      %v950 = vpack.c.bf16 %v947, %v947
      %v952 = vsel %vm628, %v949, 0
      %v955 = vsel %vm632, %v950, 0
      %957 = vmatprep.subr.bf16.mxu0 0
      %958 = vmatpush1.bf16.msra.mxu0 %v955
      %959 = vmatprep.subr.bf16.mxu0 0
      %960 = vmatpush1.bf16.msra.mxu0 0
      %961 = vmatprep.subr.bf16.mxu0 0
      %962 = vmatpush1.bf16.msra.mxu0 0
      %963 = vmatprep.subr.bf16.mxu0 0
      %964 = vmatpush1.bf16.msra.mxu0 0
      %965 = vmatprep.subr.bf16.mxu0 0
      %966 = vmatpush1.bf16.msra.mxu0 0
      %967 = vmatprep.subr.bf16.mxu0 0
      %968 = vmatpush1.bf16.msra.mxu0 0
      %969 = vmatprep.subr.bf16.mxu0 0
      %970 = vmatpush1.bf16.msra.mxu0 0
      %971 = vmatprep.subr.bf16.mxu0 0
      %972 = vmatpush1.bf16.msra.mxu0 0
      %973 = vmatprep.subr.bf16.mxu0 0
      %974 = vmatpush1.bf16.msra.mxu0 0
      %975 = vmatprep.subr.bf16.mxu0 0
      %976 = vmatpush1.bf16.msra.mxu0 0
      %977 = vmatprep.subr.bf16.mxu0 0
      %978 = vmatpush1.bf16.msra.mxu0 0
      %979 = vmatprep.subr.bf16.mxu0 0
      %980 = vmatpush1.bf16.msra.mxu0 0
      %981 = vmatprep.subr.bf16.mxu0 0
      %982 = vmatpush1.bf16.msra.mxu0 0
      %983 = vmatprep.subr.bf16.mxu0 0
      %984 = vmatpush1.bf16.msra.mxu0 0
      %985 = vmatprep.subr.bf16.mxu0 0
      %986 = vmatpush1.bf16.msra.mxu0 0
      %987 = vmatprep.subr.bf16.mxu0 0
      %988 = vmatpush1.bf16.msra.mxu0 0
      %989 = vmatprep.mubr.bf16.mxu0 0
      %990 = vmatmul.mubr.bf16.gmra.mrb[0].mxu0 %v952
      %v991 = vpop.f32.mrb[0].mxu0
      %v992 = vadd.f32 0.0, %v991
      %v993 = vpop.f32.mrb[0].mxu0
      %v994 = vpop.f32.mrb[0].mxu0
      %v995 = vpop.f32.mrb[0].mxu0
      %996 = vdwg.mxu0
      %v997 = vadd.f32 %v941, %v992
      %998 = vrot.lane.b32.xlu0 %v606, 121
      %v999 = vpop.permute.xlu0 %998
      %vm1001 = vcmask 343040
      %v1002 = vsel %vm1001, %v999, 0.0
      %s1003 = scalar_lea.vmem %s1, 28
      %v1004 = vld [vmem:[%s1003] sm:$0xf]
      %v1005 = vpack.c.bf16 %v1002, %v1002
      %v1007 = vsel %vm628, %v1004, 0
      %v1010 = vsel %vm632, %v1005, 0
      %1012 = vmatprep.subr.bf16.mxu0 0
      %1013 = vmatpush1.bf16.msra.mxu0 %v1010
      %1014 = vmatprep.subr.bf16.mxu0 0
      %1015 = vmatpush1.bf16.msra.mxu0 0
      %1016 = vmatprep.subr.bf16.mxu0 0
      %1017 = vmatpush1.bf16.msra.mxu0 0
      %1018 = vmatprep.subr.bf16.mxu0 0
      %1019 = vmatpush1.bf16.msra.mxu0 0
      %1020 = vmatprep.subr.bf16.mxu0 0
      %1021 = vmatpush1.bf16.msra.mxu0 0
      %1022 = vmatprep.subr.bf16.mxu0 0
      %1023 = vmatpush1.bf16.msra.mxu0 0
      %1024 = vmatprep.subr.bf16.mxu0 0
      %1025 = vmatpush1.bf16.msra.mxu0 0
      %1026 = vmatprep.subr.bf16.mxu0 0
      %1027 = vmatpush1.bf16.msra.mxu0 0
      %1028 = vmatprep.subr.bf16.mxu0 0
      %1029 = vmatpush1.bf16.msra.mxu0 0
      %1030 = vmatprep.subr.bf16.mxu0 0
      %1031 = vmatpush1.bf16.msra.mxu0 0
      %1032 = vmatprep.subr.bf16.mxu0 0
      %1033 = vmatpush1.bf16.msra.mxu0 0
      %1034 = vmatprep.subr.bf16.mxu0 0
      %1035 = vmatpush1.bf16.msra.mxu0 0
      %1036 = vmatprep.subr.bf16.mxu0 0
      %1037 = vmatpush1.bf16.msra.mxu0 0
      %1038 = vmatprep.subr.bf16.mxu0 0
      %1039 = vmatpush1.bf16.msra.mxu0 0
      %1040 = vmatprep.subr.bf16.mxu0 0
      %1041 = vmatpush1.bf16.msra.mxu0 0
      %1042 = vmatprep.subr.bf16.mxu0 0
      %1043 = vmatpush1.bf16.msra.mxu0 0
      %1044 = vmatprep.mubr.bf16.mxu0 0
      %1045 = vmatmul.mubr.bf16.gmra.mrb[0].mxu0 %v1007
      %v1046 = vpop.f32.mrb[0].mxu0
      %v1047 = vadd.f32 0.0, %v1046
      %v1048 = vpop.f32.mrb[0].mxu0
      %v1049 = vpop.f32.mrb[0].mxu0
      %v1050 = vpop.f32.mrb[0].mxu0
      %1051 = vdwg.mxu0
      %v1052 = vadd.f32 %v997, %v1047
      %1053 = vrot.lane.b32.xlu0 %v606, 120
      %v1054 = vpop.permute.xlu0 %1053
      %vm1056 = vcmask 334848
      %v1057 = vsel %vm1056, %v1054, 0.0
      %v1058 = vsel %vm728, %v1057, 0.0
      %s1059 = scalar_lea.vmem %s1, 32
      %v1060 = vld [vmem:[%s1059] sm:$0xf]
      %v1061 = vpack.c.bf16 %v1058, %v1058
      %v1063 = vsel %vm628, %v1060, 0
      %v1066 = vsel %vm632, %v1061, 0
      %1068 = vmatprep.subr.bf16.mxu0 0
      %1069 = vmatpush1.bf16.msra.mxu0 %v1066
      %1070 = vmatprep.subr.bf16.mxu0 0
      %1071 = vmatpush1.bf16.msra.mxu0 0
      %1072 = vmatprep.subr.bf16.mxu0 0
      %1073 = vmatpush1.bf16.msra.mxu0 0
      %1074 = vmatprep.subr.bf16.mxu0 0
      %1075 = vmatpush1.bf16.msra.mxu0 0
      %1076 = vmatprep.subr.bf16.mxu0 0
      %1077 = vmatpush1.bf16.msra.mxu0 0
      %1078 = vmatprep.subr.bf16.mxu0 0
      %1079 = vmatpush1.bf16.msra.mxu0 0
      %1080 = vmatprep.subr.bf16.mxu0 0
      %1081 = vmatpush1.bf16.msra.mxu0 0
      %1082 = vmatprep.subr.bf16.mxu0 0
      %1083 = vmatpush1.bf16.msra.mxu0 0
      %1084 = vmatprep.subr.bf16.mxu0 0
      %1085 = vmatpush1.bf16.msra.mxu0 0
      %1086 = vmatprep.subr.bf16.mxu0 0
      %1087 = vmatpush1.bf16.msra.mxu0 0
      %1088 = vmatprep.subr.bf16.mxu0 0
      %1089 = vmatpush1.bf16.msra.mxu0 0
      %1090 = vmatprep.subr.bf16.mxu0 0
      %1091 = vmatpush1.bf16.msra.mxu0 0
      %1092 = vmatprep.subr.bf16.mxu0 0
      %1093 = vmatpush1.bf16.msra.mxu0 0
      %1094 = vmatprep.subr.bf16.mxu0 0
      %1095 = vmatpush1.bf16.msra.mxu0 0
      %1096 = vmatprep.subr.bf16.mxu0 0
      %1097 = vmatpush1.bf16.msra.mxu0 0
      %1098 = vmatprep.subr.bf16.mxu0 0
      %1099 = vmatpush1.bf16.msra.mxu0 0
      %1100 = vmatprep.mubr.bf16.mxu0 0
      %1101 = vmatmul.mubr.bf16.gmra.mrb[0].mxu0 %v1063
      %v1102 = vpop.f32.mrb[0].mxu0
      %v1103 = vadd.f32 0.0, %v1102
      %v1104 = vpop.f32.mrb[0].mxu0
      %v1105 = vpop.f32.mrb[0].mxu0
      %v1106 = vpop.f32.mrb[0].mxu0
      %1107 = vdwg.mxu0
      %v1108 = vadd.f32 %v1052, %v1103
      %1110 = vset.pattern.permute.xlu0 0
      %1111 = vperm.xlu0 %1110, %v402
      %v1112 = vpop.permute.xlu0 %1111
      %v1114 = vadd.f32 %v1108, %v1112
      %v1115 = vmax.f32 %v1114, 0.0
      %1117 = vrot.lane.b32.xlu0 %v1115, 8
      %v1118 = vpop.permute.xlu0 %1117
      %v1120 = vsel %vm613, 0.0, %v1118
      %v1121 = vsel %vm616, %v1120, 0.0
      %v1122 = vld [vmem:[%s2] sm:$0xf]
      %v1123 = vpack.c.bf16 %v1121, %v1121
      %1124 = vrot.lane.b32.xlu0 %v1115, 7
      %v1125 = vpop.permute.xlu0 %1124
      %v1127 = vsel %vm623, 0.0, %v1125
      %s1128 = scalar_lea.vmem %s2, 4
      %v1129 = vld [vmem:[%s1128] sm:$0xf]
      %v1130 = vpack.c.bf16 %v1127, %v1127
      %v1132 = vsel %vm613, %v1129, 0
      %vm1134 = vcmask 1043456
      %v1136 = vsel %vm1134, %v1130, 0
      %1138 = vmatprep.subr.bf16.mxu0 0
      %1139 = vmatpush1.bf16.msra.mxu0 %v1136
      %1140 = vmatprep.subr.bf16.mxu0 0
      %1141 = vmatpush1.bf16.msra.mxu0 0
      %1142 = vmatprep.subr.bf16.mxu0 0
      %1143 = vmatpush1.bf16.msra.mxu0 0
      %1144 = vmatprep.subr.bf16.mxu0 0
      %1145 = vmatpush1.bf16.msra.mxu0 0
      %1146 = vmatprep.subr.bf16.mxu0 0
      %1147 = vmatpush1.bf16.msra.mxu0 0
      %1148 = vmatprep.subr.bf16.mxu0 0
      %1149 = vmatpush1.bf16.msra.mxu0 0
      %1150 = vmatprep.subr.bf16.mxu0 0
      %1151 = vmatpush1.bf16.msra.mxu0 0
      %1152 = vmatprep.subr.bf16.mxu0 0
      %1153 = vmatpush1.bf16.msra.mxu0 0
      %1154 = vmatprep.subr.bf16.mxu0 0
      %1155 = vmatpush1.bf16.msra.mxu0 0
      %1156 = vmatprep.subr.bf16.mxu0 0
      %1157 = vmatpush1.bf16.msra.mxu0 0
      %1158 = vmatprep.subr.bf16.mxu0 0
      %1159 = vmatpush1.bf16.msra.mxu0 0
      %1160 = vmatprep.subr.bf16.mxu0 0
      %1161 = vmatpush1.bf16.msra.mxu0 0
      %1162 = vmatprep.subr.bf16.mxu0 0
      %1163 = vmatpush1.bf16.msra.mxu0 0
      %1164 = vmatprep.subr.bf16.mxu0 0
      %1165 = vmatpush1.bf16.msra.mxu0 0
      %1166 = vmatprep.subr.bf16.mxu0 0
      %1167 = vmatpush1.bf16.msra.mxu0 0
      %1168 = vmatprep.subr.bf16.mxu0 0
      %1169 = vmatpush1.bf16.msra.mxu0 0
      %1170 = vmatprep.mubr.bf16.mxu0 0
      %1171 = vmatmul.mubr.bf16.gmra.mrb[0].mxu0 %v1132
      %v1172 = vpop.f32.mrb[0].mxu0
      %v1173 = vadd.f32 0.0, %v1172
      %v1174 = vpop.f32.mrb[0].mxu0
      %v1175 = vpop.f32.mrb[0].mxu0
      %v1176 = vpop.f32.mrb[0].mxu0
      %1177 = vdwg.mxu0
      %v1179 = vsel %vm613, %v1122, 0
      %v1182 = vsel %vm1134, %v1123, 0
      %1184 = vmatprep.subr.bf16.mxu0 0
      %1185 = vmatpush1.bf16.msra.mxu0 %v1182
      %1186 = vmatprep.subr.bf16.mxu0 0
      %1187 = vmatpush1.bf16.msra.mxu0 0
      %1188 = vmatprep.subr.bf16.mxu0 0
      %1189 = vmatpush1.bf16.msra.mxu0 0
      %1190 = vmatprep.subr.bf16.mxu0 0
      %1191 = vmatpush1.bf16.msra.mxu0 0
      %1192 = vmatprep.subr.bf16.mxu0 0
      %1193 = vmatpush1.bf16.msra.mxu0 0
      %1194 = vmatprep.subr.bf16.mxu0 0
      %1195 = vmatpush1.bf16.msra.mxu0 0
      %1196 = vmatprep.subr.bf16.mxu0 0
      %1197 = vmatpush1.bf16.msra.mxu0 0
      %1198 = vmatprep.subr.bf16.mxu0 0
      %1199 = vmatpush1.bf16.msra.mxu0 0
      %1200 = vmatprep.subr.bf16.mxu0 0
      %1201 = vmatpush1.bf16.msra.mxu0 0
      %1202 = vmatprep.subr.bf16.mxu0 0
      %1203 = vmatpush1.bf16.msra.mxu0 0
      %1204 = vmatprep.subr.bf16.mxu0 0
      %1205 = vmatpush1.bf16.msra.mxu0 0
      %1206 = vmatprep.subr.bf16.mxu0 0
      %1207 = vmatpush1.bf16.msra.mxu0 0
      %1208 = vmatprep.subr.bf16.mxu0 0
      %1209 = vmatpush1.bf16.msra.mxu0 0
      %1210 = vmatprep.subr.bf16.mxu0 0
      %1211 = vmatpush1.bf16.msra.mxu0 0
      %1212 = vmatprep.subr.bf16.mxu0 0
      %1213 = vmatpush1.bf16.msra.mxu0 0
      %1214 = vmatprep.subr.bf16.mxu0 0
      %1215 = vmatpush1.bf16.msra.mxu0 0
      %1216 = vmatprep.mubr.bf16.mxu0 0
      %1217 = vmatmul.mubr.bf16.gmra.mrb[0].mxu0 %v1179
      %v1218 = vpop.f32.mrb[0].mxu0
      %v1219 = vadd.f32 %v1173, %v1218
      %v1220 = vpop.f32.mrb[0].mxu0
      %v1221 = vpop.f32.mrb[0].mxu0
      %v1222 = vpop.f32.mrb[0].mxu0
      %1223 = vdwg.mxu0
      %1224 = vrot.lane.b32.xlu0 %v1115, 6
      %v1225 = vpop.permute.xlu0 %1224
      %v1227 = vsel %vm725, 0.0, %v1225
      %v1228 = vsel %vm728, %v1227, 0.0
      %s1229 = scalar_lea.vmem %s2, 8
      %v1230 = vld [vmem:[%s1229] sm:$0xf]
      %v1231 = vpack.c.bf16 %v1228, %v1228
      %v1233 = vsel %vm613, %v1230, 0
      %v1236 = vsel %vm1134, %v1231, 0
      %1238 = vmatprep.subr.bf16.mxu0 0
      %1239 = vmatpush1.bf16.msra.mxu0 %v1236
      %1240 = vmatprep.subr.bf16.mxu0 0
      %1241 = vmatpush1.bf16.msra.mxu0 0
      %1242 = vmatprep.subr.bf16.mxu0 0
      %1243 = vmatpush1.bf16.msra.mxu0 0
      %1244 = vmatprep.subr.bf16.mxu0 0
      %1245 = vmatpush1.bf16.msra.mxu0 0
      %1246 = vmatprep.subr.bf16.mxu0 0
      %1247 = vmatpush1.bf16.msra.mxu0 0
      %1248 = vmatprep.subr.bf16.mxu0 0
      %1249 = vmatpush1.bf16.msra.mxu0 0
      %1250 = vmatprep.subr.bf16.mxu0 0
      %1251 = vmatpush1.bf16.msra.mxu0 0
      %1252 = vmatprep.subr.bf16.mxu0 0
      %1253 = vmatpush1.bf16.msra.mxu0 0
      %1254 = vmatprep.subr.bf16.mxu0 0
      %1255 = vmatpush1.bf16.msra.mxu0 0
      %1256 = vmatprep.subr.bf16.mxu0 0
      %1257 = vmatpush1.bf16.msra.mxu0 0
      %1258 = vmatprep.subr.bf16.mxu0 0
      %1259 = vmatpush1.bf16.msra.mxu0 0
      %1260 = vmatprep.subr.bf16.mxu0 0
      %1261 = vmatpush1.bf16.msra.mxu0 0
      %1262 = vmatprep.subr.bf16.mxu0 0
      %1263 = vmatpush1.bf16.msra.mxu0 0
      %1264 = vmatprep.subr.bf16.mxu0 0
      %1265 = vmatpush1.bf16.msra.mxu0 0
      %1266 = vmatprep.subr.bf16.mxu0 0
      %1267 = vmatpush1.bf16.msra.mxu0 0
      %1268 = vmatprep.subr.bf16.mxu0 0
      %1269 = vmatpush1.bf16.msra.mxu0 0
      %1270 = vmatprep.mubr.bf16.mxu0 0
      %1271 = vmatmul.mubr.bf16.gmra.mrb[0].mxu0 %v1233
      %v1272 = vpop.f32.mrb[0].mxu0
      %v1273 = vadd.f32 0.0, %v1272
      %v1274 = vpop.f32.mrb[0].mxu0
      %v1275 = vpop.f32.mrb[0].mxu0
      %v1276 = vpop.f32.mrb[0].mxu0
      %1277 = vdwg.mxu0
      %v1278 = vadd.f32 %v1219, %v1273
      %1279 = vrot.lane.b32.xlu0 %v1115, 1
      %v1280 = vpop.permute.xlu0 %1279
      %v1282 = vsel %vm783, 0.0, %v1280
      %v1283 = vsel %vm616, %v1282, 0.0
      %s1284 = scalar_lea.vmem %s2, 12
      %v1285 = vld [vmem:[%s1284] sm:$0xf]
      %v1286 = vpack.c.bf16 %v1283, %v1283
      %v1288 = vsel %vm613, %v1285, 0
      %v1291 = vsel %vm1134, %v1286, 0
      %1293 = vmatprep.subr.bf16.mxu0 0
      %1294 = vmatpush1.bf16.msra.mxu0 %v1291
      %1295 = vmatprep.subr.bf16.mxu0 0
      %1296 = vmatpush1.bf16.msra.mxu0 0
      %1297 = vmatprep.subr.bf16.mxu0 0
      %1298 = vmatpush1.bf16.msra.mxu0 0
      %1299 = vmatprep.subr.bf16.mxu0 0
      %1300 = vmatpush1.bf16.msra.mxu0 0
      %1301 = vmatprep.subr.bf16.mxu0 0
      %1302 = vmatpush1.bf16.msra.mxu0 0
      %1303 = vmatprep.subr.bf16.mxu0 0
      %1304 = vmatpush1.bf16.msra.mxu0 0
      %1305 = vmatprep.subr.bf16.mxu0 0
      %1306 = vmatpush1.bf16.msra.mxu0 0
      %1307 = vmatprep.subr.bf16.mxu0 0
      %1308 = vmatpush1.bf16.msra.mxu0 0
      %1309 = vmatprep.subr.bf16.mxu0 0
      %1310 = vmatpush1.bf16.msra.mxu0 0
      %1311 = vmatprep.subr.bf16.mxu0 0
      %1312 = vmatpush1.bf16.msra.mxu0 0
      %1313 = vmatprep.subr.bf16.mxu0 0
      %1314 = vmatpush1.bf16.msra.mxu0 0
      %1315 = vmatprep.subr.bf16.mxu0 0
      %1316 = vmatpush1.bf16.msra.mxu0 0
      %1317 = vmatprep.subr.bf16.mxu0 0
      %1318 = vmatpush1.bf16.msra.mxu0 0
      %1319 = vmatprep.subr.bf16.mxu0 0
      %1320 = vmatpush1.bf16.msra.mxu0 0
      %1321 = vmatprep.subr.bf16.mxu0 0
      %1322 = vmatpush1.bf16.msra.mxu0 0
      %1323 = vmatprep.subr.bf16.mxu0 0
      %1324 = vmatpush1.bf16.msra.mxu0 0
      %1325 = vmatprep.mubr.bf16.mxu0 0
      %1326 = vmatmul.mubr.bf16.gmra.mrb[0].mxu0 %v1288
      %v1327 = vpop.f32.mrb[0].mxu0
      %v1328 = vadd.f32 0.0, %v1327
      %v1329 = vpop.f32.mrb[0].mxu0
      %v1330 = vpop.f32.mrb[0].mxu0
      %v1331 = vpop.f32.mrb[0].mxu0
      %1332 = vdwg.mxu0
      %v1333 = vadd.f32 %v1278, %v1328
      %s1334 = scalar_lea.vmem %s2, 16
      %v1335 = vld [vmem:[%s1334] sm:$0xf]
      %v1336 = vpack.c.bf16 %v1115, %v1115
      %v1338 = vsel %vm613, %v1335, 0
      %v1341 = vsel %vm1134, %v1336, 0
      %1343 = vmatprep.subr.bf16.mxu0 0
      %1344 = vmatpush1.bf16.msra.mxu0 %v1341
      %1345 = vmatprep.subr.bf16.mxu0 0
      %1346 = vmatpush1.bf16.msra.mxu0 0
      %1347 = vmatprep.subr.bf16.mxu0 0
      %1348 = vmatpush1.bf16.msra.mxu0 0
      %1349 = vmatprep.subr.bf16.mxu0 0
      %1350 = vmatpush1.bf16.msra.mxu0 0
      %1351 = vmatprep.subr.bf16.mxu0 0
      %1352 = vmatpush1.bf16.msra.mxu0 0
      %1353 = vmatprep.subr.bf16.mxu0 0
      %1354 = vmatpush1.bf16.msra.mxu0 0
      %1355 = vmatprep.subr.bf16.mxu0 0
      %1356 = vmatpush1.bf16.msra.mxu0 0
      %1357 = vmatprep.subr.bf16.mxu0 0
      %1358 = vmatpush1.bf16.msra.mxu0 0
      %1359 = vmatprep.subr.bf16.mxu0 0
      %1360 = vmatpush1.bf16.msra.mxu0 0
      %1361 = vmatprep.subr.bf16.mxu0 0
      %1362 = vmatpush1.bf16.msra.mxu0 0
      %1363 = vmatprep.subr.bf16.mxu0 0
      %1364 = vmatpush1.bf16.msra.mxu0 0
      %1365 = vmatprep.subr.bf16.mxu0 0
      %1366 = vmatpush1.bf16.msra.mxu0 0
      %1367 = vmatprep.subr.bf16.mxu0 0
      %1368 = vmatpush1.bf16.msra.mxu0 0
      %1369 = vmatprep.subr.bf16.mxu0 0
      %1370 = vmatpush1.bf16.msra.mxu0 0
      %1371 = vmatprep.subr.bf16.mxu0 0
      %1372 = vmatpush1.bf16.msra.mxu0 0
      %1373 = vmatprep.subr.bf16.mxu0 0
      %1374 = vmatpush1.bf16.msra.mxu0 0
      %1375 = vmatprep.mubr.bf16.mxu0 0
      %1376 = vmatmul.mubr.bf16.gmra.mrb[0].mxu0 %v1338
      %v1377 = vpop.f32.mrb[0].mxu0
      %v1378 = vadd.f32 0.0, %v1377
      %v1379 = vpop.f32.mrb[0].mxu0
      %v1380 = vpop.f32.mrb[0].mxu0
      %v1381 = vpop.f32.mrb[0].mxu0
      %1382 = vdwg.mxu0
      %v1383 = vadd.f32 %v1333, %v1378
      %1384 = vrot.lane.b32.xlu0 %v1115, 127
      %v1385 = vpop.permute.xlu0 %1384
      %v1387 = vsel %vm889, %v1385, 0.0
      %v1388 = vsel %vm728, %v1387, 0.0
      %s1389 = scalar_lea.vmem %s2, 20
      %v1390 = vld [vmem:[%s1389] sm:$0xf]
      %v1391 = vpack.c.bf16 %v1388, %v1388
      %v1393 = vsel %vm613, %v1390, 0
      %v1396 = vsel %vm1134, %v1391, 0
      %1398 = vmatprep.subr.bf16.mxu0 0
      %1399 = vmatpush1.bf16.msra.mxu0 %v1396
      %1400 = vmatprep.subr.bf16.mxu0 0
      %1401 = vmatpush1.bf16.msra.mxu0 0
      %1402 = vmatprep.subr.bf16.mxu0 0
      %1403 = vmatpush1.bf16.msra.mxu0 0
      %1404 = vmatprep.subr.bf16.mxu0 0
      %1405 = vmatpush1.bf16.msra.mxu0 0
      %1406 = vmatprep.subr.bf16.mxu0 0
      %1407 = vmatpush1.bf16.msra.mxu0 0
      %1408 = vmatprep.subr.bf16.mxu0 0
      %1409 = vmatpush1.bf16.msra.mxu0 0
      %1410 = vmatprep.subr.bf16.mxu0 0
      %1411 = vmatpush1.bf16.msra.mxu0 0
      %1412 = vmatprep.subr.bf16.mxu0 0
      %1413 = vmatpush1.bf16.msra.mxu0 0
      %1414 = vmatprep.subr.bf16.mxu0 0
      %1415 = vmatpush1.bf16.msra.mxu0 0
      %1416 = vmatprep.subr.bf16.mxu0 0
      %1417 = vmatpush1.bf16.msra.mxu0 0
      %1418 = vmatprep.subr.bf16.mxu0 0
      %1419 = vmatpush1.bf16.msra.mxu0 0
      %1420 = vmatprep.subr.bf16.mxu0 0
      %1421 = vmatpush1.bf16.msra.mxu0 0
      %1422 = vmatprep.subr.bf16.mxu0 0
      %1423 = vmatpush1.bf16.msra.mxu0 0
      %1424 = vmatprep.subr.bf16.mxu0 0
      %1425 = vmatpush1.bf16.msra.mxu0 0
      %1426 = vmatprep.subr.bf16.mxu0 0
      %1427 = vmatpush1.bf16.msra.mxu0 0
      %1428 = vmatprep.subr.bf16.mxu0 0
      %1429 = vmatpush1.bf16.msra.mxu0 0
      %1430 = vmatprep.mubr.bf16.mxu0 0
      %1431 = vmatmul.mubr.bf16.gmra.mrb[0].mxu0 %v1393
      %v1432 = vpop.f32.mrb[0].mxu0
      %v1433 = vadd.f32 0.0, %v1432
      %v1434 = vpop.f32.mrb[0].mxu0
      %v1435 = vpop.f32.mrb[0].mxu0
      %v1436 = vpop.f32.mrb[0].mxu0
      %1437 = vdwg.mxu0
      %v1438 = vadd.f32 %v1383, %v1433
      %1439 = vrot.lane.b32.xlu0 %v1115, 122
      %v1440 = vpop.permute.xlu0 %1439
      %v1442 = vsel %vm945, %v1440, 0.0
      %v1443 = vsel %vm616, %v1442, 0.0
      %s1444 = scalar_lea.vmem %s2, 24
      %v1445 = vld [vmem:[%s1444] sm:$0xf]
      %v1446 = vpack.c.bf16 %v1443, %v1443
      %v1448 = vsel %vm613, %v1445, 0
      %v1451 = vsel %vm1134, %v1446, 0
      %1453 = vmatprep.subr.bf16.mxu0 0
      %1454 = vmatpush1.bf16.msra.mxu0 %v1451
      %1455 = vmatprep.subr.bf16.mxu0 0
      %1456 = vmatpush1.bf16.msra.mxu0 0
      %1457 = vmatprep.subr.bf16.mxu0 0
      %1458 = vmatpush1.bf16.msra.mxu0 0
      %1459 = vmatprep.subr.bf16.mxu0 0
      %1460 = vmatpush1.bf16.msra.mxu0 0
      %1461 = vmatprep.subr.bf16.mxu0 0
      %1462 = vmatpush1.bf16.msra.mxu0 0
      %1463 = vmatprep.subr.bf16.mxu0 0
      %1464 = vmatpush1.bf16.msra.mxu0 0
      %1465 = vmatprep.subr.bf16.mxu0 0
      %1466 = vmatpush1.bf16.msra.mxu0 0
      %1467 = vmatprep.subr.bf16.mxu0 0
      %1468 = vmatpush1.bf16.msra.mxu0 0
      %1469 = vmatprep.subr.bf16.mxu0 0
      %1470 = vmatpush1.bf16.msra.mxu0 0
      %1471 = vmatprep.subr.bf16.mxu0 0
      %1472 = vmatpush1.bf16.msra.mxu0 0
      %1473 = vmatprep.subr.bf16.mxu0 0
      %1474 = vmatpush1.bf16.msra.mxu0 0
      %1475 = vmatprep.subr.bf16.mxu0 0
      %1476 = vmatpush1.bf16.msra.mxu0 0
      %1477 = vmatprep.subr.bf16.mxu0 0
      %1478 = vmatpush1.bf16.msra.mxu0 0
      %1479 = vmatprep.subr.bf16.mxu0 0
      %1480 = vmatpush1.bf16.msra.mxu0 0
      %1481 = vmatprep.subr.bf16.mxu0 0
      %1482 = vmatpush1.bf16.msra.mxu0 0
      %1483 = vmatprep.subr.bf16.mxu0 0
      %1484 = vmatpush1.bf16.msra.mxu0 0
      %1485 = vmatprep.mubr.bf16.mxu0 0
      %1486 = vmatmul.mubr.bf16.gmra.mrb[0].mxu0 %v1448
      %v1487 = vpop.f32.mrb[0].mxu0
      %v1488 = vadd.f32 0.0, %v1487
      %v1489 = vpop.f32.mrb[0].mxu0
      %v1490 = vpop.f32.mrb[0].mxu0
      %v1491 = vpop.f32.mrb[0].mxu0
      %1492 = vdwg.mxu0
      %v1493 = vadd.f32 %v1438, %v1488
      %1494 = vrot.lane.b32.xlu0 %v1115, 121
      %v1495 = vpop.permute.xlu0 %1494
      %v1497 = vsel %vm1001, %v1495, 0.0
      %s1498 = scalar_lea.vmem %s2, 28
      %v1499 = vld [vmem:[%s1498] sm:$0xf]
      %v1500 = vpack.c.bf16 %v1497, %v1497
      %v1502 = vsel %vm613, %v1499, 0
      %v1505 = vsel %vm1134, %v1500, 0
      %1507 = vmatprep.subr.bf16.mxu0 0
      %1508 = vmatpush1.bf16.msra.mxu0 %v1505
      %1509 = vmatprep.subr.bf16.mxu0 0
      %1510 = vmatpush1.bf16.msra.mxu0 0
      %1511 = vmatprep.subr.bf16.mxu0 0
      %1512 = vmatpush1.bf16.msra.mxu0 0
      %1513 = vmatprep.subr.bf16.mxu0 0
      %1514 = vmatpush1.bf16.msra.mxu0 0
      %1515 = vmatprep.subr.bf16.mxu0 0
      %1516 = vmatpush1.bf16.msra.mxu0 0
      %1517 = vmatprep.subr.bf16.mxu0 0
      %1518 = vmatpush1.bf16.msra.mxu0 0
      %1519 = vmatprep.subr.bf16.mxu0 0
      %1520 = vmatpush1.bf16.msra.mxu0 0
      %1521 = vmatprep.subr.bf16.mxu0 0
      %1522 = vmatpush1.bf16.msra.mxu0 0
      %1523 = vmatprep.subr.bf16.mxu0 0
      %1524 = vmatpush1.bf16.msra.mxu0 0
      %1525 = vmatprep.subr.bf16.mxu0 0
      %1526 = vmatpush1.bf16.msra.mxu0 0
      %1527 = vmatprep.subr.bf16.mxu0 0
      %1528 = vmatpush1.bf16.msra.mxu0 0
      %1529 = vmatprep.subr.bf16.mxu0 0
      %1530 = vmatpush1.bf16.msra.mxu0 0
      %1531 = vmatprep.subr.bf16.mxu0 0
      %1532 = vmatpush1.bf16.msra.mxu0 0
      %1533 = vmatprep.subr.bf16.mxu0 0
      %1534 = vmatpush1.bf16.msra.mxu0 0
      %1535 = vmatprep.subr.bf16.mxu0 0
      %1536 = vmatpush1.bf16.msra.mxu0 0
      %1537 = vmatprep.subr.bf16.mxu0 0
      %1538 = vmatpush1.bf16.msra.mxu0 0
      %1539 = vmatprep.mubr.bf16.mxu0 0
      %1540 = vmatmul.mubr.bf16.gmra.mrb[0].mxu0 %v1502
      %v1541 = vpop.f32.mrb[0].mxu0
      %v1542 = vadd.f32 0.0, %v1541
      %v1543 = vpop.f32.mrb[0].mxu0
      %v1544 = vpop.f32.mrb[0].mxu0
      %v1545 = vpop.f32.mrb[0].mxu0
      %1546 = vdwg.mxu0
      %v1547 = vadd.f32 %v1493, %v1542
      %1548 = vrot.lane.b32.xlu0 %v1115, 120
      %v1549 = vpop.permute.xlu0 %1548
      %v1551 = vsel %vm1056, %v1549, 0.0
      %v1552 = vsel %vm728, %v1551, 0.0
      %s1553 = scalar_lea.vmem %s2, 32
      %v1554 = vld [vmem:[%s1553] sm:$0xf]
      %v1555 = vpack.c.bf16 %v1552, %v1552
      %v1557 = vsel %vm613, %v1554, 0
      %v1560 = vsel %vm1134, %v1555, 0
      %1562 = vmatprep.subr.bf16.mxu0 0
      %1563 = vmatpush1.bf16.msra.mxu0 %v1560
      %1564 = vmatprep.subr.bf16.mxu0 0
      %1565 = vmatpush1.bf16.msra.mxu0 0
      %1566 = vmatprep.subr.bf16.mxu0 0
      %1567 = vmatpush1.bf16.msra.mxu0 0
      %1568 = vmatprep.subr.bf16.mxu0 0
      %1569 = vmatpush1.bf16.msra.mxu0 0
      %1570 = vmatprep.subr.bf16.mxu0 0
      %1571 = vmatpush1.bf16.msra.mxu0 0
      %1572 = vmatprep.subr.bf16.mxu0 0
      %1573 = vmatpush1.bf16.msra.mxu0 0
      %1574 = vmatprep.subr.bf16.mxu0 0
      %1575 = vmatpush1.bf16.msra.mxu0 0
      %1576 = vmatprep.subr.bf16.mxu0 0
      %1577 = vmatpush1.bf16.msra.mxu0 0
      %1578 = vmatprep.subr.bf16.mxu0 0
      %1579 = vmatpush1.bf16.msra.mxu0 0
      %1580 = vmatprep.subr.bf16.mxu0 0
      %1581 = vmatpush1.bf16.msra.mxu0 0
      %1582 = vmatprep.subr.bf16.mxu0 0
      %1583 = vmatpush1.bf16.msra.mxu0 0
      %1584 = vmatprep.subr.bf16.mxu0 0
      %1585 = vmatpush1.bf16.msra.mxu0 0
      %1586 = vmatprep.subr.bf16.mxu0 0
      %1587 = vmatpush1.bf16.msra.mxu0 0
      %1588 = vmatprep.subr.bf16.mxu0 0
      %1589 = vmatpush1.bf16.msra.mxu0 0
      %1590 = vmatprep.subr.bf16.mxu0 0
      %1591 = vmatpush1.bf16.msra.mxu0 0
      %1592 = vmatprep.subr.bf16.mxu0 0
      %1593 = vmatpush1.bf16.msra.mxu0 0
      %1594 = vmatprep.mubr.bf16.mxu0 0
      %1595 = vmatmul.mubr.bf16.gmra.mrb[0].mxu0 %v1557
      %v1596 = vpop.f32.mrb[0].mxu0
      %v1597 = vadd.f32 0.0, %v1596
      %v1598 = vpop.f32.mrb[0].mxu0
      %v1599 = vpop.f32.mrb[0].mxu0
      %v1600 = vpop.f32.mrb[0].mxu0
      %1601 = vdwg.mxu0
      %v1602 = vadd.f32 %v1547, %v1597
      %1603 = vset.pattern.permute.xlu0 1
      %1604 = vperm.xlu0 %1603, %v402
      %v1605 = vpop.permute.xlu0 %1604
      %v1607 = vadd.f32 %v1602, %v1605
      %v1609 = vsel %vm628, %v403, 0
      %1611 = vmatprep.subr.bf16.mxu0 0
      %1612 = vmatpush1.bf16.msra.mxu0 %v843
      %1613 = vmatprep.subr.bf16.mxu0 0
      %1614 = vmatpush1.bf16.msra.mxu0 0
      %1615 = vmatprep.subr.bf16.mxu0 0
      %1616 = vmatpush1.bf16.msra.mxu0 0
      %1617 = vmatprep.subr.bf16.mxu0 0
      %1618 = vmatpush1.bf16.msra.mxu0 0
      %1619 = vmatprep.subr.bf16.mxu0 0
      %1620 = vmatpush1.bf16.msra.mxu0 0
      %1621 = vmatprep.subr.bf16.mxu0 0
      %1622 = vmatpush1.bf16.msra.mxu0 0
      %1623 = vmatprep.subr.bf16.mxu0 0
      %1624 = vmatpush1.bf16.msra.mxu0 0
      %1625 = vmatprep.subr.bf16.mxu0 0
      %1626 = vmatpush1.bf16.msra.mxu0 0
      %1627 = vmatprep.subr.bf16.mxu0 0
      %1628 = vmatpush1.bf16.msra.mxu0 0
      %1629 = vmatprep.subr.bf16.mxu0 0
      %1630 = vmatpush1.bf16.msra.mxu0 0
      %1631 = vmatprep.subr.bf16.mxu0 0
      %1632 = vmatpush1.bf16.msra.mxu0 0
      %1633 = vmatprep.subr.bf16.mxu0 0
      %1634 = vmatpush1.bf16.msra.mxu0 0
      %1635 = vmatprep.subr.bf16.mxu0 0
      %1636 = vmatpush1.bf16.msra.mxu0 0
      %1637 = vmatprep.subr.bf16.mxu0 0
      %1638 = vmatpush1.bf16.msra.mxu0 0
      %1639 = vmatprep.subr.bf16.mxu0 0
      %1640 = vmatpush1.bf16.msra.mxu0 0
      %1641 = vmatprep.subr.bf16.mxu0 0
      %1642 = vmatpush1.bf16.msra.mxu0 0
      %1643 = vmatprep.mubr.bf16.mxu0 0
      %1644 = vmatmul.mubr.bf16.gmra.mrb[0].mxu0 %v1609
      %v1645 = vpop.f32.mrb[0].mxu0
      %v1646 = vadd.f32 0.0, %v1645
      %v1647 = vpop.f32.mrb[0].mxu0
      %v1648 = vpop.f32.mrb[0].mxu0
      %v1649 = vpop.f32.mrb[0].mxu0
      %1650 = vdwg.mxu0
      %v1651 = vadd.f32 %v1607, %v1646
      %v1652 = vld [vmem:[%s7] sm:$0xff]
      %v1653 = vld [vmem:[%s7 + $0x8] sm:$0xff]
      %v1654 = vld [vmem:[%s7 + $0x10] sm:$0xff]
      %v1655 = vld [vmem:[%s7 + $0x18] sm:$0xff]
      %v1656 = vld [vmem:[%s7 + $0x20] sm:$0xff]
      %v1657 = vld [vmem:[%s7 + $0x28] sm:$0xff]
      %v1658 = vld [vmem:[%s7 + $0x30] sm:$0x1]
      %1660 = vrot.lane.b32.xlu0 %v1651, 127
      %v1661 = vpop.permute.xlu0 %1660
      %v1663 = vsel %vm889, %v1661, 0.0
      %v1664 = vmax.f32 %v1651, %v1663
      %1665 = vrot.lane.b32.xlu0 %v1651, 126
      %v1666 = vpop.permute.xlu0 %1665
      %vm1668 = vcmask 384000
      %v1669 = vsel %vm1668, %v1666, 0.0
      %v1670 = vmax.f32 %v1664, %v1669
      %1671 = vrot.lane.b32.xlu0 %v1651, 121
      %v1672 = vpop.permute.xlu0 %1671
      %v1674 = vsel %vm1001, %v1672, 0.0
      %v1675 = vmax.f32 %v1670, %v1674
      %1676 = vrot.lane.b32.xlu0 %v1651, 120
      %v1677 = vpop.permute.xlu0 %1676
      %v1679 = vsel %vm1056, %v1677, 0.0
      %v1680 = vmax.f32 %v1675, %v1679
      %1681 = vrot.lane.b32.xlu0 %v1651, 119
      %v1682 = vpop.permute.xlu0 %1681
      %vm1684 = vcmask 326656
      %v1685 = vsel %vm1684, %v1682, 0.0
      %v1686 = vmax.f32 %v1680, %v1685
      %1687 = vrot.lane.b32.xlu0 %v1651, 114
      %v1688 = vpop.permute.xlu0 %1687
      %vm1690 = vcmask 285696
      %v1691 = vsel %vm1690, %v1688, 0.0
      %v1692 = vmax.f32 %v1686, %v1691
      %1693 = vrot.lane.b32.xlu0 %v1651, 113
      %v1694 = vpop.permute.xlu0 %1693
      %vm1696 = vcmask 277504
      %v1697 = vsel %vm1696, %v1694, 0.0
      %v1698 = vmax.f32 %v1692, %v1697
      %1699 = vrot.lane.b32.xlu0 %v1651, 112
      %v1700 = vpop.permute.xlu0 %1699
      %vm1702 = vcmask 269312
      %v1703 = vsel %vm1702, %v1700, 0.0
      %v1704 = vmax.f32 %v1698, %v1703
      %vm1705 = vcmask 400384
      %v1707 = vsel %vm1705, %v1704, 0
      %vm1709 = vcmask 1040384
      %v1711 = vsel %vm1709, %v1658, 0
      %1713 = vmatprep.subr.mxu0 0.0
      %1714 = vmatpush1.msra.mxu0 %v1652
      %1715 = vmatprep.subr.mxu0 0.0
      %1716 = vmatpush1.msra.mxu0 %v1653
      %1717 = vmatprep.subr.mxu0 0.0
      %1718 = vmatpush1.msra.mxu0 %v1654
      %1719 = vmatprep.subr.mxu0 0.0
      %1720 = vmatpush1.msra.mxu0 %v1655
      %1721 = vmatprep.subr.mxu0 0.0
      %1722 = vmatpush1.msra.mxu0 %v1656
      %1723 = vmatprep.subr.mxu0 0.0
      %1724 = vmatpush1.msra.mxu0 %v1657
      %1725 = vmatprep.subr.mxu0 0.0
      %1726 = vmatpush1.msra.mxu0 %v1711
      %1727 = vmatprep.subr.mxu0 0.0
      %1728 = vmatpush1.msra.mxu0 0.0
      %1729 = vmatprep.subr.mxu0 0.0
      %1730 = vmatpush1.msra.mxu0 0.0
      %1731 = vmatprep.subr.mxu0 0.0
      %1732 = vmatpush1.msra.mxu0 0.0
      %1733 = vmatprep.subr.mxu0 0.0
      %1734 = vmatpush1.msra.mxu0 0.0
      %1735 = vmatprep.subr.mxu0 0.0
      %1736 = vmatpush1.msra.mxu0 0.0
      %1737 = vmatprep.subr.mxu0 0.0
      %1738 = vmatpush1.msra.mxu0 0.0
      %1739 = vmatprep.subr.mxu0 0.0
      %1740 = vmatpush1.msra.mxu0 0.0
      %1741 = vmatprep.subr.mxu0 0.0
      %1742 = vmatpush1.msra.mxu0 0.0
      %1743 = vmatprep.subr.mxu0 0.0
      %1744 = vmatpush1.msra.mxu0 0.0
      %1745 = vmatprep.subr.mxu0 0.0
      %1746 = vmatpush1.msra.mxu0 0.0
      %1747 = vmatprep.subr.mxu0 0.0
      %1748 = vmatpush1.msra.mxu0 0.0
      %1749 = vmatprep.subr.mxu0 0.0
      %1750 = vmatpush1.msra.mxu0 0.0
      %1751 = vmatprep.subr.mxu0 0.0
      %1752 = vmatpush1.msra.mxu0 0.0
      %1753 = vmatprep.subr.mxu0 0.0
      %1754 = vmatpush1.msra.mxu0 0.0
      %1755 = vmatprep.subr.mxu0 0.0
      %1756 = vmatpush1.msra.mxu0 0.0
      %1757 = vmatprep.subr.mxu0 0.0
      %1758 = vmatpush1.msra.mxu0 0.0
      %1759 = vmatprep.subr.mxu0 0.0
      %1760 = vmatpush1.msra.mxu0 0.0
      %1761 = vmatprep.subr.mxu0 0.0
      %1762 = vmatpush1.msra.mxu0 0.0
      %1763 = vmatprep.subr.mxu0 0.0
      %1764 = vmatpush1.msra.mxu0 0.0
      %1765 = vmatprep.subr.mxu0 0.0
      %1766 = vmatpush1.msra.mxu0 0.0
      %1767 = vmatprep.subr.mxu0 0.0
      %1768 = vmatpush1.msra.mxu0 0.0
      %1769 = vmatprep.subr.mxu0 0.0
      %1770 = vmatpush1.msra.mxu0 0.0
      %1771 = vmatprep.subr.mxu0 0.0
      %1772 = vmatpush1.msra.mxu0 0.0
      %1773 = vmatprep.subr.mxu0 0.0
      %1774 = vmatpush1.msra.mxu0 0.0
      %1775 = vmatprep.subr.mxu0 0.0
      %1776 = vmatpush1.msra.mxu0 0.0
      %1777 = vmatprep.mubr.f32.mxu0 0.0
      %1778 = vmatmul.mubr.f32.gmra.mrb[0].mxu0 %v1707
      %v1779 = vpop.f32.mrb[0].mxu0
      %v1780 = vadd.f32 0.0, %v1779
      %v1781 = vpop.f32.mrb[0].mxu0
      %1782 = vdwg.mxu0
      %1784 = vrot.lane.b32.xlu0 %v1780, 4
      %v1785 = vpop.permute.xlu0 %1784
      %v1787 = vsel %vm628, 0.0, %v1785
      %v1788 = vsel %vm400, 1, 0
      %vm1789 = vcmp.eq.s32.totalorder %v1788, 1
      %v1790 = vsel %vm1789, %v1787, 0.0
      %s1791 = scalar_lea.vmem %s2, 36
      %v1792 = vld [vmem:[%s1791] sm:$0xf]
      %v1793 = vpack.c.bf16 %v1790, %v1790
      %1794 = vrot.lane.b32.xlu0 %v1780, 3
      %v1795 = vpop.permute.xlu0 %1794
      %vm1797 = vcmask 23552
      %v1798 = vsel %vm1797, 0.0, %v1795
      %s1799 = scalar_lea.vmem %s2, 40
      %v1800 = vld [vmem:[%s1799] sm:$0xf]
      %v1801 = vpack.c.bf16 %v1798, %v1798
      %v1803 = vsel %vm613, %v1800, 0
      %v1806 = vsel %vm1134, %v1801, 0
      %1808 = vmatprep.subr.bf16.mxu0 0
      %1809 = vmatpush1.bf16.msra.mxu0 %v1806
      %1810 = vmatprep.subr.bf16.mxu0 0
      %1811 = vmatpush1.bf16.msra.mxu0 0
      %1812 = vmatprep.subr.bf16.mxu0 0
      %1813 = vmatpush1.bf16.msra.mxu0 0
      %1814 = vmatprep.subr.bf16.mxu0 0
      %1815 = vmatpush1.bf16.msra.mxu0 0
      %1816 = vmatprep.subr.bf16.mxu0 0
      %1817 = vmatpush1.bf16.msra.mxu0 0
      %1818 = vmatprep.subr.bf16.mxu0 0
      %1819 = vmatpush1.bf16.msra.mxu0 0
      %1820 = vmatprep.subr.bf16.mxu0 0
      %1821 = vmatpush1.bf16.msra.mxu0 0
      %1822 = vmatprep.subr.bf16.mxu0 0
      %1823 = vmatpush1.bf16.msra.mxu0 0
      %1824 = vmatprep.subr.bf16.mxu0 0
      %1825 = vmatpush1.bf16.msra.mxu0 0
      %1826 = vmatprep.subr.bf16.mxu0 0
      %1827 = vmatpush1.bf16.msra.mxu0 0
      %1828 = vmatprep.subr.bf16.mxu0 0
      %1829 = vmatpush1.bf16.msra.mxu0 0
      %1830 = vmatprep.subr.bf16.mxu0 0
      %1831 = vmatpush1.bf16.msra.mxu0 0
      %1832 = vmatprep.subr.bf16.mxu0 0
      %1833 = vmatpush1.bf16.msra.mxu0 0
      %1834 = vmatprep.subr.bf16.mxu0 0
      %1835 = vmatpush1.bf16.msra.mxu0 0
      %1836 = vmatprep.subr.bf16.mxu0 0
      %1837 = vmatpush1.bf16.msra.mxu0 0
      %1838 = vmatprep.subr.bf16.mxu0 0
      %1839 = vmatpush1.bf16.msra.mxu0 0
      %1840 = vmatprep.mubr.bf16.mxu0 0
      %1841 = vmatmul.mubr.bf16.gmra.mrb[0].mxu0 %v1803
      %v1842 = vpop.f32.mrb[0].mxu0
      %v1843 = vadd.f32 0.0, %v1842
      %v1844 = vpop.f32.mrb[0].mxu0
      %v1845 = vpop.f32.mrb[0].mxu0
      %v1846 = vpop.f32.mrb[0].mxu0
      %1847 = vdwg.mxu0
      %v1849 = vsel %vm613, %v1792, 0
      %v1852 = vsel %vm1134, %v1793, 0
      %1854 = vmatprep.subr.bf16.mxu0 0
      %1855 = vmatpush1.bf16.msra.mxu0 %v1852
      %1856 = vmatprep.subr.bf16.mxu0 0
      %1857 = vmatpush1.bf16.msra.mxu0 0
      %1858 = vmatprep.subr.bf16.mxu0 0
      %1859 = vmatpush1.bf16.msra.mxu0 0
      %1860 = vmatprep.subr.bf16.mxu0 0
      %1861 = vmatpush1.bf16.msra.mxu0 0
      %1862 = vmatprep.subr.bf16.mxu0 0
      %1863 = vmatpush1.bf16.msra.mxu0 0
      %1864 = vmatprep.subr.bf16.mxu0 0
      %1865 = vmatpush1.bf16.msra.mxu0 0
      %1866 = vmatprep.subr.bf16.mxu0 0
      %1867 = vmatpush1.bf16.msra.mxu0 0
      %1868 = vmatprep.subr.bf16.mxu0 0
      %1869 = vmatpush1.bf16.msra.mxu0 0
      %1870 = vmatprep.subr.bf16.mxu0 0
      %1871 = vmatpush1.bf16.msra.mxu0 0
      %1872 = vmatprep.subr.bf16.mxu0 0
      %1873 = vmatpush1.bf16.msra.mxu0 0
      %1874 = vmatprep.subr.bf16.mxu0 0
      %1875 = vmatpush1.bf16.msra.mxu0 0
      %1876 = vmatprep.subr.bf16.mxu0 0
      %1877 = vmatpush1.bf16.msra.mxu0 0
      %1878 = vmatprep.subr.bf16.mxu0 0
      %1879 = vmatpush1.bf16.msra.mxu0 0
      %1880 = vmatprep.subr.bf16.mxu0 0
      %1881 = vmatpush1.bf16.msra.mxu0 0
      %1882 = vmatprep.subr.bf16.mxu0 0
      %1883 = vmatpush1.bf16.msra.mxu0 0
      %1884 = vmatprep.subr.bf16.mxu0 0
      %1885 = vmatpush1.bf16.msra.mxu0 0
      %1886 = vmatprep.mubr.bf16.mxu0 0
      %1887 = vmatmul.mubr.bf16.gmra.mrb[0].mxu0 %v1849
      %v1888 = vpop.f32.mrb[0].mxu0
      %v1889 = vadd.f32 %v1843, %v1888
      %v1890 = vpop.f32.mrb[0].mxu0
      %v1891 = vpop.f32.mrb[0].mxu0
      %v1892 = vpop.f32.mrb[0].mxu0
      %1893 = vdwg.mxu0
      %1894 = vrot.lane.b32.xlu0 %v1780, 2
      %v1895 = vpop.permute.xlu0 %1894
      %vm1897 = vcmask 15360
      %v1898 = vsel %vm1897, 0.0, %v1895
      %v1899 = vsel %vm401, 1, 0
      %vm1900 = vcmp.eq.s32.totalorder %v1899, 1
      %v1901 = vsel %vm1900, %v1898, 0.0
      %s1902 = scalar_lea.vmem %s2, 44
      %v1903 = vld [vmem:[%s1902] sm:$0xf]
      %v1904 = vpack.c.bf16 %v1901, %v1901
      %v1906 = vsel %vm613, %v1903, 0
      %v1909 = vsel %vm1134, %v1904, 0
      %1911 = vmatprep.subr.bf16.mxu0 0
      %1912 = vmatpush1.bf16.msra.mxu0 %v1909
      %1913 = vmatprep.subr.bf16.mxu0 0
      %1914 = vmatpush1.bf16.msra.mxu0 0
      %1915 = vmatprep.subr.bf16.mxu0 0
      %1916 = vmatpush1.bf16.msra.mxu0 0
      %1917 = vmatprep.subr.bf16.mxu0 0
      %1918 = vmatpush1.bf16.msra.mxu0 0
      %1919 = vmatprep.subr.bf16.mxu0 0
      %1920 = vmatpush1.bf16.msra.mxu0 0
      %1921 = vmatprep.subr.bf16.mxu0 0
      %1922 = vmatpush1.bf16.msra.mxu0 0
      %1923 = vmatprep.subr.bf16.mxu0 0
      %1924 = vmatpush1.bf16.msra.mxu0 0
      %1925 = vmatprep.subr.bf16.mxu0 0
      %1926 = vmatpush1.bf16.msra.mxu0 0
      %1927 = vmatprep.subr.bf16.mxu0 0
      %1928 = vmatpush1.bf16.msra.mxu0 0
      %1929 = vmatprep.subr.bf16.mxu0 0
      %1930 = vmatpush1.bf16.msra.mxu0 0
      %1931 = vmatprep.subr.bf16.mxu0 0
      %1932 = vmatpush1.bf16.msra.mxu0 0
      %1933 = vmatprep.subr.bf16.mxu0 0
      %1934 = vmatpush1.bf16.msra.mxu0 0
      %1935 = vmatprep.subr.bf16.mxu0 0
      %1936 = vmatpush1.bf16.msra.mxu0 0
      %1937 = vmatprep.subr.bf16.mxu0 0
      %1938 = vmatpush1.bf16.msra.mxu0 0
      %1939 = vmatprep.subr.bf16.mxu0 0
      %1940 = vmatpush1.bf16.msra.mxu0 0
      %1941 = vmatprep.subr.bf16.mxu0 0
      %1942 = vmatpush1.bf16.msra.mxu0 0
      %1943 = vmatprep.mubr.bf16.mxu0 0
      %1944 = vmatmul.mubr.bf16.gmra.mrb[0].mxu0 %v1906
      %v1945 = vpop.f32.mrb[0].mxu0
      %v1946 = vadd.f32 0.0, %v1945
      %v1947 = vpop.f32.mrb[0].mxu0
      %v1948 = vpop.f32.mrb[0].mxu0
      %v1949 = vpop.f32.mrb[0].mxu0
      %1950 = vdwg.mxu0
      %v1951 = vadd.f32 %v1889, %v1946
      %1952 = vrot.lane.b32.xlu0 %v1780, 1
      %v1953 = vpop.permute.xlu0 %1952
      %v1955 = vsel %vm783, 0.0, %v1953
      %v1956 = vsel %vm1789, %v1955, 0.0
      %s1957 = scalar_lea.vmem %s2, 48
      %v1958 = vld [vmem:[%s1957] sm:$0xf]
      %v1959 = vpack.c.bf16 %v1956, %v1956
      %v1961 = vsel %vm613, %v1958, 0
      %v1964 = vsel %vm1134, %v1959, 0
      %1966 = vmatprep.subr.bf16.mxu0 0
      %1967 = vmatpush1.bf16.msra.mxu0 %v1964
      %1968 = vmatprep.subr.bf16.mxu0 0
      %1969 = vmatpush1.bf16.msra.mxu0 0
      %1970 = vmatprep.subr.bf16.mxu0 0
      %1971 = vmatpush1.bf16.msra.mxu0 0
      %1972 = vmatprep.subr.bf16.mxu0 0
      %1973 = vmatpush1.bf16.msra.mxu0 0
      %1974 = vmatprep.subr.bf16.mxu0 0
      %1975 = vmatpush1.bf16.msra.mxu0 0
      %1976 = vmatprep.subr.bf16.mxu0 0
      %1977 = vmatpush1.bf16.msra.mxu0 0
      %1978 = vmatprep.subr.bf16.mxu0 0
      %1979 = vmatpush1.bf16.msra.mxu0 0
      %1980 = vmatprep.subr.bf16.mxu0 0
      %1981 = vmatpush1.bf16.msra.mxu0 0
      %1982 = vmatprep.subr.bf16.mxu0 0
      %1983 = vmatpush1.bf16.msra.mxu0 0
      %1984 = vmatprep.subr.bf16.mxu0 0
      %1985 = vmatpush1.bf16.msra.mxu0 0
      %1986 = vmatprep.subr.bf16.mxu0 0
      %1987 = vmatpush1.bf16.msra.mxu0 0
      %1988 = vmatprep.subr.bf16.mxu0 0
      %1989 = vmatpush1.bf16.msra.mxu0 0
      %1990 = vmatprep.subr.bf16.mxu0 0
      %1991 = vmatpush1.bf16.msra.mxu0 0
      %1992 = vmatprep.subr.bf16.mxu0 0
      %1993 = vmatpush1.bf16.msra.mxu0 0
      %1994 = vmatprep.subr.bf16.mxu0 0
      %1995 = vmatpush1.bf16.msra.mxu0 0
      %1996 = vmatprep.subr.bf16.mxu0 0
      %1997 = vmatpush1.bf16.msra.mxu0 0
      %1998 = vmatprep.mubr.bf16.mxu0 0
      %1999 = vmatmul.mubr.bf16.gmra.mrb[0].mxu0 %v1961
      %v2000 = vpop.f32.mrb[0].mxu0
      %v2001 = vadd.f32 0.0, %v2000
      %v2002 = vpop.f32.mrb[0].mxu0
      %v2003 = vpop.f32.mrb[0].mxu0
      %v2004 = vpop.f32.mrb[0].mxu0
      %2005 = vdwg.mxu0
      %v2006 = vadd.f32 %v1951, %v2001
      %s2007 = scalar_lea.vmem %s2, 52
      %v2008 = vld [vmem:[%s2007] sm:$0xf]
      %v2009 = vpack.c.bf16 %v1780, %v1780
      %v2011 = vsel %vm613, %v2008, 0
      %v2014 = vsel %vm1134, %v2009, 0
      %2016 = vmatprep.subr.bf16.mxu0 0
      %2017 = vmatpush1.bf16.msra.mxu0 %v2014
      %2018 = vmatprep.subr.bf16.mxu0 0
      %2019 = vmatpush1.bf16.msra.mxu0 0
      %2020 = vmatprep.subr.bf16.mxu0 0
      %2021 = vmatpush1.bf16.msra.mxu0 0
      %2022 = vmatprep.subr.bf16.mxu0 0
      %2023 = vmatpush1.bf16.msra.mxu0 0
      %2024 = vmatprep.subr.bf16.mxu0 0
      %2025 = vmatpush1.bf16.msra.mxu0 0
      %2026 = vmatprep.subr.bf16.mxu0 0
      %2027 = vmatpush1.bf16.msra.mxu0 0
      %2028 = vmatprep.subr.bf16.mxu0 0
      %2029 = vmatpush1.bf16.msra.mxu0 0
      %2030 = vmatprep.subr.bf16.mxu0 0
      %2031 = vmatpush1.bf16.msra.mxu0 0
      %2032 = vmatprep.subr.bf16.mxu0 0
      %2033 = vmatpush1.bf16.msra.mxu0 0
      %2034 = vmatprep.subr.bf16.mxu0 0
      %2035 = vmatpush1.bf16.msra.mxu0 0
      %2036 = vmatprep.subr.bf16.mxu0 0
      %2037 = vmatpush1.bf16.msra.mxu0 0
      %2038 = vmatprep.subr.bf16.mxu0 0
      %2039 = vmatpush1.bf16.msra.mxu0 0
      %2040 = vmatprep.subr.bf16.mxu0 0
      %2041 = vmatpush1.bf16.msra.mxu0 0
      %2042 = vmatprep.subr.bf16.mxu0 0
      %2043 = vmatpush1.bf16.msra.mxu0 0
      %2044 = vmatprep.subr.bf16.mxu0 0
      %2045 = vmatpush1.bf16.msra.mxu0 0
      %2046 = vmatprep.subr.bf16.mxu0 0
      %2047 = vmatpush1.bf16.msra.mxu0 0
      %2048 = vmatprep.mubr.bf16.mxu0 0
      %2049 = vmatmul.mubr.bf16.gmra.mrb[0].mxu0 %v2011
      %v2050 = vpop.f32.mrb[0].mxu0
      %v2051 = vadd.f32 0.0, %v2050
      %v2052 = vpop.f32.mrb[0].mxu0
      %v2053 = vpop.f32.mrb[0].mxu0
      %v2054 = vpop.f32.mrb[0].mxu0
      %2055 = vdwg.mxu0
      %v2056 = vadd.f32 %v2006, %v2051
      %2057 = vrot.lane.b32.xlu0 %v1780, 127
      %v2058 = vpop.permute.xlu0 %2057
      %v2060 = vsel %vm613, %v2058, 0.0
      %v2061 = vsel %vm1900, %v2060, 0.0
      %s2062 = scalar_lea.vmem %s2, 56
      %v2063 = vld [vmem:[%s2062] sm:$0xf]
      %v2064 = vpack.c.bf16 %v2061, %v2061
      %v2066 = vsel %vm613, %v2063, 0
      %v2069 = vsel %vm1134, %v2064, 0
      %2071 = vmatprep.subr.bf16.mxu0 0
      %2072 = vmatpush1.bf16.msra.mxu0 %v2069
      %2073 = vmatprep.subr.bf16.mxu0 0
      %2074 = vmatpush1.bf16.msra.mxu0 0
      %2075 = vmatprep.subr.bf16.mxu0 0
      %2076 = vmatpush1.bf16.msra.mxu0 0
      %2077 = vmatprep.subr.bf16.mxu0 0
      %2078 = vmatpush1.bf16.msra.mxu0 0
      %2079 = vmatprep.subr.bf16.mxu0 0
      %2080 = vmatpush1.bf16.msra.mxu0 0
      %2081 = vmatprep.subr.bf16.mxu0 0
      %2082 = vmatpush1.bf16.msra.mxu0 0
      %2083 = vmatprep.subr.bf16.mxu0 0
      %2084 = vmatpush1.bf16.msra.mxu0 0
      %2085 = vmatprep.subr.bf16.mxu0 0
      %2086 = vmatpush1.bf16.msra.mxu0 0
      %2087 = vmatprep.subr.bf16.mxu0 0
      %2088 = vmatpush1.bf16.msra.mxu0 0
      %2089 = vmatprep.subr.bf16.mxu0 0
      %2090 = vmatpush1.bf16.msra.mxu0 0
      %2091 = vmatprep.subr.bf16.mxu0 0
      %2092 = vmatpush1.bf16.msra.mxu0 0
      %2093 = vmatprep.subr.bf16.mxu0 0
      %2094 = vmatpush1.bf16.msra.mxu0 0
      %2095 = vmatprep.subr.bf16.mxu0 0
      %2096 = vmatpush1.bf16.msra.mxu0 0
      %2097 = vmatprep.subr.bf16.mxu0 0
      %2098 = vmatpush1.bf16.msra.mxu0 0
      %2099 = vmatprep.subr.bf16.mxu0 0
      %2100 = vmatpush1.bf16.msra.mxu0 0
      %2101 = vmatprep.subr.bf16.mxu0 0
      %2102 = vmatpush1.bf16.msra.mxu0 0
      %2103 = vmatprep.mubr.bf16.mxu0 0
      %2104 = vmatmul.mubr.bf16.gmra.mrb[0].mxu0 %v2066
      %v2105 = vpop.f32.mrb[0].mxu0
      %v2106 = vadd.f32 0.0, %v2105
      %v2107 = vpop.f32.mrb[0].mxu0
      %v2108 = vpop.f32.mrb[0].mxu0
      %v2109 = vpop.f32.mrb[0].mxu0
      %2110 = vdwg.mxu0
      %v2111 = vadd.f32 %v2056, %v2106
      %2112 = vrot.lane.b32.xlu0 %v1780, 126
      %v2113 = vpop.permute.xlu0 %2112
      %v2115 = vsel %vm623, %v2113, 0.0
      %v2116 = vsel %vm1789, %v2115, 0.0
      %s2117 = scalar_lea.vmem %s2, 60
      %v2118 = vld [vmem:[%s2117] sm:$0xf]
      %v2119 = vpack.c.bf16 %v2116, %v2116
      %v2121 = vsel %vm613, %v2118, 0
      %v2124 = vsel %vm1134, %v2119, 0
      %2126 = vmatprep.subr.bf16.mxu0 0
      %2127 = vmatpush1.bf16.msra.mxu0 %v2124
      %2128 = vmatprep.subr.bf16.mxu0 0
      %2129 = vmatpush1.bf16.msra.mxu0 0
      %2130 = vmatprep.subr.bf16.mxu0 0
      %2131 = vmatpush1.bf16.msra.mxu0 0
      %2132 = vmatprep.subr.bf16.mxu0 0
      %2133 = vmatpush1.bf16.msra.mxu0 0
      %2134 = vmatprep.subr.bf16.mxu0 0
      %2135 = vmatpush1.bf16.msra.mxu0 0
      %2136 = vmatprep.subr.bf16.mxu0 0
      %2137 = vmatpush1.bf16.msra.mxu0 0
      %2138 = vmatprep.subr.bf16.mxu0 0
      %2139 = vmatpush1.bf16.msra.mxu0 0
      %2140 = vmatprep.subr.bf16.mxu0 0
      %2141 = vmatpush1.bf16.msra.mxu0 0
      %2142 = vmatprep.subr.bf16.mxu0 0
      %2143 = vmatpush1.bf16.msra.mxu0 0
      %2144 = vmatprep.subr.bf16.mxu0 0
      %2145 = vmatpush1.bf16.msra.mxu0 0
      %2146 = vmatprep.subr.bf16.mxu0 0
      %2147 = vmatpush1.bf16.msra.mxu0 0
      %2148 = vmatprep.subr.bf16.mxu0 0
      %2149 = vmatpush1.bf16.msra.mxu0 0
      %2150 = vmatprep.subr.bf16.mxu0 0
      %2151 = vmatpush1.bf16.msra.mxu0 0
      %2152 = vmatprep.subr.bf16.mxu0 0
      %2153 = vmatpush1.bf16.msra.mxu0 0
      %2154 = vmatprep.subr.bf16.mxu0 0
      %2155 = vmatpush1.bf16.msra.mxu0 0
      %2156 = vmatprep.subr.bf16.mxu0 0
      %2157 = vmatpush1.bf16.msra.mxu0 0
      %2158 = vmatprep.mubr.bf16.mxu0 0
      %2159 = vmatmul.mubr.bf16.gmra.mrb[0].mxu0 %v2121
      %v2160 = vpop.f32.mrb[0].mxu0
      %v2161 = vadd.f32 0.0, %v2160
      %v2162 = vpop.f32.mrb[0].mxu0
      %v2163 = vpop.f32.mrb[0].mxu0
      %v2164 = vpop.f32.mrb[0].mxu0
      %2165 = vdwg.mxu0
      %v2166 = vadd.f32 %v2111, %v2161
      %2167 = vrot.lane.b32.xlu0 %v1780, 125
      %v2168 = vpop.permute.xlu0 %2167
      %v2170 = vsel %vm725, %v2168, 0.0
      %s2171 = scalar_lea.vmem %s2, 64
      %v2172 = vld [vmem:[%s2171] sm:$0xf]
      %v2173 = vpack.c.bf16 %v2170, %v2170
      %v2175 = vsel %vm613, %v2172, 0
      %v2178 = vsel %vm1134, %v2173, 0
      %2180 = vmatprep.subr.bf16.mxu0 0
      %2181 = vmatpush1.bf16.msra.mxu0 %v2178
      %2182 = vmatprep.subr.bf16.mxu0 0
      %2183 = vmatpush1.bf16.msra.mxu0 0
      %2184 = vmatprep.subr.bf16.mxu0 0
      %2185 = vmatpush1.bf16.msra.mxu0 0
      %2186 = vmatprep.subr.bf16.mxu0 0
      %2187 = vmatpush1.bf16.msra.mxu0 0
      %2188 = vmatprep.subr.bf16.mxu0 0
      %2189 = vmatpush1.bf16.msra.mxu0 0
      %2190 = vmatprep.subr.bf16.mxu0 0
      %2191 = vmatpush1.bf16.msra.mxu0 0
      %2192 = vmatprep.subr.bf16.mxu0 0
      %2193 = vmatpush1.bf16.msra.mxu0 0
      %2194 = vmatprep.subr.bf16.mxu0 0
      %2195 = vmatpush1.bf16.msra.mxu0 0
      %2196 = vmatprep.subr.bf16.mxu0 0
      %2197 = vmatpush1.bf16.msra.mxu0 0
      %2198 = vmatprep.subr.bf16.mxu0 0
      %2199 = vmatpush1.bf16.msra.mxu0 0
      %2200 = vmatprep.subr.bf16.mxu0 0
      %2201 = vmatpush1.bf16.msra.mxu0 0
      %2202 = vmatprep.subr.bf16.mxu0 0
      %2203 = vmatpush1.bf16.msra.mxu0 0
      %2204 = vmatprep.subr.bf16.mxu0 0
      %2205 = vmatpush1.bf16.msra.mxu0 0
      %2206 = vmatprep.subr.bf16.mxu0 0
      %2207 = vmatpush1.bf16.msra.mxu0 0
      %2208 = vmatprep.subr.bf16.mxu0 0
      %2209 = vmatpush1.bf16.msra.mxu0 0
      %2210 = vmatprep.subr.bf16.mxu0 0
      %2211 = vmatpush1.bf16.msra.mxu0 0
      %2212 = vmatprep.mubr.bf16.mxu0 0
      %2213 = vmatmul.mubr.bf16.gmra.mrb[0].mxu0 %v2175
      %v2214 = vpop.f32.mrb[0].mxu0
      %v2215 = vadd.f32 0.0, %v2214
      %v2216 = vpop.f32.mrb[0].mxu0
      %v2217 = vpop.f32.mrb[0].mxu0
      %v2218 = vpop.f32.mrb[0].mxu0
      %2219 = vdwg.mxu0
      %v2220 = vadd.f32 %v2166, %v2215
      %2221 = vrot.lane.b32.xlu0 %v1780, 124
      %v2222 = vpop.permute.xlu0 %2221
      %vm2224 = vcmask 39936
      %v2225 = vsel %vm2224, %v2222, 0.0
      %v2226 = vsel %vm1900, %v2225, 0.0
      %s2227 = scalar_lea.vmem %s2, 68
      %v2228 = vld [vmem:[%s2227] sm:$0xf]
      %v2229 = vpack.c.bf16 %v2226, %v2226
      %v2231 = vsel %vm613, %v2228, 0
      %v2234 = vsel %vm1134, %v2229, 0
      %2236 = vmatprep.subr.bf16.mxu0 0
      %2237 = vmatpush1.bf16.msra.mxu0 %v2234
      %2238 = vmatprep.subr.bf16.mxu0 0
      %2239 = vmatpush1.bf16.msra.mxu0 0
      %2240 = vmatprep.subr.bf16.mxu0 0
      %2241 = vmatpush1.bf16.msra.mxu0 0
      %2242 = vmatprep.subr.bf16.mxu0 0
      %2243 = vmatpush1.bf16.msra.mxu0 0
      %2244 = vmatprep.subr.bf16.mxu0 0
      %2245 = vmatpush1.bf16.msra.mxu0 0
      %2246 = vmatprep.subr.bf16.mxu0 0
      %2247 = vmatpush1.bf16.msra.mxu0 0
      %2248 = vmatprep.subr.bf16.mxu0 0
      %2249 = vmatpush1.bf16.msra.mxu0 0
      %2250 = vmatprep.subr.bf16.mxu0 0
      %2251 = vmatpush1.bf16.msra.mxu0 0
      %2252 = vmatprep.subr.bf16.mxu0 0
      %2253 = vmatpush1.bf16.msra.mxu0 0
      %2254 = vmatprep.subr.bf16.mxu0 0
      %2255 = vmatpush1.bf16.msra.mxu0 0
      %2256 = vmatprep.subr.bf16.mxu0 0
      %2257 = vmatpush1.bf16.msra.mxu0 0
      %2258 = vmatprep.subr.bf16.mxu0 0
      %2259 = vmatpush1.bf16.msra.mxu0 0
      %2260 = vmatprep.subr.bf16.mxu0 0
      %2261 = vmatpush1.bf16.msra.mxu0 0
      %2262 = vmatprep.subr.bf16.mxu0 0
      %2263 = vmatpush1.bf16.msra.mxu0 0
      %2264 = vmatprep.subr.bf16.mxu0 0
      %2265 = vmatpush1.bf16.msra.mxu0 0
      %2266 = vmatprep.subr.bf16.mxu0 0
      %2267 = vmatpush1.bf16.msra.mxu0 0
      %2268 = vmatprep.mubr.bf16.mxu0 0
      %2269 = vmatmul.mubr.bf16.gmra.mrb[0].mxu0 %v2231
      %v2270 = vpop.f32.mrb[0].mxu0
      %v2271 = vadd.f32 0.0, %v2270
      %v2272 = vpop.f32.mrb[0].mxu0
      %v2273 = vpop.f32.mrb[0].mxu0
      %v2274 = vpop.f32.mrb[0].mxu0
      %2275 = vdwg.mxu0
      %v2276 = vadd.f32 %v2220, %v2271
      %2277 = vset.pattern.permute.xlu0 2
      %2278 = vperm.xlu0 %2277, %v402
      %v2279 = vpop.permute.xlu0 %2278
      %v2281 = vadd.f32 %v2276, %v2279
      %v2282 = vmax.f32 %v2281, 0.0
      %2284 = vrot.lane.b32.xlu0 %v2282, 4
      %v2285 = vpop.permute.xlu0 %2284
      %v2287 = vsel %vm628, 0.0, %v2285
      %v2288 = vsel %vm1789, %v2287, 0.0
      %s2289 = scalar_lea.vmem %s2, 72
      %v2290 = vld [vmem:[%s2289] sm:$0xf]
      %v2291 = vpack.c.bf16 %v2288, %v2288
      %2292 = vrot.lane.b32.xlu0 %v2282, 3
      %v2293 = vpop.permute.xlu0 %2292
      %v2295 = vsel %vm1797, 0.0, %v2293
      %s2296 = scalar_lea.vmem %s2, 76
      %v2297 = vld [vmem:[%s2296] sm:$0xf]
      %v2298 = vpack.c.bf16 %v2295, %v2295
      %v2300 = vsel %vm613, %v2297, 0
      %v2303 = vsel %vm1134, %v2298, 0
      %2305 = vmatprep.subr.bf16.mxu0 0
      %2306 = vmatpush1.bf16.msra.mxu0 %v2303
      %2307 = vmatprep.subr.bf16.mxu0 0
      %2308 = vmatpush1.bf16.msra.mxu0 0
      %2309 = vmatprep.subr.bf16.mxu0 0
      %2310 = vmatpush1.bf16.msra.mxu0 0
      %2311 = vmatprep.subr.bf16.mxu0 0
      %2312 = vmatpush1.bf16.msra.mxu0 0
      %2313 = vmatprep.subr.bf16.mxu0 0
      %2314 = vmatpush1.bf16.msra.mxu0 0
      %2315 = vmatprep.subr.bf16.mxu0 0
      %2316 = vmatpush1.bf16.msra.mxu0 0
      %2317 = vmatprep.subr.bf16.mxu0 0
      %2318 = vmatpush1.bf16.msra.mxu0 0
      %2319 = vmatprep.subr.bf16.mxu0 0
      %2320 = vmatpush1.bf16.msra.mxu0 0
      %2321 = vmatprep.subr.bf16.mxu0 0
      %2322 = vmatpush1.bf16.msra.mxu0 0
      %2323 = vmatprep.subr.bf16.mxu0 0
      %2324 = vmatpush1.bf16.msra.mxu0 0
      %2325 = vmatprep.subr.bf16.mxu0 0
      %2326 = vmatpush1.bf16.msra.mxu0 0
      %2327 = vmatprep.subr.bf16.mxu0 0
      %2328 = vmatpush1.bf16.msra.mxu0 0
      %2329 = vmatprep.subr.bf16.mxu0 0
      %2330 = vmatpush1.bf16.msra.mxu0 0
      %2331 = vmatprep.subr.bf16.mxu0 0
      %2332 = vmatpush1.bf16.msra.mxu0 0
      %2333 = vmatprep.subr.bf16.mxu0 0
      %2334 = vmatpush1.bf16.msra.mxu0 0
      %2335 = vmatprep.subr.bf16.mxu0 0
      %2336 = vmatpush1.bf16.msra.mxu0 0
      %2337 = vmatprep.mubr.bf16.mxu0 0
      %2338 = vmatmul.mubr.bf16.gmra.mrb[0].mxu0 %v2300
      %v2339 = vpop.f32.mrb[0].mxu0
      %v2340 = vadd.f32 0.0, %v2339
      %v2341 = vpop.f32.mrb[0].mxu0
      %v2342 = vpop.f32.mrb[0].mxu0
      %v2343 = vpop.f32.mrb[0].mxu0
      %2344 = vdwg.mxu0
      %v2346 = vsel %vm613, %v2290, 0
      %v2349 = vsel %vm1134, %v2291, 0
      %2351 = vmatprep.subr.bf16.mxu0 0
      %2352 = vmatpush1.bf16.msra.mxu0 %v2349
      %2353 = vmatprep.subr.bf16.mxu0 0
      %2354 = vmatpush1.bf16.msra.mxu0 0
      %2355 = vmatprep.subr.bf16.mxu0 0
      %2356 = vmatpush1.bf16.msra.mxu0 0
      %2357 = vmatprep.subr.bf16.mxu0 0
      %2358 = vmatpush1.bf16.msra.mxu0 0
      %2359 = vmatprep.subr.bf16.mxu0 0
      %2360 = vmatpush1.bf16.msra.mxu0 0
      %2361 = vmatprep.subr.bf16.mxu0 0
      %2362 = vmatpush1.bf16.msra.mxu0 0
      %2363 = vmatprep.subr.bf16.mxu0 0
      %2364 = vmatpush1.bf16.msra.mxu0 0
      %2365 = vmatprep.subr.bf16.mxu0 0
      %2366 = vmatpush1.bf16.msra.mxu0 0
      %2367 = vmatprep.subr.bf16.mxu0 0
      %2368 = vmatpush1.bf16.msra.mxu0 0
      %2369 = vmatprep.subr.bf16.mxu0 0
      %2370 = vmatpush1.bf16.msra.mxu0 0
      %2371 = vmatprep.subr.bf16.mxu0 0
      %2372 = vmatpush1.bf16.msra.mxu0 0
      %2373 = vmatprep.subr.bf16.mxu0 0
      %2374 = vmatpush1.bf16.msra.mxu0 0
      %2375 = vmatprep.subr.bf16.mxu0 0
      %2376 = vmatpush1.bf16.msra.mxu0 0
      %2377 = vmatprep.subr.bf16.mxu0 0
      %2378 = vmatpush1.bf16.msra.mxu0 0
      %2379 = vmatprep.subr.bf16.mxu0 0
      %2380 = vmatpush1.bf16.msra.mxu0 0
      %2381 = vmatprep.subr.bf16.mxu0 0
      %2382 = vmatpush1.bf16.msra.mxu0 0
      %2383 = vmatprep.mubr.bf16.mxu0 0
      %2384 = vmatmul.mubr.bf16.gmra.mrb[0].mxu0 %v2346
      %v2385 = vpop.f32.mrb[0].mxu0
      %v2386 = vadd.f32 %v2340, %v2385
      %v2387 = vpop.f32.mrb[0].mxu0
      %v2388 = vpop.f32.mrb[0].mxu0
      %v2389 = vpop.f32.mrb[0].mxu0
      %2390 = vdwg.mxu0
      %2391 = vrot.lane.b32.xlu0 %v2282, 2
      %v2392 = vpop.permute.xlu0 %2391
      %v2394 = vsel %vm1897, 0.0, %v2392
      %v2395 = vsel %vm1900, %v2394, 0.0
      %s2396 = scalar_lea.vmem %s2, 80
      %v2397 = vld [vmem:[%s2396] sm:$0xf]
      %v2398 = vpack.c.bf16 %v2395, %v2395
      %v2400 = vsel %vm613, %v2397, 0
      %v2403 = vsel %vm1134, %v2398, 0
      %2405 = vmatprep.subr.bf16.mxu0 0
      %2406 = vmatpush1.bf16.msra.mxu0 %v2403
      %2407 = vmatprep.subr.bf16.mxu0 0
      %2408 = vmatpush1.bf16.msra.mxu0 0
      %2409 = vmatprep.subr.bf16.mxu0 0
      %2410 = vmatpush1.bf16.msra.mxu0 0
      %2411 = vmatprep.subr.bf16.mxu0 0
      %2412 = vmatpush1.bf16.msra.mxu0 0
      %2413 = vmatprep.subr.bf16.mxu0 0
      %2414 = vmatpush1.bf16.msra.mxu0 0
      %2415 = vmatprep.subr.bf16.mxu0 0
      %2416 = vmatpush1.bf16.msra.mxu0 0
      %2417 = vmatprep.subr.bf16.mxu0 0
      %2418 = vmatpush1.bf16.msra.mxu0 0
      %2419 = vmatprep.subr.bf16.mxu0 0
      %2420 = vmatpush1.bf16.msra.mxu0 0
      %2421 = vmatprep.subr.bf16.mxu0 0
      %2422 = vmatpush1.bf16.msra.mxu0 0
      %2423 = vmatprep.subr.bf16.mxu0 0
      %2424 = vmatpush1.bf16.msra.mxu0 0
      %2425 = vmatprep.subr.bf16.mxu0 0
      %2426 = vmatpush1.bf16.msra.mxu0 0
      %2427 = vmatprep.subr.bf16.mxu0 0
      %2428 = vmatpush1.bf16.msra.mxu0 0
      %2429 = vmatprep.subr.bf16.mxu0 0
      %2430 = vmatpush1.bf16.msra.mxu0 0
      %2431 = vmatprep.subr.bf16.mxu0 0
      %2432 = vmatpush1.bf16.msra.mxu0 0
      %2433 = vmatprep.subr.bf16.mxu0 0
      %2434 = vmatpush1.bf16.msra.mxu0 0
      %2435 = vmatprep.subr.bf16.mxu0 0
      %2436 = vmatpush1.bf16.msra.mxu0 0
      %2437 = vmatprep.mubr.bf16.mxu0 0
      %2438 = vmatmul.mubr.bf16.gmra.mrb[0].mxu0 %v2400
      %v2439 = vpop.f32.mrb[0].mxu0
      %v2440 = vadd.f32 0.0, %v2439
      %v2441 = vpop.f32.mrb[0].mxu0
      %v2442 = vpop.f32.mrb[0].mxu0
      %v2443 = vpop.f32.mrb[0].mxu0
      %2444 = vdwg.mxu0
      %v2445 = vadd.f32 %v2386, %v2440
      %2446 = vrot.lane.b32.xlu0 %v2282, 1
      %v2447 = vpop.permute.xlu0 %2446
      %v2449 = vsel %vm783, 0.0, %v2447
      %v2450 = vsel %vm1789, %v2449, 0.0
      %s2451 = scalar_lea.vmem %s2, 84
      %v2452 = vld [vmem:[%s2451] sm:$0xf]
      %v2453 = vpack.c.bf16 %v2450, %v2450
      %v2455 = vsel %vm613, %v2452, 0
      %v2458 = vsel %vm1134, %v2453, 0
      %2460 = vmatprep.subr.bf16.mxu0 0
      %2461 = vmatpush1.bf16.msra.mxu0 %v2458
      %2462 = vmatprep.subr.bf16.mxu0 0
      %2463 = vmatpush1.bf16.msra.mxu0 0
      %2464 = vmatprep.subr.bf16.mxu0 0
      %2465 = vmatpush1.bf16.msra.mxu0 0
      %2466 = vmatprep.subr.bf16.mxu0 0
      %2467 = vmatpush1.bf16.msra.mxu0 0
      %2468 = vmatprep.subr.bf16.mxu0 0
      %2469 = vmatpush1.bf16.msra.mxu0 0
      %2470 = vmatprep.subr.bf16.mxu0 0
      %2471 = vmatpush1.bf16.msra.mxu0 0
      %2472 = vmatprep.subr.bf16.mxu0 0
      %2473 = vmatpush1.bf16.msra.mxu0 0
      %2474 = vmatprep.subr.bf16.mxu0 0
      %2475 = vmatpush1.bf16.msra.mxu0 0
      %2476 = vmatprep.subr.bf16.mxu0 0
      %2477 = vmatpush1.bf16.msra.mxu0 0
      %2478 = vmatprep.subr.bf16.mxu0 0
      %2479 = vmatpush1.bf16.msra.mxu0 0
      %2480 = vmatprep.subr.bf16.mxu0 0
      %2481 = vmatpush1.bf16.msra.mxu0 0
      %2482 = vmatprep.subr.bf16.mxu0 0
      %2483 = vmatpush1.bf16.msra.mxu0 0
      %2484 = vmatprep.subr.bf16.mxu0 0
      %2485 = vmatpush1.bf16.msra.mxu0 0
      %2486 = vmatprep.subr.bf16.mxu0 0
      %2487 = vmatpush1.bf16.msra.mxu0 0
      %2488 = vmatprep.subr.bf16.mxu0 0
      %2489 = vmatpush1.bf16.msra.mxu0 0
      %2490 = vmatprep.subr.bf16.mxu0 0
      %2491 = vmatpush1.bf16.msra.mxu0 0
      %2492 = vmatprep.mubr.bf16.mxu0 0
      %2493 = vmatmul.mubr.bf16.gmra.mrb[0].mxu0 %v2455
      %v2494 = vpop.f32.mrb[0].mxu0
      %v2495 = vadd.f32 0.0, %v2494
      %v2496 = vpop.f32.mrb[0].mxu0
      %v2497 = vpop.f32.mrb[0].mxu0
      %v2498 = vpop.f32.mrb[0].mxu0
      %2499 = vdwg.mxu0
      %v2500 = vadd.f32 %v2445, %v2495
      %s2501 = scalar_lea.vmem %s2, 88
      %v2502 = vld [vmem:[%s2501] sm:$0xf]
      %v2503 = vpack.c.bf16 %v2282, %v2282
      %v2505 = vsel %vm613, %v2502, 0
      %v2508 = vsel %vm1134, %v2503, 0
      %2510 = vmatprep.subr.bf16.mxu0 0
      %2511 = vmatpush1.bf16.msra.mxu0 %v2508
      %2512 = vmatprep.subr.bf16.mxu0 0
      %2513 = vmatpush1.bf16.msra.mxu0 0
      %2514 = vmatprep.subr.bf16.mxu0 0
      %2515 = vmatpush1.bf16.msra.mxu0 0
      %2516 = vmatprep.subr.bf16.mxu0 0
      %2517 = vmatpush1.bf16.msra.mxu0 0
      %2518 = vmatprep.subr.bf16.mxu0 0
      %2519 = vmatpush1.bf16.msra.mxu0 0
      %2520 = vmatprep.subr.bf16.mxu0 0
      %2521 = vmatpush1.bf16.msra.mxu0 0
      %2522 = vmatprep.subr.bf16.mxu0 0
      %2523 = vmatpush1.bf16.msra.mxu0 0
      %2524 = vmatprep.subr.bf16.mxu0 0
      %2525 = vmatpush1.bf16.msra.mxu0 0
      %2526 = vmatprep.subr.bf16.mxu0 0
      %2527 = vmatpush1.bf16.msra.mxu0 0
      %2528 = vmatprep.subr.bf16.mxu0 0
      %2529 = vmatpush1.bf16.msra.mxu0 0
      %2530 = vmatprep.subr.bf16.mxu0 0
      %2531 = vmatpush1.bf16.msra.mxu0 0
      %2532 = vmatprep.subr.bf16.mxu0 0
      %2533 = vmatpush1.bf16.msra.mxu0 0
      %2534 = vmatprep.subr.bf16.mxu0 0
      %2535 = vmatpush1.bf16.msra.mxu0 0
      %2536 = vmatprep.subr.bf16.mxu0 0
      %2537 = vmatpush1.bf16.msra.mxu0 0
      %2538 = vmatprep.subr.bf16.mxu0 0
      %2539 = vmatpush1.bf16.msra.mxu0 0
      %2540 = vmatprep.subr.bf16.mxu0 0
      %2541 = vmatpush1.bf16.msra.mxu0 0
      %2542 = vmatprep.mubr.bf16.mxu0 0
      %2543 = vmatmul.mubr.bf16.gmra.mrb[0].mxu0 %v2505
      %v2544 = vpop.f32.mrb[0].mxu0
      %v2545 = vadd.f32 0.0, %v2544
      %v2546 = vpop.f32.mrb[0].mxu0
      %v2547 = vpop.f32.mrb[0].mxu0
      %v2548 = vpop.f32.mrb[0].mxu0
      %2549 = vdwg.mxu0
      %v2550 = vadd.f32 %v2500, %v2545
      %2551 = vrot.lane.b32.xlu0 %v2282, 127
      %v2552 = vpop.permute.xlu0 %2551
      %v2554 = vsel %vm613, %v2552, 0.0
      %v2555 = vsel %vm1900, %v2554, 0.0
      %s2556 = scalar_lea.vmem %s2, 92
      %v2557 = vld [vmem:[%s2556] sm:$0xf]
      %v2558 = vpack.c.bf16 %v2555, %v2555
      %v2560 = vsel %vm613, %v2557, 0
      %v2563 = vsel %vm1134, %v2558, 0
      %2565 = vmatprep.subr.bf16.mxu0 0
      %2566 = vmatpush1.bf16.msra.mxu0 %v2563
      %2567 = vmatprep.subr.bf16.mxu0 0
      %2568 = vmatpush1.bf16.msra.mxu0 0
      %2569 = vmatprep.subr.bf16.mxu0 0
      %2570 = vmatpush1.bf16.msra.mxu0 0
      %2571 = vmatprep.subr.bf16.mxu0 0
      %2572 = vmatpush1.bf16.msra.mxu0 0
      %2573 = vmatprep.subr.bf16.mxu0 0
      %2574 = vmatpush1.bf16.msra.mxu0 0
      %2575 = vmatprep.subr.bf16.mxu0 0
      %2576 = vmatpush1.bf16.msra.mxu0 0
      %2577 = vmatprep.subr.bf16.mxu0 0
      %2578 = vmatpush1.bf16.msra.mxu0 0
      %2579 = vmatprep.subr.bf16.mxu0 0
      %2580 = vmatpush1.bf16.msra.mxu0 0
      %2581 = vmatprep.subr.bf16.mxu0 0
      %2582 = vmatpush1.bf16.msra.mxu0 0
      %2583 = vmatprep.subr.bf16.mxu0 0
      %2584 = vmatpush1.bf16.msra.mxu0 0
      %2585 = vmatprep.subr.bf16.mxu0 0
      %2586 = vmatpush1.bf16.msra.mxu0 0
      %2587 = vmatprep.subr.bf16.mxu0 0
      %2588 = vmatpush1.bf16.msra.mxu0 0
      %2589 = vmatprep.subr.bf16.mxu0 0
      %2590 = vmatpush1.bf16.msra.mxu0 0
      %2591 = vmatprep.subr.bf16.mxu0 0
      %2592 = vmatpush1.bf16.msra.mxu0 0
      %2593 = vmatprep.subr.bf16.mxu0 0
      %2594 = vmatpush1.bf16.msra.mxu0 0
      %2595 = vmatprep.subr.bf16.mxu0 0
      %2596 = vmatpush1.bf16.msra.mxu0 0
      %2597 = vmatprep.mubr.bf16.mxu0 0
      %2598 = vmatmul.mubr.bf16.gmra.mrb[0].mxu0 %v2560
      %v2599 = vpop.f32.mrb[0].mxu0
      %v2600 = vadd.f32 0.0, %v2599
      %v2601 = vpop.f32.mrb[0].mxu0
      %v2602 = vpop.f32.mrb[0].mxu0
      %v2603 = vpop.f32.mrb[0].mxu0
      %2604 = vdwg.mxu0
      %v2605 = vadd.f32 %v2550, %v2600
      %2606 = vrot.lane.b32.xlu0 %v2282, 126
      %v2607 = vpop.permute.xlu0 %2606
      %v2609 = vsel %vm623, %v2607, 0.0
      %v2610 = vsel %vm1789, %v2609, 0.0
      %s2611 = scalar_lea.vmem %s2, 96
      %v2612 = vld [vmem:[%s2611] sm:$0xf]
      %v2613 = vpack.c.bf16 %v2610, %v2610
      %v2615 = vsel %vm613, %v2612, 0
      %v2618 = vsel %vm1134, %v2613, 0
      %2620 = vmatprep.subr.bf16.mxu0 0
      %2621 = vmatpush1.bf16.msra.mxu0 %v2618
      %2622 = vmatprep.subr.bf16.mxu0 0
      %2623 = vmatpush1.bf16.msra.mxu0 0
      %2624 = vmatprep.subr.bf16.mxu0 0
      %2625 = vmatpush1.bf16.msra.mxu0 0
      %2626 = vmatprep.subr.bf16.mxu0 0
      %2627 = vmatpush1.bf16.msra.mxu0 0
      %2628 = vmatprep.subr.bf16.mxu0 0
      %2629 = vmatpush1.bf16.msra.mxu0 0
      %2630 = vmatprep.subr.bf16.mxu0 0
      %2631 = vmatpush1.bf16.msra.mxu0 0
      %2632 = vmatprep.subr.bf16.mxu0 0
      %2633 = vmatpush1.bf16.msra.mxu0 0
      %2634 = vmatprep.subr.bf16.mxu0 0
      %2635 = vmatpush1.bf16.msra.mxu0 0
      %2636 = vmatprep.subr.bf16.mxu0 0
      %2637 = vmatpush1.bf16.msra.mxu0 0
      %2638 = vmatprep.subr.bf16.mxu0 0
      %2639 = vmatpush1.bf16.msra.mxu0 0
      %2640 = vmatprep.subr.bf16.mxu0 0
      %2641 = vmatpush1.bf16.msra.mxu0 0
      %2642 = vmatprep.subr.bf16.mxu0 0
      %2643 = vmatpush1.bf16.msra.mxu0 0
      %2644 = vmatprep.subr.bf16.mxu0 0
      %2645 = vmatpush1.bf16.msra.mxu0 0
      %2646 = vmatprep.subr.bf16.mxu0 0
      %2647 = vmatpush1.bf16.msra.mxu0 0
      %2648 = vmatprep.subr.bf16.mxu0 0
      %2649 = vmatpush1.bf16.msra.mxu0 0
      %2650 = vmatprep.subr.bf16.mxu0 0
      %2651 = vmatpush1.bf16.msra.mxu0 0
      %2652 = vmatprep.mubr.bf16.mxu0 0
      %2653 = vmatmul.mubr.bf16.gmra.mrb[0].mxu0 %v2615
      %v2654 = vpop.f32.mrb[0].mxu0
      %v2655 = vadd.f32 0.0, %v2654
      %v2656 = vpop.f32.mrb[0].mxu0
      %v2657 = vpop.f32.mrb[0].mxu0
      %v2658 = vpop.f32.mrb[0].mxu0
      %2659 = vdwg.mxu0
      %v2660 = vadd.f32 %v2605, %v2655
      %2661 = vrot.lane.b32.xlu0 %v2282, 125
      %v2662 = vpop.permute.xlu0 %2661
      %v2664 = vsel %vm725, %v2662, 0.0
      %s2665 = scalar_lea.vmem %s2, 100
      %v2666 = vld [vmem:[%s2665] sm:$0xf]
      %v2667 = vpack.c.bf16 %v2664, %v2664
      %v2669 = vsel %vm613, %v2666, 0
      %v2672 = vsel %vm1134, %v2667, 0
      %2674 = vmatprep.subr.bf16.mxu0 0
      %2675 = vmatpush1.bf16.msra.mxu0 %v2672
      %2676 = vmatprep.subr.bf16.mxu0 0
      %2677 = vmatpush1.bf16.msra.mxu0 0
      %2678 = vmatprep.subr.bf16.mxu0 0
      %2679 = vmatpush1.bf16.msra.mxu0 0
      %2680 = vmatprep.subr.bf16.mxu0 0
      %2681 = vmatpush1.bf16.msra.mxu0 0
      %2682 = vmatprep.subr.bf16.mxu0 0
      %2683 = vmatpush1.bf16.msra.mxu0 0
      %2684 = vmatprep.subr.bf16.mxu0 0
      %2685 = vmatpush1.bf16.msra.mxu0 0
      %2686 = vmatprep.subr.bf16.mxu0 0
      %2687 = vmatpush1.bf16.msra.mxu0 0
      %2688 = vmatprep.subr.bf16.mxu0 0
      %2689 = vmatpush1.bf16.msra.mxu0 0
      %2690 = vmatprep.subr.bf16.mxu0 0
      %2691 = vmatpush1.bf16.msra.mxu0 0
      %2692 = vmatprep.subr.bf16.mxu0 0
      %2693 = vmatpush1.bf16.msra.mxu0 0
      %2694 = vmatprep.subr.bf16.mxu0 0
      %2695 = vmatpush1.bf16.msra.mxu0 0
      %2696 = vmatprep.subr.bf16.mxu0 0
      %2697 = vmatpush1.bf16.msra.mxu0 0
      %2698 = vmatprep.subr.bf16.mxu0 0
      %2699 = vmatpush1.bf16.msra.mxu0 0
      %2700 = vmatprep.subr.bf16.mxu0 0
      %2701 = vmatpush1.bf16.msra.mxu0 0
      %2702 = vmatprep.subr.bf16.mxu0 0
      %2703 = vmatpush1.bf16.msra.mxu0 0
      %2704 = vmatprep.subr.bf16.mxu0 0
      %2705 = vmatpush1.bf16.msra.mxu0 0
      %2706 = vmatprep.mubr.bf16.mxu0 0
      %2707 = vmatmul.mubr.bf16.gmra.mrb[0].mxu0 %v2669
      %v2708 = vpop.f32.mrb[0].mxu0
      %v2709 = vadd.f32 0.0, %v2708
      %v2710 = vpop.f32.mrb[0].mxu0
      %v2711 = vpop.f32.mrb[0].mxu0
      %v2712 = vpop.f32.mrb[0].mxu0
      %2713 = vdwg.mxu0
      %v2714 = vadd.f32 %v2660, %v2709
      %2715 = vrot.lane.b32.xlu0 %v2282, 124
      %v2716 = vpop.permute.xlu0 %2715
      %v2718 = vsel %vm2224, %v2716, 0.0
      %v2719 = vsel %vm1900, %v2718, 0.0
      %s2720 = scalar_lea.vmem %s2, 104
      %v2721 = vld [vmem:[%s2720] sm:$0xf]
      %v2722 = vpack.c.bf16 %v2719, %v2719
      %v2724 = vsel %vm613, %v2721, 0
      %v2727 = vsel %vm1134, %v2722, 0
      %2729 = vmatprep.subr.bf16.mxu0 0
      %2730 = vmatpush1.bf16.msra.mxu0 %v2727
      %2731 = vmatprep.subr.bf16.mxu0 0
      %2732 = vmatpush1.bf16.msra.mxu0 0
      %2733 = vmatprep.subr.bf16.mxu0 0
      %2734 = vmatpush1.bf16.msra.mxu0 0
      %2735 = vmatprep.subr.bf16.mxu0 0
      %2736 = vmatpush1.bf16.msra.mxu0 0
      %2737 = vmatprep.subr.bf16.mxu0 0
      %2738 = vmatpush1.bf16.msra.mxu0 0
      %2739 = vmatprep.subr.bf16.mxu0 0
      %2740 = vmatpush1.bf16.msra.mxu0 0
      %2741 = vmatprep.subr.bf16.mxu0 0
      %2742 = vmatpush1.bf16.msra.mxu0 0
      %2743 = vmatprep.subr.bf16.mxu0 0
      %2744 = vmatpush1.bf16.msra.mxu0 0
      %2745 = vmatprep.subr.bf16.mxu0 0
      %2746 = vmatpush1.bf16.msra.mxu0 0
      %2747 = vmatprep.subr.bf16.mxu0 0
      %2748 = vmatpush1.bf16.msra.mxu0 0
      %2749 = vmatprep.subr.bf16.mxu0 0
      %2750 = vmatpush1.bf16.msra.mxu0 0
      %2751 = vmatprep.subr.bf16.mxu0 0
      %2752 = vmatpush1.bf16.msra.mxu0 0
      %2753 = vmatprep.subr.bf16.mxu0 0
      %2754 = vmatpush1.bf16.msra.mxu0 0
      %2755 = vmatprep.subr.bf16.mxu0 0
      %2756 = vmatpush1.bf16.msra.mxu0 0
      %2757 = vmatprep.subr.bf16.mxu0 0
      %2758 = vmatpush1.bf16.msra.mxu0 0
      %2759 = vmatprep.subr.bf16.mxu0 0
      %2760 = vmatpush1.bf16.msra.mxu0 0
      %2761 = vmatprep.mubr.bf16.mxu0 0
      %2762 = vmatmul.mubr.bf16.gmra.mrb[0].mxu0 %v2724
      %v2763 = vpop.f32.mrb[0].mxu0
      %v2764 = vadd.f32 0.0, %v2763
      %v2765 = vpop.f32.mrb[0].mxu0
      %v2766 = vpop.f32.mrb[0].mxu0
      %v2767 = vpop.f32.mrb[0].mxu0
      %2768 = vdwg.mxu0
      %v2769 = vadd.f32 %v2714, %v2764
      %2770 = vset.pattern.permute.xlu0 3
      %2771 = vperm.xlu0 %2770, %v402
      %v2772 = vpop.permute.xlu0 %2771
      %v2774 = vadd.f32 %v2769, %v2772
      %v2775 = vadd.f32 %v2774, %v1780
      %2777 = vrot.lane.b32.xlu0 %v2775, 4
      %v2778 = vpop.permute.xlu0 %2777
      %v2780 = vsel %vm628, 0.0, %v2778
      %v2781 = vsel %vm1789, %v2780, 0.0
      %v2782 = vpack.c.bf16 %v2781, %v2781
      %2783 = vrot.lane.b32.xlu0 %v2775, 3
      %v2784 = vpop.permute.xlu0 %2783
      %v2786 = vsel %vm1797, 0.0, %v2784
      %v2787 = vpack.c.bf16 %v2786, %v2786
      %v2789 = vsel %vm1134, %v2787, 0
      %2791 = vmatprep.subr.bf16.mxu0 0
      %2792 = vmatpush1.bf16.msra.mxu0 %v2789
      %2793 = vmatprep.subr.bf16.mxu0 0
      %2794 = vmatpush1.bf16.msra.mxu0 0
      %2795 = vmatprep.subr.bf16.mxu0 0
      %2796 = vmatpush1.bf16.msra.mxu0 0
      %2797 = vmatprep.subr.bf16.mxu0 0
      %2798 = vmatpush1.bf16.msra.mxu0 0
      %2799 = vmatprep.subr.bf16.mxu0 0
      %2800 = vmatpush1.bf16.msra.mxu0 0
      %2801 = vmatprep.subr.bf16.mxu0 0
      %2802 = vmatpush1.bf16.msra.mxu0 0
      %2803 = vmatprep.subr.bf16.mxu0 0
      %2804 = vmatpush1.bf16.msra.mxu0 0
      %2805 = vmatprep.subr.bf16.mxu0 0
      %2806 = vmatpush1.bf16.msra.mxu0 0
      %2807 = vmatprep.subr.bf16.mxu0 0
      %2808 = vmatpush1.bf16.msra.mxu0 0
      %2809 = vmatprep.subr.bf16.mxu0 0
      %2810 = vmatpush1.bf16.msra.mxu0 0
      %2811 = vmatprep.subr.bf16.mxu0 0
      %2812 = vmatpush1.bf16.msra.mxu0 0
      %2813 = vmatprep.subr.bf16.mxu0 0
      %2814 = vmatpush1.bf16.msra.mxu0 0
      %2815 = vmatprep.subr.bf16.mxu0 0
      %2816 = vmatpush1.bf16.msra.mxu0 0
      %2817 = vmatprep.subr.bf16.mxu0 0
      %2818 = vmatpush1.bf16.msra.mxu0 0
      %2819 = vmatprep.subr.bf16.mxu0 0
      %2820 = vmatpush1.bf16.msra.mxu0 0
      %2821 = vmatprep.subr.bf16.mxu0 0
      %2822 = vmatpush1.bf16.msra.mxu0 0
      %2823 = vmatprep.mubr.bf16.mxu0 0
      %2824 = vmatmul.mubr.bf16.gmra.mrb[0].mxu0 %v1803
      %v2825 = vpop.f32.mrb[0].mxu0
      %v2826 = vadd.f32 0.0, %v2825
      %v2827 = vpop.f32.mrb[0].mxu0
      %v2828 = vpop.f32.mrb[0].mxu0
      %v2829 = vpop.f32.mrb[0].mxu0
      %2830 = vdwg.mxu0
      %v2832 = vsel %vm1134, %v2782, 0
      %2834 = vmatprep.subr.bf16.mxu0 0
      %2835 = vmatpush1.bf16.msra.mxu0 %v2832
      %2836 = vmatprep.subr.bf16.mxu0 0
      %2837 = vmatpush1.bf16.msra.mxu0 0
      %2838 = vmatprep.subr.bf16.mxu0 0
      %2839 = vmatpush1.bf16.msra.mxu0 0
      %2840 = vmatprep.subr.bf16.mxu0 0
      %2841 = vmatpush1.bf16.msra.mxu0 0
      %2842 = vmatprep.subr.bf16.mxu0 0
      %2843 = vmatpush1.bf16.msra.mxu0 0
      %2844 = vmatprep.subr.bf16.mxu0 0
      %2845 = vmatpush1.bf16.msra.mxu0 0
      %2846 = vmatprep.subr.bf16.mxu0 0
      %2847 = vmatpush1.bf16.msra.mxu0 0
      %2848 = vmatprep.subr.bf16.mxu0 0
      %2849 = vmatpush1.bf16.msra.mxu0 0
      %2850 = vmatprep.subr.bf16.mxu0 0
      %2851 = vmatpush1.bf16.msra.mxu0 0
      %2852 = vmatprep.subr.bf16.mxu0 0
      %2853 = vmatpush1.bf16.msra.mxu0 0
      %2854 = vmatprep.subr.bf16.mxu0 0
      %2855 = vmatpush1.bf16.msra.mxu0 0
      %2856 = vmatprep.subr.bf16.mxu0 0
      %2857 = vmatpush1.bf16.msra.mxu0 0
      %2858 = vmatprep.subr.bf16.mxu0 0
      %2859 = vmatpush1.bf16.msra.mxu0 0
      %2860 = vmatprep.subr.bf16.mxu0 0
      %2861 = vmatpush1.bf16.msra.mxu0 0
      %2862 = vmatprep.subr.bf16.mxu0 0
      %2863 = vmatpush1.bf16.msra.mxu0 0
      %2864 = vmatprep.subr.bf16.mxu0 0
      %2865 = vmatpush1.bf16.msra.mxu0 0
      %2866 = vmatprep.mubr.bf16.mxu0 0
      %2867 = vmatmul.mubr.bf16.gmra.mrb[0].mxu0 %v1849
      %v2868 = vpop.f32.mrb[0].mxu0
      %v2869 = vadd.f32 %v2826, %v2868
      %v2870 = vpop.f32.mrb[0].mxu0
      %v2871 = vpop.f32.mrb[0].mxu0
      %v2872 = vpop.f32.mrb[0].mxu0
      %2873 = vdwg.mxu0
      %2874 = vrot.lane.b32.xlu0 %v2775, 2
      %v2875 = vpop.permute.xlu0 %2874
      %v2877 = vsel %vm1897, 0.0, %v2875
      %v2878 = vsel %vm1900, %v2877, 0.0
      %v2879 = vpack.c.bf16 %v2878, %v2878
      %v2881 = vsel %vm1134, %v2879, 0
      %2883 = vmatprep.subr.bf16.mxu0 0
      %2884 = vmatpush1.bf16.msra.mxu0 %v2881
      %2885 = vmatprep.subr.bf16.mxu0 0
      %2886 = vmatpush1.bf16.msra.mxu0 0
      %2887 = vmatprep.subr.bf16.mxu0 0
      %2888 = vmatpush1.bf16.msra.mxu0 0
      %2889 = vmatprep.subr.bf16.mxu0 0
      %2890 = vmatpush1.bf16.msra.mxu0 0
      %2891 = vmatprep.subr.bf16.mxu0 0
      %2892 = vmatpush1.bf16.msra.mxu0 0
      %2893 = vmatprep.subr.bf16.mxu0 0
      %2894 = vmatpush1.bf16.msra.mxu0 0
      %2895 = vmatprep.subr.bf16.mxu0 0
      %2896 = vmatpush1.bf16.msra.mxu0 0
      %2897 = vmatprep.subr.bf16.mxu0 0
      %2898 = vmatpush1.bf16.msra.mxu0 0
      %2899 = vmatprep.subr.bf16.mxu0 0
      %2900 = vmatpush1.bf16.msra.mxu0 0
      %2901 = vmatprep.subr.bf16.mxu0 0
      %2902 = vmatpush1.bf16.msra.mxu0 0
      %2903 = vmatprep.subr.bf16.mxu0 0
      %2904 = vmatpush1.bf16.msra.mxu0 0
      %2905 = vmatprep.subr.bf16.mxu0 0
      %2906 = vmatpush1.bf16.msra.mxu0 0
      %2907 = vmatprep.subr.bf16.mxu0 0
      %2908 = vmatpush1.bf16.msra.mxu0 0
      %2909 = vmatprep.subr.bf16.mxu0 0
      %2910 = vmatpush1.bf16.msra.mxu0 0
      %2911 = vmatprep.subr.bf16.mxu0 0
      %2912 = vmatpush1.bf16.msra.mxu0 0
      %2913 = vmatprep.subr.bf16.mxu0 0
      %2914 = vmatpush1.bf16.msra.mxu0 0
      %2915 = vmatprep.mubr.bf16.mxu0 0
      %2916 = vmatmul.mubr.bf16.gmra.mrb[0].mxu0 %v1906
      %v2917 = vpop.f32.mrb[0].mxu0
      %v2918 = vadd.f32 0.0, %v2917
      %v2919 = vpop.f32.mrb[0].mxu0
      %v2920 = vpop.f32.mrb[0].mxu0
      %v2921 = vpop.f32.mrb[0].mxu0
      %2922 = vdwg.mxu0
      %v2923 = vadd.f32 %v2869, %v2918
      %2924 = vrot.lane.b32.xlu0 %v2775, 1
      %v2925 = vpop.permute.xlu0 %2924
      %v2927 = vsel %vm783, 0.0, %v2925
      %v2928 = vsel %vm1789, %v2927, 0.0
      %v2929 = vpack.c.bf16 %v2928, %v2928
      %v2931 = vsel %vm1134, %v2929, 0
      %2933 = vmatprep.subr.bf16.mxu0 0
      %2934 = vmatpush1.bf16.msra.mxu0 %v2931
      %2935 = vmatprep.subr.bf16.mxu0 0
      %2936 = vmatpush1.bf16.msra.mxu0 0
      %2937 = vmatprep.subr.bf16.mxu0 0
      %2938 = vmatpush1.bf16.msra.mxu0 0
      %2939 = vmatprep.subr.bf16.mxu0 0
      %2940 = vmatpush1.bf16.msra.mxu0 0
      %2941 = vmatprep.subr.bf16.mxu0 0
      %2942 = vmatpush1.bf16.msra.mxu0 0
      %2943 = vmatprep.subr.bf16.mxu0 0
      %2944 = vmatpush1.bf16.msra.mxu0 0
      %2945 = vmatprep.subr.bf16.mxu0 0
      %2946 = vmatpush1.bf16.msra.mxu0 0
      %2947 = vmatprep.subr.bf16.mxu0 0
      %2948 = vmatpush1.bf16.msra.mxu0 0
      %2949 = vmatprep.subr.bf16.mxu0 0
      %2950 = vmatpush1.bf16.msra.mxu0 0
      %2951 = vmatprep.subr.bf16.mxu0 0
      %2952 = vmatpush1.bf16.msra.mxu0 0
      %2953 = vmatprep.subr.bf16.mxu0 0
      %2954 = vmatpush1.bf16.msra.mxu0 0
      %2955 = vmatprep.subr.bf16.mxu0 0
      %2956 = vmatpush1.bf16.msra.mxu0 0
      %2957 = vmatprep.subr.bf16.mxu0 0
      %2958 = vmatpush1.bf16.msra.mxu0 0
      %2959 = vmatprep.subr.bf16.mxu0 0
      %2960 = vmatpush1.bf16.msra.mxu0 0
      %2961 = vmatprep.subr.bf16.mxu0 0
      %2962 = vmatpush1.bf16.msra.mxu0 0
      %2963 = vmatprep.subr.bf16.mxu0 0
      %2964 = vmatpush1.bf16.msra.mxu0 0
      %2965 = vmatprep.mubr.bf16.mxu0 0
      %2966 = vmatmul.mubr.bf16.gmra.mrb[0].mxu0 %v1961
      %v2967 = vpop.f32.mrb[0].mxu0
      %v2968 = vadd.f32 0.0, %v2967
      %v2969 = vpop.f32.mrb[0].mxu0
      %v2970 = vpop.f32.mrb[0].mxu0
      %v2971 = vpop.f32.mrb[0].mxu0
      %2972 = vdwg.mxu0
      %v2973 = vadd.f32 %v2923, %v2968
      %v2974 = vpack.c.bf16 %v2775, %v2775
      %v2976 = vsel %vm1134, %v2974, 0
      %2978 = vmatprep.subr.bf16.mxu0 0
      %2979 = vmatpush1.bf16.msra.mxu0 %v2976
      %2980 = vmatprep.subr.bf16.mxu0 0
      %2981 = vmatpush1.bf16.msra.mxu0 0
      %2982 = vmatprep.subr.bf16.mxu0 0
      %2983 = vmatpush1.bf16.msra.mxu0 0
      %2984 = vmatprep.subr.bf16.mxu0 0
      %2985 = vmatpush1.bf16.msra.mxu0 0
      %2986 = vmatprep.subr.bf16.mxu0 0
      %2987 = vmatpush1.bf16.msra.mxu0 0
      %2988 = vmatprep.subr.bf16.mxu0 0
      %2989 = vmatpush1.bf16.msra.mxu0 0
      %2990 = vmatprep.subr.bf16.mxu0 0
      %2991 = vmatpush1.bf16.msra.mxu0 0
      %2992 = vmatprep.subr.bf16.mxu0 0
      %2993 = vmatpush1.bf16.msra.mxu0 0
      %2994 = vmatprep.subr.bf16.mxu0 0
      %2995 = vmatpush1.bf16.msra.mxu0 0
      %2996 = vmatprep.subr.bf16.mxu0 0
      %2997 = vmatpush1.bf16.msra.mxu0 0
      %2998 = vmatprep.subr.bf16.mxu0 0
      %2999 = vmatpush1.bf16.msra.mxu0 0
      %3000 = vmatprep.subr.bf16.mxu0 0
      %3001 = vmatpush1.bf16.msra.mxu0 0
      %3002 = vmatprep.subr.bf16.mxu0 0
      %3003 = vmatpush1.bf16.msra.mxu0 0
      %3004 = vmatprep.subr.bf16.mxu0 0
      %3005 = vmatpush1.bf16.msra.mxu0 0
      %3006 = vmatprep.subr.bf16.mxu0 0
      %3007 = vmatpush1.bf16.msra.mxu0 0
      %3008 = vmatprep.subr.bf16.mxu0 0
      %3009 = vmatpush1.bf16.msra.mxu0 0
      %3010 = vmatprep.mubr.bf16.mxu0 0
      %3011 = vmatmul.mubr.bf16.gmra.mrb[0].mxu0 %v2011
      %v3012 = vpop.f32.mrb[0].mxu0
      %v3013 = vadd.f32 0.0, %v3012
      %v3014 = vpop.f32.mrb[0].mxu0
      %v3015 = vpop.f32.mrb[0].mxu0
      %v3016 = vpop.f32.mrb[0].mxu0
      %3017 = vdwg.mxu0
      %v3018 = vadd.f32 %v2973, %v3013
      %3019 = vrot.lane.b32.xlu0 %v2775, 127
      %v3020 = vpop.permute.xlu0 %3019
      %v3022 = vsel %vm613, %v3020, 0.0
      %v3023 = vsel %vm1900, %v3022, 0.0
      %v3024 = vpack.c.bf16 %v3023, %v3023
      %v3026 = vsel %vm1134, %v3024, 0
      %3028 = vmatprep.subr.bf16.mxu0 0
      %3029 = vmatpush1.bf16.msra.mxu0 %v3026
      %3030 = vmatprep.subr.bf16.mxu0 0
      %3031 = vmatpush1.bf16.msra.mxu0 0
      %3032 = vmatprep.subr.bf16.mxu0 0
      %3033 = vmatpush1.bf16.msra.mxu0 0
      %3034 = vmatprep.subr.bf16.mxu0 0
      %3035 = vmatpush1.bf16.msra.mxu0 0
      %3036 = vmatprep.subr.bf16.mxu0 0
      %3037 = vmatpush1.bf16.msra.mxu0 0
      %3038 = vmatprep.subr.bf16.mxu0 0
      %3039 = vmatpush1.bf16.msra.mxu0 0
      %3040 = vmatprep.subr.bf16.mxu0 0
      %3041 = vmatpush1.bf16.msra.mxu0 0
      %3042 = vmatprep.subr.bf16.mxu0 0
      %3043 = vmatpush1.bf16.msra.mxu0 0
      %3044 = vmatprep.subr.bf16.mxu0 0
      %3045 = vmatpush1.bf16.msra.mxu0 0
      %3046 = vmatprep.subr.bf16.mxu0 0
      %3047 = vmatpush1.bf16.msra.mxu0 0
      %3048 = vmatprep.subr.bf16.mxu0 0
      %3049 = vmatpush1.bf16.msra.mxu0 0
      %3050 = vmatprep.subr.bf16.mxu0 0
      %3051 = vmatpush1.bf16.msra.mxu0 0
      %3052 = vmatprep.subr.bf16.mxu0 0
      %3053 = vmatpush1.bf16.msra.mxu0 0
      %3054 = vmatprep.subr.bf16.mxu0 0
      %3055 = vmatpush1.bf16.msra.mxu0 0
      %3056 = vmatprep.subr.bf16.mxu0 0
      %3057 = vmatpush1.bf16.msra.mxu0 0
      %3058 = vmatprep.subr.bf16.mxu0 0
      %3059 = vmatpush1.bf16.msra.mxu0 0
      %3060 = vmatprep.mubr.bf16.mxu0 0
      %3061 = vmatmul.mubr.bf16.gmra.mrb[0].mxu0 %v2066
      %v3062 = vpop.f32.mrb[0].mxu0
      %v3063 = vadd.f32 0.0, %v3062
      %v3064 = vpop.f32.mrb[0].mxu0
      %v3065 = vpop.f32.mrb[0].mxu0
      %v3066 = vpop.f32.mrb[0].mxu0
      %3067 = vdwg.mxu0
      %v3068 = vadd.f32 %v3018, %v3063
      %3069 = vrot.lane.b32.xlu0 %v2775, 126
      %v3070 = vpop.permute.xlu0 %3069
      %v3072 = vsel %vm623, %v3070, 0.0
      %v3073 = vsel %vm1789, %v3072, 0.0
      %v3074 = vpack.c.bf16 %v3073, %v3073
      %v3076 = vsel %vm1134, %v3074, 0
      %3078 = vmatprep.subr.bf16.mxu0 0
      %3079 = vmatpush1.bf16.msra.mxu0 %v3076
      %3080 = vmatprep.subr.bf16.mxu0 0
      %3081 = vmatpush1.bf16.msra.mxu0 0
      %3082 = vmatprep.subr.bf16.mxu0 0
      %3083 = vmatpush1.bf16.msra.mxu0 0
      %3084 = vmatprep.subr.bf16.mxu0 0
      %3085 = vmatpush1.bf16.msra.mxu0 0
      %3086 = vmatprep.subr.bf16.mxu0 0
      %3087 = vmatpush1.bf16.msra.mxu0 0
      %3088 = vmatprep.subr.bf16.mxu0 0
      %3089 = vmatpush1.bf16.msra.mxu0 0
      %3090 = vmatprep.subr.bf16.mxu0 0
      %3091 = vmatpush1.bf16.msra.mxu0 0
      %3092 = vmatprep.subr.bf16.mxu0 0
      %3093 = vmatpush1.bf16.msra.mxu0 0
      %3094 = vmatprep.subr.bf16.mxu0 0
      %3095 = vmatpush1.bf16.msra.mxu0 0
      %3096 = vmatprep.subr.bf16.mxu0 0
      %3097 = vmatpush1.bf16.msra.mxu0 0
      %3098 = vmatprep.subr.bf16.mxu0 0
      %3099 = vmatpush1.bf16.msra.mxu0 0
      %3100 = vmatprep.subr.bf16.mxu0 0
      %3101 = vmatpush1.bf16.msra.mxu0 0
      %3102 = vmatprep.subr.bf16.mxu0 0
      %3103 = vmatpush1.bf16.msra.mxu0 0
      %3104 = vmatprep.subr.bf16.mxu0 0
      %3105 = vmatpush1.bf16.msra.mxu0 0
      %3106 = vmatprep.subr.bf16.mxu0 0
      %3107 = vmatpush1.bf16.msra.mxu0 0
      %3108 = vmatprep.subr.bf16.mxu0 0
      %3109 = vmatpush1.bf16.msra.mxu0 0
      %3110 = vmatprep.mubr.bf16.mxu0 0
      %3111 = vmatmul.mubr.bf16.gmra.mrb[0].mxu0 %v2121
      %v3112 = vpop.f32.mrb[0].mxu0
      %v3113 = vadd.f32 0.0, %v3112
      %v3114 = vpop.f32.mrb[0].mxu0
      %v3115 = vpop.f32.mrb[0].mxu0
      %v3116 = vpop.f32.mrb[0].mxu0
      %3117 = vdwg.mxu0
      %v3118 = vadd.f32 %v3068, %v3113
      %3119 = vrot.lane.b32.xlu0 %v2775, 125
      %v3120 = vpop.permute.xlu0 %3119
      %v3122 = vsel %vm725, %v3120, 0.0
      %v3123 = vpack.c.bf16 %v3122, %v3122
      %v3125 = vsel %vm1134, %v3123, 0
      %3127 = vmatprep.subr.bf16.mxu0 0
      %3128 = vmatpush1.bf16.msra.mxu0 %v3125
      %3129 = vmatprep.subr.bf16.mxu0 0
      %3130 = vmatpush1.bf16.msra.mxu0 0
      %3131 = vmatprep.subr.bf16.mxu0 0
      %3132 = vmatpush1.bf16.msra.mxu0 0
      %3133 = vmatprep.subr.bf16.mxu0 0
      %3134 = vmatpush1.bf16.msra.mxu0 0
      %3135 = vmatprep.subr.bf16.mxu0 0
      %3136 = vmatpush1.bf16.msra.mxu0 0
      %3137 = vmatprep.subr.bf16.mxu0 0
      %3138 = vmatpush1.bf16.msra.mxu0 0
      %3139 = vmatprep.subr.bf16.mxu0 0
      %3140 = vmatpush1.bf16.msra.mxu0 0
      %3141 = vmatprep.subr.bf16.mxu0 0
      %3142 = vmatpush1.bf16.msra.mxu0 0
      %3143 = vmatprep.subr.bf16.mxu0 0
      %3144 = vmatpush1.bf16.msra.mxu0 0
      %3145 = vmatprep.subr.bf16.mxu0 0
      %3146 = vmatpush1.bf16.msra.mxu0 0
      %3147 = vmatprep.subr.bf16.mxu0 0
      %3148 = vmatpush1.bf16.msra.mxu0 0
      %3149 = vmatprep.subr.bf16.mxu0 0
      %3150 = vmatpush1.bf16.msra.mxu0 0
      %3151 = vmatprep.subr.bf16.mxu0 0
      %3152 = vmatpush1.bf16.msra.mxu0 0
      %3153 = vmatprep.subr.bf16.mxu0 0
      %3154 = vmatpush1.bf16.msra.mxu0 0
      %3155 = vmatprep.subr.bf16.mxu0 0
      %3156 = vmatpush1.bf16.msra.mxu0 0
      %3157 = vmatprep.subr.bf16.mxu0 0
      %3158 = vmatpush1.bf16.msra.mxu0 0
      %3159 = vmatprep.mubr.bf16.mxu0 0
      %3160 = vmatmul.mubr.bf16.gmra.mrb[0].mxu0 %v2175
      %v3161 = vpop.f32.mrb[0].mxu0
      %v3162 = vadd.f32 0.0, %v3161
      %v3163 = vpop.f32.mrb[0].mxu0
      %v3164 = vpop.f32.mrb[0].mxu0
      %v3165 = vpop.f32.mrb[0].mxu0
      %3166 = vdwg.mxu0
      %v3167 = vadd.f32 %v3118, %v3162
      %3168 = vrot.lane.b32.xlu0 %v2775, 124
      %v3169 = vpop.permute.xlu0 %3168
      %v3171 = vsel %vm2224, %v3169, 0.0
      %v3172 = vsel %vm1900, %v3171, 0.0
      %v3173 = vpack.c.bf16 %v3172, %v3172
      %v3175 = vsel %vm1134, %v3173, 0
      %3177 = vmatprep.subr.bf16.mxu0 0
      %3178 = vmatpush1.bf16.msra.mxu0 %v3175
      %3179 = vmatprep.subr.bf16.mxu0 0
      %3180 = vmatpush1.bf16.msra.mxu0 0
      %3181 = vmatprep.subr.bf16.mxu0 0
      %3182 = vmatpush1.bf16.msra.mxu0 0
      %3183 = vmatprep.subr.bf16.mxu0 0
      %3184 = vmatpush1.bf16.msra.mxu0 0
      %3185 = vmatprep.subr.bf16.mxu0 0
      %3186 = vmatpush1.bf16.msra.mxu0 0
      %3187 = vmatprep.subr.bf16.mxu0 0
      %3188 = vmatpush1.bf16.msra.mxu0 0
      %3189 = vmatprep.subr.bf16.mxu0 0
      %3190 = vmatpush1.bf16.msra.mxu0 0
      %3191 = vmatprep.subr.bf16.mxu0 0
      %3192 = vmatpush1.bf16.msra.mxu0 0
      %3193 = vmatprep.subr.bf16.mxu0 0
      %3194 = vmatpush1.bf16.msra.mxu0 0
      %3195 = vmatprep.subr.bf16.mxu0 0
      %3196 = vmatpush1.bf16.msra.mxu0 0
      %3197 = vmatprep.subr.bf16.mxu0 0
      %3198 = vmatpush1.bf16.msra.mxu0 0
      %3199 = vmatprep.subr.bf16.mxu0 0
      %3200 = vmatpush1.bf16.msra.mxu0 0
      %3201 = vmatprep.subr.bf16.mxu0 0
      %3202 = vmatpush1.bf16.msra.mxu0 0
      %3203 = vmatprep.subr.bf16.mxu0 0
      %3204 = vmatpush1.bf16.msra.mxu0 0
      %3205 = vmatprep.subr.bf16.mxu0 0
      %3206 = vmatpush1.bf16.msra.mxu0 0
      %3207 = vmatprep.subr.bf16.mxu0 0
      %3208 = vmatpush1.bf16.msra.mxu0 0
      %3209 = vmatprep.mubr.bf16.mxu0 0
      %3210 = vmatmul.mubr.bf16.gmra.mrb[0].mxu0 %v2231
      %v3211 = vpop.f32.mrb[0].mxu0
      %v3212 = vadd.f32 0.0, %v3211
      %v3213 = vpop.f32.mrb[0].mxu0
      %v3214 = vpop.f32.mrb[0].mxu0
      %v3215 = vpop.f32.mrb[0].mxu0
      %3216 = vdwg.mxu0
      %v3217 = vadd.f32 %v3167, %v3212
      %v3218 = vadd.f32 %v3217, %v2279
      %v3219 = vmax.f32 %v3218, 0.0
      %3221 = vrot.lane.b32.xlu0 %v3219, 4
      %v3222 = vpop.permute.xlu0 %3221
      %v3224 = vsel %vm628, 0.0, %v3222
      %v3225 = vsel %vm1789, %v3224, 0.0
      %v3226 = vpack.c.bf16 %v3225, %v3225
      %3227 = vrot.lane.b32.xlu0 %v3219, 3
      %v3228 = vpop.permute.xlu0 %3227
      %v3230 = vsel %vm1797, 0.0, %v3228
      %v3231 = vpack.c.bf16 %v3230, %v3230
      %v3233 = vsel %vm1134, %v3231, 0
      %3235 = vmatprep.subr.bf16.mxu0 0
      %3236 = vmatpush1.bf16.msra.mxu0 %v3233
      %3237 = vmatprep.subr.bf16.mxu0 0
      %3238 = vmatpush1.bf16.msra.mxu0 0
      %3239 = vmatprep.subr.bf16.mxu0 0
      %3240 = vmatpush1.bf16.msra.mxu0 0
      %3241 = vmatprep.subr.bf16.mxu0 0
      %3242 = vmatpush1.bf16.msra.mxu0 0
      %3243 = vmatprep.subr.bf16.mxu0 0
      %3244 = vmatpush1.bf16.msra.mxu0 0
      %3245 = vmatprep.subr.bf16.mxu0 0
      %3246 = vmatpush1.bf16.msra.mxu0 0
      %3247 = vmatprep.subr.bf16.mxu0 0
      %3248 = vmatpush1.bf16.msra.mxu0 0
      %3249 = vmatprep.subr.bf16.mxu0 0
      %3250 = vmatpush1.bf16.msra.mxu0 0
      %3251 = vmatprep.subr.bf16.mxu0 0
      %3252 = vmatpush1.bf16.msra.mxu0 0
      %3253 = vmatprep.subr.bf16.mxu0 0
      %3254 = vmatpush1.bf16.msra.mxu0 0
      %3255 = vmatprep.subr.bf16.mxu0 0
      %3256 = vmatpush1.bf16.msra.mxu0 0
      %3257 = vmatprep.subr.bf16.mxu0 0
      %3258 = vmatpush1.bf16.msra.mxu0 0
      %3259 = vmatprep.subr.bf16.mxu0 0
      %3260 = vmatpush1.bf16.msra.mxu0 0
      %3261 = vmatprep.subr.bf16.mxu0 0
      %3262 = vmatpush1.bf16.msra.mxu0 0
      %3263 = vmatprep.subr.bf16.mxu0 0
      %3264 = vmatpush1.bf16.msra.mxu0 0
      %3265 = vmatprep.subr.bf16.mxu0 0
      %3266 = vmatpush1.bf16.msra.mxu0 0
      %3267 = vmatprep.mubr.bf16.mxu0 0
      %3268 = vmatmul.mubr.bf16.gmra.mrb[0].mxu0 %v2300
      %v3269 = vpop.f32.mrb[0].mxu0
      %v3270 = vadd.f32 0.0, %v3269
      %v3271 = vpop.f32.mrb[0].mxu0
      %v3272 = vpop.f32.mrb[0].mxu0
      %v3273 = vpop.f32.mrb[0].mxu0
      %3274 = vdwg.mxu0
      %v3276 = vsel %vm1134, %v3226, 0
      %3278 = vmatprep.subr.bf16.mxu0 0
      %3279 = vmatpush1.bf16.msra.mxu0 %v3276
      %3280 = vmatprep.subr.bf16.mxu0 0
      %3281 = vmatpush1.bf16.msra.mxu0 0
      %3282 = vmatprep.subr.bf16.mxu0 0
      %3283 = vmatpush1.bf16.msra.mxu0 0
      %3284 = vmatprep.subr.bf16.mxu0 0
      %3285 = vmatpush1.bf16.msra.mxu0 0
      %3286 = vmatprep.subr.bf16.mxu0 0
      %3287 = vmatpush1.bf16.msra.mxu0 0
      %3288 = vmatprep.subr.bf16.mxu0 0
      %3289 = vmatpush1.bf16.msra.mxu0 0
      %3290 = vmatprep.subr.bf16.mxu0 0
      %3291 = vmatpush1.bf16.msra.mxu0 0
      %3292 = vmatprep.subr.bf16.mxu0 0
      %3293 = vmatpush1.bf16.msra.mxu0 0
      %3294 = vmatprep.subr.bf16.mxu0 0
      %3295 = vmatpush1.bf16.msra.mxu0 0
      %3296 = vmatprep.subr.bf16.mxu0 0
      %3297 = vmatpush1.bf16.msra.mxu0 0
      %3298 = vmatprep.subr.bf16.mxu0 0
      %3299 = vmatpush1.bf16.msra.mxu0 0
      %3300 = vmatprep.subr.bf16.mxu0 0
      %3301 = vmatpush1.bf16.msra.mxu0 0
      %3302 = vmatprep.subr.bf16.mxu0 0
      %3303 = vmatpush1.bf16.msra.mxu0 0
      %3304 = vmatprep.subr.bf16.mxu0 0
      %3305 = vmatpush1.bf16.msra.mxu0 0
      %3306 = vmatprep.subr.bf16.mxu0 0
      %3307 = vmatpush1.bf16.msra.mxu0 0
      %3308 = vmatprep.subr.bf16.mxu0 0
      %3309 = vmatpush1.bf16.msra.mxu0 0
      %3310 = vmatprep.mubr.bf16.mxu0 0
      %3311 = vmatmul.mubr.bf16.gmra.mrb[0].mxu0 %v2346
      %v3312 = vpop.f32.mrb[0].mxu0
      %v3313 = vadd.f32 %v3270, %v3312
      %v3314 = vpop.f32.mrb[0].mxu0
      %v3315 = vpop.f32.mrb[0].mxu0
      %v3316 = vpop.f32.mrb[0].mxu0
      %3317 = vdwg.mxu0
      %3318 = vrot.lane.b32.xlu0 %v3219, 2
      %v3319 = vpop.permute.xlu0 %3318
      %v3321 = vsel %vm1897, 0.0, %v3319
      %v3322 = vsel %vm1900, %v3321, 0.0
      %v3323 = vpack.c.bf16 %v3322, %v3322
      %v3325 = vsel %vm1134, %v3323, 0
      %3327 = vmatprep.subr.bf16.mxu0 0
      %3328 = vmatpush1.bf16.msra.mxu0 %v3325
      %3329 = vmatprep.subr.bf16.mxu0 0
      %3330 = vmatpush1.bf16.msra.mxu0 0
      %3331 = vmatprep.subr.bf16.mxu0 0
      %3332 = vmatpush1.bf16.msra.mxu0 0
      %3333 = vmatprep.subr.bf16.mxu0 0
      %3334 = vmatpush1.bf16.msra.mxu0 0
      %3335 = vmatprep.subr.bf16.mxu0 0
      %3336 = vmatpush1.bf16.msra.mxu0 0
      %3337 = vmatprep.subr.bf16.mxu0 0
      %3338 = vmatpush1.bf16.msra.mxu0 0
      %3339 = vmatprep.subr.bf16.mxu0 0
      %3340 = vmatpush1.bf16.msra.mxu0 0
      %3341 = vmatprep.subr.bf16.mxu0 0
      %3342 = vmatpush1.bf16.msra.mxu0 0
      %3343 = vmatprep.subr.bf16.mxu0 0
      %3344 = vmatpush1.bf16.msra.mxu0 0
      %3345 = vmatprep.subr.bf16.mxu0 0
      %3346 = vmatpush1.bf16.msra.mxu0 0
      %3347 = vmatprep.subr.bf16.mxu0 0
      %3348 = vmatpush1.bf16.msra.mxu0 0
      %3349 = vmatprep.subr.bf16.mxu0 0
      %3350 = vmatpush1.bf16.msra.mxu0 0
      %3351 = vmatprep.subr.bf16.mxu0 0
      %3352 = vmatpush1.bf16.msra.mxu0 0
      %3353 = vmatprep.subr.bf16.mxu0 0
      %3354 = vmatpush1.bf16.msra.mxu0 0
      %3355 = vmatprep.subr.bf16.mxu0 0
      %3356 = vmatpush1.bf16.msra.mxu0 0
      %3357 = vmatprep.subr.bf16.mxu0 0
      %3358 = vmatpush1.bf16.msra.mxu0 0
      %3359 = vmatprep.mubr.bf16.mxu0 0
      %3360 = vmatmul.mubr.bf16.gmra.mrb[0].mxu0 %v2400
      %v3361 = vpop.f32.mrb[0].mxu0
      %v3362 = vadd.f32 0.0, %v3361
      %v3363 = vpop.f32.mrb[0].mxu0
      %v3364 = vpop.f32.mrb[0].mxu0
      %v3365 = vpop.f32.mrb[0].mxu0
      %3366 = vdwg.mxu0
      %v3367 = vadd.f32 %v3313, %v3362
      %3368 = vrot.lane.b32.xlu0 %v3219, 1
      %v3369 = vpop.permute.xlu0 %3368
      %v3371 = vsel %vm783, 0.0, %v3369
      %v3372 = vsel %vm1789, %v3371, 0.0
      %v3373 = vpack.c.bf16 %v3372, %v3372
      %v3375 = vsel %vm1134, %v3373, 0
      %3377 = vmatprep.subr.bf16.mxu0 0
      %3378 = vmatpush1.bf16.msra.mxu0 %v3375
      %3379 = vmatprep.subr.bf16.mxu0 0
      %3380 = vmatpush1.bf16.msra.mxu0 0
      %3381 = vmatprep.subr.bf16.mxu0 0
      %3382 = vmatpush1.bf16.msra.mxu0 0
      %3383 = vmatprep.subr.bf16.mxu0 0
      %3384 = vmatpush1.bf16.msra.mxu0 0
      %3385 = vmatprep.subr.bf16.mxu0 0
      %3386 = vmatpush1.bf16.msra.mxu0 0
      %3387 = vmatprep.subr.bf16.mxu0 0
      %3388 = vmatpush1.bf16.msra.mxu0 0
      %3389 = vmatprep.subr.bf16.mxu0 0
      %3390 = vmatpush1.bf16.msra.mxu0 0
      %3391 = vmatprep.subr.bf16.mxu0 0
      %3392 = vmatpush1.bf16.msra.mxu0 0
      %3393 = vmatprep.subr.bf16.mxu0 0
      %3394 = vmatpush1.bf16.msra.mxu0 0
      %3395 = vmatprep.subr.bf16.mxu0 0
      %3396 = vmatpush1.bf16.msra.mxu0 0
      %3397 = vmatprep.subr.bf16.mxu0 0
      %3398 = vmatpush1.bf16.msra.mxu0 0
      %3399 = vmatprep.subr.bf16.mxu0 0
      %3400 = vmatpush1.bf16.msra.mxu0 0
      %3401 = vmatprep.subr.bf16.mxu0 0
      %3402 = vmatpush1.bf16.msra.mxu0 0
      %3403 = vmatprep.subr.bf16.mxu0 0
      %3404 = vmatpush1.bf16.msra.mxu0 0
      %3405 = vmatprep.subr.bf16.mxu0 0
      %3406 = vmatpush1.bf16.msra.mxu0 0
      %3407 = vmatprep.subr.bf16.mxu0 0
      %3408 = vmatpush1.bf16.msra.mxu0 0
      %3409 = vmatprep.mubr.bf16.mxu0 0
      %3410 = vmatmul.mubr.bf16.gmra.mrb[0].mxu0 %v2455
      %v3411 = vpop.f32.mrb[0].mxu0
      %v3412 = vadd.f32 0.0, %v3411
      %v3413 = vpop.f32.mrb[0].mxu0
      %v3414 = vpop.f32.mrb[0].mxu0
      %v3415 = vpop.f32.mrb[0].mxu0
      %3416 = vdwg.mxu0
      %v3417 = vadd.f32 %v3367, %v3412
      %v3418 = vpack.c.bf16 %v3219, %v3219
      %v3420 = vsel %vm1134, %v3418, 0
      %3422 = vmatprep.subr.bf16.mxu0 0
      %3423 = vmatpush1.bf16.msra.mxu0 %v3420
      %3424 = vmatprep.subr.bf16.mxu0 0
      %3425 = vmatpush1.bf16.msra.mxu0 0
      %3426 = vmatprep.subr.bf16.mxu0 0
      %3427 = vmatpush1.bf16.msra.mxu0 0
      %3428 = vmatprep.subr.bf16.mxu0 0
      %3429 = vmatpush1.bf16.msra.mxu0 0
      %3430 = vmatprep.subr.bf16.mxu0 0
      %3431 = vmatpush1.bf16.msra.mxu0 0
      %3432 = vmatprep.subr.bf16.mxu0 0
      %3433 = vmatpush1.bf16.msra.mxu0 0
      %3434 = vmatprep.subr.bf16.mxu0 0
      %3435 = vmatpush1.bf16.msra.mxu0 0
      %3436 = vmatprep.subr.bf16.mxu0 0
      %3437 = vmatpush1.bf16.msra.mxu0 0
      %3438 = vmatprep.subr.bf16.mxu0 0
      %3439 = vmatpush1.bf16.msra.mxu0 0
      %3440 = vmatprep.subr.bf16.mxu0 0
      %3441 = vmatpush1.bf16.msra.mxu0 0
      %3442 = vmatprep.subr.bf16.mxu0 0
      %3443 = vmatpush1.bf16.msra.mxu0 0
      %3444 = vmatprep.subr.bf16.mxu0 0
      %3445 = vmatpush1.bf16.msra.mxu0 0
      %3446 = vmatprep.subr.bf16.mxu0 0
      %3447 = vmatpush1.bf16.msra.mxu0 0
      %3448 = vmatprep.subr.bf16.mxu0 0
      %3449 = vmatpush1.bf16.msra.mxu0 0
      %3450 = vmatprep.subr.bf16.mxu0 0
      %3451 = vmatpush1.bf16.msra.mxu0 0
      %3452 = vmatprep.subr.bf16.mxu0 0
      %3453 = vmatpush1.bf16.msra.mxu0 0
      %3454 = vmatprep.mubr.bf16.mxu0 0
      %3455 = vmatmul.mubr.bf16.gmra.mrb[0].mxu0 %v2505
      %v3456 = vpop.f32.mrb[0].mxu0
      %v3457 = vadd.f32 0.0, %v3456
      %v3458 = vpop.f32.mrb[0].mxu0
      %v3459 = vpop.f32.mrb[0].mxu0
      %v3460 = vpop.f32.mrb[0].mxu0
      %3461 = vdwg.mxu0
      %v3462 = vadd.f32 %v3417, %v3457
      %3463 = vrot.lane.b32.xlu0 %v3219, 127
      %v3464 = vpop.permute.xlu0 %3463
      %v3466 = vsel %vm613, %v3464, 0.0
      %v3467 = vsel %vm1900, %v3466, 0.0
      %v3468 = vpack.c.bf16 %v3467, %v3467
      %v3470 = vsel %vm1134, %v3468, 0
      %3472 = vmatprep.subr.bf16.mxu0 0
      %3473 = vmatpush1.bf16.msra.mxu0 %v3470
      %3474 = vmatprep.subr.bf16.mxu0 0
      %3475 = vmatpush1.bf16.msra.mxu0 0
      %3476 = vmatprep.subr.bf16.mxu0 0
      %3477 = vmatpush1.bf16.msra.mxu0 0
      %3478 = vmatprep.subr.bf16.mxu0 0
      %3479 = vmatpush1.bf16.msra.mxu0 0
      %3480 = vmatprep.subr.bf16.mxu0 0
      %3481 = vmatpush1.bf16.msra.mxu0 0
      %3482 = vmatprep.subr.bf16.mxu0 0
      %3483 = vmatpush1.bf16.msra.mxu0 0
      %3484 = vmatprep.subr.bf16.mxu0 0
      %3485 = vmatpush1.bf16.msra.mxu0 0
      %3486 = vmatprep.subr.bf16.mxu0 0
      %3487 = vmatpush1.bf16.msra.mxu0 0
      %3488 = vmatprep.subr.bf16.mxu0 0
      %3489 = vmatpush1.bf16.msra.mxu0 0
      %3490 = vmatprep.subr.bf16.mxu0 0
      %3491 = vmatpush1.bf16.msra.mxu0 0
      %3492 = vmatprep.subr.bf16.mxu0 0
      %3493 = vmatpush1.bf16.msra.mxu0 0
      %3494 = vmatprep.subr.bf16.mxu0 0
      %3495 = vmatpush1.bf16.msra.mxu0 0
      %3496 = vmatprep.subr.bf16.mxu0 0
      %3497 = vmatpush1.bf16.msra.mxu0 0
      %3498 = vmatprep.subr.bf16.mxu0 0
      %3499 = vmatpush1.bf16.msra.mxu0 0
      %3500 = vmatprep.subr.bf16.mxu0 0
      %3501 = vmatpush1.bf16.msra.mxu0 0
      %3502 = vmatprep.subr.bf16.mxu0 0
      %3503 = vmatpush1.bf16.msra.mxu0 0
      %3504 = vmatprep.mubr.bf16.mxu0 0
      %3505 = vmatmul.mubr.bf16.gmra.mrb[0].mxu0 %v2560
      %v3506 = vpop.f32.mrb[0].mxu0
      %v3507 = vadd.f32 0.0, %v3506
      %v3508 = vpop.f32.mrb[0].mxu0
      %v3509 = vpop.f32.mrb[0].mxu0
      %v3510 = vpop.f32.mrb[0].mxu0
      %3511 = vdwg.mxu0
      %v3512 = vadd.f32 %v3462, %v3507
      %3513 = vrot.lane.b32.xlu0 %v3219, 126
      %v3514 = vpop.permute.xlu0 %3513
      %v3516 = vsel %vm623, %v3514, 0.0
      %v3517 = vsel %vm1789, %v3516, 0.0
      %v3518 = vpack.c.bf16 %v3517, %v3517
      %v3520 = vsel %vm1134, %v3518, 0
      %3522 = vmatprep.subr.bf16.mxu0 0
      %3523 = vmatpush1.bf16.msra.mxu0 %v3520
      %3524 = vmatprep.subr.bf16.mxu0 0
      %3525 = vmatpush1.bf16.msra.mxu0 0
      %3526 = vmatprep.subr.bf16.mxu0 0
      %3527 = vmatpush1.bf16.msra.mxu0 0
      %3528 = vmatprep.subr.bf16.mxu0 0
      %3529 = vmatpush1.bf16.msra.mxu0 0
      %3530 = vmatprep.subr.bf16.mxu0 0
      %3531 = vmatpush1.bf16.msra.mxu0 0
      %3532 = vmatprep.subr.bf16.mxu0 0
      %3533 = vmatpush1.bf16.msra.mxu0 0
      %3534 = vmatprep.subr.bf16.mxu0 0
      %3535 = vmatpush1.bf16.msra.mxu0 0
      %3536 = vmatprep.subr.bf16.mxu0 0
      %3537 = vmatpush1.bf16.msra.mxu0 0
      %3538 = vmatprep.subr.bf16.mxu0 0
      %3539 = vmatpush1.bf16.msra.mxu0 0
      %3540 = vmatprep.subr.bf16.mxu0 0
      %3541 = vmatpush1.bf16.msra.mxu0 0
      %3542 = vmatprep.subr.bf16.mxu0 0
      %3543 = vmatpush1.bf16.msra.mxu0 0
      %3544 = vmatprep.subr.bf16.mxu0 0
      %3545 = vmatpush1.bf16.msra.mxu0 0
      %3546 = vmatprep.subr.bf16.mxu0 0
      %3547 = vmatpush1.bf16.msra.mxu0 0
      %3548 = vmatprep.subr.bf16.mxu0 0
      %3549 = vmatpush1.bf16.msra.mxu0 0
      %3550 = vmatprep.subr.bf16.mxu0 0
      %3551 = vmatpush1.bf16.msra.mxu0 0
      %3552 = vmatprep.subr.bf16.mxu0 0
      %3553 = vmatpush1.bf16.msra.mxu0 0
      %3554 = vmatprep.mubr.bf16.mxu0 0
      %3555 = vmatmul.mubr.bf16.gmra.mrb[0].mxu0 %v2615
      %v3556 = vpop.f32.mrb[0].mxu0
      %v3557 = vadd.f32 0.0, %v3556
      %v3558 = vpop.f32.mrb[0].mxu0
      %v3559 = vpop.f32.mrb[0].mxu0
      %v3560 = vpop.f32.mrb[0].mxu0
      %3561 = vdwg.mxu0
      %v3562 = vadd.f32 %v3512, %v3557
      %3563 = vrot.lane.b32.xlu0 %v3219, 125
      %v3564 = vpop.permute.xlu0 %3563
      %v3566 = vsel %vm725, %v3564, 0.0
      %v3567 = vpack.c.bf16 %v3566, %v3566
      %v3569 = vsel %vm1134, %v3567, 0
      %3571 = vmatprep.subr.bf16.mxu0 0
      %3572 = vmatpush1.bf16.msra.mxu0 %v3569
      %3573 = vmatprep.subr.bf16.mxu0 0
      %3574 = vmatpush1.bf16.msra.mxu0 0
      %3575 = vmatprep.subr.bf16.mxu0 0
      %3576 = vmatpush1.bf16.msra.mxu0 0
      %3577 = vmatprep.subr.bf16.mxu0 0
      %3578 = vmatpush1.bf16.msra.mxu0 0
      %3579 = vmatprep.subr.bf16.mxu0 0
      %3580 = vmatpush1.bf16.msra.mxu0 0
      %3581 = vmatprep.subr.bf16.mxu0 0
      %3582 = vmatpush1.bf16.msra.mxu0 0
      %3583 = vmatprep.subr.bf16.mxu0 0
      %3584 = vmatpush1.bf16.msra.mxu0 0
      %3585 = vmatprep.subr.bf16.mxu0 0
      %3586 = vmatpush1.bf16.msra.mxu0 0
      %3587 = vmatprep.subr.bf16.mxu0 0
      %3588 = vmatpush1.bf16.msra.mxu0 0
      %3589 = vmatprep.subr.bf16.mxu0 0
      %3590 = vmatpush1.bf16.msra.mxu0 0
      %3591 = vmatprep.subr.bf16.mxu0 0
      %3592 = vmatpush1.bf16.msra.mxu0 0
      %3593 = vmatprep.subr.bf16.mxu0 0
      %3594 = vmatpush1.bf16.msra.mxu0 0
      %3595 = vmatprep.subr.bf16.mxu0 0
      %3596 = vmatpush1.bf16.msra.mxu0 0
      %3597 = vmatprep.subr.bf16.mxu0 0
      %3598 = vmatpush1.bf16.msra.mxu0 0
      %3599 = vmatprep.subr.bf16.mxu0 0
      %3600 = vmatpush1.bf16.msra.mxu0 0
      %3601 = vmatprep.subr.bf16.mxu0 0
      %3602 = vmatpush1.bf16.msra.mxu0 0
      %3603 = vmatprep.mubr.bf16.mxu0 0
      %3604 = vmatmul.mubr.bf16.gmra.mrb[0].mxu0 %v2669
      %v3605 = vpop.f32.mrb[0].mxu0
      %v3606 = vadd.f32 0.0, %v3605
      %v3607 = vpop.f32.mrb[0].mxu0
      %v3608 = vpop.f32.mrb[0].mxu0
      %v3609 = vpop.f32.mrb[0].mxu0
      %3610 = vdwg.mxu0
      %v3611 = vadd.f32 %v3562, %v3606
      %3612 = vrot.lane.b32.xlu0 %v3219, 124
      %v3613 = vpop.permute.xlu0 %3612
      %v3615 = vsel %vm2224, %v3613, 0.0
      %v3616 = vsel %vm1900, %v3615, 0.0
      %v3617 = vpack.c.bf16 %v3616, %v3616
      %v3619 = vsel %vm1134, %v3617, 0
      %3621 = vmatprep.subr.bf16.mxu0 0
      %3622 = vmatpush1.bf16.msra.mxu0 %v3619
      %3623 = vmatprep.subr.bf16.mxu0 0
      %3624 = vmatpush1.bf16.msra.mxu0 0
      %3625 = vmatprep.subr.bf16.mxu0 0
      %3626 = vmatpush1.bf16.msra.mxu0 0
      %3627 = vmatprep.subr.bf16.mxu0 0
      %3628 = vmatpush1.bf16.msra.mxu0 0
      %3629 = vmatprep.subr.bf16.mxu0 0
      %3630 = vmatpush1.bf16.msra.mxu0 0
      %3631 = vmatprep.subr.bf16.mxu0 0
      %3632 = vmatpush1.bf16.msra.mxu0 0
      %3633 = vmatprep.subr.bf16.mxu0 0
      %3634 = vmatpush1.bf16.msra.mxu0 0
      %3635 = vmatprep.subr.bf16.mxu0 0
      %3636 = vmatpush1.bf16.msra.mxu0 0
      %3637 = vmatprep.subr.bf16.mxu0 0
      %3638 = vmatpush1.bf16.msra.mxu0 0
      %3639 = vmatprep.subr.bf16.mxu0 0
      %3640 = vmatpush1.bf16.msra.mxu0 0
      %3641 = vmatprep.subr.bf16.mxu0 0
      %3642 = vmatpush1.bf16.msra.mxu0 0
      %3643 = vmatprep.subr.bf16.mxu0 0
      %3644 = vmatpush1.bf16.msra.mxu0 0
      %3645 = vmatprep.subr.bf16.mxu0 0
      %3646 = vmatpush1.bf16.msra.mxu0 0
      %3647 = vmatprep.subr.bf16.mxu0 0
      %3648 = vmatpush1.bf16.msra.mxu0 0
      %3649 = vmatprep.subr.bf16.mxu0 0
      %3650 = vmatpush1.bf16.msra.mxu0 0
      %3651 = vmatprep.subr.bf16.mxu0 0
      %3652 = vmatpush1.bf16.msra.mxu0 0
      %3653 = vmatprep.mubr.bf16.mxu0 0
      %3654 = vmatmul.mubr.bf16.gmra.mrb[0].mxu0 %v2724
      %v3655 = vpop.f32.mrb[0].mxu0
      %v3656 = vadd.f32 0.0, %v3655
      %v3657 = vpop.f32.mrb[0].mxu0
      %v3658 = vpop.f32.mrb[0].mxu0
      %v3659 = vpop.f32.mrb[0].mxu0
      %3660 = vdwg.mxu0
      %v3661 = vadd.f32 %v3611, %v3656
      %v3662 = vadd.f32 %v3661, %v2772
      %v3663 = vadd.f32 %v3662, %v2775
      %3664 = vrot.lane.b32.xlu0 %v1651, 8
      %v3665 = vpop.permute.xlu0 %3664
      %v3667 = vsel %vm613, 0.0, %v3665
      %v3668 = vsel %vm616, %v3667, 0.0
      %s3669 = scalar_lea.vmem %s2, 108
      %v3670 = vld [vmem:[%s3669] sm:$0xf]
      %v3671 = vpack.c.bf16 %v3668, %v3668
      %3672 = vrot.lane.b32.xlu0 %v1651, 7
      %v3673 = vpop.permute.xlu0 %3672
      %v3675 = vsel %vm623, 0.0, %v3673
      %s3676 = scalar_lea.vmem %s2, 112
      %v3677 = vld [vmem:[%s3676] sm:$0xf]
      %v3678 = vpack.c.bf16 %v3675, %v3675
      %v3680 = vsel %vm613, %v3677, 0
      %v3683 = vsel %vm1134, %v3678, 0
      %3685 = vmatprep.subr.bf16.mxu0 0
      %3686 = vmatpush1.bf16.msra.mxu0 %v3683
      %3687 = vmatprep.subr.bf16.mxu0 0
      %3688 = vmatpush1.bf16.msra.mxu0 0
      %3689 = vmatprep.subr.bf16.mxu0 0
      %3690 = vmatpush1.bf16.msra.mxu0 0
      %3691 = vmatprep.subr.bf16.mxu0 0
      %3692 = vmatpush1.bf16.msra.mxu0 0
      %3693 = vmatprep.subr.bf16.mxu0 0
      %3694 = vmatpush1.bf16.msra.mxu0 0
      %3695 = vmatprep.subr.bf16.mxu0 0
      %3696 = vmatpush1.bf16.msra.mxu0 0
      %3697 = vmatprep.subr.bf16.mxu0 0
      %3698 = vmatpush1.bf16.msra.mxu0 0
      %3699 = vmatprep.subr.bf16.mxu0 0
      %3700 = vmatpush1.bf16.msra.mxu0 0
      %3701 = vmatprep.subr.bf16.mxu0 0
      %3702 = vmatpush1.bf16.msra.mxu0 0
      %3703 = vmatprep.subr.bf16.mxu0 0
      %3704 = vmatpush1.bf16.msra.mxu0 0
      %3705 = vmatprep.subr.bf16.mxu0 0
      %3706 = vmatpush1.bf16.msra.mxu0 0
      %3707 = vmatprep.subr.bf16.mxu0 0
      %3708 = vmatpush1.bf16.msra.mxu0 0
      %3709 = vmatprep.subr.bf16.mxu0 0
      %3710 = vmatpush1.bf16.msra.mxu0 0
      %3711 = vmatprep.subr.bf16.mxu0 0
      %3712 = vmatpush1.bf16.msra.mxu0 0
      %3713 = vmatprep.subr.bf16.mxu0 0
      %3714 = vmatpush1.bf16.msra.mxu0 0
      %3715 = vmatprep.subr.bf16.mxu0 0
      %3716 = vmatpush1.bf16.msra.mxu0 0
      %3717 = vmatprep.mubr.bf16.mxu0 0
      %3718 = vmatmul.mubr.bf16.gmra.mrb[0].mxu0 %v3680
      %v3719 = vpop.f32.mrb[0].mxu0
      %v3720 = vadd.f32 0.0, %v3719
      %v3721 = vpop.f32.mrb[0].mxu0
      %v3722 = vpop.f32.mrb[0].mxu0
      %v3723 = vpop.f32.mrb[0].mxu0
      %3724 = vdwg.mxu0
      %v3726 = vsel %vm613, %v3670, 0
      %v3729 = vsel %vm1134, %v3671, 0
      %3731 = vmatprep.subr.bf16.mxu0 0
      %3732 = vmatpush1.bf16.msra.mxu0 %v3729
      %3733 = vmatprep.subr.bf16.mxu0 0
      %3734 = vmatpush1.bf16.msra.mxu0 0
      %3735 = vmatprep.subr.bf16.mxu0 0
      %3736 = vmatpush1.bf16.msra.mxu0 0
      %3737 = vmatprep.subr.bf16.mxu0 0
      %3738 = vmatpush1.bf16.msra.mxu0 0
      %3739 = vmatprep.subr.bf16.mxu0 0
      %3740 = vmatpush1.bf16.msra.mxu0 0
      %3741 = vmatprep.subr.bf16.mxu0 0
      %3742 = vmatpush1.bf16.msra.mxu0 0
      %3743 = vmatprep.subr.bf16.mxu0 0
      %3744 = vmatpush1.bf16.msra.mxu0 0
      %3745 = vmatprep.subr.bf16.mxu0 0
      %3746 = vmatpush1.bf16.msra.mxu0 0
      %3747 = vmatprep.subr.bf16.mxu0 0
      %3748 = vmatpush1.bf16.msra.mxu0 0
      %3749 = vmatprep.subr.bf16.mxu0 0
      %3750 = vmatpush1.bf16.msra.mxu0 0
      %3751 = vmatprep.subr.bf16.mxu0 0
      %3752 = vmatpush1.bf16.msra.mxu0 0
      %3753 = vmatprep.subr.bf16.mxu0 0
      %3754 = vmatpush1.bf16.msra.mxu0 0
      %3755 = vmatprep.subr.bf16.mxu0 0
      %3756 = vmatpush1.bf16.msra.mxu0 0
      %3757 = vmatprep.subr.bf16.mxu0 0
      %3758 = vmatpush1.bf16.msra.mxu0 0
      %3759 = vmatprep.subr.bf16.mxu0 0
      %3760 = vmatpush1.bf16.msra.mxu0 0
      %3761 = vmatprep.subr.bf16.mxu0 0
      %3762 = vmatpush1.bf16.msra.mxu0 0
      %3763 = vmatprep.mubr.bf16.mxu0 0
      %3764 = vmatmul.mubr.bf16.gmra.mrb[0].mxu0 %v3726
      %v3765 = vpop.f32.mrb[0].mxu0
      %v3766 = vadd.f32 %v3720, %v3765
      %v3767 = vpop.f32.mrb[0].mxu0
      %v3768 = vpop.f32.mrb[0].mxu0
      %v3769 = vpop.f32.mrb[0].mxu0
      %3770 = vdwg.mxu0
      %3771 = vrot.lane.b32.xlu0 %v1651, 6
      %v3772 = vpop.permute.xlu0 %3771
      %v3774 = vsel %vm725, 0.0, %v3772
      %v3775 = vsel %vm728, %v3774, 0.0
      %s3776 = scalar_lea.vmem %s2, 116
      %v3777 = vld [vmem:[%s3776] sm:$0xf]
      %v3778 = vpack.c.bf16 %v3775, %v3775
      %v3780 = vsel %vm613, %v3777, 0
      %v3783 = vsel %vm1134, %v3778, 0
      %3785 = vmatprep.subr.bf16.mxu0 0
      %3786 = vmatpush1.bf16.msra.mxu0 %v3783
      %3787 = vmatprep.subr.bf16.mxu0 0
      %3788 = vmatpush1.bf16.msra.mxu0 0
      %3789 = vmatprep.subr.bf16.mxu0 0
      %3790 = vmatpush1.bf16.msra.mxu0 0
      %3791 = vmatprep.subr.bf16.mxu0 0
      %3792 = vmatpush1.bf16.msra.mxu0 0
      %3793 = vmatprep.subr.bf16.mxu0 0
      %3794 = vmatpush1.bf16.msra.mxu0 0
      %3795 = vmatprep.subr.bf16.mxu0 0
      %3796 = vmatpush1.bf16.msra.mxu0 0
      %3797 = vmatprep.subr.bf16.mxu0 0
      %3798 = vmatpush1.bf16.msra.mxu0 0
      %3799 = vmatprep.subr.bf16.mxu0 0
      %3800 = vmatpush1.bf16.msra.mxu0 0
      %3801 = vmatprep.subr.bf16.mxu0 0
      %3802 = vmatpush1.bf16.msra.mxu0 0
      %3803 = vmatprep.subr.bf16.mxu0 0
      %3804 = vmatpush1.bf16.msra.mxu0 0
      %3805 = vmatprep.subr.bf16.mxu0 0
      %3806 = vmatpush1.bf16.msra.mxu0 0
      %3807 = vmatprep.subr.bf16.mxu0 0
      %3808 = vmatpush1.bf16.msra.mxu0 0
      %3809 = vmatprep.subr.bf16.mxu0 0
      %3810 = vmatpush1.bf16.msra.mxu0 0
      %3811 = vmatprep.subr.bf16.mxu0 0
      %3812 = vmatpush1.bf16.msra.mxu0 0
      %3813 = vmatprep.subr.bf16.mxu0 0
      %3814 = vmatpush1.bf16.msra.mxu0 0
      %3815 = vmatprep.subr.bf16.mxu0 0
      %3816 = vmatpush1.bf16.msra.mxu0 0
      %3817 = vmatprep.mubr.bf16.mxu0 0
      %3818 = vmatmul.mubr.bf16.gmra.mrb[0].mxu0 %v3780
      %v3819 = vpop.f32.mrb[0].mxu0
      %v3820 = vadd.f32 0.0, %v3819
      %v3821 = vpop.f32.mrb[0].mxu0
      %v3822 = vpop.f32.mrb[0].mxu0
      %v3823 = vpop.f32.mrb[0].mxu0
      %3824 = vdwg.mxu0
      %v3825 = vadd.f32 %v3766, %v3820
      %3826 = vrot.lane.b32.xlu0 %v1651, 1
      %v3827 = vpop.permute.xlu0 %3826
      %v3829 = vsel %vm783, 0.0, %v3827
      %v3830 = vsel %vm616, %v3829, 0.0
      %s3831 = scalar_lea.vmem %s2, 120
      %v3832 = vld [vmem:[%s3831] sm:$0xf]
      %v3833 = vpack.c.bf16 %v3830, %v3830
      %v3835 = vsel %vm613, %v3832, 0
      %v3838 = vsel %vm1134, %v3833, 0
      %3840 = vmatprep.subr.bf16.mxu0 0
      %3841 = vmatpush1.bf16.msra.mxu0 %v3838
      %3842 = vmatprep.subr.bf16.mxu0 0
      %3843 = vmatpush1.bf16.msra.mxu0 0
      %3844 = vmatprep.subr.bf16.mxu0 0
      %3845 = vmatpush1.bf16.msra.mxu0 0
      %3846 = vmatprep.subr.bf16.mxu0 0
      %3847 = vmatpush1.bf16.msra.mxu0 0
      %3848 = vmatprep.subr.bf16.mxu0 0
      %3849 = vmatpush1.bf16.msra.mxu0 0
      %3850 = vmatprep.subr.bf16.mxu0 0
      %3851 = vmatpush1.bf16.msra.mxu0 0
      %3852 = vmatprep.subr.bf16.mxu0 0
      %3853 = vmatpush1.bf16.msra.mxu0 0
      %3854 = vmatprep.subr.bf16.mxu0 0
      %3855 = vmatpush1.bf16.msra.mxu0 0
      %3856 = vmatprep.subr.bf16.mxu0 0
      %3857 = vmatpush1.bf16.msra.mxu0 0
      %3858 = vmatprep.subr.bf16.mxu0 0
      %3859 = vmatpush1.bf16.msra.mxu0 0
      %3860 = vmatprep.subr.bf16.mxu0 0
      %3861 = vmatpush1.bf16.msra.mxu0 0
      %3862 = vmatprep.subr.bf16.mxu0 0
      %3863 = vmatpush1.bf16.msra.mxu0 0
      %3864 = vmatprep.subr.bf16.mxu0 0
      %3865 = vmatpush1.bf16.msra.mxu0 0
      %3866 = vmatprep.subr.bf16.mxu0 0
      %3867 = vmatpush1.bf16.msra.mxu0 0
      %3868 = vmatprep.subr.bf16.mxu0 0
      %3869 = vmatpush1.bf16.msra.mxu0 0
      %3870 = vmatprep.subr.bf16.mxu0 0
      %3871 = vmatpush1.bf16.msra.mxu0 0
      %3872 = vmatprep.mubr.bf16.mxu0 0
      %3873 = vmatmul.mubr.bf16.gmra.mrb[0].mxu0 %v3835
      %v3874 = vpop.f32.mrb[0].mxu0
      %v3875 = vadd.f32 0.0, %v3874
      %v3876 = vpop.f32.mrb[0].mxu0
      %v3877 = vpop.f32.mrb[0].mxu0
      %v3878 = vpop.f32.mrb[0].mxu0
      %3879 = vdwg.mxu0
      %v3880 = vadd.f32 %v3825, %v3875
      %s3881 = scalar_lea.vmem %s2, 124
      %v3882 = vld [vmem:[%s3881] sm:$0xf]
      %v3883 = vpack.c.bf16 %v1651, %v1651
      %v3885 = vsel %vm613, %v3882, 0
      %v3888 = vsel %vm1134, %v3883, 0
      %3890 = vmatprep.subr.bf16.mxu0 0
      %3891 = vmatpush1.bf16.msra.mxu0 %v3888
      %3892 = vmatprep.subr.bf16.mxu0 0
      %3893 = vmatpush1.bf16.msra.mxu0 0
      %3894 = vmatprep.subr.bf16.mxu0 0
      %3895 = vmatpush1.bf16.msra.mxu0 0
      %3896 = vmatprep.subr.bf16.mxu0 0
      %3897 = vmatpush1.bf16.msra.mxu0 0
      %3898 = vmatprep.subr.bf16.mxu0 0
      %3899 = vmatpush1.bf16.msra.mxu0 0
      %3900 = vmatprep.subr.bf16.mxu0 0
      %3901 = vmatpush1.bf16.msra.mxu0 0
      %3902 = vmatprep.subr.bf16.mxu0 0
      %3903 = vmatpush1.bf16.msra.mxu0 0
      %3904 = vmatprep.subr.bf16.mxu0 0
      %3905 = vmatpush1.bf16.msra.mxu0 0
      %3906 = vmatprep.subr.bf16.mxu0 0
      %3907 = vmatpush1.bf16.msra.mxu0 0
      %3908 = vmatprep.subr.bf16.mxu0 0
      %3909 = vmatpush1.bf16.msra.mxu0 0
      %3910 = vmatprep.subr.bf16.mxu0 0
      %3911 = vmatpush1.bf16.msra.mxu0 0
      %3912 = vmatprep.subr.bf16.mxu0 0
      %3913 = vmatpush1.bf16.msra.mxu0 0
      %3914 = vmatprep.subr.bf16.mxu0 0
      %3915 = vmatpush1.bf16.msra.mxu0 0
      %3916 = vmatprep.subr.bf16.mxu0 0
      %3917 = vmatpush1.bf16.msra.mxu0 0
      %3918 = vmatprep.subr.bf16.mxu0 0
      %3919 = vmatpush1.bf16.msra.mxu0 0
      %3920 = vmatprep.subr.bf16.mxu0 0
      %3921 = vmatpush1.bf16.msra.mxu0 0
      %3922 = vmatprep.mubr.bf16.mxu0 0
      %3923 = vmatmul.mubr.bf16.gmra.mrb[0].mxu0 %v3885
      %v3924 = vpop.f32.mrb[0].mxu0
      %v3925 = vadd.f32 0.0, %v3924
      %v3926 = vpop.f32.mrb[0].mxu0
      %v3927 = vpop.f32.mrb[0].mxu0
      %v3928 = vpop.f32.mrb[0].mxu0
      %3929 = vdwg.mxu0
      %v3930 = vadd.f32 %v3880, %v3925
      %v3931 = vsel %vm728, %v1663, 0.0
      %s3932 = scalar_lea.vmem %s2, 128
      %v3933 = vld [vmem:[%s3932] sm:$0xf]
      %v3934 = vpack.c.bf16 %v3931, %v3931
      %v3936 = vsel %vm613, %v3933, 0
      %v3939 = vsel %vm1134, %v3934, 0
      %3941 = vmatprep.subr.bf16.mxu0 0
      %3942 = vmatpush1.bf16.msra.mxu0 %v3939
      %3943 = vmatprep.subr.bf16.mxu0 0
      %3944 = vmatpush1.bf16.msra.mxu0 0
      %3945 = vmatprep.subr.bf16.mxu0 0
      %3946 = vmatpush1.bf16.msra.mxu0 0
      %3947 = vmatprep.subr.bf16.mxu0 0
      %3948 = vmatpush1.bf16.msra.mxu0 0
      %3949 = vmatprep.subr.bf16.mxu0 0
      %3950 = vmatpush1.bf16.msra.mxu0 0
      %3951 = vmatprep.subr.bf16.mxu0 0
      %3952 = vmatpush1.bf16.msra.mxu0 0
      %3953 = vmatprep.subr.bf16.mxu0 0
      %3954 = vmatpush1.bf16.msra.mxu0 0
      %3955 = vmatprep.subr.bf16.mxu0 0
      %3956 = vmatpush1.bf16.msra.mxu0 0
      %3957 = vmatprep.subr.bf16.mxu0 0
      %3958 = vmatpush1.bf16.msra.mxu0 0
      %3959 = vmatprep.subr.bf16.mxu0 0
      %3960 = vmatpush1.bf16.msra.mxu0 0
      %3961 = vmatprep.subr.bf16.mxu0 0
      %3962 = vmatpush1.bf16.msra.mxu0 0
      %3963 = vmatprep.subr.bf16.mxu0 0
      %3964 = vmatpush1.bf16.msra.mxu0 0
      %3965 = vmatprep.subr.bf16.mxu0 0
      %3966 = vmatpush1.bf16.msra.mxu0 0
      %3967 = vmatprep.subr.bf16.mxu0 0
      %3968 = vmatpush1.bf16.msra.mxu0 0
      %3969 = vmatprep.subr.bf16.mxu0 0
      %3970 = vmatpush1.bf16.msra.mxu0 0
      %3971 = vmatprep.subr.bf16.mxu0 0
      %3972 = vmatpush1.bf16.msra.mxu0 0
      %3973 = vmatprep.mubr.bf16.mxu0 0
      %3974 = vmatmul.mubr.bf16.gmra.mrb[0].mxu0 %v3936
      %v3975 = vpop.f32.mrb[0].mxu0
      %v3976 = vadd.f32 0.0, %v3975
      %v3977 = vpop.f32.mrb[0].mxu0
      %v3978 = vpop.f32.mrb[0].mxu0
      %v3979 = vpop.f32.mrb[0].mxu0
      %3980 = vdwg.mxu0
      %v3981 = vadd.f32 %v3930, %v3976
      %3982 = vrot.lane.b32.xlu0 %v1651, 122
      %v3983 = vpop.permute.xlu0 %3982
      %v3985 = vsel %vm945, %v3983, 0.0
      %v3986 = vsel %vm616, %v3985, 0.0
      %s3987 = scalar_lea.vmem %s2, 132
      %v3988 = vld [vmem:[%s3987] sm:$0xf]
      %v3989 = vpack.c.bf16 %v3986, %v3986
      %v3991 = vsel %vm613, %v3988, 0
      %v3994 = vsel %vm1134, %v3989, 0
      %3996 = vmatprep.subr.bf16.mxu0 0
      %3997 = vmatpush1.bf16.msra.mxu0 %v3994
      %3998 = vmatprep.subr.bf16.mxu0 0
      %3999 = vmatpush1.bf16.msra.mxu0 0
      %4000 = vmatprep.subr.bf16.mxu0 0
      %4001 = vmatpush1.bf16.msra.mxu0 0
      %4002 = vmatprep.subr.bf16.mxu0 0
      %4003 = vmatpush1.bf16.msra.mxu0 0
      %4004 = vmatprep.subr.bf16.mxu0 0
      %4005 = vmatpush1.bf16.msra.mxu0 0
      %4006 = vmatprep.subr.bf16.mxu0 0
      %4007 = vmatpush1.bf16.msra.mxu0 0
      %4008 = vmatprep.subr.bf16.mxu0 0
      %4009 = vmatpush1.bf16.msra.mxu0 0
      %4010 = vmatprep.subr.bf16.mxu0 0
      %4011 = vmatpush1.bf16.msra.mxu0 0
      %4012 = vmatprep.subr.bf16.mxu0 0
      %4013 = vmatpush1.bf16.msra.mxu0 0
      %4014 = vmatprep.subr.bf16.mxu0 0
      %4015 = vmatpush1.bf16.msra.mxu0 0
      %4016 = vmatprep.subr.bf16.mxu0 0
      %4017 = vmatpush1.bf16.msra.mxu0 0
      %4018 = vmatprep.subr.bf16.mxu0 0
      %4019 = vmatpush1.bf16.msra.mxu0 0
      %4020 = vmatprep.subr.bf16.mxu0 0
      %4021 = vmatpush1.bf16.msra.mxu0 0
      %4022 = vmatprep.subr.bf16.mxu0 0
      %4023 = vmatpush1.bf16.msra.mxu0 0
      %4024 = vmatprep.subr.bf16.mxu0 0
      %4025 = vmatpush1.bf16.msra.mxu0 0
      %4026 = vmatprep.subr.bf16.mxu0 0
      %4027 = vmatpush1.bf16.msra.mxu0 0
      %4028 = vmatprep.mubr.bf16.mxu0 0
      %4029 = vmatmul.mubr.bf16.gmra.mrb[0].mxu0 %v3991
      %v4030 = vpop.f32.mrb[0].mxu0
      %v4031 = vadd.f32 0.0, %v4030
      %v4032 = vpop.f32.mrb[0].mxu0
      %v4033 = vpop.f32.mrb[0].mxu0
      %v4034 = vpop.f32.mrb[0].mxu0
      %4035 = vdwg.mxu0
      %v4036 = vadd.f32 %v3981, %v4031
      %s4037 = scalar_lea.vmem %s2, 136
      %v4038 = vld [vmem:[%s4037] sm:$0xf]
      %v4039 = vpack.c.bf16 %v1674, %v1674
      %v4041 = vsel %vm613, %v4038, 0
      %v4044 = vsel %vm1134, %v4039, 0
      %4046 = vmatprep.subr.bf16.mxu0 0
      %4047 = vmatpush1.bf16.msra.mxu0 %v4044
      %4048 = vmatprep.subr.bf16.mxu0 0
      %4049 = vmatpush1.bf16.msra.mxu0 0
      %4050 = vmatprep.subr.bf16.mxu0 0
      %4051 = vmatpush1.bf16.msra.mxu0 0
      %4052 = vmatprep.subr.bf16.mxu0 0
      %4053 = vmatpush1.bf16.msra.mxu0 0
      %4054 = vmatprep.subr.bf16.mxu0 0
      %4055 = vmatpush1.bf16.msra.mxu0 0
      %4056 = vmatprep.subr.bf16.mxu0 0
      %4057 = vmatpush1.bf16.msra.mxu0 0
      %4058 = vmatprep.subr.bf16.mxu0 0
      %4059 = vmatpush1.bf16.msra.mxu0 0
      %4060 = vmatprep.subr.bf16.mxu0 0
      %4061 = vmatpush1.bf16.msra.mxu0 0
      %4062 = vmatprep.subr.bf16.mxu0 0
      %4063 = vmatpush1.bf16.msra.mxu0 0
      %4064 = vmatprep.subr.bf16.mxu0 0
      %4065 = vmatpush1.bf16.msra.mxu0 0
      %4066 = vmatprep.subr.bf16.mxu0 0
      %4067 = vmatpush1.bf16.msra.mxu0 0
      %4068 = vmatprep.subr.bf16.mxu0 0
      %4069 = vmatpush1.bf16.msra.mxu0 0
      %4070 = vmatprep.subr.bf16.mxu0 0
      %4071 = vmatpush1.bf16.msra.mxu0 0
      %4072 = vmatprep.subr.bf16.mxu0 0
      %4073 = vmatpush1.bf16.msra.mxu0 0
      %4074 = vmatprep.subr.bf16.mxu0 0
      %4075 = vmatpush1.bf16.msra.mxu0 0
      %4076 = vmatprep.subr.bf16.mxu0 0
      %4077 = vmatpush1.bf16.msra.mxu0 0
      %4078 = vmatprep.mubr.bf16.mxu0 0
      %4079 = vmatmul.mubr.bf16.gmra.mrb[0].mxu0 %v4041
      %v4080 = vpop.f32.mrb[0].mxu0
      %v4081 = vadd.f32 0.0, %v4080
      %v4082 = vpop.f32.mrb[0].mxu0
      %v4083 = vpop.f32.mrb[0].mxu0
      %v4084 = vpop.f32.mrb[0].mxu0
      %4085 = vdwg.mxu0
      %v4086 = vadd.f32 %v4036, %v4081
      %v4087 = vsel %vm728, %v1679, 0.0
      %s4088 = scalar_lea.vmem %s2, 140
      %v4089 = vld [vmem:[%s4088] sm:$0xf]
      %v4090 = vpack.c.bf16 %v4087, %v4087
      %v4092 = vsel %vm613, %v4089, 0
      %v4095 = vsel %vm1134, %v4090, 0
      %4097 = vmatprep.subr.bf16.mxu0 0
      %4098 = vmatpush1.bf16.msra.mxu0 %v4095
      %4099 = vmatprep.subr.bf16.mxu0 0
      %4100 = vmatpush1.bf16.msra.mxu0 0
      %4101 = vmatprep.subr.bf16.mxu0 0
      %4102 = vmatpush1.bf16.msra.mxu0 0
      %4103 = vmatprep.subr.bf16.mxu0 0
      %4104 = vmatpush1.bf16.msra.mxu0 0
      %4105 = vmatprep.subr.bf16.mxu0 0
      %4106 = vmatpush1.bf16.msra.mxu0 0
      %4107 = vmatprep.subr.bf16.mxu0 0
      %4108 = vmatpush1.bf16.msra.mxu0 0
      %4109 = vmatprep.subr.bf16.mxu0 0
      %4110 = vmatpush1.bf16.msra.mxu0 0
      %4111 = vmatprep.subr.bf16.mxu0 0
      %4112 = vmatpush1.bf16.msra.mxu0 0
      %4113 = vmatprep.subr.bf16.mxu0 0
      %4114 = vmatpush1.bf16.msra.mxu0 0
      %4115 = vmatprep.subr.bf16.mxu0 0
      %4116 = vmatpush1.bf16.msra.mxu0 0
      %4117 = vmatprep.subr.bf16.mxu0 0
      %4118 = vmatpush1.bf16.msra.mxu0 0
      %4119 = vmatprep.subr.bf16.mxu0 0
      %4120 = vmatpush1.bf16.msra.mxu0 0
      %4121 = vmatprep.subr.bf16.mxu0 0
      %4122 = vmatpush1.bf16.msra.mxu0 0
      %4123 = vmatprep.subr.bf16.mxu0 0
      %4124 = vmatpush1.bf16.msra.mxu0 0
      %4125 = vmatprep.subr.bf16.mxu0 0
      %4126 = vmatpush1.bf16.msra.mxu0 0
      %4127 = vmatprep.subr.bf16.mxu0 0
      %4128 = vmatpush1.bf16.msra.mxu0 0
      %4129 = vmatprep.mubr.bf16.mxu0 0
      %4130 = vmatmul.mubr.bf16.gmra.mrb[0].mxu0 %v4092
      %v4131 = vpop.f32.mrb[0].mxu0
      %v4132 = vadd.f32 0.0, %v4131
      %v4133 = vpop.f32.mrb[0].mxu0
      %v4134 = vpop.f32.mrb[0].mxu0
      %v4135 = vpop.f32.mrb[0].mxu0
      %4136 = vdwg.mxu0
      %v4137 = vadd.f32 %v4086, %v4132
      %4138 = vset.pattern.permute.xlu0 4
      %4139 = vperm.xlu0 %4138, %v402
      %v4140 = vpop.permute.xlu0 %4139
      %v4142 = vadd.f32 %v4137, %v4140
      %v4143 = vmax.f32 %v4142, 0.0
      %4145 = vrot.lane.b32.xlu0 %v4143, 8
      %v4146 = vpop.permute.xlu0 %4145
      %v4148 = vsel %vm613, 0.0, %v4146
      %v4149 = vsel %vm616, %v4148, 0.0
      %s4150 = scalar_lea.vmem %s2, 144
      %v4151 = vld [vmem:[%s4150] sm:$0xf]
      %v4152 = vpack.c.bf16 %v4149, %v4149
      %4153 = vrot.lane.b32.xlu0 %v4143, 7
      %v4154 = vpop.permute.xlu0 %4153
      %v4156 = vsel %vm623, 0.0, %v4154
      %s4157 = scalar_lea.vmem %s2, 148
      %v4158 = vld [vmem:[%s4157] sm:$0xf]
      %v4159 = vpack.c.bf16 %v4156, %v4156
      %v4161 = vsel %vm613, %v4158, 0
      %v4164 = vsel %vm1134, %v4159, 0
      %4166 = vmatprep.subr.bf16.mxu0 0
      %4167 = vmatpush1.bf16.msra.mxu0 %v4164
      %4168 = vmatprep.subr.bf16.mxu0 0
      %4169 = vmatpush1.bf16.msra.mxu0 0
      %4170 = vmatprep.subr.bf16.mxu0 0
      %4171 = vmatpush1.bf16.msra.mxu0 0
      %4172 = vmatprep.subr.bf16.mxu0 0
      %4173 = vmatpush1.bf16.msra.mxu0 0
      %4174 = vmatprep.subr.bf16.mxu0 0
      %4175 = vmatpush1.bf16.msra.mxu0 0
      %4176 = vmatprep.subr.bf16.mxu0 0
      %4177 = vmatpush1.bf16.msra.mxu0 0
      %4178 = vmatprep.subr.bf16.mxu0 0
      %4179 = vmatpush1.bf16.msra.mxu0 0
      %4180 = vmatprep.subr.bf16.mxu0 0
      %4181 = vmatpush1.bf16.msra.mxu0 0
      %4182 = vmatprep.subr.bf16.mxu0 0
      %4183 = vmatpush1.bf16.msra.mxu0 0
      %4184 = vmatprep.subr.bf16.mxu0 0
      %4185 = vmatpush1.bf16.msra.mxu0 0
      %4186 = vmatprep.subr.bf16.mxu0 0
      %4187 = vmatpush1.bf16.msra.mxu0 0
      %4188 = vmatprep.subr.bf16.mxu0 0
      %4189 = vmatpush1.bf16.msra.mxu0 0
      %4190 = vmatprep.subr.bf16.mxu0 0
      %4191 = vmatpush1.bf16.msra.mxu0 0
      %4192 = vmatprep.subr.bf16.mxu0 0
      %4193 = vmatpush1.bf16.msra.mxu0 0
      %4194 = vmatprep.subr.bf16.mxu0 0
      %4195 = vmatpush1.bf16.msra.mxu0 0
      %4196 = vmatprep.subr.bf16.mxu0 0
      %4197 = vmatpush1.bf16.msra.mxu0 0
      %4198 = vmatprep.mubr.bf16.mxu0 0
      %4199 = vmatmul.mubr.bf16.gmra.mrb[0].mxu0 %v4161
      %v4200 = vpop.f32.mrb[0].mxu0
      %v4201 = vadd.f32 0.0, %v4200
      %v4202 = vpop.f32.mrb[0].mxu0
      %v4203 = vpop.f32.mrb[0].mxu0
      %v4204 = vpop.f32.mrb[0].mxu0
      %4205 = vdwg.mxu0
      %v4207 = vsel %vm613, %v4151, 0
      %v4210 = vsel %vm1134, %v4152, 0
      %4212 = vmatprep.subr.bf16.mxu0 0
      %4213 = vmatpush1.bf16.msra.mxu0 %v4210
      %4214 = vmatprep.subr.bf16.mxu0 0
      %4215 = vmatpush1.bf16.msra.mxu0 0
      %4216 = vmatprep.subr.bf16.mxu0 0
      %4217 = vmatpush1.bf16.msra.mxu0 0
      %4218 = vmatprep.subr.bf16.mxu0 0
      %4219 = vmatpush1.bf16.msra.mxu0 0
      %4220 = vmatprep.subr.bf16.mxu0 0
      %4221 = vmatpush1.bf16.msra.mxu0 0
      %4222 = vmatprep.subr.bf16.mxu0 0
      %4223 = vmatpush1.bf16.msra.mxu0 0
      %4224 = vmatprep.subr.bf16.mxu0 0
      %4225 = vmatpush1.bf16.msra.mxu0 0
      %4226 = vmatprep.subr.bf16.mxu0 0
      %4227 = vmatpush1.bf16.msra.mxu0 0
      %4228 = vmatprep.subr.bf16.mxu0 0
      %4229 = vmatpush1.bf16.msra.mxu0 0
      %4230 = vmatprep.subr.bf16.mxu0 0
      %4231 = vmatpush1.bf16.msra.mxu0 0
      %4232 = vmatprep.subr.bf16.mxu0 0
      %4233 = vmatpush1.bf16.msra.mxu0 0
      %4234 = vmatprep.subr.bf16.mxu0 0
      %4235 = vmatpush1.bf16.msra.mxu0 0
      %4236 = vmatprep.subr.bf16.mxu0 0
      %4237 = vmatpush1.bf16.msra.mxu0 0
      %4238 = vmatprep.subr.bf16.mxu0 0
      %4239 = vmatpush1.bf16.msra.mxu0 0
      %4240 = vmatprep.subr.bf16.mxu0 0
      %4241 = vmatpush1.bf16.msra.mxu0 0
      %4242 = vmatprep.subr.bf16.mxu0 0
      %4243 = vmatpush1.bf16.msra.mxu0 0
      %4244 = vmatprep.mubr.bf16.mxu0 0
      %4245 = vmatmul.mubr.bf16.gmra.mrb[0].mxu0 %v4207
      %v4246 = vpop.f32.mrb[0].mxu0
      %v4247 = vadd.f32 %v4201, %v4246
      %v4248 = vpop.f32.mrb[0].mxu0
      %v4249 = vpop.f32.mrb[0].mxu0
      %v4250 = vpop.f32.mrb[0].mxu0
      %4251 = vdwg.mxu0
      %4252 = vrot.lane.b32.xlu0 %v4143, 6
      %v4253 = vpop.permute.xlu0 %4252
      %v4255 = vsel %vm725, 0.0, %v4253
      %v4256 = vsel %vm728, %v4255, 0.0
      %s4257 = scalar_lea.vmem %s2, 152
      %v4258 = vld [vmem:[%s4257] sm:$0xf]
      %v4259 = vpack.c.bf16 %v4256, %v4256
      %v4261 = vsel %vm613, %v4258, 0
      %v4264 = vsel %vm1134, %v4259, 0
      %4266 = vmatprep.subr.bf16.mxu0 0
      %4267 = vmatpush1.bf16.msra.mxu0 %v4264
      %4268 = vmatprep.subr.bf16.mxu0 0
      %4269 = vmatpush1.bf16.msra.mxu0 0
      %4270 = vmatprep.subr.bf16.mxu0 0
      %4271 = vmatpush1.bf16.msra.mxu0 0
      %4272 = vmatprep.subr.bf16.mxu0 0
      %4273 = vmatpush1.bf16.msra.mxu0 0
      %4274 = vmatprep.subr.bf16.mxu0 0
      %4275 = vmatpush1.bf16.msra.mxu0 0
      %4276 = vmatprep.subr.bf16.mxu0 0
      %4277 = vmatpush1.bf16.msra.mxu0 0
      %4278 = vmatprep.subr.bf16.mxu0 0
      %4279 = vmatpush1.bf16.msra.mxu0 0
      %4280 = vmatprep.subr.bf16.mxu0 0
      %4281 = vmatpush1.bf16.msra.mxu0 0
      %4282 = vmatprep.subr.bf16.mxu0 0
      %4283 = vmatpush1.bf16.msra.mxu0 0
      %4284 = vmatprep.subr.bf16.mxu0 0
      %4285 = vmatpush1.bf16.msra.mxu0 0
      %4286 = vmatprep.subr.bf16.mxu0 0
      %4287 = vmatpush1.bf16.msra.mxu0 0
      %4288 = vmatprep.subr.bf16.mxu0 0
      %4289 = vmatpush1.bf16.msra.mxu0 0
      %4290 = vmatprep.subr.bf16.mxu0 0
      %4291 = vmatpush1.bf16.msra.mxu0 0
      %4292 = vmatprep.subr.bf16.mxu0 0
      %4293 = vmatpush1.bf16.msra.mxu0 0
      %4294 = vmatprep.subr.bf16.mxu0 0
      %4295 = vmatpush1.bf16.msra.mxu0 0
      %4296 = vmatprep.subr.bf16.mxu0 0
      %4297 = vmatpush1.bf16.msra.mxu0 0
      %4298 = vmatprep.mubr.bf16.mxu0 0
      %4299 = vmatmul.mubr.bf16.gmra.mrb[0].mxu0 %v4261
      %v4300 = vpop.f32.mrb[0].mxu0
      %v4301 = vadd.f32 0.0, %v4300
      %v4302 = vpop.f32.mrb[0].mxu0
      %v4303 = vpop.f32.mrb[0].mxu0
      %v4304 = vpop.f32.mrb[0].mxu0
      %4305 = vdwg.mxu0
      %v4306 = vadd.f32 %v4247, %v4301
      %4307 = vrot.lane.b32.xlu0 %v4143, 1
      %v4308 = vpop.permute.xlu0 %4307
      %v4310 = vsel %vm783, 0.0, %v4308
      %v4311 = vsel %vm616, %v4310, 0.0
      %s4312 = scalar_lea.vmem %s2, 156
      %v4313 = vld [vmem:[%s4312] sm:$0xf]
      %v4314 = vpack.c.bf16 %v4311, %v4311
      %v4316 = vsel %vm613, %v4313, 0
      %v4319 = vsel %vm1134, %v4314, 0
      %4321 = vmatprep.subr.bf16.mxu0 0
      %4322 = vmatpush1.bf16.msra.mxu0 %v4319
      %4323 = vmatprep.subr.bf16.mxu0 0
      %4324 = vmatpush1.bf16.msra.mxu0 0
      %4325 = vmatprep.subr.bf16.mxu0 0
      %4326 = vmatpush1.bf16.msra.mxu0 0
      %4327 = vmatprep.subr.bf16.mxu0 0
      %4328 = vmatpush1.bf16.msra.mxu0 0
      %4329 = vmatprep.subr.bf16.mxu0 0
      %4330 = vmatpush1.bf16.msra.mxu0 0
      %4331 = vmatprep.subr.bf16.mxu0 0
      %4332 = vmatpush1.bf16.msra.mxu0 0
      %4333 = vmatprep.subr.bf16.mxu0 0
      %4334 = vmatpush1.bf16.msra.mxu0 0
      %4335 = vmatprep.subr.bf16.mxu0 0
      %4336 = vmatpush1.bf16.msra.mxu0 0
      %4337 = vmatprep.subr.bf16.mxu0 0
      %4338 = vmatpush1.bf16.msra.mxu0 0
      %4339 = vmatprep.subr.bf16.mxu0 0
      %4340 = vmatpush1.bf16.msra.mxu0 0
      %4341 = vmatprep.subr.bf16.mxu0 0
      %4342 = vmatpush1.bf16.msra.mxu0 0
      %4343 = vmatprep.subr.bf16.mxu0 0
      %4344 = vmatpush1.bf16.msra.mxu0 0
      %4345 = vmatprep.subr.bf16.mxu0 0
      %4346 = vmatpush1.bf16.msra.mxu0 0
      %4347 = vmatprep.subr.bf16.mxu0 0
      %4348 = vmatpush1.bf16.msra.mxu0 0
      %4349 = vmatprep.subr.bf16.mxu0 0
      %4350 = vmatpush1.bf16.msra.mxu0 0
      %4351 = vmatprep.subr.bf16.mxu0 0
      %4352 = vmatpush1.bf16.msra.mxu0 0
      %4353 = vmatprep.mubr.bf16.mxu0 0
      %4354 = vmatmul.mubr.bf16.gmra.mrb[0].mxu0 %v4316
      %v4355 = vpop.f32.mrb[0].mxu0
      %v4356 = vadd.f32 0.0, %v4355
      %v4357 = vpop.f32.mrb[0].mxu0
      %v4358 = vpop.f32.mrb[0].mxu0
      %v4359 = vpop.f32.mrb[0].mxu0
      %4360 = vdwg.mxu0
      %v4361 = vadd.f32 %v4306, %v4356
      %s4362 = scalar_lea.vmem %s2, 160
      %v4363 = vld [vmem:[%s4362] sm:$0xf]
      %v4364 = vpack.c.bf16 %v4143, %v4143
      %v4366 = vsel %vm613, %v4363, 0
      %v4369 = vsel %vm1134, %v4364, 0
      %4371 = vmatprep.subr.bf16.mxu0 0
      %4372 = vmatpush1.bf16.msra.mxu0 %v4369
      %4373 = vmatprep.subr.bf16.mxu0 0
      %4374 = vmatpush1.bf16.msra.mxu0 0
      %4375 = vmatprep.subr.bf16.mxu0 0
      %4376 = vmatpush1.bf16.msra.mxu0 0
      %4377 = vmatprep.subr.bf16.mxu0 0
      %4378 = vmatpush1.bf16.msra.mxu0 0
      %4379 = vmatprep.subr.bf16.mxu0 0
      %4380 = vmatpush1.bf16.msra.mxu0 0
      %4381 = vmatprep.subr.bf16.mxu0 0
      %4382 = vmatpush1.bf16.msra.mxu0 0
      %4383 = vmatprep.subr.bf16.mxu0 0
      %4384 = vmatpush1.bf16.msra.mxu0 0
      %4385 = vmatprep.subr.bf16.mxu0 0
      %4386 = vmatpush1.bf16.msra.mxu0 0
      %4387 = vmatprep.subr.bf16.mxu0 0
      %4388 = vmatpush1.bf16.msra.mxu0 0
      %4389 = vmatprep.subr.bf16.mxu0 0
      %4390 = vmatpush1.bf16.msra.mxu0 0
      %4391 = vmatprep.subr.bf16.mxu0 0
      %4392 = vmatpush1.bf16.msra.mxu0 0
      %4393 = vmatprep.subr.bf16.mxu0 0
      %4394 = vmatpush1.bf16.msra.mxu0 0
      %4395 = vmatprep.subr.bf16.mxu0 0
      %4396 = vmatpush1.bf16.msra.mxu0 0
      %4397 = vmatprep.subr.bf16.mxu0 0
      %4398 = vmatpush1.bf16.msra.mxu0 0
      %4399 = vmatprep.subr.bf16.mxu0 0
      %4400 = vmatpush1.bf16.msra.mxu0 0
      %4401 = vmatprep.subr.bf16.mxu0 0
      %4402 = vmatpush1.bf16.msra.mxu0 0
      %4403 = vmatprep.mubr.bf16.mxu0 0
      %4404 = vmatmul.mubr.bf16.gmra.mrb[0].mxu0 %v4366
      %v4405 = vpop.f32.mrb[0].mxu0
      %v4406 = vadd.f32 0.0, %v4405
      %v4407 = vpop.f32.mrb[0].mxu0
      %v4408 = vpop.f32.mrb[0].mxu0
      %v4409 = vpop.f32.mrb[0].mxu0
      %4410 = vdwg.mxu0
      %v4411 = vadd.f32 %v4361, %v4406
      %4412 = vrot.lane.b32.xlu0 %v4143, 127
      %v4413 = vpop.permute.xlu0 %4412
      %v4415 = vsel %vm889, %v4413, 0.0
      %v4416 = vsel %vm728, %v4415, 0.0
      %s4417 = scalar_lea.vmem %s2, 164
      %v4418 = vld [vmem:[%s4417] sm:$0xf]
      %v4419 = vpack.c.bf16 %v4416, %v4416
      %v4421 = vsel %vm613, %v4418, 0
      %v4424 = vsel %vm1134, %v4419, 0
      %4426 = vmatprep.subr.bf16.mxu0 0
      %4427 = vmatpush1.bf16.msra.mxu0 %v4424
      %4428 = vmatprep.subr.bf16.mxu0 0
      %4429 = vmatpush1.bf16.msra.mxu0 0
      %4430 = vmatprep.subr.bf16.mxu0 0
      %4431 = vmatpush1.bf16.msra.mxu0 0
      %4432 = vmatprep.subr.bf16.mxu0 0
      %4433 = vmatpush1.bf16.msra.mxu0 0
      %4434 = vmatprep.subr.bf16.mxu0 0
      %4435 = vmatpush1.bf16.msra.mxu0 0
      %4436 = vmatprep.subr.bf16.mxu0 0
      %4437 = vmatpush1.bf16.msra.mxu0 0
      %4438 = vmatprep.subr.bf16.mxu0 0
      %4439 = vmatpush1.bf16.msra.mxu0 0
      %4440 = vmatprep.subr.bf16.mxu0 0
      %4441 = vmatpush1.bf16.msra.mxu0 0
      %4442 = vmatprep.subr.bf16.mxu0 0
      %4443 = vmatpush1.bf16.msra.mxu0 0
      %4444 = vmatprep.subr.bf16.mxu0 0
      %4445 = vmatpush1.bf16.msra.mxu0 0
      %4446 = vmatprep.subr.bf16.mxu0 0
      %4447 = vmatpush1.bf16.msra.mxu0 0
      %4448 = vmatprep.subr.bf16.mxu0 0
      %4449 = vmatpush1.bf16.msra.mxu0 0
      %4450 = vmatprep.subr.bf16.mxu0 0
      %4451 = vmatpush1.bf16.msra.mxu0 0
      %4452 = vmatprep.subr.bf16.mxu0 0
      %4453 = vmatpush1.bf16.msra.mxu0 0
      %4454 = vmatprep.subr.bf16.mxu0 0
      %4455 = vmatpush1.bf16.msra.mxu0 0
      %4456 = vmatprep.subr.bf16.mxu0 0
      %4457 = vmatpush1.bf16.msra.mxu0 0
      %4458 = vmatprep.mubr.bf16.mxu0 0
      %4459 = vmatmul.mubr.bf16.gmra.mrb[0].mxu0 %v4421
      %v4460 = vpop.f32.mrb[0].mxu0
      %v4461 = vadd.f32 0.0, %v4460
      %v4462 = vpop.f32.mrb[0].mxu0
      %v4463 = vpop.f32.mrb[0].mxu0
      %v4464 = vpop.f32.mrb[0].mxu0
      %4465 = vdwg.mxu0
      %v4466 = vadd.f32 %v4411, %v4461
      %4467 = vrot.lane.b32.xlu0 %v4143, 122
      %v4468 = vpop.permute.xlu0 %4467
      %v4470 = vsel %vm945, %v4468, 0.0
      %v4471 = vsel %vm616, %v4470, 0.0
      %s4472 = scalar_lea.vmem %s2, 168
      %v4473 = vld [vmem:[%s4472] sm:$0xf]
      %v4474 = vpack.c.bf16 %v4471, %v4471
      %v4476 = vsel %vm613, %v4473, 0
      %v4479 = vsel %vm1134, %v4474, 0
      %4481 = vmatprep.subr.bf16.mxu0 0
      %4482 = vmatpush1.bf16.msra.mxu0 %v4479
      %4483 = vmatprep.subr.bf16.mxu0 0
      %4484 = vmatpush1.bf16.msra.mxu0 0
      %4485 = vmatprep.subr.bf16.mxu0 0
      %4486 = vmatpush1.bf16.msra.mxu0 0
      %4487 = vmatprep.subr.bf16.mxu0 0
      %4488 = vmatpush1.bf16.msra.mxu0 0
      %4489 = vmatprep.subr.bf16.mxu0 0
      %4490 = vmatpush1.bf16.msra.mxu0 0
      %4491 = vmatprep.subr.bf16.mxu0 0
      %4492 = vmatpush1.bf16.msra.mxu0 0
      %4493 = vmatprep.subr.bf16.mxu0 0
      %4494 = vmatpush1.bf16.msra.mxu0 0
      %4495 = vmatprep.subr.bf16.mxu0 0
      %4496 = vmatpush1.bf16.msra.mxu0 0
      %4497 = vmatprep.subr.bf16.mxu0 0
      %4498 = vmatpush1.bf16.msra.mxu0 0
      %4499 = vmatprep.subr.bf16.mxu0 0
      %4500 = vmatpush1.bf16.msra.mxu0 0
      %4501 = vmatprep.subr.bf16.mxu0 0
      %4502 = vmatpush1.bf16.msra.mxu0 0
      %4503 = vmatprep.subr.bf16.mxu0 0
      %4504 = vmatpush1.bf16.msra.mxu0 0
      %4505 = vmatprep.subr.bf16.mxu0 0
      %4506 = vmatpush1.bf16.msra.mxu0 0
      %4507 = vmatprep.subr.bf16.mxu0 0
      %4508 = vmatpush1.bf16.msra.mxu0 0
      %4509 = vmatprep.subr.bf16.mxu0 0
      %4510 = vmatpush1.bf16.msra.mxu0 0
      %4511 = vmatprep.subr.bf16.mxu0 0
      %4512 = vmatpush1.bf16.msra.mxu0 0
      %4513 = vmatprep.mubr.bf16.mxu0 0
      %4514 = vmatmul.mubr.bf16.gmra.mrb[0].mxu0 %v4476
      %v4515 = vpop.f32.mrb[0].mxu0
      %v4516 = vadd.f32 0.0, %v4515
      %v4517 = vpop.f32.mrb[0].mxu0
      %v4518 = vpop.f32.mrb[0].mxu0
      %v4519 = vpop.f32.mrb[0].mxu0
      %4520 = vdwg.mxu0
      %v4521 = vadd.f32 %v4466, %v4516
      %4522 = vrot.lane.b32.xlu0 %v4143, 121
      %v4523 = vpop.permute.xlu0 %4522
      %v4525 = vsel %vm1001, %v4523, 0.0
      %s4526 = scalar_lea.vmem %s2, 172
      %v4527 = vld [vmem:[%s4526] sm:$0xf]
      %v4528 = vpack.c.bf16 %v4525, %v4525
      %v4530 = vsel %vm613, %v4527, 0
      %v4533 = vsel %vm1134, %v4528, 0
      %4535 = vmatprep.subr.bf16.mxu0 0
      %4536 = vmatpush1.bf16.msra.mxu0 %v4533
      %4537 = vmatprep.subr.bf16.mxu0 0
      %4538 = vmatpush1.bf16.msra.mxu0 0
      %4539 = vmatprep.subr.bf16.mxu0 0
      %4540 = vmatpush1.bf16.msra.mxu0 0
      %4541 = vmatprep.subr.bf16.mxu0 0
      %4542 = vmatpush1.bf16.msra.mxu0 0
      %4543 = vmatprep.subr.bf16.mxu0 0
      %4544 = vmatpush1.bf16.msra.mxu0 0
      %4545 = vmatprep.subr.bf16.mxu0 0
      %4546 = vmatpush1.bf16.msra.mxu0 0
      %4547 = vmatprep.subr.bf16.mxu0 0
      %4548 = vmatpush1.bf16.msra.mxu0 0
      %4549 = vmatprep.subr.bf16.mxu0 0
      %4550 = vmatpush1.bf16.msra.mxu0 0
      %4551 = vmatprep.subr.bf16.mxu0 0
      %4552 = vmatpush1.bf16.msra.mxu0 0
      %4553 = vmatprep.subr.bf16.mxu0 0
      %4554 = vmatpush1.bf16.msra.mxu0 0
      %4555 = vmatprep.subr.bf16.mxu0 0
      %4556 = vmatpush1.bf16.msra.mxu0 0
      %4557 = vmatprep.subr.bf16.mxu0 0
      %4558 = vmatpush1.bf16.msra.mxu0 0
      %4559 = vmatprep.subr.bf16.mxu0 0
      %4560 = vmatpush1.bf16.msra.mxu0 0
      %4561 = vmatprep.subr.bf16.mxu0 0
      %4562 = vmatpush1.bf16.msra.mxu0 0
      %4563 = vmatprep.subr.bf16.mxu0 0
      %4564 = vmatpush1.bf16.msra.mxu0 0
      %4565 = vmatprep.subr.bf16.mxu0 0
      %4566 = vmatpush1.bf16.msra.mxu0 0
      %4567 = vmatprep.mubr.bf16.mxu0 0
      %4568 = vmatmul.mubr.bf16.gmra.mrb[0].mxu0 %v4530
      %v4569 = vpop.f32.mrb[0].mxu0
      %v4570 = vadd.f32 0.0, %v4569
      %v4571 = vpop.f32.mrb[0].mxu0
      %v4572 = vpop.f32.mrb[0].mxu0
      %v4573 = vpop.f32.mrb[0].mxu0
      %4574 = vdwg.mxu0
      %v4575 = vadd.f32 %v4521, %v4570
      %4576 = vrot.lane.b32.xlu0 %v4143, 120
      %v4577 = vpop.permute.xlu0 %4576
      %v4579 = vsel %vm1056, %v4577, 0.0
      %v4580 = vsel %vm728, %v4579, 0.0
      %s4581 = scalar_lea.vmem %s2, 176
      %v4582 = vld [vmem:[%s4581] sm:$0xf]
      %v4583 = vpack.c.bf16 %v4580, %v4580
      %v4585 = vsel %vm613, %v4582, 0
      %v4588 = vsel %vm1134, %v4583, 0
      %4590 = vmatprep.subr.bf16.mxu0 0
      %4591 = vmatpush1.bf16.msra.mxu0 %v4588
      %4592 = vmatprep.subr.bf16.mxu0 0
      %4593 = vmatpush1.bf16.msra.mxu0 0
      %4594 = vmatprep.subr.bf16.mxu0 0
      %4595 = vmatpush1.bf16.msra.mxu0 0
      %4596 = vmatprep.subr.bf16.mxu0 0
      %4597 = vmatpush1.bf16.msra.mxu0 0
      %4598 = vmatprep.subr.bf16.mxu0 0
      %4599 = vmatpush1.bf16.msra.mxu0 0
      %4600 = vmatprep.subr.bf16.mxu0 0
      %4601 = vmatpush1.bf16.msra.mxu0 0
      %4602 = vmatprep.subr.bf16.mxu0 0
      %4603 = vmatpush1.bf16.msra.mxu0 0
      %4604 = vmatprep.subr.bf16.mxu0 0
      %4605 = vmatpush1.bf16.msra.mxu0 0
      %4606 = vmatprep.subr.bf16.mxu0 0
      %4607 = vmatpush1.bf16.msra.mxu0 0
      %4608 = vmatprep.subr.bf16.mxu0 0
      %4609 = vmatpush1.bf16.msra.mxu0 0
      %4610 = vmatprep.subr.bf16.mxu0 0
      %4611 = vmatpush1.bf16.msra.mxu0 0
      %4612 = vmatprep.subr.bf16.mxu0 0
      %4613 = vmatpush1.bf16.msra.mxu0 0
      %4614 = vmatprep.subr.bf16.mxu0 0
      %4615 = vmatpush1.bf16.msra.mxu0 0
      %4616 = vmatprep.subr.bf16.mxu0 0
      %4617 = vmatpush1.bf16.msra.mxu0 0
      %4618 = vmatprep.subr.bf16.mxu0 0
      %4619 = vmatpush1.bf16.msra.mxu0 0
      %4620 = vmatprep.subr.bf16.mxu0 0
      %4621 = vmatpush1.bf16.msra.mxu0 0
      %4622 = vmatprep.mubr.bf16.mxu0 0
      %4623 = vmatmul.mubr.bf16.gmra.mrb[0].mxu0 %v4585
      %v4624 = vpop.f32.mrb[0].mxu0
      %v4625 = vadd.f32 0.0, %v4624
      %v4626 = vpop.f32.mrb[0].mxu0
      %v4627 = vpop.f32.mrb[0].mxu0
      %v4628 = vpop.f32.mrb[0].mxu0
      %4629 = vdwg.mxu0
      %v4630 = vadd.f32 %v4575, %v4625
      %4631 = vset.pattern.permute.xlu0 5
      %4632 = vperm.xlu0 %4631, %v402
      %v4633 = vpop.permute.xlu0 %4632
      %v4635 = vadd.f32 %v4630, %v4633
      %v4636 = vadd.f32 %v4635, %v1651
      %v4637 = vld [vmem:[%s8] sm:$0xff]
      %v4638 = vld [vmem:[%s8 + $0x8] sm:$0x1]
      %vm4639 = vcmask 72704
      %v4641 = vsel %vm4639, %v3663, 0
      %v4644 = vsel %vm1709, %v4638, 0
      %4646 = vmatprep.subr.mxu0 0.0
      %4647 = vmatpush1.msra.mxu0 %v4637
      %4648 = vmatprep.subr.mxu0 0.0
      %4649 = vmatpush1.msra.mxu0 %v4644
      %4650 = vmatprep.subr.mxu0 0.0
      %4651 = vmatpush1.msra.mxu0 0.0
      %4652 = vmatprep.subr.mxu0 0.0
      %4653 = vmatpush1.msra.mxu0 0.0
      %4654 = vmatprep.subr.mxu0 0.0
      %4655 = vmatpush1.msra.mxu0 0.0
      %4656 = vmatprep.subr.mxu0 0.0
      %4657 = vmatpush1.msra.mxu0 0.0
      %4658 = vmatprep.subr.mxu0 0.0
      %4659 = vmatpush1.msra.mxu0 0.0
      %4660 = vmatprep.subr.mxu0 0.0
      %4661 = vmatpush1.msra.mxu0 0.0
      %4662 = vmatprep.subr.mxu0 0.0
      %4663 = vmatpush1.msra.mxu0 0.0
      %4664 = vmatprep.subr.mxu0 0.0
      %4665 = vmatpush1.msra.mxu0 0.0
      %4666 = vmatprep.subr.mxu0 0.0
      %4667 = vmatpush1.msra.mxu0 0.0
      %4668 = vmatprep.subr.mxu0 0.0
      %4669 = vmatpush1.msra.mxu0 0.0
      %4670 = vmatprep.subr.mxu0 0.0
      %4671 = vmatpush1.msra.mxu0 0.0
      %4672 = vmatprep.subr.mxu0 0.0
      %4673 = vmatpush1.msra.mxu0 0.0
      %4674 = vmatprep.subr.mxu0 0.0
      %4675 = vmatpush1.msra.mxu0 0.0
      %4676 = vmatprep.subr.mxu0 0.0
      %4677 = vmatpush1.msra.mxu0 0.0
      %4678 = vmatprep.subr.mxu0 0.0
      %4679 = vmatpush1.msra.mxu0 0.0
      %4680 = vmatprep.subr.mxu0 0.0
      %4681 = vmatpush1.msra.mxu0 0.0
      %4682 = vmatprep.subr.mxu0 0.0
      %4683 = vmatpush1.msra.mxu0 0.0
      %4684 = vmatprep.subr.mxu0 0.0
      %4685 = vmatpush1.msra.mxu0 0.0
      %4686 = vmatprep.subr.mxu0 0.0
      %4687 = vmatpush1.msra.mxu0 0.0
      %4688 = vmatprep.subr.mxu0 0.0
      %4689 = vmatpush1.msra.mxu0 0.0
      %4690 = vmatprep.subr.mxu0 0.0
      %4691 = vmatpush1.msra.mxu0 0.0
      %4692 = vmatprep.subr.mxu0 0.0
      %4693 = vmatpush1.msra.mxu0 0.0
      %4694 = vmatprep.subr.mxu0 0.0
      %4695 = vmatpush1.msra.mxu0 0.0
      %4696 = vmatprep.subr.mxu0 0.0
      %4697 = vmatpush1.msra.mxu0 0.0
      %4698 = vmatprep.subr.mxu0 0.0
      %4699 = vmatpush1.msra.mxu0 0.0
      %4700 = vmatprep.subr.mxu0 0.0
      %4701 = vmatpush1.msra.mxu0 0.0
      %4702 = vmatprep.subr.mxu0 0.0
      %4703 = vmatpush1.msra.mxu0 0.0
      %4704 = vmatprep.subr.mxu0 0.0
      %4705 = vmatpush1.msra.mxu0 0.0
      %4706 = vmatprep.subr.mxu0 0.0
      %4707 = vmatpush1.msra.mxu0 0.0
      %4708 = vmatprep.subr.mxu0 0.0
      %4709 = vmatpush1.msra.mxu0 0.0
      %4710 = vmatprep.mubr.f32.mxu0 0.0
      %4711 = vmatmul.mubr.f32.gmra.mrb[0].mxu0 %v4641
      %v4712 = vpop.f32.mrb[0].mxu0
      %v4713 = vadd.f32 %v4636, %v4712
      %v4714 = vpop.f32.mrb[0].mxu0
      %4715 = vdwg.mxu0
      %4717 = vrot.lane.b32.xlu0 %v4713, 8
      %v4718 = vpop.permute.xlu0 %4717
      %v4720 = vsel %vm613, 0.0, %v4718
      %v4721 = vsel %vm616, %v4720, 0.0
      %s4722 = scalar_lea.vmem %s2, 180
      %v4723 = vld [vmem:[%s4722] sm:$0xf]
      %v4724 = vpack.c.bf16 %v4721, %v4721
      %4725 = vrot.lane.b32.xlu0 %v4713, 7
      %v4726 = vpop.permute.xlu0 %4725
      %v4728 = vsel %vm623, 0.0, %v4726
      %s4729 = scalar_lea.vmem %s2, 184
      %v4730 = vld [vmem:[%s4729] sm:$0xf]
      %v4731 = vpack.c.bf16 %v4728, %v4728
      %v4733 = vsel %vm613, %v4730, 0
      %v4736 = vsel %vm1134, %v4731, 0
      %4738 = vmatprep.subr.bf16.mxu0 0
      %4739 = vmatpush1.bf16.msra.mxu0 %v4736
      %4740 = vmatprep.subr.bf16.mxu0 0
      %4741 = vmatpush1.bf16.msra.mxu0 0
      %4742 = vmatprep.subr.bf16.mxu0 0
      %4743 = vmatpush1.bf16.msra.mxu0 0
      %4744 = vmatprep.subr.bf16.mxu0 0
      %4745 = vmatpush1.bf16.msra.mxu0 0
      %4746 = vmatprep.subr.bf16.mxu0 0
      %4747 = vmatpush1.bf16.msra.mxu0 0
      %4748 = vmatprep.subr.bf16.mxu0 0
      %4749 = vmatpush1.bf16.msra.mxu0 0
      %4750 = vmatprep.subr.bf16.mxu0 0
      %4751 = vmatpush1.bf16.msra.mxu0 0
      %4752 = vmatprep.subr.bf16.mxu0 0
      %4753 = vmatpush1.bf16.msra.mxu0 0
      %4754 = vmatprep.subr.bf16.mxu0 0
      %4755 = vmatpush1.bf16.msra.mxu0 0
      %4756 = vmatprep.subr.bf16.mxu0 0
      %4757 = vmatpush1.bf16.msra.mxu0 0
      %4758 = vmatprep.subr.bf16.mxu0 0
      %4759 = vmatpush1.bf16.msra.mxu0 0
      %4760 = vmatprep.subr.bf16.mxu0 0
      %4761 = vmatpush1.bf16.msra.mxu0 0
      %4762 = vmatprep.subr.bf16.mxu0 0
      %4763 = vmatpush1.bf16.msra.mxu0 0
      %4764 = vmatprep.subr.bf16.mxu0 0
      %4765 = vmatpush1.bf16.msra.mxu0 0
      %4766 = vmatprep.subr.bf16.mxu0 0
      %4767 = vmatpush1.bf16.msra.mxu0 0
      %4768 = vmatprep.subr.bf16.mxu0 0
      %4769 = vmatpush1.bf16.msra.mxu0 0
      %4770 = vmatprep.mubr.bf16.mxu0 0
      %4771 = vmatmul.mubr.bf16.gmra.mrb[0].mxu0 %v4733
      %v4772 = vpop.f32.mrb[0].mxu0
      %v4773 = vadd.f32 0.0, %v4772
      %v4774 = vpop.f32.mrb[0].mxu0
      %v4775 = vpop.f32.mrb[0].mxu0
      %v4776 = vpop.f32.mrb[0].mxu0
      %4777 = vdwg.mxu0
      %v4779 = vsel %vm613, %v4723, 0
      %v4782 = vsel %vm1134, %v4724, 0
      %4784 = vmatprep.subr.bf16.mxu0 0
      %4785 = vmatpush1.bf16.msra.mxu0 %v4782
      %4786 = vmatprep.subr.bf16.mxu0 0
      %4787 = vmatpush1.bf16.msra.mxu0 0
      %4788 = vmatprep.subr.bf16.mxu0 0
      %4789 = vmatpush1.bf16.msra.mxu0 0
      %4790 = vmatprep.subr.bf16.mxu0 0
      %4791 = vmatpush1.bf16.msra.mxu0 0
      %4792 = vmatprep.subr.bf16.mxu0 0
      %4793 = vmatpush1.bf16.msra.mxu0 0
      %4794 = vmatprep.subr.bf16.mxu0 0
      %4795 = vmatpush1.bf16.msra.mxu0 0
      %4796 = vmatprep.subr.bf16.mxu0 0
      %4797 = vmatpush1.bf16.msra.mxu0 0
      %4798 = vmatprep.subr.bf16.mxu0 0
      %4799 = vmatpush1.bf16.msra.mxu0 0
      %4800 = vmatprep.subr.bf16.mxu0 0
      %4801 = vmatpush1.bf16.msra.mxu0 0
      %4802 = vmatprep.subr.bf16.mxu0 0
      %4803 = vmatpush1.bf16.msra.mxu0 0
      %4804 = vmatprep.subr.bf16.mxu0 0
      %4805 = vmatpush1.bf16.msra.mxu0 0
      %4806 = vmatprep.subr.bf16.mxu0 0
      %4807 = vmatpush1.bf16.msra.mxu0 0
      %4808 = vmatprep.subr.bf16.mxu0 0
      %4809 = vmatpush1.bf16.msra.mxu0 0
      %4810 = vmatprep.subr.bf16.mxu0 0
      %4811 = vmatpush1.bf16.msra.mxu0 0
      %4812 = vmatprep.subr.bf16.mxu0 0
      %4813 = vmatpush1.bf16.msra.mxu0 0
      %4814 = vmatprep.subr.bf16.mxu0 0
      %4815 = vmatpush1.bf16.msra.mxu0 0
      %4816 = vmatprep.mubr.bf16.mxu0 0
      %4817 = vmatmul.mubr.bf16.gmra.mrb[0].mxu0 %v4779
      %v4818 = vpop.f32.mrb[0].mxu0
      %v4819 = vadd.f32 %v4773, %v4818
      %v4820 = vpop.f32.mrb[0].mxu0
      %v4821 = vpop.f32.mrb[0].mxu0
      %v4822 = vpop.f32.mrb[0].mxu0
      %4823 = vdwg.mxu0
      %4824 = vrot.lane.b32.xlu0 %v4713, 6
      %v4825 = vpop.permute.xlu0 %4824
      %v4827 = vsel %vm725, 0.0, %v4825
      %v4828 = vsel %vm728, %v4827, 0.0
      %s4829 = scalar_lea.vmem %s2, 188
      %v4830 = vld [vmem:[%s4829] sm:$0xf]
      %v4831 = vpack.c.bf16 %v4828, %v4828
      %v4833 = vsel %vm613, %v4830, 0
      %v4836 = vsel %vm1134, %v4831, 0
      %4838 = vmatprep.subr.bf16.mxu0 0
      %4839 = vmatpush1.bf16.msra.mxu0 %v4836
      %4840 = vmatprep.subr.bf16.mxu0 0
      %4841 = vmatpush1.bf16.msra.mxu0 0
      %4842 = vmatprep.subr.bf16.mxu0 0
      %4843 = vmatpush1.bf16.msra.mxu0 0
      %4844 = vmatprep.subr.bf16.mxu0 0
      %4845 = vmatpush1.bf16.msra.mxu0 0
      %4846 = vmatprep.subr.bf16.mxu0 0
      %4847 = vmatpush1.bf16.msra.mxu0 0
      %4848 = vmatprep.subr.bf16.mxu0 0
      %4849 = vmatpush1.bf16.msra.mxu0 0
      %4850 = vmatprep.subr.bf16.mxu0 0
      %4851 = vmatpush1.bf16.msra.mxu0 0
      %4852 = vmatprep.subr.bf16.mxu0 0
      %4853 = vmatpush1.bf16.msra.mxu0 0
      %4854 = vmatprep.subr.bf16.mxu0 0
      %4855 = vmatpush1.bf16.msra.mxu0 0
      %4856 = vmatprep.subr.bf16.mxu0 0
      %4857 = vmatpush1.bf16.msra.mxu0 0
      %4858 = vmatprep.subr.bf16.mxu0 0
      %4859 = vmatpush1.bf16.msra.mxu0 0
      %4860 = vmatprep.subr.bf16.mxu0 0
      %4861 = vmatpush1.bf16.msra.mxu0 0
      %4862 = vmatprep.subr.bf16.mxu0 0
      %4863 = vmatpush1.bf16.msra.mxu0 0
      %4864 = vmatprep.subr.bf16.mxu0 0
      %4865 = vmatpush1.bf16.msra.mxu0 0
      %4866 = vmatprep.subr.bf16.mxu0 0
      %4867 = vmatpush1.bf16.msra.mxu0 0
      %4868 = vmatprep.subr.bf16.mxu0 0
      %4869 = vmatpush1.bf16.msra.mxu0 0
      %4870 = vmatprep.mubr.bf16.mxu0 0
      %4871 = vmatmul.mubr.bf16.gmra.mrb[0].mxu0 %v4833
      %v4872 = vpop.f32.mrb[0].mxu0
      %v4873 = vadd.f32 0.0, %v4872
      %v4874 = vpop.f32.mrb[0].mxu0
      %v4875 = vpop.f32.mrb[0].mxu0
      %v4876 = vpop.f32.mrb[0].mxu0
      %4877 = vdwg.mxu0
      %v4878 = vadd.f32 %v4819, %v4873
      %4879 = vrot.lane.b32.xlu0 %v4713, 1
      %v4880 = vpop.permute.xlu0 %4879
      %v4882 = vsel %vm783, 0.0, %v4880
      %v4883 = vsel %vm616, %v4882, 0.0
      %s4884 = scalar_lea.vmem %s2, 192
      %v4885 = vld [vmem:[%s4884] sm:$0xf]
      %v4886 = vpack.c.bf16 %v4883, %v4883
      %v4888 = vsel %vm613, %v4885, 0
      %v4891 = vsel %vm1134, %v4886, 0
      %4893 = vmatprep.subr.bf16.mxu0 0
      %4894 = vmatpush1.bf16.msra.mxu0 %v4891
      %4895 = vmatprep.subr.bf16.mxu0 0
      %4896 = vmatpush1.bf16.msra.mxu0 0
      %4897 = vmatprep.subr.bf16.mxu0 0
      %4898 = vmatpush1.bf16.msra.mxu0 0
      %4899 = vmatprep.subr.bf16.mxu0 0
      %4900 = vmatpush1.bf16.msra.mxu0 0
      %4901 = vmatprep.subr.bf16.mxu0 0
      %4902 = vmatpush1.bf16.msra.mxu0 0
      %4903 = vmatprep.subr.bf16.mxu0 0
      %4904 = vmatpush1.bf16.msra.mxu0 0
      %4905 = vmatprep.subr.bf16.mxu0 0
      %4906 = vmatpush1.bf16.msra.mxu0 0
      %4907 = vmatprep.subr.bf16.mxu0 0
      %4908 = vmatpush1.bf16.msra.mxu0 0
      %4909 = vmatprep.subr.bf16.mxu0 0
      %4910 = vmatpush1.bf16.msra.mxu0 0
      %4911 = vmatprep.subr.bf16.mxu0 0
      %4912 = vmatpush1.bf16.msra.mxu0 0
      %4913 = vmatprep.subr.bf16.mxu0 0
      %4914 = vmatpush1.bf16.msra.mxu0 0
      %4915 = vmatprep.subr.bf16.mxu0 0
      %4916 = vmatpush1.bf16.msra.mxu0 0
      %4917 = vmatprep.subr.bf16.mxu0 0
      %4918 = vmatpush1.bf16.msra.mxu0 0
      %4919 = vmatprep.subr.bf16.mxu0 0
      %4920 = vmatpush1.bf16.msra.mxu0 0
      %4921 = vmatprep.subr.bf16.mxu0 0
      %4922 = vmatpush1.bf16.msra.mxu0 0
      %4923 = vmatprep.subr.bf16.mxu0 0
      %4924 = vmatpush1.bf16.msra.mxu0 0
      %4925 = vmatprep.mubr.bf16.mxu0 0
      %4926 = vmatmul.mubr.bf16.gmra.mrb[0].mxu0 %v4888
      %v4927 = vpop.f32.mrb[0].mxu0
      %v4928 = vadd.f32 0.0, %v4927
      %v4929 = vpop.f32.mrb[0].mxu0
      %v4930 = vpop.f32.mrb[0].mxu0
      %v4931 = vpop.f32.mrb[0].mxu0
      %4932 = vdwg.mxu0
      %v4933 = vadd.f32 %v4878, %v4928
      %s4934 = scalar_lea.vmem %s2, 196
      %v4935 = vld [vmem:[%s4934] sm:$0xf]
      %v4936 = vpack.c.bf16 %v4713, %v4713
      %v4938 = vsel %vm613, %v4935, 0
      %v4941 = vsel %vm1134, %v4936, 0
      %4943 = vmatprep.subr.bf16.mxu0 0
      %4944 = vmatpush1.bf16.msra.mxu0 %v4941
      %4945 = vmatprep.subr.bf16.mxu0 0
      %4946 = vmatpush1.bf16.msra.mxu0 0
      %4947 = vmatprep.subr.bf16.mxu0 0
      %4948 = vmatpush1.bf16.msra.mxu0 0
      %4949 = vmatprep.subr.bf16.mxu0 0
      %4950 = vmatpush1.bf16.msra.mxu0 0
      %4951 = vmatprep.subr.bf16.mxu0 0
      %4952 = vmatpush1.bf16.msra.mxu0 0
      %4953 = vmatprep.subr.bf16.mxu0 0
      %4954 = vmatpush1.bf16.msra.mxu0 0
      %4955 = vmatprep.subr.bf16.mxu0 0
      %4956 = vmatpush1.bf16.msra.mxu0 0
      %4957 = vmatprep.subr.bf16.mxu0 0
      %4958 = vmatpush1.bf16.msra.mxu0 0
      %4959 = vmatprep.subr.bf16.mxu0 0
      %4960 = vmatpush1.bf16.msra.mxu0 0
      %4961 = vmatprep.subr.bf16.mxu0 0
      %4962 = vmatpush1.bf16.msra.mxu0 0
      %4963 = vmatprep.subr.bf16.mxu0 0
      %4964 = vmatpush1.bf16.msra.mxu0 0
      %4965 = vmatprep.subr.bf16.mxu0 0
      %4966 = vmatpush1.bf16.msra.mxu0 0
      %4967 = vmatprep.subr.bf16.mxu0 0
      %4968 = vmatpush1.bf16.msra.mxu0 0
      %4969 = vmatprep.subr.bf16.mxu0 0
      %4970 = vmatpush1.bf16.msra.mxu0 0
      %4971 = vmatprep.subr.bf16.mxu0 0
      %4972 = vmatpush1.bf16.msra.mxu0 0
      %4973 = vmatprep.subr.bf16.mxu0 0
      %4974 = vmatpush1.bf16.msra.mxu0 0
      %4975 = vmatprep.mubr.bf16.mxu0 0
      %4976 = vmatmul.mubr.bf16.gmra.mrb[0].mxu0 %v4938
      %v4977 = vpop.f32.mrb[0].mxu0
      %v4978 = vadd.f32 0.0, %v4977
      %v4979 = vpop.f32.mrb[0].mxu0
      %v4980 = vpop.f32.mrb[0].mxu0
      %v4981 = vpop.f32.mrb[0].mxu0
      %4982 = vdwg.mxu0
      %v4983 = vadd.f32 %v4933, %v4978
      %4984 = vrot.lane.b32.xlu0 %v4713, 127
      %v4985 = vpop.permute.xlu0 %4984
      %v4987 = vsel %vm889, %v4985, 0.0
      %v4988 = vsel %vm728, %v4987, 0.0
      %s4989 = scalar_lea.vmem %s2, 200
      %v4990 = vld [vmem:[%s4989] sm:$0xf]
      %v4991 = vpack.c.bf16 %v4988, %v4988
      %v4993 = vsel %vm613, %v4990, 0
      %v4996 = vsel %vm1134, %v4991, 0
      %4998 = vmatprep.subr.bf16.mxu0 0
      %4999 = vmatpush1.bf16.msra.mxu0 %v4996
      %5000 = vmatprep.subr.bf16.mxu0 0
      %5001 = vmatpush1.bf16.msra.mxu0 0
      %5002 = vmatprep.subr.bf16.mxu0 0
      %5003 = vmatpush1.bf16.msra.mxu0 0
      %5004 = vmatprep.subr.bf16.mxu0 0
      %5005 = vmatpush1.bf16.msra.mxu0 0
      %5006 = vmatprep.subr.bf16.mxu0 0
      %5007 = vmatpush1.bf16.msra.mxu0 0
      %5008 = vmatprep.subr.bf16.mxu0 0
      %5009 = vmatpush1.bf16.msra.mxu0 0
      %5010 = vmatprep.subr.bf16.mxu0 0
      %5011 = vmatpush1.bf16.msra.mxu0 0
      %5012 = vmatprep.subr.bf16.mxu0 0
      %5013 = vmatpush1.bf16.msra.mxu0 0
      %5014 = vmatprep.subr.bf16.mxu0 0
      %5015 = vmatpush1.bf16.msra.mxu0 0
      %5016 = vmatprep.subr.bf16.mxu0 0
      %5017 = vmatpush1.bf16.msra.mxu0 0
      %5018 = vmatprep.subr.bf16.mxu0 0
      %5019 = vmatpush1.bf16.msra.mxu0 0
      %5020 = vmatprep.subr.bf16.mxu0 0
      %5021 = vmatpush1.bf16.msra.mxu0 0
      %5022 = vmatprep.subr.bf16.mxu0 0
      %5023 = vmatpush1.bf16.msra.mxu0 0
      %5024 = vmatprep.subr.bf16.mxu0 0
      %5025 = vmatpush1.bf16.msra.mxu0 0
      %5026 = vmatprep.subr.bf16.mxu0 0
      %5027 = vmatpush1.bf16.msra.mxu0 0
      %5028 = vmatprep.subr.bf16.mxu0 0
      %5029 = vmatpush1.bf16.msra.mxu0 0
      %5030 = vmatprep.mubr.bf16.mxu0 0
      %5031 = vmatmul.mubr.bf16.gmra.mrb[0].mxu0 %v4993
      %v5032 = vpop.f32.mrb[0].mxu0
      %v5033 = vadd.f32 0.0, %v5032
      %v5034 = vpop.f32.mrb[0].mxu0
      %v5035 = vpop.f32.mrb[0].mxu0
      %v5036 = vpop.f32.mrb[0].mxu0
      %5037 = vdwg.mxu0
      %v5038 = vadd.f32 %v4983, %v5033
      %5039 = vrot.lane.b32.xlu0 %v4713, 122
      %v5040 = vpop.permute.xlu0 %5039
      %v5042 = vsel %vm945, %v5040, 0.0
      %v5043 = vsel %vm616, %v5042, 0.0
      %s5044 = scalar_lea.vmem %s2, 204
      %v5045 = vld [vmem:[%s5044] sm:$0xf]
      %v5046 = vpack.c.bf16 %v5043, %v5043
      %v5048 = vsel %vm613, %v5045, 0
      %v5051 = vsel %vm1134, %v5046, 0
      %5053 = vmatprep.subr.bf16.mxu0 0
      %5054 = vmatpush1.bf16.msra.mxu0 %v5051
      %5055 = vmatprep.subr.bf16.mxu0 0
      %5056 = vmatpush1.bf16.msra.mxu0 0
      %5057 = vmatprep.subr.bf16.mxu0 0
      %5058 = vmatpush1.bf16.msra.mxu0 0
      %5059 = vmatprep.subr.bf16.mxu0 0
      %5060 = vmatpush1.bf16.msra.mxu0 0
      %5061 = vmatprep.subr.bf16.mxu0 0
      %5062 = vmatpush1.bf16.msra.mxu0 0
      %5063 = vmatprep.subr.bf16.mxu0 0
      %5064 = vmatpush1.bf16.msra.mxu0 0
      %5065 = vmatprep.subr.bf16.mxu0 0
      %5066 = vmatpush1.bf16.msra.mxu0 0
      %5067 = vmatprep.subr.bf16.mxu0 0
      %5068 = vmatpush1.bf16.msra.mxu0 0
      %5069 = vmatprep.subr.bf16.mxu0 0
      %5070 = vmatpush1.bf16.msra.mxu0 0
      %5071 = vmatprep.subr.bf16.mxu0 0
      %5072 = vmatpush1.bf16.msra.mxu0 0
      %5073 = vmatprep.subr.bf16.mxu0 0
      %5074 = vmatpush1.bf16.msra.mxu0 0
      %5075 = vmatprep.subr.bf16.mxu0 0
      %5076 = vmatpush1.bf16.msra.mxu0 0
      %5077 = vmatprep.subr.bf16.mxu0 0
      %5078 = vmatpush1.bf16.msra.mxu0 0
      %5079 = vmatprep.subr.bf16.mxu0 0
      %5080 = vmatpush1.bf16.msra.mxu0 0
      %5081 = vmatprep.subr.bf16.mxu0 0
      %5082 = vmatpush1.bf16.msra.mxu0 0
      %5083 = vmatprep.subr.bf16.mxu0 0
      %5084 = vmatpush1.bf16.msra.mxu0 0
      %5085 = vmatprep.mubr.bf16.mxu0 0
      %5086 = vmatmul.mubr.bf16.gmra.mrb[0].mxu0 %v5048
      %v5087 = vpop.f32.mrb[0].mxu0
      %v5088 = vadd.f32 0.0, %v5087
      %v5089 = vpop.f32.mrb[0].mxu0
      %v5090 = vpop.f32.mrb[0].mxu0
      %v5091 = vpop.f32.mrb[0].mxu0
      %5092 = vdwg.mxu0
      %v5093 = vadd.f32 %v5038, %v5088
      %5094 = vrot.lane.b32.xlu0 %v4713, 121
      %v5095 = vpop.permute.xlu0 %5094
      %v5097 = vsel %vm1001, %v5095, 0.0
      %s5098 = scalar_lea.vmem %s2, 208
      %v5099 = vld [vmem:[%s5098] sm:$0xf]
      %v5100 = vpack.c.bf16 %v5097, %v5097
      %v5102 = vsel %vm613, %v5099, 0
      %v5105 = vsel %vm1134, %v5100, 0
      %5107 = vmatprep.subr.bf16.mxu0 0
      %5108 = vmatpush1.bf16.msra.mxu0 %v5105
      %5109 = vmatprep.subr.bf16.mxu0 0
      %5110 = vmatpush1.bf16.msra.mxu0 0
      %5111 = vmatprep.subr.bf16.mxu0 0
      %5112 = vmatpush1.bf16.msra.mxu0 0
      %5113 = vmatprep.subr.bf16.mxu0 0
      %5114 = vmatpush1.bf16.msra.mxu0 0
      %5115 = vmatprep.subr.bf16.mxu0 0
      %5116 = vmatpush1.bf16.msra.mxu0 0
      %5117 = vmatprep.subr.bf16.mxu0 0
      %5118 = vmatpush1.bf16.msra.mxu0 0
      %5119 = vmatprep.subr.bf16.mxu0 0
      %5120 = vmatpush1.bf16.msra.mxu0 0
      %5121 = vmatprep.subr.bf16.mxu0 0
      %5122 = vmatpush1.bf16.msra.mxu0 0
      %5123 = vmatprep.subr.bf16.mxu0 0
      %5124 = vmatpush1.bf16.msra.mxu0 0
      %5125 = vmatprep.subr.bf16.mxu0 0
      %5126 = vmatpush1.bf16.msra.mxu0 0
      %5127 = vmatprep.subr.bf16.mxu0 0
      %5128 = vmatpush1.bf16.msra.mxu0 0
      %5129 = vmatprep.subr.bf16.mxu0 0
      %5130 = vmatpush1.bf16.msra.mxu0 0
      %5131 = vmatprep.subr.bf16.mxu0 0
      %5132 = vmatpush1.bf16.msra.mxu0 0
      %5133 = vmatprep.subr.bf16.mxu0 0
      %5134 = vmatpush1.bf16.msra.mxu0 0
      %5135 = vmatprep.subr.bf16.mxu0 0
      %5136 = vmatpush1.bf16.msra.mxu0 0
      %5137 = vmatprep.subr.bf16.mxu0 0
      %5138 = vmatpush1.bf16.msra.mxu0 0
      %5139 = vmatprep.mubr.bf16.mxu0 0
      %5140 = vmatmul.mubr.bf16.gmra.mrb[0].mxu0 %v5102
      %v5141 = vpop.f32.mrb[0].mxu0
      %v5142 = vadd.f32 0.0, %v5141
      %v5143 = vpop.f32.mrb[0].mxu0
      %v5144 = vpop.f32.mrb[0].mxu0
      %v5145 = vpop.f32.mrb[0].mxu0
      %5146 = vdwg.mxu0
      %v5147 = vadd.f32 %v5093, %v5142
      %5148 = vrot.lane.b32.xlu0 %v4713, 120
      %v5149 = vpop.permute.xlu0 %5148
      %v5151 = vsel %vm1056, %v5149, 0.0
      %v5152 = vsel %vm728, %v5151, 0.0
      %s5153 = scalar_lea.vmem %s2, 212
      %v5154 = vld [vmem:[%s5153] sm:$0xf]
      %v5155 = vpack.c.bf16 %v5152, %v5152
      %v5157 = vsel %vm613, %v5154, 0
      %v5160 = vsel %vm1134, %v5155, 0
      %5162 = vmatprep.subr.bf16.mxu0 0
      %5163 = vmatpush1.bf16.msra.mxu0 %v5160
      %5164 = vmatprep.subr.bf16.mxu0 0
      %5165 = vmatpush1.bf16.msra.mxu0 0
      %5166 = vmatprep.subr.bf16.mxu0 0
      %5167 = vmatpush1.bf16.msra.mxu0 0
      %5168 = vmatprep.subr.bf16.mxu0 0
      %5169 = vmatpush1.bf16.msra.mxu0 0
      %5170 = vmatprep.subr.bf16.mxu0 0
      %5171 = vmatpush1.bf16.msra.mxu0 0
      %5172 = vmatprep.subr.bf16.mxu0 0
      %5173 = vmatpush1.bf16.msra.mxu0 0
      %5174 = vmatprep.subr.bf16.mxu0 0
      %5175 = vmatpush1.bf16.msra.mxu0 0
      %5176 = vmatprep.subr.bf16.mxu0 0
      %5177 = vmatpush1.bf16.msra.mxu0 0
      %5178 = vmatprep.subr.bf16.mxu0 0
      %5179 = vmatpush1.bf16.msra.mxu0 0
      %5180 = vmatprep.subr.bf16.mxu0 0
      %5181 = vmatpush1.bf16.msra.mxu0 0
      %5182 = vmatprep.subr.bf16.mxu0 0
      %5183 = vmatpush1.bf16.msra.mxu0 0
      %5184 = vmatprep.subr.bf16.mxu0 0
      %5185 = vmatpush1.bf16.msra.mxu0 0
      %5186 = vmatprep.subr.bf16.mxu0 0
      %5187 = vmatpush1.bf16.msra.mxu0 0
      %5188 = vmatprep.subr.bf16.mxu0 0
      %5189 = vmatpush1.bf16.msra.mxu0 0
      %5190 = vmatprep.subr.bf16.mxu0 0
      %5191 = vmatpush1.bf16.msra.mxu0 0
      %5192 = vmatprep.subr.bf16.mxu0 0
      %5193 = vmatpush1.bf16.msra.mxu0 0
      %5194 = vmatprep.mubr.bf16.mxu0 0
      %5195 = vmatmul.mubr.bf16.gmra.mrb[0].mxu0 %v5157
      %v5196 = vpop.f32.mrb[0].mxu0
      %v5197 = vadd.f32 0.0, %v5196
      %v5198 = vpop.f32.mrb[0].mxu0
      %v5199 = vpop.f32.mrb[0].mxu0
      %v5200 = vpop.f32.mrb[0].mxu0
      %5201 = vdwg.mxu0
      %v5202 = vadd.f32 %v5147, %v5197
      %5203 = vset.pattern.permute.xlu0 6
      %5204 = vperm.xlu0 %5203, %v402
      %v5205 = vpop.permute.xlu0 %5204
      %v5207 = vadd.f32 %v5202, %v5205
      %v5208 = vmax.f32 %v5207, 0.0
      %5210 = vrot.lane.b32.xlu0 %v5208, 8
      %v5211 = vpop.permute.xlu0 %5210
      %v5213 = vsel %vm613, 0.0, %v5211
      %v5214 = vsel %vm616, %v5213, 0.0
      %s5215 = scalar_lea.vmem %s2, 216
      %v5216 = vld [vmem:[%s5215] sm:$0xf]
      %v5217 = vpack.c.bf16 %v5214, %v5214
      %5218 = vrot.lane.b32.xlu0 %v5208, 7
      %v5219 = vpop.permute.xlu0 %5218
      %v5221 = vsel %vm623, 0.0, %v5219
      %s5222 = scalar_lea.vmem %s2, 220
      %v5223 = vld [vmem:[%s5222] sm:$0xf]
      %v5224 = vpack.c.bf16 %v5221, %v5221
      %v5226 = vsel %vm613, %v5223, 0
      %v5229 = vsel %vm1134, %v5224, 0
      %5231 = vmatprep.subr.bf16.mxu0 0
      %5232 = vmatpush1.bf16.msra.mxu0 %v5229
      %5233 = vmatprep.subr.bf16.mxu0 0
      %5234 = vmatpush1.bf16.msra.mxu0 0
      %5235 = vmatprep.subr.bf16.mxu0 0
      %5236 = vmatpush1.bf16.msra.mxu0 0
      %5237 = vmatprep.subr.bf16.mxu0 0
      %5238 = vmatpush1.bf16.msra.mxu0 0
      %5239 = vmatprep.subr.bf16.mxu0 0
      %5240 = vmatpush1.bf16.msra.mxu0 0
      %5241 = vmatprep.subr.bf16.mxu0 0
      %5242 = vmatpush1.bf16.msra.mxu0 0
      %5243 = vmatprep.subr.bf16.mxu0 0
      %5244 = vmatpush1.bf16.msra.mxu0 0
      %5245 = vmatprep.subr.bf16.mxu0 0
      %5246 = vmatpush1.bf16.msra.mxu0 0
      %5247 = vmatprep.subr.bf16.mxu0 0
      %5248 = vmatpush1.bf16.msra.mxu0 0
      %5249 = vmatprep.subr.bf16.mxu0 0
      %5250 = vmatpush1.bf16.msra.mxu0 0
      %5251 = vmatprep.subr.bf16.mxu0 0
      %5252 = vmatpush1.bf16.msra.mxu0 0
      %5253 = vmatprep.subr.bf16.mxu0 0
      %5254 = vmatpush1.bf16.msra.mxu0 0
      %5255 = vmatprep.subr.bf16.mxu0 0
      %5256 = vmatpush1.bf16.msra.mxu0 0
      %5257 = vmatprep.subr.bf16.mxu0 0
      %5258 = vmatpush1.bf16.msra.mxu0 0
      %5259 = vmatprep.subr.bf16.mxu0 0
      %5260 = vmatpush1.bf16.msra.mxu0 0
      %5261 = vmatprep.subr.bf16.mxu0 0
      %5262 = vmatpush1.bf16.msra.mxu0 0
      %5263 = vmatprep.mubr.bf16.mxu0 0
      %5264 = vmatmul.mubr.bf16.gmra.mrb[0].mxu0 %v5226
      %v5265 = vpop.f32.mrb[0].mxu0
      %v5266 = vadd.f32 0.0, %v5265
      %v5267 = vpop.f32.mrb[0].mxu0
      %v5268 = vpop.f32.mrb[0].mxu0
      %v5269 = vpop.f32.mrb[0].mxu0
      %5270 = vdwg.mxu0
      %v5272 = vsel %vm613, %v5216, 0
      %v5275 = vsel %vm1134, %v5217, 0
      %5277 = vmatprep.subr.bf16.mxu0 0
      %5278 = vmatpush1.bf16.msra.mxu0 %v5275
      %5279 = vmatprep.subr.bf16.mxu0 0
      %5280 = vmatpush1.bf16.msra.mxu0 0
      %5281 = vmatprep.subr.bf16.mxu0 0
      %5282 = vmatpush1.bf16.msra.mxu0 0
      %5283 = vmatprep.subr.bf16.mxu0 0
      %5284 = vmatpush1.bf16.msra.mxu0 0
      %5285 = vmatprep.subr.bf16.mxu0 0
      %5286 = vmatpush1.bf16.msra.mxu0 0
      %5287 = vmatprep.subr.bf16.mxu0 0
      %5288 = vmatpush1.bf16.msra.mxu0 0
      %5289 = vmatprep.subr.bf16.mxu0 0
      %5290 = vmatpush1.bf16.msra.mxu0 0
      %5291 = vmatprep.subr.bf16.mxu0 0
      %5292 = vmatpush1.bf16.msra.mxu0 0
      %5293 = vmatprep.subr.bf16.mxu0 0
      %5294 = vmatpush1.bf16.msra.mxu0 0
      %5295 = vmatprep.subr.bf16.mxu0 0
      %5296 = vmatpush1.bf16.msra.mxu0 0
      %5297 = vmatprep.subr.bf16.mxu0 0
      %5298 = vmatpush1.bf16.msra.mxu0 0
      %5299 = vmatprep.subr.bf16.mxu0 0
      %5300 = vmatpush1.bf16.msra.mxu0 0
      %5301 = vmatprep.subr.bf16.mxu0 0
      %5302 = vmatpush1.bf16.msra.mxu0 0
      %5303 = vmatprep.subr.bf16.mxu0 0
      %5304 = vmatpush1.bf16.msra.mxu0 0
      %5305 = vmatprep.subr.bf16.mxu0 0
      %5306 = vmatpush1.bf16.msra.mxu0 0
      %5307 = vmatprep.subr.bf16.mxu0 0
      %5308 = vmatpush1.bf16.msra.mxu0 0
      %5309 = vmatprep.mubr.bf16.mxu0 0
      %5310 = vmatmul.mubr.bf16.gmra.mrb[0].mxu0 %v5272
      %v5311 = vpop.f32.mrb[0].mxu0
      %v5312 = vadd.f32 %v5266, %v5311
      %v5313 = vpop.f32.mrb[0].mxu0
      %v5314 = vpop.f32.mrb[0].mxu0
      %v5315 = vpop.f32.mrb[0].mxu0
      %5316 = vdwg.mxu0
      %5317 = vrot.lane.b32.xlu0 %v5208, 6
      %v5318 = vpop.permute.xlu0 %5317
      %v5320 = vsel %vm725, 0.0, %v5318
      %v5321 = vsel %vm728, %v5320, 0.0
      %s5322 = scalar_lea.vmem %s2, 224
      %v5323 = vld [vmem:[%s5322] sm:$0xf]
      %v5324 = vpack.c.bf16 %v5321, %v5321
      %v5326 = vsel %vm613, %v5323, 0
      %v5329 = vsel %vm1134, %v5324, 0
      %5331 = vmatprep.subr.bf16.mxu0 0
      %5332 = vmatpush1.bf16.msra.mxu0 %v5329
      %5333 = vmatprep.subr.bf16.mxu0 0
      %5334 = vmatpush1.bf16.msra.mxu0 0
      %5335 = vmatprep.subr.bf16.mxu0 0
      %5336 = vmatpush1.bf16.msra.mxu0 0
      %5337 = vmatprep.subr.bf16.mxu0 0
      %5338 = vmatpush1.bf16.msra.mxu0 0
      %5339 = vmatprep.subr.bf16.mxu0 0
      %5340 = vmatpush1.bf16.msra.mxu0 0
      %5341 = vmatprep.subr.bf16.mxu0 0
      %5342 = vmatpush1.bf16.msra.mxu0 0
      %5343 = vmatprep.subr.bf16.mxu0 0
      %5344 = vmatpush1.bf16.msra.mxu0 0
      %5345 = vmatprep.subr.bf16.mxu0 0
      %5346 = vmatpush1.bf16.msra.mxu0 0
      %5347 = vmatprep.subr.bf16.mxu0 0
      %5348 = vmatpush1.bf16.msra.mxu0 0
      %5349 = vmatprep.subr.bf16.mxu0 0
      %5350 = vmatpush1.bf16.msra.mxu0 0
      %5351 = vmatprep.subr.bf16.mxu0 0
      %5352 = vmatpush1.bf16.msra.mxu0 0
      %5353 = vmatprep.subr.bf16.mxu0 0
      %5354 = vmatpush1.bf16.msra.mxu0 0
      %5355 = vmatprep.subr.bf16.mxu0 0
      %5356 = vmatpush1.bf16.msra.mxu0 0
      %5357 = vmatprep.subr.bf16.mxu0 0
      %5358 = vmatpush1.bf16.msra.mxu0 0
      %5359 = vmatprep.subr.bf16.mxu0 0
      %5360 = vmatpush1.bf16.msra.mxu0 0
      %5361 = vmatprep.subr.bf16.mxu0 0
      %5362 = vmatpush1.bf16.msra.mxu0 0
      %5363 = vmatprep.mubr.bf16.mxu0 0
      %5364 = vmatmul.mubr.bf16.gmra.mrb[0].mxu0 %v5326
      %v5365 = vpop.f32.mrb[0].mxu0
      %v5366 = vadd.f32 0.0, %v5365
      %v5367 = vpop.f32.mrb[0].mxu0
      %v5368 = vpop.f32.mrb[0].mxu0
      %v5369 = vpop.f32.mrb[0].mxu0
      %5370 = vdwg.mxu0
      %v5371 = vadd.f32 %v5312, %v5366
      %5372 = vrot.lane.b32.xlu0 %v5208, 1
      %v5373 = vpop.permute.xlu0 %5372
      %v5375 = vsel %vm783, 0.0, %v5373
      %v5376 = vsel %vm616, %v5375, 0.0
      %s5377 = scalar_lea.vmem %s2, 228
      %v5378 = vld [vmem:[%s5377] sm:$0xf]
      %v5379 = vpack.c.bf16 %v5376, %v5376
      %v5381 = vsel %vm613, %v5378, 0
      %v5384 = vsel %vm1134, %v5379, 0
      %5386 = vmatprep.subr.bf16.mxu0 0
      %5387 = vmatpush1.bf16.msra.mxu0 %v5384
      %5388 = vmatprep.subr.bf16.mxu0 0
      %5389 = vmatpush1.bf16.msra.mxu0 0
      %5390 = vmatprep.subr.bf16.mxu0 0
      %5391 = vmatpush1.bf16.msra.mxu0 0
      %5392 = vmatprep.subr.bf16.mxu0 0
      %5393 = vmatpush1.bf16.msra.mxu0 0
      %5394 = vmatprep.subr.bf16.mxu0 0
      %5395 = vmatpush1.bf16.msra.mxu0 0
      %5396 = vmatprep.subr.bf16.mxu0 0
      %5397 = vmatpush1.bf16.msra.mxu0 0
      %5398 = vmatprep.subr.bf16.mxu0 0
      %5399 = vmatpush1.bf16.msra.mxu0 0
      %5400 = vmatprep.subr.bf16.mxu0 0
      %5401 = vmatpush1.bf16.msra.mxu0 0
      %5402 = vmatprep.subr.bf16.mxu0 0
      %5403 = vmatpush1.bf16.msra.mxu0 0
      %5404 = vmatprep.subr.bf16.mxu0 0
      %5405 = vmatpush1.bf16.msra.mxu0 0
      %5406 = vmatprep.subr.bf16.mxu0 0
      %5407 = vmatpush1.bf16.msra.mxu0 0
      %5408 = vmatprep.subr.bf16.mxu0 0
      %5409 = vmatpush1.bf16.msra.mxu0 0
      %5410 = vmatprep.subr.bf16.mxu0 0
      %5411 = vmatpush1.bf16.msra.mxu0 0
      %5412 = vmatprep.subr.bf16.mxu0 0
      %5413 = vmatpush1.bf16.msra.mxu0 0
      %5414 = vmatprep.subr.bf16.mxu0 0
      %5415 = vmatpush1.bf16.msra.mxu0 0
      %5416 = vmatprep.subr.bf16.mxu0 0
      %5417 = vmatpush1.bf16.msra.mxu0 0
      %5418 = vmatprep.mubr.bf16.mxu0 0
      %5419 = vmatmul.mubr.bf16.gmra.mrb[0].mxu0 %v5381
      %v5420 = vpop.f32.mrb[0].mxu0
      %v5421 = vadd.f32 0.0, %v5420
      %v5422 = vpop.f32.mrb[0].mxu0
      %v5423 = vpop.f32.mrb[0].mxu0
      %v5424 = vpop.f32.mrb[0].mxu0
      %5425 = vdwg.mxu0
      %v5426 = vadd.f32 %v5371, %v5421
      %s5427 = scalar_lea.vmem %s2, 232
      %v5428 = vld [vmem:[%s5427] sm:$0xf]
      %v5429 = vpack.c.bf16 %v5208, %v5208
      %v5431 = vsel %vm613, %v5428, 0
      %v5434 = vsel %vm1134, %v5429, 0
      %5436 = vmatprep.subr.bf16.mxu0 0
      %5437 = vmatpush1.bf16.msra.mxu0 %v5434
      %5438 = vmatprep.subr.bf16.mxu0 0
      %5439 = vmatpush1.bf16.msra.mxu0 0
      %5440 = vmatprep.subr.bf16.mxu0 0
      %5441 = vmatpush1.bf16.msra.mxu0 0
      %5442 = vmatprep.subr.bf16.mxu0 0
      %5443 = vmatpush1.bf16.msra.mxu0 0
      %5444 = vmatprep.subr.bf16.mxu0 0
      %5445 = vmatpush1.bf16.msra.mxu0 0
      %5446 = vmatprep.subr.bf16.mxu0 0
      %5447 = vmatpush1.bf16.msra.mxu0 0
      %5448 = vmatprep.subr.bf16.mxu0 0
      %5449 = vmatpush1.bf16.msra.mxu0 0
      %5450 = vmatprep.subr.bf16.mxu0 0
      %5451 = vmatpush1.bf16.msra.mxu0 0
      %5452 = vmatprep.subr.bf16.mxu0 0
      %5453 = vmatpush1.bf16.msra.mxu0 0
      %5454 = vmatprep.subr.bf16.mxu0 0
      %5455 = vmatpush1.bf16.msra.mxu0 0
      %5456 = vmatprep.subr.bf16.mxu0 0
      %5457 = vmatpush1.bf16.msra.mxu0 0
      %5458 = vmatprep.subr.bf16.mxu0 0
      %5459 = vmatpush1.bf16.msra.mxu0 0
      %5460 = vmatprep.subr.bf16.mxu0 0
      %5461 = vmatpush1.bf16.msra.mxu0 0
      %5462 = vmatprep.subr.bf16.mxu0 0
      %5463 = vmatpush1.bf16.msra.mxu0 0
      %5464 = vmatprep.subr.bf16.mxu0 0
      %5465 = vmatpush1.bf16.msra.mxu0 0
      %5466 = vmatprep.subr.bf16.mxu0 0
      %5467 = vmatpush1.bf16.msra.mxu0 0
      %5468 = vmatprep.mubr.bf16.mxu0 0
      %5469 = vmatmul.mubr.bf16.gmra.mrb[0].mxu0 %v5431
      %v5470 = vpop.f32.mrb[0].mxu0
      %v5471 = vadd.f32 0.0, %v5470
      %v5472 = vpop.f32.mrb[0].mxu0
      %v5473 = vpop.f32.mrb[0].mxu0
      %v5474 = vpop.f32.mrb[0].mxu0
      %5475 = vdwg.mxu0
      %v5476 = vadd.f32 %v5426, %v5471
      %5477 = vrot.lane.b32.xlu0 %v5208, 127
      %v5478 = vpop.permute.xlu0 %5477
      %v5480 = vsel %vm889, %v5478, 0.0
      %v5481 = vsel %vm728, %v5480, 0.0
      %s5482 = scalar_lea.vmem %s2, 236
      %v5483 = vld [vmem:[%s5482] sm:$0xf]
      %v5484 = vpack.c.bf16 %v5481, %v5481
      %v5486 = vsel %vm613, %v5483, 0
      %v5489 = vsel %vm1134, %v5484, 0
      %5491 = vmatprep.subr.bf16.mxu0 0
      %5492 = vmatpush1.bf16.msra.mxu0 %v5489
      %5493 = vmatprep.subr.bf16.mxu0 0
      %5494 = vmatpush1.bf16.msra.mxu0 0
      %5495 = vmatprep.subr.bf16.mxu0 0
      %5496 = vmatpush1.bf16.msra.mxu0 0
      %5497 = vmatprep.subr.bf16.mxu0 0
      %5498 = vmatpush1.bf16.msra.mxu0 0
      %5499 = vmatprep.subr.bf16.mxu0 0
      %5500 = vmatpush1.bf16.msra.mxu0 0
      %5501 = vmatprep.subr.bf16.mxu0 0
      %5502 = vmatpush1.bf16.msra.mxu0 0
      %5503 = vmatprep.subr.bf16.mxu0 0
      %5504 = vmatpush1.bf16.msra.mxu0 0
      %5505 = vmatprep.subr.bf16.mxu0 0
      %5506 = vmatpush1.bf16.msra.mxu0 0
      %5507 = vmatprep.subr.bf16.mxu0 0
      %5508 = vmatpush1.bf16.msra.mxu0 0
      %5509 = vmatprep.subr.bf16.mxu0 0
      %5510 = vmatpush1.bf16.msra.mxu0 0
      %5511 = vmatprep.subr.bf16.mxu0 0
      %5512 = vmatpush1.bf16.msra.mxu0 0
      %5513 = vmatprep.subr.bf16.mxu0 0
      %5514 = vmatpush1.bf16.msra.mxu0 0
      %5515 = vmatprep.subr.bf16.mxu0 0
      %5516 = vmatpush1.bf16.msra.mxu0 0
      %5517 = vmatprep.subr.bf16.mxu0 0
      %5518 = vmatpush1.bf16.msra.mxu0 0
      %5519 = vmatprep.subr.bf16.mxu0 0
      %5520 = vmatpush1.bf16.msra.mxu0 0
      %5521 = vmatprep.subr.bf16.mxu0 0
      %5522 = vmatpush1.bf16.msra.mxu0 0
      %5523 = vmatprep.mubr.bf16.mxu0 0
      %5524 = vmatmul.mubr.bf16.gmra.mrb[0].mxu0 %v5486
      %v5525 = vpop.f32.mrb[0].mxu0
      %v5526 = vadd.f32 0.0, %v5525
      %v5527 = vpop.f32.mrb[0].mxu0
      %v5528 = vpop.f32.mrb[0].mxu0
      %v5529 = vpop.f32.mrb[0].mxu0
      %5530 = vdwg.mxu0
      %v5531 = vadd.f32 %v5476, %v5526
      %5532 = vrot.lane.b32.xlu0 %v5208, 122
      %v5533 = vpop.permute.xlu0 %5532
      %v5535 = vsel %vm945, %v5533, 0.0
      %v5536 = vsel %vm616, %v5535, 0.0
      %s5537 = scalar_lea.vmem %s2, 240
      %v5538 = vld [vmem:[%s5537] sm:$0xf]
      %v5539 = vpack.c.bf16 %v5536, %v5536
      %v5541 = vsel %vm613, %v5538, 0
      %v5544 = vsel %vm1134, %v5539, 0
      %5546 = vmatprep.subr.bf16.mxu0 0
      %5547 = vmatpush1.bf16.msra.mxu0 %v5544
      %5548 = vmatprep.subr.bf16.mxu0 0
      %5549 = vmatpush1.bf16.msra.mxu0 0
      %5550 = vmatprep.subr.bf16.mxu0 0
      %5551 = vmatpush1.bf16.msra.mxu0 0
      %5552 = vmatprep.subr.bf16.mxu0 0
      %5553 = vmatpush1.bf16.msra.mxu0 0
      %5554 = vmatprep.subr.bf16.mxu0 0
      %5555 = vmatpush1.bf16.msra.mxu0 0
      %5556 = vmatprep.subr.bf16.mxu0 0
      %5557 = vmatpush1.bf16.msra.mxu0 0
      %5558 = vmatprep.subr.bf16.mxu0 0
      %5559 = vmatpush1.bf16.msra.mxu0 0
      %5560 = vmatprep.subr.bf16.mxu0 0
      %5561 = vmatpush1.bf16.msra.mxu0 0
      %5562 = vmatprep.subr.bf16.mxu0 0
      %5563 = vmatpush1.bf16.msra.mxu0 0
      %5564 = vmatprep.subr.bf16.mxu0 0
      %5565 = vmatpush1.bf16.msra.mxu0 0
      %5566 = vmatprep.subr.bf16.mxu0 0
      %5567 = vmatpush1.bf16.msra.mxu0 0
      %5568 = vmatprep.subr.bf16.mxu0 0
      %5569 = vmatpush1.bf16.msra.mxu0 0
      %5570 = vmatprep.subr.bf16.mxu0 0
      %5571 = vmatpush1.bf16.msra.mxu0 0
      %5572 = vmatprep.subr.bf16.mxu0 0
      %5573 = vmatpush1.bf16.msra.mxu0 0
      %5574 = vmatprep.subr.bf16.mxu0 0
      %5575 = vmatpush1.bf16.msra.mxu0 0
      %5576 = vmatprep.subr.bf16.mxu0 0
      %5577 = vmatpush1.bf16.msra.mxu0 0
      %5578 = vmatprep.mubr.bf16.mxu0 0
      %5579 = vmatmul.mubr.bf16.gmra.mrb[0].mxu0 %v5541
      %v5580 = vpop.f32.mrb[0].mxu0
      %v5581 = vadd.f32 0.0, %v5580
      %v5582 = vpop.f32.mrb[0].mxu0
      %v5583 = vpop.f32.mrb[0].mxu0
      %v5584 = vpop.f32.mrb[0].mxu0
      %5585 = vdwg.mxu0
      %v5586 = vadd.f32 %v5531, %v5581
      %5587 = vrot.lane.b32.xlu0 %v5208, 121
      %v5588 = vpop.permute.xlu0 %5587
      %v5590 = vsel %vm1001, %v5588, 0.0
      %s5591 = scalar_lea.vmem %s2, 244
      %v5592 = vld [vmem:[%s5591] sm:$0xf]
      %v5593 = vpack.c.bf16 %v5590, %v5590
      %v5595 = vsel %vm613, %v5592, 0
      %v5598 = vsel %vm1134, %v5593, 0
      %5600 = vmatprep.subr.bf16.mxu0 0
      %5601 = vmatpush1.bf16.msra.mxu0 %v5598
      %5602 = vmatprep.subr.bf16.mxu0 0
      %5603 = vmatpush1.bf16.msra.mxu0 0
      %5604 = vmatprep.subr.bf16.mxu0 0
      %5605 = vmatpush1.bf16.msra.mxu0 0
      %5606 = vmatprep.subr.bf16.mxu0 0
      %5607 = vmatpush1.bf16.msra.mxu0 0
      %5608 = vmatprep.subr.bf16.mxu0 0
      %5609 = vmatpush1.bf16.msra.mxu0 0
      %5610 = vmatprep.subr.bf16.mxu0 0
      %5611 = vmatpush1.bf16.msra.mxu0 0
      %5612 = vmatprep.subr.bf16.mxu0 0
      %5613 = vmatpush1.bf16.msra.mxu0 0
      %5614 = vmatprep.subr.bf16.mxu0 0
      %5615 = vmatpush1.bf16.msra.mxu0 0
      %5616 = vmatprep.subr.bf16.mxu0 0
      %5617 = vmatpush1.bf16.msra.mxu0 0
      %5618 = vmatprep.subr.bf16.mxu0 0
      %5619 = vmatpush1.bf16.msra.mxu0 0
      %5620 = vmatprep.subr.bf16.mxu0 0
      %5621 = vmatpush1.bf16.msra.mxu0 0
      %5622 = vmatprep.subr.bf16.mxu0 0
      %5623 = vmatpush1.bf16.msra.mxu0 0
      %5624 = vmatprep.subr.bf16.mxu0 0
      %5625 = vmatpush1.bf16.msra.mxu0 0
      %5626 = vmatprep.subr.bf16.mxu0 0
      %5627 = vmatpush1.bf16.msra.mxu0 0
      %5628 = vmatprep.subr.bf16.mxu0 0
      %5629 = vmatpush1.bf16.msra.mxu0 0
      %5630 = vmatprep.subr.bf16.mxu0 0
      %5631 = vmatpush1.bf16.msra.mxu0 0
      %5632 = vmatprep.mubr.bf16.mxu0 0
      %5633 = vmatmul.mubr.bf16.gmra.mrb[0].mxu0 %v5595
      %v5634 = vpop.f32.mrb[0].mxu0
      %v5635 = vadd.f32 0.0, %v5634
      %v5636 = vpop.f32.mrb[0].mxu0
      %v5637 = vpop.f32.mrb[0].mxu0
      %v5638 = vpop.f32.mrb[0].mxu0
      %5639 = vdwg.mxu0
      %v5640 = vadd.f32 %v5586, %v5635
      %5641 = vrot.lane.b32.xlu0 %v5208, 120
      %v5642 = vpop.permute.xlu0 %5641
      %v5644 = vsel %vm1056, %v5642, 0.0
      %v5645 = vsel %vm728, %v5644, 0.0
      %s5646 = scalar_lea.vmem %s2, 248
      %v5647 = vld [vmem:[%s5646] sm:$0xf]
      %v5648 = vpack.c.bf16 %v5645, %v5645
      %v5650 = vsel %vm613, %v5647, 0
      %v5653 = vsel %vm1134, %v5648, 0
      %5655 = vmatprep.subr.bf16.mxu0 0
      %5656 = vmatpush1.bf16.msra.mxu0 %v5653
      %5657 = vmatprep.subr.bf16.mxu0 0
      %5658 = vmatpush1.bf16.msra.mxu0 0
      %5659 = vmatprep.subr.bf16.mxu0 0
      %5660 = vmatpush1.bf16.msra.mxu0 0
      %5661 = vmatprep.subr.bf16.mxu0 0
      %5662 = vmatpush1.bf16.msra.mxu0 0
      %5663 = vmatprep.subr.bf16.mxu0 0
      %5664 = vmatpush1.bf16.msra.mxu0 0
      %5665 = vmatprep.subr.bf16.mxu0 0
      %5666 = vmatpush1.bf16.msra.mxu0 0
      %5667 = vmatprep.subr.bf16.mxu0 0
      %5668 = vmatpush1.bf16.msra.mxu0 0
      %5669 = vmatprep.subr.bf16.mxu0 0
      %5670 = vmatpush1.bf16.msra.mxu0 0
      %5671 = vmatprep.subr.bf16.mxu0 0
      %5672 = vmatpush1.bf16.msra.mxu0 0
      %5673 = vmatprep.subr.bf16.mxu0 0
      %5674 = vmatpush1.bf16.msra.mxu0 0
      %5675 = vmatprep.subr.bf16.mxu0 0
      %5676 = vmatpush1.bf16.msra.mxu0 0
      %5677 = vmatprep.subr.bf16.mxu0 0
      %5678 = vmatpush1.bf16.msra.mxu0 0
      %5679 = vmatprep.subr.bf16.mxu0 0
      %5680 = vmatpush1.bf16.msra.mxu0 0
      %5681 = vmatprep.subr.bf16.mxu0 0
      %5682 = vmatpush1.bf16.msra.mxu0 0
      %5683 = vmatprep.subr.bf16.mxu0 0
      %5684 = vmatpush1.bf16.msra.mxu0 0
      %5685 = vmatprep.subr.bf16.mxu0 0
      %5686 = vmatpush1.bf16.msra.mxu0 0
      %5687 = vmatprep.mubr.bf16.mxu0 0
      %5688 = vmatmul.mubr.bf16.gmra.mrb[0].mxu0 %v5650
      %v5689 = vpop.f32.mrb[0].mxu0
      %v5690 = vadd.f32 0.0, %v5689
      %v5691 = vpop.f32.mrb[0].mxu0
      %v5692 = vpop.f32.mrb[0].mxu0
      %v5693 = vpop.f32.mrb[0].mxu0
      %5694 = vdwg.mxu0
      %v5695 = vadd.f32 %v5640, %v5690
      %5696 = vset.pattern.permute.xlu0 7
      %5697 = vperm.xlu0 %5696, %v402
      %v5698 = vpop.permute.xlu0 %5697
      %v5700 = vadd.f32 %v5695, %v5698
      %v5701 = vadd.f32 %v5700, %v4713
      %v5702 = vld [vmem:[%s9] sm:$0xff]
      %v5703 = vld [vmem:[%s9 + $0x8] sm:$0xff]
      %v5704 = vld [vmem:[%s9 + $0x10] sm:$0xff]
      %v5705 = vld [vmem:[%s9 + $0x18] sm:$0xff]
      %v5706 = vld [vmem:[%s9 + $0x20] sm:$0xff]
      %v5707 = vld [vmem:[%s9 + $0x28] sm:$0xff]
      %v5708 = vld [vmem:[%s9 + $0x30] sm:$0xff]
      %v5709 = vld [vmem:[%s9 + $0x38] sm:$0xff]
      %v5710 = vld [vmem:[%s9 + $0x40] sm:$0xff]
      %v5711 = vld [vmem:[%s9 + $0x48] sm:$0xff]
      %v5712 = vld [vmem:[%s9 + $0x50] sm:$0xff]
      %v5713 = vld [vmem:[%s9 + $0x58] sm:$0xff]
      %v5714 = vld [vmem:[%s9 + $0x60] sm:$0x1]
      %v5715 = vld [vmem:[%s9 + $0x68] sm:$0x1]
      %v5717 = vsel %vm1705, %v5701, 0
      %v5720 = vsel %vm1709, %v5714, 0
      %v5723 = vsel %vm1709, %v5715, 0
      %5725 = vmatprep.subr.mxu0 %v5703
      %5726 = vmatpush1.msra.mxu0 %v5702
      %5727 = vmatprep.subr.mxu0 %v5705
      %5728 = vmatpush1.msra.mxu0 %v5704
      %5729 = vmatprep.subr.mxu0 %v5707
      %5730 = vmatpush1.msra.mxu0 %v5706
      %5731 = vmatprep.subr.mxu0 %v5709
      %5732 = vmatpush1.msra.mxu0 %v5708
      %5733 = vmatprep.subr.mxu0 %v5711
      %5734 = vmatpush1.msra.mxu0 %v5710
      %5735 = vmatprep.subr.mxu0 %v5713
      %5736 = vmatpush1.msra.mxu0 %v5712
      %5737 = vmatprep.subr.mxu0 %v5723
      %5738 = vmatpush1.msra.mxu0 %v5720
      %5739 = vmatprep.subr.mxu0 0.0
      %5740 = vmatpush1.msra.mxu0 0.0
      %5741 = vmatprep.subr.mxu0 0.0
      %5742 = vmatpush1.msra.mxu0 0.0
      %5743 = vmatprep.subr.mxu0 0.0
      %5744 = vmatpush1.msra.mxu0 0.0
      %5745 = vmatprep.subr.mxu0 0.0
      %5746 = vmatpush1.msra.mxu0 0.0
      %5747 = vmatprep.subr.mxu0 0.0
      %5748 = vmatpush1.msra.mxu0 0.0
      %5749 = vmatprep.subr.mxu0 0.0
      %5750 = vmatpush1.msra.mxu0 0.0
      %5751 = vmatprep.subr.mxu0 0.0
      %5752 = vmatpush1.msra.mxu0 0.0
      %5753 = vmatprep.subr.mxu0 0.0
      %5754 = vmatpush1.msra.mxu0 0.0
      %5755 = vmatprep.subr.mxu0 0.0
      %5756 = vmatpush1.msra.mxu0 0.0
      %5757 = vmatprep.subr.mxu0 0.0
      %5758 = vmatpush1.msra.mxu0 0.0
      %5759 = vmatprep.subr.mxu0 0.0
      %5760 = vmatpush1.msra.mxu0 0.0
      %5761 = vmatprep.subr.mxu0 0.0
      %5762 = vmatpush1.msra.mxu0 0.0
      %5763 = vmatprep.subr.mxu0 0.0
      %5764 = vmatpush1.msra.mxu0 0.0
      %5765 = vmatprep.subr.mxu0 0.0
      %5766 = vmatpush1.msra.mxu0 0.0
      %5767 = vmatprep.subr.mxu0 0.0
      %5768 = vmatpush1.msra.mxu0 0.0
      %5769 = vmatprep.subr.mxu0 0.0
      %5770 = vmatpush1.msra.mxu0 0.0
      %5771 = vmatprep.subr.mxu0 0.0
      %5772 = vmatpush1.msra.mxu0 0.0
      %5773 = vmatprep.subr.mxu0 0.0
      %5774 = vmatpush1.msra.mxu0 0.0
      %5775 = vmatprep.subr.mxu0 0.0
      %5776 = vmatpush1.msra.mxu0 0.0
      %5777 = vmatprep.subr.mxu0 0.0
      %5778 = vmatpush1.msra.mxu0 0.0
      %5779 = vmatprep.subr.mxu0 0.0
      %5780 = vmatpush1.msra.mxu0 0.0
      %5781 = vmatprep.subr.mxu0 0.0
      %5782 = vmatpush1.msra.mxu0 0.0
      %5783 = vmatprep.subr.mxu0 0.0
      %5784 = vmatpush1.msra.mxu0 0.0
      %5785 = vmatprep.subr.mxu0 0.0
      %5786 = vmatpush1.msra.mxu0 0.0
      %5787 = vmatprep.subr.mxu0 0.0
      %5788 = vmatpush1.msra.mxu0 0.0
      %5789 = vmatprep.mubr.f32.mxu0 0.0
      %5790 = vmatmul.mubr.f32.gmra.mrb[0].mxu0 %v5717
      %v5791 = vpop.f32.mrb[0].mxu0
      %v5792 = vadd.f32 0.0, %v5791
      %v5793 = vpop.f32.mrb[0].mxu0
      %v5794 = vadd.f32 0.0, %v5793
      %5795 = vdwg.mxu0
      %v5796 = vld [vmem:[%s4] sm:$0xf]
      %v5797 = vmax.f32 %v5792, 0.0
      %v5798 = vmax.f32 %v5794, 0.0
      %v5799 = vpack.c.bf16 %v5797, %v5797
      %v5800 = vpack.c.bf16 %v5798, %v5798
      %5801 = vset.pattern.permute.xlu0 8
      %5802 = vperm.xlu0 %5801, %v402
      %v5803 = vpop.permute.xlu0 %5802
      %v5806 = vsel %vm613, %v5796, 0
      %v5809 = vsel %vm1134, %v5799, 0
      %v5812 = vsel %vm1134, %v5800, 0
      %5814 = vmatprep.subr.bf16.mxu0 %v5812
      %5815 = vmatpush1.bf16.msra.mxu0 %v5809
      %5816 = vmatprep.subr.bf16.mxu0 0
      %5817 = vmatpush1.bf16.msra.mxu0 0
      %5818 = vmatprep.subr.bf16.mxu0 0
      %5819 = vmatpush1.bf16.msra.mxu0 0
      %5820 = vmatprep.subr.bf16.mxu0 0
      %5821 = vmatpush1.bf16.msra.mxu0 0
      %5822 = vmatprep.subr.bf16.mxu0 0
      %5823 = vmatpush1.bf16.msra.mxu0 0
      %5824 = vmatprep.subr.bf16.mxu0 0
      %5825 = vmatpush1.bf16.msra.mxu0 0
      %5826 = vmatprep.subr.bf16.mxu0 0
      %5827 = vmatpush1.bf16.msra.mxu0 0
      %5828 = vmatprep.subr.bf16.mxu0 0
      %5829 = vmatpush1.bf16.msra.mxu0 0
      %5830 = vmatprep.subr.bf16.mxu0 0
      %5831 = vmatpush1.bf16.msra.mxu0 0
      %5832 = vmatprep.subr.bf16.mxu0 0
      %5833 = vmatpush1.bf16.msra.mxu0 0
      %5834 = vmatprep.subr.bf16.mxu0 0
      %5835 = vmatpush1.bf16.msra.mxu0 0
      %5836 = vmatprep.subr.bf16.mxu0 0
      %5837 = vmatpush1.bf16.msra.mxu0 0
      %5838 = vmatprep.subr.bf16.mxu0 0
      %5839 = vmatpush1.bf16.msra.mxu0 0
      %5840 = vmatprep.subr.bf16.mxu0 0
      %5841 = vmatpush1.bf16.msra.mxu0 0
      %5842 = vmatprep.subr.bf16.mxu0 0
      %5843 = vmatpush1.bf16.msra.mxu0 0
      %5844 = vmatprep.subr.bf16.mxu0 0
      %5845 = vmatpush1.bf16.msra.mxu0 0
      %5846 = vmatprep.mubr.bf16.mxu0 0
      %5847 = vmatmul.mubr.bf16.gmra.mrb[0].mxu0 %v5806
      %v5848 = vpop.f32.mrb[0].mxu0
      %v5849 = vadd.f32 %v5803, %v5848
      %v5850 = vpop.f32.mrb[0].mxu0
      %v5851 = vadd.f32 %v5803, %v5850
      %v5852 = vpop.f32.mrb[0].mxu0
      %v5853 = vpop.f32.mrb[0].mxu0
      %5854 = vdwg.mxu0
      %s5855 = scalar_lea.vmem %s4, 4
      %v5856 = vld [vmem:[%s5855] sm:$0xf]
      %v5857 = vmax.f32 %v5849, 0.0
      %v5858 = vmax.f32 %v5851, 0.0
      %v5859 = vpack.c.bf16 %v5857, %v5857
      %v5860 = vpack.c.bf16 %v5858, %v5858
      %5861 = vset.pattern.permute.xlu0 9
      %5862 = vperm.xlu0 %5861, %v402
      %v5863 = vpop.permute.xlu0 %5862
      %v5866 = vsel %vm613, %v5856, 0
      %v5869 = vsel %vm1134, %v5859, 0
      %v5872 = vsel %vm1134, %v5860, 0
      %5874 = vmatprep.subr.bf16.mxu0 %v5872
      %5875 = vmatpush1.bf16.msra.mxu0 %v5869
      %5876 = vmatprep.subr.bf16.mxu0 0
      %5877 = vmatpush1.bf16.msra.mxu0 0
      %5878 = vmatprep.subr.bf16.mxu0 0
      %5879 = vmatpush1.bf16.msra.mxu0 0
      %5880 = vmatprep.subr.bf16.mxu0 0
      %5881 = vmatpush1.bf16.msra.mxu0 0
      %5882 = vmatprep.subr.bf16.mxu0 0
      %5883 = vmatpush1.bf16.msra.mxu0 0
      %5884 = vmatprep.subr.bf16.mxu0 0
      %5885 = vmatpush1.bf16.msra.mxu0 0
      %5886 = vmatprep.subr.bf16.mxu0 0
      %5887 = vmatpush1.bf16.msra.mxu0 0
      %5888 = vmatprep.subr.bf16.mxu0 0
      %5889 = vmatpush1.bf16.msra.mxu0 0
      %5890 = vmatprep.subr.bf16.mxu0 0
      %5891 = vmatpush1.bf16.msra.mxu0 0
      %5892 = vmatprep.subr.bf16.mxu0 0
      %5893 = vmatpush1.bf16.msra.mxu0 0
      %5894 = vmatprep.subr.bf16.mxu0 0
      %5895 = vmatpush1.bf16.msra.mxu0 0
      %5896 = vmatprep.subr.bf16.mxu0 0
      %5897 = vmatpush1.bf16.msra.mxu0 0
      %5898 = vmatprep.subr.bf16.mxu0 0
      %5899 = vmatpush1.bf16.msra.mxu0 0
      %5900 = vmatprep.subr.bf16.mxu0 0
      %5901 = vmatpush1.bf16.msra.mxu0 0
      %5902 = vmatprep.subr.bf16.mxu0 0
      %5903 = vmatpush1.bf16.msra.mxu0 0
      %5904 = vmatprep.subr.bf16.mxu0 0
      %5905 = vmatpush1.bf16.msra.mxu0 0
      %5906 = vmatprep.mubr.bf16.mxu0 0
      %5907 = vmatmul.mubr.bf16.gmra.mrb[0].mxu0 %v5866
      %v5908 = vpop.f32.mrb[0].mxu0
      %v5909 = vadd.f32 %v5863, %v5908
      %v5910 = vpop.f32.mrb[0].mxu0
      %v5911 = vadd.f32 %v5863, %v5910
      %v5912 = vpop.f32.mrb[0].mxu0
      %v5913 = vpop.f32.mrb[0].mxu0
      %5914 = vdwg.mxu0
      %v5915 = vxor.u32 %v5909, 2147483648
      %v5916 = vxor.u32 %v5911, 2147483648
      %v5917 = vmul.f32 %v5915, 1.442695
      %v5918 = vpow.pop %v5917
      %v5919 = vmul.f32 %v5916, 1.442695
      %v5920 = vpow.pop %v5919
      %v5921 = vadd.f32 %v5918, 1.0
      %v5922 = vadd.f32 %v5920, 1.0
      %v5923 = vrcp.pop %v5921
      %v5924 = vmul.f32 1.0, %v5923
      %v5925 = vrcp.pop %v5922
      %v5926 = vmul.f32 1.0, %v5925
      %5927 = vst [vmem:[%s359] sm:$0xff] %v5924
      %5928 = vst [vmem:[%s359 + $0x8] sm:$0xff] %v5926
      %p5929 = scmp.lt.s32.totalorder %s21, 5
      %s5930 = scalar_select %p5929, %s21, 5
      %s5931 = smul.addr %s5930, 2
      %s5932 = smul.addr %s5931, 8
      %s5933 = scalar_lea.vmem %s10, %s5932
      // Predicated region
      $region61: #{soft_mask_branch_forward.1} parent=59 // pred_check
        %p5934 = pneg %p254
      $region62: #{soft_mask_branch_forward.1} parent=59 // pred_check_branch
        %5936 = sbr.rel (%p5934) target = $region64
      $region63: #{soft_mask_branch_forward.1} parent=59 // pred_region
        _
      $region64: #{soft_mask_branch_forward.1} parent=59 // pred_fallthru
        _
    $region60: #{soft_mask_branch_forward.1} parent=5 // pred_fallthru
      _
    %p5937 = scmp.le.s32.totalorder 2, %s16
    // Predicated region
    $region65: #{soft_mask_branch_forward.1} parent=5 // pred_check
      %p5938 = pneg %p5937
    $region66: #{soft_mask_branch_forward.1} parent=5 // pred_check_branch
      %5940 = sbr.rel (%p5938) target = $region68
    $region67: #{soft_mask_branch_forward.1} parent=5 // pred_region
      %s5941 = ssub.s32 %s16, 2
      // Predicated region
      $region69: #{soft_mask_branch_forward.1} parent=67 // pred_check
        %p5942 = pneg %p260
      $region70: #{soft_mask_branch_forward.1} parent=67 // pred_check_branch
        %5944 = sbr.rel (%p5942) target = $region72
      $region71: #{soft_mask_branch_forward.1} parent=67 // pred_region
        %p5945 = scmp.lt.s32.totalorder %s22, 5
        %s5946 = scalar_select %p5945, %s22, 5
        %s5947 = smul.addr %s5946, 2
        %s5948 = smul.addr %s5947, 8
        %s5949 = scalar_lea.vmem %s10, %s5948
      $region72: #{soft_mask_branch_forward.1} parent=67 // pred_fallthru
        _
    $region68: #{soft_mask_branch_forward.1} parent=5 // pred_fallthru
      _
  $region6: #{soft_mask_branch_forward.1} parent=0 // loop_footer
    %s20 = sadd.s32 1, %s16
  $region7: #{soft_mask_branch_forward.1} parent=0 // loop_footer_branch
    %15 = sbr.rel target = $region3
  $region8: #{soft_mask_branch_forward.1} parent=0 // loop_exit
    _

</llo_original>
